<compile_context>
chip_gen: v6e
topology: v6e:2x2x1
jax: 0.10.0
libtpu: 0.0.40
codegen_flags: <defaults>
</compile_context>

<pallas_src>
import functools
import math

import jax
import jax.numpy as jnp
from jax.experimental import pallas as pl
from jax.experimental.pallas import tpu as pltpu

_LN_EPS = 1e-6  # nn.LayerNorm(d_model, eps=1e-6) in the usual TransformerBlock impl.


def _layer_norm(v, gamma, beta, eps):
    mu = jnp.mean(v, axis=-1, keepdims=True)
    c = v - mu
    var = jnp.mean(c * c, axis=-1, keepdims=True)
    return c * jax.lax.rsqrt(var + eps) * gamma + beta


def _vmem_limit_bytes(per_step_bytes):
    # Floor at the default 32 MiB scoped limit, cap well below v7x's 64 MiB physical
    # VMEM to leave headroom for Mosaic internal scratch.
    return int(min(max(per_step_bytes + (8 << 20), 32 << 20), 48 << 20))


# ----------------------------------------------------------------------------
# Fused per-layer kernel: MHA + residual + LN1 + FFN + residual + LN2
# ----------------------------------------------------------------------------
def transformer_layer_kernel(
    x_ref,                  # (1, S, D)            bf16  residual stream
    maskb_ref,              # (1, 1, S)            f32   additive key bias (0 / -1e9)
    wqkv_ref, bqkv_ref,     # (D, 2*Hdk+Hdv) bf16, (1, 2*Hdk+Hdv) f32 (1/sqrt(dk) folded into Q)
    wo_ref, bo_ref,         # (Hdv, D) bf16, (1, D) f32
    ln1_g_ref, ln1_b_ref,   # (1, D) f32
    w1_ref, b1_ref,         # (D, d_inner) bf16, (1, d_inner) f32
    w2_ref, b2_ref,         # (d_inner, D) bf16, (1, D) f32
    ln2_g_ref, ln2_b_ref,   # (1, D) f32
    out_ref,                # (1, S, D)            bf16
    *, n_head, d_k, d_v, eps,
):
    xb = x_ref[0]                                   # (S, D) bf16
    x = xb.astype(jnp.float32)

    # --- Fused Q/K/V projection: one lane-dense MXU matmul for all heads. ---
    qkv = jnp.dot(xb, wqkv_ref[...], preferred_element_type=jnp.float32) + bqkv_ref[...]
    hdk = n_head * d_k
    hdv = n_head * d_v
    q_all = qkv[:, :hdk]                            # already scaled by 1/sqrt(d_k)
    k_all = qkv[:, hdk:2 * hdk]
    v_all = qkv[:, 2 * hdk:2 * hdk + hdv]

    mask_bias = maskb_ref[0]                        # (1, S), broadcast over query rows

    # --- Per-head softmax(QK^T)V; contexts concatenated into a (S, Hdv) slab. ---
    ctx_parts = []
    for h in range(n_head):                         # static unroll (n_head small)
        qh = q_all[:, h * d_k:(h + 1) * d_k].astype(jnp.bfloat16)
        kh = k_all[:, h * d_k:(h + 1) * d_k].astype(jnp.bfloat16)
        vh = v_all[:, h * d_v:(h + 1) * d_v].astype(jnp.bfloat16)
        s = jax.lax.dot_general(qh, kh, (((1,), (1,)), ((), ())),
                                preferred_element_type=jnp.float32)   # (S, S)
        s = s + mask_bias
        m = jnp.max(s, axis=-1, keepdims=True)
        p = jnp.exp(s - m)
        denom = jnp.sum(p, axis=-1, keepdims=True)
        p = p * pl.reciprocal(denom)                # exact reciprocal (EUP slot)
        ctx_parts.append(jnp.dot(p.astype(jnp.bfloat16), vh,
                                 preferred_element_type=jnp.float32))  # (S, dv)
    ctx = jnp.concatenate(ctx_parts, axis=-1)       # (S, Hdv) f32

    # --- Single fused output projection across heads + residual + LayerNorm1. ---
    attn = jnp.dot(ctx.astype(jnp.bfloat16), wo_ref[...],
                   preferred_element_type=jnp.float32) + bo_ref[...]
    y = _layer_norm(attn + x, ln1_g_ref[...], ln1_b_ref[...], eps)     # (S, D) f32

    # --- Position-wise FFN (ReLU) + residual + LayerNorm2 (y stays in VMEM). ---
    h1 = jnp.dot(y.astype(jnp.bfloat16), w1_ref[...],
                 preferred_element_type=jnp.float32) + b1_ref[...]
    h1 = jnp.maximum(h1, 0.0)
    h2 = jnp.dot(h1.astype(jnp.bfloat16), w2_ref[...],
                 preferred_element_type=jnp.float32) + b2_ref[...]
    out_ref[0] = _layer_norm(h2 + y, ln2_g_ref[...], ln2_b_ref[...], eps).astype(out_ref.dtype)


def transformer_layer(x, mask_bias, kp, *, n_head, d_k, d_v, eps=_LN_EPS):
    B, S, D = x.shape
    hdk = n_head * d_k
    hdv = n_head * d_v
    qkv_cols = 2 * hdk + hdv
    d_inner = kp["w1"].shape[1]

    kernel = functools.partial(transformer_layer_kernel,
                               n_head=n_head, d_k=d_k, d_v=d_v, eps=eps)

    # VMEM estimate: BlockSpec double-buffers every input (even constant index_map).
    # TODO(synk): on v7x, mark the resident weight specs pipeline_mode=pl.Buffered(1)
    # if the model size makes double-buffered weights exceed ~48 MiB.
    w_bytes = 2 * (D * qkv_cols * 2 + qkv_cols * 4          # wqkv + bqkv
                   + hdv * D * 2 + D * 4 + 2 * D * 4        # wo + bo + ln1
                   + D * d_inner * 2 + d_inner * 4          # w1 + b1
                   + d_inner * D * 2 + D * 4 + 2 * D * 4)   # w2 + b2 + ln2
    act_bytes = 2 * 2 * (S * D * 2) + 2 * S * 4             # x/out blocks (bf16) + mask
    inter_bytes = (S * qkv_cols * 4 + 3 * S * S * 4 + S * hdv * 4
                   + 3 * S * D * 4 + 2 * S * d_inner * 4)
    per_step_bytes = w_bytes + act_bytes + inter_bytes

    const = lambda b: (0, 0)

    return pl.pallas_call(
        kernel,
        out_shape=jax.ShapeDtypeStruct((B, S, D), x.dtype),
        grid=(B,),
        in_specs=[
            pl.BlockSpec((1, S, D), lambda b: (b, 0, 0)),    # x
            pl.BlockSpec((1, 1, S), lambda b: (b, 0, 0)),    # mask bias
            pl.BlockSpec((D, qkv_cols), const),              # wqkv
            pl.BlockSpec((1, qkv_cols), const),              # bqkv
            pl.BlockSpec((hdv, D), const),                   # wo
            pl.BlockSpec((1, D), const),                     # bo
            pl.BlockSpec((1, D), const),                     # ln1_g
            pl.BlockSpec((1, D), const),                     # ln1_b
            pl.BlockSpec((D, d_inner), const),               # w1
            pl.BlockSpec((1, d_inner), const),               # b1
            pl.BlockSpec((d_inner, D), const),               # w2
            pl.BlockSpec((1, D), const),                     # b2
            pl.BlockSpec((1, D), const),                     # ln2_g
            pl.BlockSpec((1, D), const),                     # ln2_b
        ],
        out_specs=pl.BlockSpec((1, S, D), lambda b: (b, 0, 0)),
        input_output_aliases={0: 0},
        compiler_params=pltpu.CompilerParams(
            dimension_semantics=("parallel",),
            vmem_limit_bytes=_vmem_limit_bytes(per_step_bytes)),
    )(x, mask_bias, kp["wqkv"], kp["bqkv"], kp["wo"], kp["bo"],
      kp["ln1_g"], kp["ln1_b"], kp["w1"], kp["b1"], kp["w2"], kp["b2"],
      kp["ln2_g"], kp["ln2_b"])


# ----------------------------------------------------------------------------
# Full BERT forward (mirrors BERT.forward: returns None if mask is None)
# ----------------------------------------------------------------------------
def bert_forward(x, mask, kernel_params, *, n_head, d_k, d_v):
    if mask is None:
        return None
    # Additive key-padding bias computed once and shared by all layers.
    mask_bias = (mask.astype(jnp.float32) - 1.0) * 1e9
    out = x.astype(jnp.bfloat16)                     # bf16 residual stream in HBM
    for kp in kernel_params:
        out = transformer_layer(out, mask_bias, kp, n_head=n_head, d_k=d_k, d_v=d_v)
    return out.astype(jnp.float32)
    # TODO(synk): for S >> 512 switch the attention part to an online-softmax (flash)
    # formulation gridded over (q_tile, kv_tile) and drop the input/output alias.


# ----------------------------------------------------------------------------
# Parameters: head-major reference params + packed kernel-layout params
# ----------------------------------------------------------------------------
def init_layer_params(key, d_model, d_k, d_v, n_head, d_inner):
    ks = jax.random.split(key, 16)
    std = 0.02
    n = lambda k, shape: std * jax.random.normal(k, shape, jnp.float32)
    return {
        "wq": n(ks[0], (n_head, d_model, d_k)), "bq": n(ks[1], (n_head, 1, d_k)),
        "wk": n(ks[2], (n_head, d_model, d_k)), "bk": n(ks[3], (n_head, 1, d_k)),
        "wv": n(ks[4], (n_head, d_model, d_v)), "bv": n(ks[5], (n_head, 1, d_v)),
        "wo": n(ks[6], (n_head, d_v, d_model)), "bo": n(ks[7], (1, d_model)),
        "ln1_g": 1.0 + n(ks[8], (1, d_model)), "ln1_b": n(ks[9], (1, d_model)),
        "w1": n(ks[10], (d_model, d_inner)), "b1": n(ks[11], (1, d_inner)),
        "w2": n(ks[12], (d_inner, d_model)), "b2": n(ks[13], (1, d_model)),
        "ln2_g": 1.0 + n(ks[14], (1, d_model)), "ln2_b": n(ks[15], (1, d_model)),
    }


def pack_layer_params(p, d_k):
    """Head-major f32 params -> fused kernel layout (bf16 weights, Q-scale folded in)."""
    H, D, dk = p["wq"].shape
    dv = p["wv"].shape[-1]
    scale = jnp.float32(1.0 / math.sqrt(d_k))

    def fuse_w(w):   # (H, D, d) -> (D, H*d)
        return jnp.transpose(w, (1, 0, 2)).reshape(D, H * w.shape[-1])

    def fuse_b(b):   # (H, 1, d) -> (1, H*d)
        return b.reshape(1, H * b.shape[-1])

    wqkv = jnp.concatenate(
        [fuse_w(p["wq"]) * scale, fuse_w(p["wk"]), fuse_w(p["wv"])], axis=-1)
    bqkv = jnp.concatenate(
        [fuse_b(p["bq"]) * scale, fuse_b(p["bk"]), fuse_b(p["bv"])], axis=-1)
    wo = p["wo"].reshape(H * dv, D)                       # (H, dv, D) -> (H*dv, D)
    return {
        "wqkv": wqkv.astype(jnp.bfloat16), "bqkv": bqkv,
        "wo": wo.astype(jnp.bfloat16), "bo": p["bo"],
        "ln1_g": p["ln1_g"], "ln1_b": p["ln1_b"],
        "w1": p["w1"].astype(jnp.bfloat16), "b1": p["b1"],
        "w2": p["w2"].astype(jnp.bfloat16), "b2": p["b2"],
        "ln2_g": p["ln2_g"], "ln2_b": p["ln2_b"],
    }


# ----------------------------------------------------------------------------
# Pure-JAX f32 reference mirroring the PyTorch BERT forward semantics
# ----------------------------------------------------------------------------
def bert_reference(x, mask, params, *, eps=_LN_EPS):
    out = x
    for p in params:
        d_k = p["wq"].shape[-1]
        q = jnp.einsum('bsd,hdk->bhsk', out, p["wq"]) + p["bq"][None]
        k = jnp.einsum('bsd,hdk->bhsk', out, p["wk"]) + p["bk"][None]
        v = jnp.einsum('bsd,hdk->bhsk', out, p["wv"]) + p["bv"][None]
        scores = jnp.einsum('bhqd,bhkd->bhqk', q, k) / math.sqrt(d_k)
        scores = jnp.where(mask[:, None] > 0, scores, -1e9)
        attn_p = jax.nn.softmax(scores, axis=-1)
        ctx = jnp.einsum('bhqk,bhkd->bhqd', attn_p, v)
        a = jnp.einsum('bhqd,hde->bqe', ctx, p["wo"]) + p["bo"]
        y = _layer_norm(a + out, p["ln1_g"], p["ln1_b"], eps)
        h1 = jnp.maximum(y @ p["w1"] + p["b1"], 0.0)
        h2 = h1 @ p["w2"] + p["b2"]
        out = _layer_norm(h2 + y, p["ln2_g"], p["ln2_b"], eps)
    return out


if __name__ == "__main__":
    # Small but lane-aligned hyperparameters (d_model, H*dk, d_inner multiples of 128).
    d_model, n_layers, n_head = 128, 2, 4
    d_k = d_v = d_model // n_head       # 32
    d_inner = 256
    dropout = 0.1                       # TODO(synk): dropout treated as eval-mode identity.
    B, S = 2, 128

    key = jax.random.PRNGKey(0)
    k_x, k_p = jax.random.split(key)
    x = jax.random.normal(k_x, (B, S, d_model), jnp.float32)

    # Key-padding mask: 1.0 = attend, 0.0 = padded key; batch 1 has 16 padded tokens.
    mask = jnp.ones((B, 1, S), jnp.float32)
    mask = mask.at[1, 0, S - 16:].set(0.0)

    layer_keys = jax.random.split(k_p, n_layers)
    params = [init_layer_params(layer_keys[i], d_model, d_k, d_v, n_head, d_inner)
              for i in range(n_layers)]
    kernel_params = [pack_layer_params(p, d_k) for p in params]

    fwd = jax.jit(functools.partial(bert_forward, n_head=n_head, d_k=d_k, d_v=d_v))
    out = jax.block_until_ready(fwd(x, mask, kernel_params))

    assert out is not None and out.shape == (B, S, d_model)
    assert bool(jnp.all(jnp.isfinite(out)))

    # Check against the pure-JAX f32 reference (kernels use bf16 MXU matmuls and
    # carry the residual stream in bf16; stats/residuals are f32 inside the kernel).
    ref = bert_reference(x, mask, params)
    max_err = float(jnp.max(jnp.abs(out - ref)))
    assert max_err < 1e-1, f"max |err| vs reference = {max_err}"
    print("KERNEL_OK")
</pallas_src>

<mosaic_0001>
module attributes {stable_mosaic.version = 11 : i64} {
  func.func @transformer_layer_kernel(%arg0: i32, %arg1: memref<1x128x128xbf16, #tpu.memory_space<vmem>>, %arg2: memref<1x1x128xf32, #tpu.memory_space<vmem>>, %arg3: memref<128x384xbf16, #tpu.memory_space<vmem>>, %arg4: memref<1x384xf32, #tpu.memory_space<vmem>>, %arg5: memref<128x128xbf16, #tpu.memory_space<vmem>>, %arg6: memref<1x128xf32, #tpu.memory_space<vmem>>, %arg7: memref<1x128xf32, #tpu.memory_space<vmem>>, %arg8: memref<1x128xf32, #tpu.memory_space<vmem>>, %arg9: memref<128x256xbf16, #tpu.memory_space<vmem>>, %arg10: memref<1x256xf32, #tpu.memory_space<vmem>>, %arg11: memref<256x128xbf16, #tpu.memory_space<vmem>>, %arg12: memref<1x128xf32, #tpu.memory_space<vmem>>, %arg13: memref<1x128xf32, #tpu.memory_space<vmem>>, %arg14: memref<1x128xf32, #tpu.memory_space<vmem>>, %arg15: memref<1x128x128xbf16, #tpu.memory_space<vmem>>) attributes {dimension_semantics = [#tpu.dimension_semantics<parallel>], iteration_bounds = array<i64: 2>, scalar_prefetch = 0 : i64, scratch_operands = 0 : i64, tpu.core_type = #tpu.core_type<tc>, window_params = [{transform_indices = @transform_0, window_bounds = array<i64: 1, 128, 128>}, {transform_indices = @transform_1, window_bounds = array<i64: 1, 1, 128>}, {pipeline_mode = #tpu.pipeline_mode<synchronous>, transform_indices = @transform_2, window_bounds = array<i64: 128, 384>}, {pipeline_mode = #tpu.pipeline_mode<synchronous>, transform_indices = @transform_3, window_bounds = array<i64: 1, 384>}, {pipeline_mode = #tpu.pipeline_mode<synchronous>, transform_indices = @transform_4, window_bounds = array<i64: 128, 128>}, {pipeline_mode = #tpu.pipeline_mode<synchronous>, transform_indices = @transform_5, window_bounds = array<i64: 1, 128>}, {pipeline_mode = #tpu.pipeline_mode<synchronous>, transform_indices = @transform_6, window_bounds = array<i64: 1, 128>}, {pipeline_mode = #tpu.pipeline_mode<synchronous>, transform_indices = @transform_7, window_bounds = array<i64: 1, 128>}, {pipeline_mode = #tpu.pipeline_mode<synchronous>, transform_indices = @transform_8, window_bounds = array<i64: 128, 256>}, {pipeline_mode = #tpu.pipeline_mode<synchronous>, transform_indices = @transform_9, window_bounds = array<i64: 1, 256>}, {pipeline_mode = #tpu.pipeline_mode<synchronous>, transform_indices = @transform_10, window_bounds = array<i64: 256, 128>}, {pipeline_mode = #tpu.pipeline_mode<synchronous>, transform_indices = @transform_11, window_bounds = array<i64: 1, 128>}, {pipeline_mode = #tpu.pipeline_mode<synchronous>, transform_indices = @transform_12, window_bounds = array<i64: 1, 128>}, {pipeline_mode = #tpu.pipeline_mode<synchronous>, transform_indices = @transform_13, window_bounds = array<i64: 1, 128>}, {transform_indices = @transform_14, window_bounds = array<i64: 1, 128, 128>}]} {
    %c0 = arith.constant 0 : index
    %c0_0 = arith.constant 0 : index
    %c0_1 = arith.constant 0 : index
    %0 = vector.load %arg1[%c0, %c0_0, %c0_1] : memref<1x128x128xbf16, #tpu.memory_space<vmem>>, vector<1x128x128xbf16>
    %1 = vector.shape_cast %0 : vector<1x128x128xbf16> to vector<128x128xbf16>
    %2 = arith.extf %1 : vector<128x128xbf16> to vector<128x128xf32>
    %c0_2 = arith.constant 0 : index
    %c0_3 = arith.constant 0 : index
    %3 = vector.load %arg3[%c0_2, %c0_3] : memref<128x384xbf16, #tpu.memory_space<vmem>>, vector<128x384xbf16>
    %cst = arith.constant dense<0.000000e+00> : vector<128x384xf32>
    %4 = tpu.matmul %1, %3, %cst {dimension_numbers = #tpu.dot_dimension_numbers<[1], [0], [0], [1], [0, 0, 1, 1], [], []>} : vector<128x128xbf16>, vector<128x384xbf16>, vector<128x384xf32> -> vector<128x384xf32>
    %c0_4 = arith.constant 0 : index
    %c0_5 = arith.constant 0 : index
    %5 = vector.load %arg4[%c0_4, %c0_5] : memref<1x384xf32, #tpu.memory_space<vmem>>, vector<1x384xf32>
    %6 = vector.broadcast %5 : vector<1x384xf32> to vector<128x384xf32>
    %7 = arith.addf %4, %6 : vector<128x384xf32>
    %8 = vector.extract_strided_slice %7 {offsets = [0, 0], sizes = [128, 128], strides = [1, 1]} : vector<128x384xf32> to vector<128x128xf32>
    %9 = vector.extract_strided_slice %7 {offsets = [0, 128], sizes = [128, 128], strides = [1, 1]} : vector<128x384xf32> to vector<128x128xf32>
    %10 = vector.extract_strided_slice %7 {offsets = [0, 256], sizes = [128, 128], strides = [1, 1]} : vector<128x384xf32> to vector<128x128xf32>
    %c0_6 = arith.constant 0 : index
    %c0_7 = arith.constant 0 : index
    %c0_8 = arith.constant 0 : index
    %11 = vector.load %arg2[%c0_6, %c0_7, %c0_8] : memref<1x1x128xf32, #tpu.memory_space<vmem>>, vector<1x1x128xf32>
    %12 = vector.shape_cast %11 : vector<1x1x128xf32> to vector<1x128xf32>
    %13 = vector.extract_strided_slice %8 {offsets = [0, 0], sizes = [128, 32], strides = [1, 1]} : vector<128x128xf32> to vector<128x32xf32>
    %14 = arith.truncf %13 : vector<128x32xf32> to vector<128x32xbf16>
    %15 = vector.extract_strided_slice %9 {offsets = [0, 0], sizes = [128, 32], strides = [1, 1]} : vector<128x128xf32> to vector<128x32xf32>
    %16 = arith.truncf %15 : vector<128x32xf32> to vector<128x32xbf16>
    %17 = vector.extract_strided_slice %10 {offsets = [0, 0], sizes = [128, 32], strides = [1, 1]} : vector<128x128xf32> to vector<128x32xf32>
    %18 = arith.truncf %17 : vector<128x32xf32> to vector<128x32xbf16>
    %cst_9 = arith.constant dense<0.000000e+00> : vector<128x128xf32>
    %19 = tpu.matmul %14, %16, %cst_9 {dimension_numbers = #tpu.dot_dimension_numbers<[1], [1], [0], [0], [0, 0, 1, 0], [], []>} : vector<128x32xbf16>, vector<128x32xbf16>, vector<128x128xf32> -> vector<128x128xf32>
    %20 = vector.broadcast %12 : vector<1x128xf32> to vector<128x128xf32>
    %21 = arith.addf %19, %20 : vector<128x128xf32>
    %cst_10 = arith.constant dense<0xFF800000> : vector<128xf32>
    %22 = vector.multi_reduction <maximumf>, %21, %cst_10 [1] : vector<128x128xf32> to vector<128xf32>
    %23 = vector.shape_cast %22 : vector<128xf32> to vector<128x1xf32>
    %24 = vector.broadcast %23 : vector<128x1xf32> to vector<128x128xf32>
    %25 = arith.subf %21, %24 : vector<128x128xf32>
    %26 = math.exp %25 : vector<128x128xf32>
    %cst_11 = arith.constant dense<0.000000e+00> : vector<128xf32>
    %27 = vector.multi_reduction <add>, %26, %cst_11 [1] : vector<128x128xf32> to vector<128xf32>
    %28 = vector.shape_cast %27 : vector<128xf32> to vector<128x1xf32>
    %29 = tpu.reciprocal %28 : vector<128x1xf32> -> vector<128x1xf32>
    %30 = vector.broadcast %29 : vector<128x1xf32> to vector<128x128xf32>
    %31 = arith.mulf %26, %30 : vector<128x128xf32>
    %32 = arith.truncf %31 : vector<128x128xf32> to vector<128x128xbf16>
    %cst_12 = arith.constant dense<0.000000e+00> : vector<128x32xf32>
    %33 = tpu.matmul %32, %18, %cst_12 {dimension_numbers = #tpu.dot_dimension_numbers<[1], [0], [0], [1], [0, 0, 1, 1], [], []>} : vector<128x128xbf16>, vector<128x32xbf16>, vector<128x32xf32> -> vector<128x32xf32>
    %34 = vector.extract_strided_slice %8 {offsets = [0, 32], sizes = [128, 32], strides = [1, 1]} : vector<128x128xf32> to vector<128x32xf32>
    %35 = arith.truncf %34 : vector<128x32xf32> to vector<128x32xbf16>
    %36 = vector.extract_strided_slice %9 {offsets = [0, 32], sizes = [128, 32], strides = [1, 1]} : vector<128x128xf32> to vector<128x32xf32>
    %37 = arith.truncf %36 : vector<128x32xf32> to vector<128x32xbf16>
    %38 = vector.extract_strided_slice %10 {offsets = [0, 32], sizes = [128, 32], strides = [1, 1]} : vector<128x128xf32> to vector<128x32xf32>
    %39 = arith.truncf %38 : vector<128x32xf32> to vector<128x32xbf16>
    %cst_13 = arith.constant dense<0.000000e+00> : vector<128x128xf32>
    %40 = tpu.matmul %35, %37, %cst_13 {dimension_numbers = #tpu.dot_dimension_numbers<[1], [1], [0], [0], [0, 0, 1, 0], [], []>} : vector<128x32xbf16>, vector<128x32xbf16>, vector<128x128xf32> -> vector<128x128xf32>
    %41 = vector.broadcast %12 : vector<1x128xf32> to vector<128x128xf32>
    %42 = arith.addf %40, %41 : vector<128x128xf32>
    %cst_14 = arith.constant dense<0xFF800000> : vector<128xf32>
    %43 = vector.multi_reduction <maximumf>, %42, %cst_14 [1] : vector<128x128xf32> to vector<128xf32>
    %44 = vector.shape_cast %43 : vector<128xf32> to vector<128x1xf32>
    %45 = vector.broadcast %44 : vector<128x1xf32> to vector<128x128xf32>
    %46 = arith.subf %42, %45 : vector<128x128xf32>
    %47 = math.exp %46 : vector<128x128xf32>
    %cst_15 = arith.constant dense<0.000000e+00> : vector<128xf32>
    %48 = vector.multi_reduction <add>, %47, %cst_15 [1] : vector<128x128xf32> to vector<128xf32>
    %49 = vector.shape_cast %48 : vector<128xf32> to vector<128x1xf32>
    %50 = tpu.reciprocal %49 : vector<128x1xf32> -> vector<128x1xf32>
    %51 = vector.broadcast %50 : vector<128x1xf32> to vector<128x128xf32>
    %52 = arith.mulf %47, %51 : vector<128x128xf32>
    %53 = arith.truncf %52 : vector<128x128xf32> to vector<128x128xbf16>
    %cst_16 = arith.constant dense<0.000000e+00> : vector<128x32xf32>
    %54 = tpu.matmul %53, %39, %cst_16 {dimension_numbers = #tpu.dot_dimension_numbers<[1], [0], [0], [1], [0, 0, 1, 1], [], []>} : vector<128x128xbf16>, vector<128x32xbf16>, vector<128x32xf32> -> vector<128x32xf32>
    %55 = vector.extract_strided_slice %8 {offsets = [0, 64], sizes = [128, 32], strides = [1, 1]} : vector<128x128xf32> to vector<128x32xf32>
    %56 = arith.truncf %55 : vector<128x32xf32> to vector<128x32xbf16>
    %57 = vector.extract_strided_slice %9 {offsets = [0, 64], sizes = [128, 32], strides = [1, 1]} : vector<128x128xf32> to vector<128x32xf32>
    %58 = arith.truncf %57 : vector<128x32xf32> to vector<128x32xbf16>
    %59 = vector.extract_strided_slice %10 {offsets = [0, 64], sizes = [128, 32], strides = [1, 1]} : vector<128x128xf32> to vector<128x32xf32>
    %60 = arith.truncf %59 : vector<128x32xf32> to vector<128x32xbf16>
    %cst_17 = arith.constant dense<0.000000e+00> : vector<128x128xf32>
    %61 = tpu.matmul %56, %58, %cst_17 {dimension_numbers = #tpu.dot_dimension_numbers<[1], [1], [0], [0], [0, 0, 1, 0], [], []>} : vector<128x32xbf16>, vector<128x32xbf16>, vector<128x128xf32> -> vector<128x128xf32>
    %62 = vector.broadcast %12 : vector<1x128xf32> to vector<128x128xf32>
    %63 = arith.addf %61, %62 : vector<128x128xf32>
    %cst_18 = arith.constant dense<0xFF800000> : vector<128xf32>
    %64 = vector.multi_reduction <maximumf>, %63, %cst_18 [1] : vector<128x128xf32> to vector<128xf32>
    %65 = vector.shape_cast %64 : vector<128xf32> to vector<128x1xf32>
    %66 = vector.broadcast %65 : vector<128x1xf32> to vector<128x128xf32>
    %67 = arith.subf %63, %66 : vector<128x128xf32>
    %68 = math.exp %67 : vector<128x128xf32>
    %cst_19 = arith.constant dense<0.000000e+00> : vector<128xf32>
    %69 = vector.multi_reduction <add>, %68, %cst_19 [1] : vector<128x128xf32> to vector<128xf32>
    %70 = vector.shape_cast %69 : vector<128xf32> to vector<128x1xf32>
    %71 = tpu.reciprocal %70 : vector<128x1xf32> -> vector<128x1xf32>
    %72 = vector.broadcast %71 : vector<128x1xf32> to vector<128x128xf32>
    %73 = arith.mulf %68, %72 : vector<128x128xf32>
    %74 = arith.truncf %73 : vector<128x128xf32> to vector<128x128xbf16>
    %cst_20 = arith.constant dense<0.000000e+00> : vector<128x32xf32>
    %75 = tpu.matmul %74, %60, %cst_20 {dimension_numbers = #tpu.dot_dimension_numbers<[1], [0], [0], [1], [0, 0, 1, 1], [], []>} : vector<128x128xbf16>, vector<128x32xbf16>, vector<128x32xf32> -> vector<128x32xf32>
    %76 = vector.extract_strided_slice %8 {offsets = [0, 96], sizes = [128, 32], strides = [1, 1]} : vector<128x128xf32> to vector<128x32xf32>
    %77 = arith.truncf %76 : vector<128x32xf32> to vector<128x32xbf16>
    %78 = vector.extract_strided_slice %9 {offsets = [0, 96], sizes = [128, 32], strides = [1, 1]} : vector<128x128xf32> to vector<128x32xf32>
    %79 = arith.truncf %78 : vector<128x32xf32> to vector<128x32xbf16>
    %80 = vector.extract_strided_slice %10 {offsets = [0, 96], sizes = [128, 32], strides = [1, 1]} : vector<128x128xf32> to vector<128x32xf32>
    %81 = arith.truncf %80 : vector<128x32xf32> to vector<128x32xbf16>
    %cst_21 = arith.constant dense<0.000000e+00> : vector<128x128xf32>
    %82 = tpu.matmul %77, %79, %cst_21 {dimension_numbers = #tpu.dot_dimension_numbers<[1], [1], [0], [0], [0, 0, 1, 0], [], []>} : vector<128x32xbf16>, vector<128x32xbf16>, vector<128x128xf32> -> vector<128x128xf32>
    %83 = vector.broadcast %12 : vector<1x128xf32> to vector<128x128xf32>
    %84 = arith.addf %82, %83 : vector<128x128xf32>
    %cst_22 = arith.constant dense<0xFF800000> : vector<128xf32>
    %85 = vector.multi_reduction <maximumf>, %84, %cst_22 [1] : vector<128x128xf32> to vector<128xf32>
    %86 = vector.shape_cast %85 : vector<128xf32> to vector<128x1xf32>
    %87 = vector.broadcast %86 : vector<128x1xf32> to vector<128x128xf32>
    %88 = arith.subf %84, %87 : vector<128x128xf32>
    %89 = math.exp %88 : vector<128x128xf32>
    %cst_23 = arith.constant dense<0.000000e+00> : vector<128xf32>
    %90 = vector.multi_reduction <add>, %89, %cst_23 [1] : vector<128x128xf32> to vector<128xf32>
    %91 = vector.shape_cast %90 : vector<128xf32> to vector<128x1xf32>
    %92 = tpu.reciprocal %91 : vector<128x1xf32> -> vector<128x1xf32>
    %93 = vector.broadcast %92 : vector<128x1xf32> to vector<128x128xf32>
    %94 = arith.mulf %89, %93 : vector<128x128xf32>
    %95 = arith.truncf %94 : vector<128x128xf32> to vector<128x128xbf16>
    %cst_24 = arith.constant dense<0.000000e+00> : vector<128x32xf32>
    %96 = tpu.matmul %95, %81, %cst_24 {dimension_numbers = #tpu.dot_dimension_numbers<[1], [0], [0], [1], [0, 0, 1, 1], [], []>} : vector<128x128xbf16>, vector<128x32xbf16>, vector<128x32xf32> -> vector<128x32xf32>
    %97 = tpu.concatenate %33, %54, %75, %96 in 1 : vector<128x32xf32>, vector<128x32xf32>, vector<128x32xf32>, vector<128x32xf32> -> vector<128x128xf32>
    %98 = arith.truncf %97 : vector<128x128xf32> to vector<128x128xbf16>
    %c0_25 = arith.constant 0 : index
    %c0_26 = arith.constant 0 : index
    %99 = vector.load %arg5[%c0_25, %c0_26] : memref<128x128xbf16, #tpu.memory_space<vmem>>, vector<128x128xbf16>
    %cst_27 = arith.constant dense<0.000000e+00> : vector<128x128xf32>
    %100 = tpu.matmul %98, %99, %cst_27 {dimension_numbers = #tpu.dot_dimension_numbers<[1], [0], [0], [1], [0, 0, 1, 1], [], []>} : vector<128x128xbf16>, vector<128x128xbf16>, vector<128x128xf32> -> vector<128x128xf32>
    %c0_28 = arith.constant 0 : index
    %c0_29 = arith.constant 0 : index
    %101 = vector.load %arg6[%c0_28, %c0_29] : memref<1x128xf32, #tpu.memory_space<vmem>>, vector<1x128xf32>
    %102 = vector.broadcast %101 : vector<1x128xf32> to vector<128x128xf32>
    %103 = arith.addf %100, %102 : vector<128x128xf32>
    %104 = arith.addf %103, %2 : vector<128x128xf32>
    %c0_30 = arith.constant 0 : index
    %c0_31 = arith.constant 0 : index
    %105 = vector.load %arg7[%c0_30, %c0_31] : memref<1x128xf32, #tpu.memory_space<vmem>>, vector<1x128xf32>
    %c0_32 = arith.constant 0 : index
    %c0_33 = arith.constant 0 : index
    %106 = vector.load %arg8[%c0_32, %c0_33] : memref<1x128xf32, #tpu.memory_space<vmem>>, vector<1x128xf32>
    %cst_34 = arith.constant dense<0.000000e+00> : vector<128xf32>
    %107 = vector.multi_reduction <add>, %104, %cst_34 [1] : vector<128x128xf32> to vector<128xf32>
    %108 = vector.shape_cast %107 : vector<128xf32> to vector<128x1xf32>
    %cst_35 = arith.constant 1.280000e+02 : f32
    %109 = vector.broadcast %cst_35 : f32 to vector<128x1xf32>
    %110 = arith.divf %108, %109 : vector<128x1xf32>
    %111 = vector.broadcast %110 : vector<128x1xf32> to vector<128x128xf32>
    %112 = arith.subf %104, %111 : vector<128x128xf32>
    %113 = arith.mulf %112, %112 : vector<128x128xf32>
    %cst_36 = arith.constant dense<0.000000e+00> : vector<128xf32>
    %114 = vector.multi_reduction <add>, %113, %cst_36 [1] : vector<128x128xf32> to vector<128xf32>
    %115 = vector.shape_cast %114 : vector<128xf32> to vector<128x1xf32>
    %cst_37 = arith.constant 1.280000e+02 : f32
    %116 = vector.broadcast %cst_37 : f32 to vector<128x1xf32>
    %117 = arith.divf %115, %116 : vector<128x1xf32>
    %cst_38 = arith.constant 9.99999997E-7 : f32
    %118 = vector.broadcast %cst_38 : f32 to vector<128x1xf32>
    %119 = arith.addf %117, %118 : vector<128x1xf32>
    %120 = math.rsqrt %119 : vector<128x1xf32>
    %121 = vector.broadcast %120 : vector<128x1xf32> to vector<128x128xf32>
    %122 = arith.mulf %112, %121 : vector<128x128xf32>
    %123 = vector.broadcast %105 : vector<1x128xf32> to vector<128x128xf32>
    %124 = arith.mulf %122, %123 : vector<128x128xf32>
    %125 = vector.broadcast %106 : vector<1x128xf32> to vector<128x128xf32>
    %126 = arith.addf %124, %125 : vector<128x128xf32>
    %127 = arith.truncf %126 : vector<128x128xf32> to vector<128x128xbf16>
    %c0_39 = arith.constant 0 : index
    %c0_40 = arith.constant 0 : index
    %128 = vector.load %arg9[%c0_39, %c0_40] : memref<128x256xbf16, #tpu.memory_space<vmem>>, vector<128x256xbf16>
    %cst_41 = arith.constant dense<0.000000e+00> : vector<128x256xf32>
    %129 = tpu.matmul %127, %128, %cst_41 {dimension_numbers = #tpu.dot_dimension_numbers<[1], [0], [0], [1], [0, 0, 1, 1], [], []>} : vector<128x128xbf16>, vector<128x256xbf16>, vector<128x256xf32> -> vector<128x256xf32>
    %c0_42 = arith.constant 0 : index
    %c0_43 = arith.constant 0 : index
    %130 = vector.load %arg10[%c0_42, %c0_43] : memref<1x256xf32, #tpu.memory_space<vmem>>, vector<1x256xf32>
    %131 = vector.broadcast %130 : vector<1x256xf32> to vector<128x256xf32>
    %132 = arith.addf %129, %131 : vector<128x256xf32>
    %cst_44 = arith.constant 0.000000e+00 : f32
    %133 = vector.broadcast %cst_44 : f32 to vector<128x256xf32>
    %134 = arith.maximumf %132, %133 : vector<128x256xf32>
    %135 = arith.truncf %134 : vector<128x256xf32> to vector<128x256xbf16>
    %c0_45 = arith.constant 0 : index
    %c0_46 = arith.constant 0 : index
    %136 = vector.load %arg11[%c0_45, %c0_46] : memref<256x128xbf16, #tpu.memory_space<vmem>>, vector<256x128xbf16>
    %cst_47 = arith.constant dense<0.000000e+00> : vector<128x128xf32>
    %137 = tpu.matmul %135, %136, %cst_47 {dimension_numbers = #tpu.dot_dimension_numbers<[1], [0], [0], [1], [0, 0, 1, 1], [], []>} : vector<128x256xbf16>, vector<256x128xbf16>, vector<128x128xf32> -> vector<128x128xf32>
    %c0_48 = arith.constant 0 : index
    %c0_49 = arith.constant 0 : index
    %138 = vector.load %arg12[%c0_48, %c0_49] : memref<1x128xf32, #tpu.memory_space<vmem>>, vector<1x128xf32>
    %139 = vector.broadcast %138 : vector<1x128xf32> to vector<128x128xf32>
    %140 = arith.addf %137, %139 : vector<128x128xf32>
    %141 = arith.addf %140, %126 : vector<128x128xf32>
    %c0_50 = arith.constant 0 : index
    %c0_51 = arith.constant 0 : index
    %142 = vector.load %arg13[%c0_50, %c0_51] : memref<1x128xf32, #tpu.memory_space<vmem>>, vector<1x128xf32>
    %c0_52 = arith.constant 0 : index
    %c0_53 = arith.constant 0 : index
    %143 = vector.load %arg14[%c0_52, %c0_53] : memref<1x128xf32, #tpu.memory_space<vmem>>, vector<1x128xf32>
    %cst_54 = arith.constant dense<0.000000e+00> : vector<128xf32>
    %144 = vector.multi_reduction <add>, %141, %cst_54 [1] : vector<128x128xf32> to vector<128xf32>
    %145 = vector.shape_cast %144 : vector<128xf32> to vector<128x1xf32>
    %cst_55 = arith.constant 1.280000e+02 : f32
    %146 = vector.broadcast %cst_55 : f32 to vector<128x1xf32>
    %147 = arith.divf %145, %146 : vector<128x1xf32>
    %148 = vector.broadcast %147 : vector<128x1xf32> to vector<128x128xf32>
    %149 = arith.subf %141, %148 : vector<128x128xf32>
    %150 = arith.mulf %149, %149 : vector<128x128xf32>
    %cst_56 = arith.constant dense<0.000000e+00> : vector<128xf32>
    %151 = vector.multi_reduction <add>, %150, %cst_56 [1] : vector<128x128xf32> to vector<128xf32>
    %152 = vector.shape_cast %151 : vector<128xf32> to vector<128x1xf32>
    %cst_57 = arith.constant 1.280000e+02 : f32
    %153 = vector.broadcast %cst_57 : f32 to vector<128x1xf32>
    %154 = arith.divf %152, %153 : vector<128x1xf32>
    %cst_58 = arith.constant 9.99999997E-7 : f32
    %155 = vector.broadcast %cst_58 : f32 to vector<128x1xf32>
    %156 = arith.addf %154, %155 : vector<128x1xf32>
    %157 = math.rsqrt %156 : vector<128x1xf32>
    %158 = vector.broadcast %157 : vector<128x1xf32> to vector<128x128xf32>
    %159 = arith.mulf %149, %158 : vector<128x128xf32>
    %160 = vector.broadcast %142 : vector<1x128xf32> to vector<128x128xf32>
    %161 = arith.mulf %159, %160 : vector<128x128xf32>
    %162 = vector.broadcast %143 : vector<1x128xf32> to vector<128x128xf32>
    %163 = arith.addf %161, %162 : vector<128x128xf32>
    %164 = arith.truncf %163 : vector<128x128xf32> to vector<128x128xbf16>
    %c0_59 = arith.constant 0 : index
    %c0_60 = arith.constant 0 : index
    %c0_61 = arith.constant 0 : index
    %165 = vector.load %arg15[%c0_59, %c0_60, %c0_61] : memref<1x128x128xbf16, #tpu.memory_space<vmem>>, vector<1x128x128xbf16>
    %166 = vector.shape_cast %165 : vector<1x128x128xbf16> to vector<128x128xbf16>
    %167 = vector.shape_cast %164 : vector<128x128xbf16> to vector<1x128x128xbf16>
    tpu.vector_store %arg15[%c0_59, %c0_60, %c0_61], %167 {strides = array<i32>} : memref<1x128x128xbf16, #tpu.memory_space<vmem>>, vector<1x128x128xbf16>,
    return
  }
  func.func @transform_0(%arg0: i32) -> (i32, i32, i32) {
    %c0_i32 = arith.constant 0 : i32
    %c0_i32_0 = arith.constant 0 : i32
    %c0_i32_1 = arith.constant 0 : i32
    return %arg0, %c0_i32, %c0_i32_0 : i32, i32, i32
  }
  func.func @transform_1(%arg0: i32) -> (i32, i32, i32) {
    %c0_i32 = arith.constant 0 : i32
    %c0_i32_0 = arith.constant 0 : i32
    %c0_i32_1 = arith.constant 0 : i32
    return %arg0, %c0_i32, %c0_i32_0 : i32, i32, i32
  }
  func.func @transform_2(%arg0: i32) -> (i32, i32) {
    %c0_i32 = arith.constant 0 : i32
    %c0_i32_0 = arith.constant 0 : i32
    %c0_i32_1 = arith.constant 0 : i32
    return %c0_i32, %c0_i32_0 : i32, i32
  }
  func.func @transform_3(%arg0: i32) -> (i32, i32) {
    %c0_i32 = arith.constant 0 : i32
    %c0_i32_0 = arith.constant 0 : i32
    %c0_i32_1 = arith.constant 0 : i32
    return %c0_i32, %c0_i32_0 : i32, i32
  }
  func.func @transform_4(%arg0: i32) -> (i32, i32) {
    %c0_i32 = arith.constant 0 : i32
    %c0_i32_0 = arith.constant 0 : i32
    %c0_i32_1 = arith.constant 0 : i32
    return %c0_i32, %c0_i32_0 : i32, i32
  }
  func.func @transform_5(%arg0: i32) -> (i32, i32) {
    %c0_i32 = arith.constant 0 : i32
    %c0_i32_0 = arith.constant 0 : i32
    %c0_i32_1 = arith.constant 0 : i32
    return %c0_i32, %c0_i32_0 : i32, i32
  }
  func.func @transform_6(%arg0: i32) -> (i32, i32) {
    %c0_i32 = arith.constant 0 : i32
    %c0_i32_0 = arith.constant 0 : i32
    %c0_i32_1 = arith.constant 0 : i32
    return %c0_i32, %c0_i32_0 : i32, i32
  }
  func.func @transform_7(%arg0: i32) -> (i32, i32) {
    %c0_i32 = arith.constant 0 : i32
    %c0_i32_0 = arith.constant 0 : i32
    %c0_i32_1 = arith.constant 0 : i32
    return %c0_i32, %c0_i32_0 : i32, i32
  }
  func.func @transform_8(%arg0: i32) -> (i32, i32) {
    %c0_i32 = arith.constant 0 : i32
    %c0_i32_0 = arith.constant 0 : i32
    %c0_i32_1 = arith.constant 0 : i32
    return %c0_i32, %c0_i32_0 : i32, i32
  }
  func.func @transform_9(%arg0: i32) -> (i32, i32) {
    %c0_i32 = arith.constant 0 : i32
    %c0_i32_0 = arith.constant 0 : i32
    %c0_i32_1 = arith.constant 0 : i32
    return %c0_i32, %c0_i32_0 : i32, i32
  }
  func.func @transform_10(%arg0: i32) -> (i32, i32) {
    %c0_i32 = arith.constant 0 : i32
    %c0_i32_0 = arith.constant 0 : i32
    %c0_i32_1 = arith.constant 0 : i32
    return %c0_i32, %c0_i32_0 : i32, i32
  }
  func.func @transform_11(%arg0: i32) -> (i32, i32) {
    %c0_i32 = arith.constant 0 : i32
    %c0_i32_0 = arith.constant 0 : i32
    %c0_i32_1 = arith.constant 0 : i32
    return %c0_i32, %c0_i32_0 : i32, i32
  }
  func.func @transform_12(%arg0: i32) -> (i32, i32) {
    %c0_i32 = arith.constant 0 : i32
    %c0_i32_0 = arith.constant 0 : i32
    %c0_i32_1 = arith.constant 0 : i32
    return %c0_i32, %c0_i32_0 : i32, i32
  }
  func.func @transform_13(%arg0: i32) -> (i32, i32) {
    %c0_i32 = arith.constant 0 : i32
    %c0_i32_0 = arith.constant 0 : i32
    %c0_i32_1 = arith.constant 0 : i32
    return %c0_i32, %c0_i32_0 : i32, i32
  }
  func.func @transform_14(%arg0: i32) -> (i32, i32, i32) {
    %c0_i32 = arith.constant 0 : i32
    %c0_i32_0 = arith.constant 0 : i32
    %c0_i32_1 = arith.constant 0 : i32
    return %arg0, %c0_i32, %c0_i32_0 : i32, i32, i32
  }
}

module attributes {stable_mosaic.version = 11 : i64} {
  func.func @transformer_layer_kernel(%arg0: i32, %arg1: memref<1x128x128xbf16, #tpu.memory_space<vmem>>, %arg2: memref<1x1x128xf32, #tpu.memory_space<vmem>>, %arg3: memref<128x384xbf16, #tpu.memory_space<vmem>>, %arg4: memref<1x384xf32, #tpu.memory_space<vmem>>, %arg5: memref<128x128xbf16, #tpu.memory_space<vmem>>, %arg6: memref<1x128xf32, #tpu.memory_space<vmem>>, %arg7: memref<1x128xf32, #tpu.memory_space<vmem>>, %arg8: memref<1x128xf32, #tpu.memory_space<vmem>>, %arg9: memref<128x256xbf16, #tpu.memory_space<vmem>>, %arg10: memref<1x256xf32, #tpu.memory_space<vmem>>, %arg11: memref<256x128xbf16, #tpu.memory_space<vmem>>, %arg12: memref<1x128xf32, #tpu.memory_space<vmem>>, %arg13: memref<1x128xf32, #tpu.memory_space<vmem>>, %arg14: memref<1x128xf32, #tpu.memory_space<vmem>>, %arg15: memref<1x128x128xbf16, #tpu.memory_space<vmem>>) attributes {dimension_semantics = [#tpu.dimension_semantics<parallel>], iteration_bounds = array<i64: 2>, scalar_prefetch = 0 : i64, scratch_operands = 0 : i64, tpu.core_type = #tpu.core_type<tc>, window_params = [{transform_indices = @transform_0, window_bounds = array<i64: 1, 128, 128>}, {transform_indices = @transform_1, window_bounds = array<i64: 1, 1, 128>}, {pipeline_mode = #tpu.pipeline_mode<synchronous>, transform_indices = @transform_2, window_bounds = array<i64: 128, 384>}, {pipeline_mode = #tpu.pipeline_mode<synchronous>, transform_indices = @transform_3, window_bounds = array<i64: 1, 384>}, {pipeline_mode = #tpu.pipeline_mode<synchronous>, transform_indices = @transform_4, window_bounds = array<i64: 128, 128>}, {pipeline_mode = #tpu.pipeline_mode<synchronous>, transform_indices = @transform_5, window_bounds = array<i64: 1, 128>}, {pipeline_mode = #tpu.pipeline_mode<synchronous>, transform_indices = @transform_6, window_bounds = array<i64: 1, 128>}, {pipeline_mode = #tpu.pipeline_mode<synchronous>, transform_indices = @transform_7, window_bounds = array<i64: 1, 128>}, {pipeline_mode = #tpu.pipeline_mode<synchronous>, transform_indices = @transform_8, window_bounds = array<i64: 128, 256>}, {pipeline_mode = #tpu.pipeline_mode<synchronous>, transform_indices = @transform_9, window_bounds = array<i64: 1, 256>}, {pipeline_mode = #tpu.pipeline_mode<synchronous>, transform_indices = @transform_10, window_bounds = array<i64: 256, 128>}, {pipeline_mode = #tpu.pipeline_mode<synchronous>, transform_indices = @transform_11, window_bounds = array<i64: 1, 128>}, {pipeline_mode = #tpu.pipeline_mode<synchronous>, transform_indices = @transform_12, window_bounds = array<i64: 1, 128>}, {pipeline_mode = #tpu.pipeline_mode<synchronous>, transform_indices = @transform_13, window_bounds = array<i64: 1, 128>}, {transform_indices = @transform_14, window_bounds = array<i64: 1, 128, 128>}]} {
    %c0 = arith.constant 0 : index
    %c0_0 = arith.constant 0 : index
    %c0_1 = arith.constant 0 : index
    %0 = vector.load %arg1[%c0, %c0_0, %c0_1] : memref<1x128x128xbf16, #tpu.memory_space<vmem>>, vector<1x128x128xbf16>
    %1 = vector.shape_cast %0 : vector<1x128x128xbf16> to vector<128x128xbf16>
    %2 = arith.extf %1 : vector<128x128xbf16> to vector<128x128xf32>
    %c0_2 = arith.constant 0 : index
    %c0_3 = arith.constant 0 : index
    %3 = vector.load %arg3[%c0_2, %c0_3] : memref<128x384xbf16, #tpu.memory_space<vmem>>, vector<128x384xbf16>
    %cst = arith.constant dense<0.000000e+00> : vector<128x384xf32>
    %4 = tpu.matmul %1, %3, %cst {dimension_numbers = #tpu.dot_dimension_numbers<[1], [0], [0], [1], [0, 0, 1, 1], [], []>} : vector<128x128xbf16>, vector<128x384xbf16>, vector<128x384xf32> -> vector<128x384xf32>
    %c0_4 = arith.constant 0 : index
    %c0_5 = arith.constant 0 : index
    %5 = vector.load %arg4[%c0_4, %c0_5] : memref<1x384xf32, #tpu.memory_space<vmem>>, vector<1x384xf32>
    %6 = vector.broadcast %5 : vector<1x384xf32> to vector<128x384xf32>
    %7 = arith.addf %4, %6 : vector<128x384xf32>
    %8 = vector.extract_strided_slice %7 {offsets = [0, 0], sizes = [128, 128], strides = [1, 1]} : vector<128x384xf32> to vector<128x128xf32>
    %9 = vector.extract_strided_slice %7 {offsets = [0, 128], sizes = [128, 128], strides = [1, 1]} : vector<128x384xf32> to vector<128x128xf32>
    %10 = vector.extract_strided_slice %7 {offsets = [0, 256], sizes = [128, 128], strides = [1, 1]} : vector<128x384xf32> to vector<128x128xf32>
    %c0_6 = arith.constant 0 : index
    %c0_7 = arith.constant 0 : index
    %c0_8 = arith.constant 0 : index
    %11 = vector.load %arg2[%c0_6, %c0_7, %c0_8] : memref<1x1x128xf32, #tpu.memory_space<vmem>>, vector<1x1x128xf32>
    %12 = vector.shape_cast %11 : vector<1x1x128xf32> to vector<1x128xf32>
    %13 = vector.extract_strided_slice %8 {offsets = [0, 0], sizes = [128, 32], strides = [1, 1]} : vector<128x128xf32> to vector<128x32xf32>
    %14 = arith.truncf %13 : vector<128x32xf32> to vector<128x32xbf16>
    %15 = vector.extract_strided_slice %9 {offsets = [0, 0], sizes = [128, 32], strides = [1, 1]} : vector<128x128xf32> to vector<128x32xf32>
    %16 = arith.truncf %15 : vector<128x32xf32> to vector<128x32xbf16>
    %17 = vector.extract_strided_slice %10 {offsets = [0, 0], sizes = [128, 32], strides = [1, 1]} : vector<128x128xf32> to vector<128x32xf32>
    %18 = arith.truncf %17 : vector<128x32xf32> to vector<128x32xbf16>
    %cst_9 = arith.constant dense<0.000000e+00> : vector<128x128xf32>
    %19 = tpu.matmul %14, %16, %cst_9 {dimension_numbers = #tpu.dot_dimension_numbers<[1], [1], [0], [0], [0, 0, 1, 0], [], []>} : vector<128x32xbf16>, vector<128x32xbf16>, vector<128x128xf32> -> vector<128x128xf32>
    %20 = vector.broadcast %12 : vector<1x128xf32> to vector<128x128xf32>
    %21 = arith.addf %19, %20 : vector<128x128xf32>
    %cst_10 = arith.constant dense<0xFF800000> : vector<128xf32>
    %22 = vector.multi_reduction <maximumf>, %21, %cst_10 [1] : vector<128x128xf32> to vector<128xf32>
    %23 = vector.shape_cast %22 : vector<128xf32> to vector<128x1xf32>
    %24 = vector.broadcast %23 : vector<128x1xf32> to vector<128x128xf32>
    %25 = arith.subf %21, %24 : vector<128x128xf32>
    %26 = math.exp %25 : vector<128x128xf32>
    %cst_11 = arith.constant dense<0.000000e+00> : vector<128xf32>
    %27 = vector.multi_reduction <add>, %26, %cst_11 [1] : vector<128x128xf32> to vector<128xf32>
    %28 = vector.shape_cast %27 : vector<128xf32> to vector<128x1xf32>
    %29 = tpu.reciprocal %28 : vector<128x1xf32> -> vector<128x1xf32>
    %30 = vector.broadcast %29 : vector<128x1xf32> to vector<128x128xf32>
    %31 = arith.mulf %26, %30 : vector<128x128xf32>
    %32 = arith.truncf %31 : vector<128x128xf32> to vector<128x128xbf16>
    %cst_12 = arith.constant dense<0.000000e+00> : vector<128x32xf32>
    %33 = tpu.matmul %32, %18, %cst_12 {dimension_numbers = #tpu.dot_dimension_numbers<[1], [0], [0], [1], [0, 0, 1, 1], [], []>} : vector<128x128xbf16>, vector<128x32xbf16>, vector<128x32xf32> -> vector<128x32xf32>
    %34 = vector.extract_strided_slice %8 {offsets = [0, 32], sizes = [128, 32], strides = [1, 1]} : vector<128x128xf32> to vector<128x32xf32>
    %35 = arith.truncf %34 : vector<128x32xf32> to vector<128x32xbf16>
    %36 = vector.extract_strided_slice %9 {offsets = [0, 32], sizes = [128, 32], strides = [1, 1]} : vector<128x128xf32> to vector<128x32xf32>
    %37 = arith.truncf %36 : vector<128x32xf32> to vector<128x32xbf16>
    %38 = vector.extract_strided_slice %10 {offsets = [0, 32], sizes = [128, 32], strides = [1, 1]} : vector<128x128xf32> to vector<128x32xf32>
    %39 = arith.truncf %38 : vector<128x32xf32> to vector<128x32xbf16>
    %cst_13 = arith.constant dense<0.000000e+00> : vector<128x128xf32>
    %40 = tpu.matmul %35, %37, %cst_13 {dimension_numbers = #tpu.dot_dimension_numbers<[1], [1], [0], [0], [0, 0, 1, 0], [], []>} : vector<128x32xbf16>, vector<128x32xbf16>, vector<128x128xf32> -> vector<128x128xf32>
    %41 = vector.broadcast %12 : vector<1x128xf32> to vector<128x128xf32>
    %42 = arith.addf %40, %41 : vector<128x128xf32>
    %cst_14 = arith.constant dense<0xFF800000> : vector<128xf32>
    %43 = vector.multi_reduction <maximumf>, %42, %cst_14 [1] : vector<128x128xf32> to vector<128xf32>
    %44 = vector.shape_cast %43 : vector<128xf32> to vector<128x1xf32>
    %45 = vector.broadcast %44 : vector<128x1xf32> to vector<128x128xf32>
    %46 = arith.subf %42, %45 : vector<128x128xf32>
    %47 = math.exp %46 : vector<128x128xf32>
    %cst_15 = arith.constant dense<0.000000e+00> : vector<128xf32>
    %48 = vector.multi_reduction <add>, %47, %cst_15 [1] : vector<128x128xf32> to vector<128xf32>
    %49 = vector.shape_cast %48 : vector<128xf32> to vector<128x1xf32>
    %50 = tpu.reciprocal %49 : vector<128x1xf32> -> vector<128x1xf32>
    %51 = vector.broadcast %50 : vector<128x1xf32> to vector<128x128xf32>
    %52 = arith.mulf %47, %51 : vector<128x128xf32>
    %53 = arith.truncf %52 : vector<128x128xf32> to vector<128x128xbf16>
    %cst_16 = arith.constant dense<0.000000e+00> : vector<128x32xf32>
    %54 = tpu.matmul %53, %39, %cst_16 {dimension_numbers = #tpu.dot_dimension_numbers<[1], [0], [0], [1], [0, 0, 1, 1], [], []>} : vector<128x128xbf16>, vector<128x32xbf16>, vector<128x32xf32> -> vector<128x32xf32>
    %55 = vector.extract_strided_slice %8 {offsets = [0, 64], sizes = [128, 32], strides = [1, 1]} : vector<128x128xf32> to vector<128x32xf32>
    %56 = arith.truncf %55 : vector<128x32xf32> to vector<128x32xbf16>
    %57 = vector.extract_strided_slice %9 {offsets = [0, 64], sizes = [128, 32], strides = [1, 1]} : vector<128x128xf32> to vector<128x32xf32>
    %58 = arith.truncf %57 : vector<128x32xf32> to vector<128x32xbf16>
    %59 = vector.extract_strided_slice %10 {offsets = [0, 64], sizes = [128, 32], strides = [1, 1]} : vector<128x128xf32> to vector<128x32xf32>
    %60 = arith.truncf %59 : vector<128x32xf32> to vector<128x32xbf16>
    %cst_17 = arith.constant dense<0.000000e+00> : vector<128x128xf32>
    %61 = tpu.matmul %56, %58, %cst_17 {dimension_numbers = #tpu.dot_dimension_numbers<[1], [1], [0], [0], [0, 0, 1, 0], [], []>} : vector<128x32xbf16>, vector<128x32xbf16>, vector<128x128xf32> -> vector<128x128xf32>
    %62 = vector.broadcast %12 : vector<1x128xf32> to vector<128x128xf32>
    %63 = arith.addf %61, %62 : vector<128x128xf32>
    %cst_18 = arith.constant dense<0xFF800000> : vector<128xf32>
    %64 = vector.multi_reduction <maximumf>, %63, %cst_18 [1] : vector<128x128xf32> to vector<128xf32>
    %65 = vector.shape_cast %64 : vector<128xf32> to vector<128x1xf32>
    %66 = vector.broadcast %65 : vector<128x1xf32> to vector<128x128xf32>
    %67 = arith.subf %63, %66 : vector<128x128xf32>
    %68 = math.exp %67 : vector<128x128xf32>
    %cst_19 = arith.constant dense<0.000000e+00> : vector<128xf32>
    %69 = vector.multi_reduction <add>, %68, %cst_19 [1] : vector<128x128xf32> to vector<128xf32>
    %70 = vector.shape_cast %69 : vector<128xf32> to vector<128x1xf32>
    %71 = tpu.reciprocal %70 : vector<128x1xf32> -> vector<128x1xf32>
    %72 = vector.broadcast %71 : vector<128x1xf32> to vector<128x128xf32>
    %73 = arith.mulf %68, %72 : vector<128x128xf32>
    %74 = arith.truncf %73 : vector<128x128xf32> to vector<128x128xbf16>
    %cst_20 = arith.constant dense<0.000000e+00> : vector<128x32xf32>
    %75 = tpu.matmul %74, %60, %cst_20 {dimension_numbers = #tpu.dot_dimension_numbers<[1], [0], [0], [1], [0, 0, 1, 1], [], []>} : vector<128x128xbf16>, vector<128x32xbf16>, vector<128x32xf32> -> vector<128x32xf32>
    %76 = vector.extract_strided_slice %8 {offsets = [0, 96], sizes = [128, 32], strides = [1, 1]} : vector<128x128xf32> to vector<128x32xf32>
    %77 = arith.truncf %76 : vector<128x32xf32> to vector<128x32xbf16>
    %78 = vector.extract_strided_slice %9 {offsets = [0, 96], sizes = [128, 32], strides = [1, 1]} : vector<128x128xf32> to vector<128x32xf32>
    %79 = arith.truncf %78 : vector<128x32xf32> to vector<128x32xbf16>
    %80 = vector.extract_strided_slice %10 {offsets = [0, 96], sizes = [128, 32], strides = [1, 1]} : vector<128x128xf32> to vector<128x32xf32>
    %81 = arith.truncf %80 : vector<128x32xf32> to vector<128x32xbf16>
    %cst_21 = arith.constant dense<0.000000e+00> : vector<128x128xf32>
    %82 = tpu.matmul %77, %79, %cst_21 {dimension_numbers = #tpu.dot_dimension_numbers<[1], [1], [0], [0], [0, 0, 1, 0], [], []>} : vector<128x32xbf16>, vector<128x32xbf16>, vector<128x128xf32> -> vector<128x128xf32>
    %83 = vector.broadcast %12 : vector<1x128xf32> to vector<128x128xf32>
    %84 = arith.addf %82, %83 : vector<128x128xf32>
    %cst_22 = arith.constant dense<0xFF800000> : vector<128xf32>
    %85 = vector.multi_reduction <maximumf>, %84, %cst_22 [1] : vector<128x128xf32> to vector<128xf32>
    %86 = vector.shape_cast %85 : vector<128xf32> to vector<128x1xf32>
    %87 = vector.broadcast %86 : vector<128x1xf32> to vector<128x128xf32>
    %88 = arith.subf %84, %87 : vector<128x128xf32>
    %89 = math.exp %88 : vector<128x128xf32>
    %cst_23 = arith.constant dense<0.000000e+00> : vector<128xf32>
    %90 = vector.multi_reduction <add>, %89, %cst_23 [1] : vector<128x128xf32> to vector<128xf32>
    %91 = vector.shape_cast %90 : vector<128xf32> to vector<128x1xf32>
    %92 = tpu.reciprocal %91 : vector<128x1xf32> -> vector<128x1xf32>
    %93 = vector.broadcast %92 : vector<128x1xf32> to vector<128x128xf32>
    %94 = arith.mulf %89, %93 : vector<128x128xf32>
    %95 = arith.truncf %94 : vector<128x128xf32> to vector<128x128xbf16>
    %cst_24 = arith.constant dense<0.000000e+00> : vector<128x32xf32>
    %96 = tpu.matmul %95, %81, %cst_24 {dimension_numbers = #tpu.dot_dimension_numbers<[1], [0], [0], [1], [0, 0, 1, 1], [], []>} : vector<128x128xbf16>, vector<128x32xbf16>, vector<128x32xf32> -> vector<128x32xf32>
    %97 = tpu.concatenate %33, %54, %75, %96 in 1 : vector<128x32xf32>, vector<128x32xf32>, vector<128x32xf32>, vector<128x32xf32> -> vector<128x128xf32>
    %98 = arith.truncf %97 : vector<128x128xf32> to vector<128x128xbf16>
    %c0_25 = arith.constant 0 : index
    %c0_26 = arith.constant 0 : index
    %99 = vector.load %arg5[%c0_25, %c0_26] : memref<128x128xbf16, #tpu.memory_space<vmem>>, vector<128x128xbf16>
    %cst_27 = arith.constant dense<0.000000e+00> : vector<128x128xf32>
    %100 = tpu.matmul %98, %99, %cst_27 {dimension_numbers = #tpu.dot_dimension_numbers<[1], [0], [0], [1], [0, 0, 1, 1], [], []>} : vector<128x128xbf16>, vector<128x128xbf16>, vector<128x128xf32> -> vector<128x128xf32>
    %c0_28 = arith.constant 0 : index
    %c0_29 = arith.constant 0 : index
    %101 = vector.load %arg6[%c0_28, %c0_29] : memref<1x128xf32, #tpu.memory_space<vmem>>, vector<1x128xf32>
    %102 = vector.broadcast %101 : vector<1x128xf32> to vector<128x128xf32>
    %103 = arith.addf %100, %102 : vector<128x128xf32>
    %104 = arith.addf %103, %2 : vector<128x128xf32>
    %c0_30 = arith.constant 0 : index
    %c0_31 = arith.constant 0 : index
    %105 = vector.load %arg7[%c0_30, %c0_31] : memref<1x128xf32, #tpu.memory_space<vmem>>, vector<1x128xf32>
    %c0_32 = arith.constant 0 : index
    %c0_33 = arith.constant 0 : index
    %106 = vector.load %arg8[%c0_32, %c0_33] : memref<1x128xf32, #tpu.memory_space<vmem>>, vector<1x128xf32>
    %cst_34 = arith.constant dense<0.000000e+00> : vector<128xf32>
    %107 = vector.multi_reduction <add>, %104, %cst_34 [1] : vector<128x128xf32> to vector<128xf32>
    %108 = vector.shape_cast %107 : vector<128xf32> to vector<128x1xf32>
    %cst_35 = arith.constant 1.280000e+02 : f32
    %109 = vector.broadcast %cst_35 : f32 to vector<128x1xf32>
    %110 = arith.divf %108, %109 : vector<128x1xf32>
    %111 = vector.broadcast %110 : vector<128x1xf32> to vector<128x128xf32>
    %112 = arith.subf %104, %111 : vector<128x128xf32>
    %113 = arith.mulf %112, %112 : vector<128x128xf32>
    %cst_36 = arith.constant dense<0.000000e+00> : vector<128xf32>
    %114 = vector.multi_reduction <add>, %113, %cst_36 [1] : vector<128x128xf32> to vector<128xf32>
    %115 = vector.shape_cast %114 : vector<128xf32> to vector<128x1xf32>
    %cst_37 = arith.constant 1.280000e+02 : f32
    %116 = vector.broadcast %cst_37 : f32 to vector<128x1xf32>
    %117 = arith.divf %115, %116 : vector<128x1xf32>
    %cst_38 = arith.constant 9.99999997E-7 : f32
    %118 = vector.broadcast %cst_38 : f32 to vector<128x1xf32>
    %119 = arith.addf %117, %118 : vector<128x1xf32>
    %120 = math.rsqrt %119 : vector<128x1xf32>
    %121 = vector.broadcast %120 : vector<128x1xf32> to vector<128x128xf32>
    %122 = arith.mulf %112, %121 : vector<128x128xf32>
    %123 = vector.broadcast %105 : vector<1x128xf32> to vector<128x128xf32>
    %124 = arith.mulf %122, %123 : vector<128x128xf32>
    %125 = vector.broadcast %106 : vector<1x128xf32> to vector<128x128xf32>
    %126 = arith.addf %124, %125 : vector<128x128xf32>
    %127 = arith.truncf %126 : vector<128x128xf32> to vector<128x128xbf16>
    %c0_39 = arith.constant 0 : index
    %c0_40 = arith.constant 0 : index
    %128 = vector.load %arg9[%c0_39, %c0_40] : memref<128x256xbf16, #tpu.memory_space<vmem>>, vector<128x256xbf16>
    %cst_41 = arith.constant dense<0.000000e+00> : vector<128x256xf32>
    %129 = tpu.matmul %127, %128, %cst_41 {dimension_numbers = #tpu.dot_dimension_numbers<[1], [0], [0], [1], [0, 0, 1, 1], [], []>} : vector<128x128xbf16>, vector<128x256xbf16>, vector<128x256xf32> -> vector<128x256xf32>
    %c0_42 = arith.constant 0 : index
    %c0_43 = arith.constant 0 : index
    %130 = vector.load %arg10[%c0_42, %c0_43] : memref<1x256xf32, #tpu.memory_space<vmem>>, vector<1x256xf32>
    %131 = vector.broadcast %130 : vector<1x256xf32> to vector<128x256xf32>
    %132 = arith.addf %129, %131 : vector<128x256xf32>
    %cst_44 = arith.constant 0.000000e+00 : f32
    %133 = vector.broadcast %cst_44 : f32 to vector<128x256xf32>
    %134 = arith.maximumf %132, %133 : vector<128x256xf32>
    %135 = arith.truncf %134 : vector<128x256xf32> to vector<128x256xbf16>
    %c0_45 = arith.constant 0 : index
    %c0_46 = arith.constant 0 : index
    %136 = vector.load %arg11[%c0_45, %c0_46] : memref<256x128xbf16, #tpu.memory_space<vmem>>, vector<256x128xbf16>
    %cst_47 = arith.constant dense<0.000000e+00> : vector<128x128xf32>
    %137 = tpu.matmul %135, %136, %cst_47 {dimension_numbers = #tpu.dot_dimension_numbers<[1], [0], [0], [1], [0, 0, 1, 1], [], []>} : vector<128x256xbf16>, vector<256x128xbf16>, vector<128x128xf32> -> vector<128x128xf32>
    %c0_48 = arith.constant 0 : index
    %c0_49 = arith.constant 0 : index
    %138 = vector.load %arg12[%c0_48, %c0_49] : memref<1x128xf32, #tpu.memory_space<vmem>>, vector<1x128xf32>
    %139 = vector.broadcast %138 : vector<1x128xf32> to vector<128x128xf32>
    %140 = arith.addf %137, %139 : vector<128x128xf32>
    %141 = arith.addf %140, %126 : vector<128x128xf32>
    %c0_50 = arith.constant 0 : index
    %c0_51 = arith.constant 0 : index
    %142 = vector.load %arg13[%c0_50, %c0_51] : memref<1x128xf32, #tpu.memory_space<vmem>>, vector<1x128xf32>
    %c0_52 = arith.constant 0 : index
    %c0_53 = arith.constant 0 : index
    %143 = vector.load %arg14[%c0_52, %c0_53] : memref<1x128xf32, #tpu.memory_space<vmem>>, vector<1x128xf32>
    %cst_54 = arith.constant dense<0.000000e+00> : vector<128xf32>
    %144 = vector.multi_reduction <add>, %141, %cst_54 [1] : vector<128x128xf32> to vector<128xf32>
    %145 = vector.shape_cast %144 : vector<128xf32> to vector<128x1xf32>
    %cst_55 = arith.constant 1.280000e+02 : f32
    %146 = vector.broadcast %cst_55 : f32 to vector<128x1xf32>
    %147 = arith.divf %145, %146 : vector<128x1xf32>
    %148 = vector.broadcast %147 : vector<128x1xf32> to vector<128x128xf32>
    %149 = arith.subf %141, %148 : vector<128x128xf32>
    %150 = arith.mulf %149, %149 : vector<128x128xf32>
    %cst_56 = arith.constant dense<0.000000e+00> : vector<128xf32>
    %151 = vector.multi_reduction <add>, %150, %cst_56 [1] : vector<128x128xf32> to vector<128xf32>
    %152 = vector.shape_cast %151 : vector<128xf32> to vector<128x1xf32>
    %cst_57 = arith.constant 1.280000e+02 : f32
    %153 = vector.broadcast %cst_57 : f32 to vector<128x1xf32>
    %154 = arith.divf %152, %153 : vector<128x1xf32>
    %cst_58 = arith.constant 9.99999997E-7 : f32
    %155 = vector.broadcast %cst_58 : f32 to vector<128x1xf32>
    %156 = arith.addf %154, %155 : vector<128x1xf32>
    %157 = math.rsqrt %156 : vector<128x1xf32>
    %158 = vector.broadcast %157 : vector<128x1xf32> to vector<128x128xf32>
    %159 = arith.mulf %149, %158 : vector<128x128xf32>
    %160 = vector.broadcast %142 : vector<1x128xf32> to vector<128x128xf32>
    %161 = arith.mulf %159, %160 : vector<128x128xf32>
    %162 = vector.broadcast %143 : vector<1x128xf32> to vector<128x128xf32>
    %163 = arith.addf %161, %162 : vector<128x128xf32>
    %164 = arith.truncf %163 : vector<128x128xf32> to vector<128x128xbf16>
    %c0_59 = arith.constant 0 : index
    %c0_60 = arith.constant 0 : index
    %c0_61 = arith.constant 0 : index
    %165 = vector.load %arg15[%c0_59, %c0_60, %c0_61] : memref<1x128x128xbf16, #tpu.memory_space<vmem>>, vector<1x128x128xbf16>
    %166 = vector.shape_cast %165 : vector<1x128x128xbf16> to vector<128x128xbf16>
    %167 = vector.shape_cast %164 : vector<128x128xbf16> to vector<1x128x128xbf16>
    tpu.vector_store %arg15[%c0_59, %c0_60, %c0_61], %167 {strides = array<i32>} : memref<1x128x128xbf16, #tpu.memory_space<vmem>>, vector<1x128x128xbf16>,
    return
  }
  func.func @transform_0(%arg0: i32) -> (i32, i32, i32) {
    %c0_i32 = arith.constant 0 : i32
    %c0_i32_0 = arith.constant 0 : i32
    %c0_i32_1 = arith.constant 0 : i32
    return %arg0, %c0_i32, %c0_i32_0 : i32, i32, i32
  }
  func.func @transform_1(%arg0: i32) -> (i32, i32, i32) {
    %c0_i32 = arith.constant 0 : i32
    %c0_i32_0 = arith.constant 0 : i32
    %c0_i32_1 = arith.constant 0 : i32
    return %arg0, %c0_i32, %c0_i32_0 : i32, i32, i32
  }
  func.func @transform_2(%arg0: i32) -> (i32, i32) {
    %c0_i32 = arith.constant 0 : i32
    %c0_i32_0 = arith.constant 0 : i32
    %c0_i32_1 = arith.constant 0 : i32
    return %c0_i32, %c0_i32_0 : i32, i32
  }
  func.func @transform_3(%arg0: i32) -> (i32, i32) {
    %c0_i32 = arith.constant 0 : i32
    %c0_i32_0 = arith.constant 0 : i32
    %c0_i32_1 = arith.constant 0 : i32
    return %c0_i32, %c0_i32_0 : i32, i32
  }
  func.func @transform_4(%arg0: i32) -> (i32, i32) {
    %c0_i32 = arith.constant 0 : i32
    %c0_i32_0 = arith.constant 0 : i32
    %c0_i32_1 = arith.constant 0 : i32
    return %c0_i32, %c0_i32_0 : i32, i32
  }
  func.func @transform_5(%arg0: i32) -> (i32, i32) {
    %c0_i32 = arith.constant 0 : i32
    %c0_i32_0 = arith.constant 0 : i32
    %c0_i32_1 = arith.constant 0 : i32
    return %c0_i32, %c0_i32_0 : i32, i32
  }
  func.func @transform_6(%arg0: i32) -> (i32, i32) {
    %c0_i32 = arith.constant 0 : i32
    %c0_i32_0 = arith.constant 0 : i32
    %c0_i32_1 = arith.constant 0 : i32
    return %c0_i32, %c0_i32_0 : i32, i32
  }
  func.func @transform_7(%arg0: i32) -> (i32, i32) {
    %c0_i32 = arith.constant 0 : i32
    %c0_i32_0 = arith.constant 0 : i32
    %c0_i32_1 = arith.constant 0 : i32
    return %c0_i32, %c0_i32_0 : i32, i32
  }
  func.func @transform_8(%arg0: i32) -> (i32, i32) {
    %c0_i32 = arith.constant 0 : i32
    %c0_i32_0 = arith.constant 0 : i32
    %c0_i32_1 = arith.constant 0 : i32
    return %c0_i32, %c0_i32_0 : i32, i32
  }
  func.func @transform_9(%arg0: i32) -> (i32, i32) {
    %c0_i32 = arith.constant 0 : i32
    %c0_i32_0 = arith.constant 0 : i32
    %c0_i32_1 = arith.constant 0 : i32
    return %c0_i32, %c0_i32_0 : i32, i32
  }
  func.func @transform_10(%arg0: i32) -> (i32, i32) {
    %c0_i32 = arith.constant 0 : i32
    %c0_i32_0 = arith.constant 0 : i32
    %c0_i32_1 = arith.constant 0 : i32
    return %c0_i32, %c0_i32_0 : i32, i32
  }
  func.func @transform_11(%arg0: i32) -> (i32, i32) {
    %c0_i32 = arith.constant 0 : i32
    %c0_i32_0 = arith.constant 0 : i32
    %c0_i32_1 = arith.constant 0 : i32
    return %c0_i32, %c0_i32_0 : i32, i32
  }
  func.func @transform_12(%arg0: i32) -> (i32, i32) {
    %c0_i32 = arith.constant 0 : i32
    %c0_i32_0 = arith.constant 0 : i32
    %c0_i32_1 = arith.constant 0 : i32
    return %c0_i32, %c0_i32_0 : i32, i32
  }
  func.func @transform_13(%arg0: i32) -> (i32, i32) {
    %c0_i32 = arith.constant 0 : i32
    %c0_i32_0 = arith.constant 0 : i32
    %c0_i32_1 = arith.constant 0 : i32
    return %c0_i32, %c0_i32_0 : i32, i32
  }
  func.func @transform_14(%arg0: i32) -> (i32, i32, i32) {
    %c0_i32 = arith.constant 0 : i32
    %c0_i32_0 = arith.constant 0 : i32
    %c0_i32_1 = arith.constant 0 : i32
    return %arg0, %c0_i32, %c0_i32_0 : i32, i32, i32
  }
}

</mosaic_0001>

<llo_original>
// kernel: bert_forward.2
$region0: #{bert_forward.2}
  #allocation0 [shape = 'u32[]', space=smem, size = 0x4, offset = 0x4, fixed_abs, tag = 'smem constant byte address 0x4 - core index']
  #allocation1 [shape = 'u32[144,128]{1,0:T(1,128)}', space=vmem, size = 0x12000, scoped, tag = 'internal scratch']
  %s0 = inlined_call_operand.vmem [shape: bf16[2,128,128], index: 0, kind: input, shape index: {}, may-alias: {0,14}]
  %s1 = inlined_call_operand.vmem [shape: f32[2,1,128], index: 1, kind: input, shape index: {}]
  %s2 = inlined_call_operand.vmem [shape: bf16[128,384], index: 2, kind: input, shape index: {}]
  %s3 = inlined_call_operand.vmem [shape: f32[1,384], index: 3, kind: input, shape index: {}]
  %s4 = inlined_call_operand.vmem [shape: bf16[128,128], index: 4, kind: input, shape index: {}]
  %s5 = inlined_call_operand.vmem [shape: f32[1,128], index: 5, kind: input, shape index: {}]
  %s6 = inlined_call_operand.vmem [shape: f32[1,128], index: 6, kind: input, shape index: {}]
  %s7 = inlined_call_operand.vmem [shape: f32[1,128], index: 7, kind: input, shape index: {}]
  %s8 = inlined_call_operand.vmem [shape: bf16[128,256], index: 8, kind: input, shape index: {}]
  %s9 = inlined_call_operand.hbm [shape: f32[1,256], index: 9, kind: input, shape index: {}]
  %s10 = inlined_call_operand.hbm [shape: bf16[256,128], index: 10, kind: input, shape index: {}]
  %s11 = inlined_call_operand.vmem [shape: f32[1,128], index: 11, kind: input, shape index: {}]
  %s12 = inlined_call_operand.vmem [shape: f32[1,128], index: 12, kind: input, shape index: {}]
  %s13 = inlined_call_operand.vmem [shape: f32[1,128], index: 13, kind: input, shape index: {}]
  %s14 = inlined_call_operand.vmem [shape: bf16[2,128,128], index: 14, kind: output, shape index: {}, may-alias: {0,14}]
  %s15 = sld [smem:[#allocation0]]
  $region97: #{bert_forward.2} parent=0
    _
  %s17 = ssub.s32 1, %s15
  %s18 = scalar_select 0, %s17, %s15
  $region1: #{bert_forward.2} parent=0
    #allocation2 [shape = 'u8[1024]{0}', space=vmem, size = 0x400, scoped, tag = 'input window, operand 9, single buffered']
    #allocation3 [shape = 's32[2]{0}', space=sflag, size = 0x8, scoped, tag = 'scoped memory for bert_forward.2']
    #allocation4 [shape = 'u8[65536]{0}', space=vmem, size = 0x10000, scoped, tag = 'input window, operand 10, single buffered']
    #allocation5 [shape = 's32[1]{0}', space=sflag, size = 0x4, scoped, tag = 'scoped memory for bert_forward.2']
    %19 = vsyncpa [#allocation3], 0
    %20 = vsyncpa [#allocation5], 0
    loop: start=0, step=1, limit=4
    $region2: #{bert_forward.2} parent=1 // loop_pre_header
      _
    $region3: #{bert_forward.2} parent=1 // loop_header
      %s22 = sphi 0, %s26
      %p23 = scmp.ge.s32.totalorder %s22, 4
      %s32 = sphi 0, %s34
      %s35 = sphi 0, %s32
      %s36 = sphi 0, %s35
      %s52 = sphi 0, %s36
      %s58 = sphi 0, %s60
      %s61 = sphi 0, %s58
      %s62 = sphi 0, %s61
      %s78 = sphi 0, %s62
      %s82 = sphi 0, %s82
      %s84 = sphi 0, %s82
      %s85 = sphi 0, %s84
      %s99 = sphi 0, %s85
      %s103 = sphi 0, %s103
      %s105 = sphi 0, %s103
      %s106 = sphi 0, %s105
      %s120 = sphi 0, %s106
      %s124 = sphi 0, %s124
      %s126 = sphi 0, %s124
      %s127 = sphi 0, %s126
      %s141 = sphi 0, %s127
      %s145 = sphi 0, %s145
      %s147 = sphi 0, %s145
      %s148 = sphi 0, %s147
      %s162 = sphi 0, %s148
      %s166 = sphi 0, %s166
      %s168 = sphi 0, %s166
      %s169 = sphi 0, %s168
      %s183 = sphi 0, %s169
      %s187 = sphi 0, %s187
      %s189 = sphi 0, %s187
      %s190 = sphi 0, %s189
      %s204 = sphi 0, %s190
      %s208 = sphi 0, %s208
      %s210 = sphi 0, %s208
      %s211 = sphi 0, %s210
      %s225 = sphi 0, %s211
      %s229 = sphi 0, %s229
      %s231 = sphi 0, %s229
      %s232 = sphi 0, %s231
      %s246 = sphi 0, %s232
      %s250 = sphi 0, %s250
      %s252 = sphi 0, %s250
      %s253 = sphi 0, %s252
      %s267 = sphi 0, %s253
      %s271 = sphi 0, %s271
      %s273 = sphi 0, %s271
      %s274 = sphi 0, %s273
      %s288 = sphi 0, %s274
      %s292 = sphi 0, %s292
      %s294 = sphi 0, %s292
      %s295 = sphi 0, %s294
      %s309 = sphi 0, %s295
      %s313 = sphi 0, %s313
      %s315 = sphi 0, %s313
      %s316 = sphi 0, %s315
      %s330 = sphi 0, %s316
      %s336 = sphi 0, %s338
      %s339 = sphi 0, %s336
      %s340 = sphi 0, %s339
      %s356 = sphi 0, %s340
    $region4: #{bert_forward.2} parent=1 // loop_header_branch
      %25 = sbr.rel (%p23) target = $region8
    $region5: #{bert_forward.2} parent=1 // loop_body
      %s27 = ssub.s32 %s22, 1
      %s28 = ssub.s32 %s22, 2
      %s29 = sadd.s32 %s22, 1
      %s30 = ssub.s32 %s22, %s29
      %p31 = scmp.eq.s32.totalorder %s30, 0
      %s33 = sadd.s32 %s32, 1
      %s34 = scalar_select %p31, %s32, %s33
      %p37 = pneg %p31
      %p38 = scmp.eq.s32.totalorder %s22, 1
      %p39 = por %p37, %p38
      %p40 = scmp.ne.s32.totalorder %s32, %s35
      %p41 = scmp.eq.s32.totalorder %s22, 0
      %p42 = por %p40, %p41
      %p43 = scmp.ne.s32.totalorder %s32, %s35
      %p44 = scmp.eq.s32.totalorder %s27, 1
      %p45 = por %p43, %p44
      %p46 = scmp.ne.s32.totalorder %s35, %s36
      %p47 = scmp.eq.s32.totalorder %s27, 0
      %p48 = por %p46, %p47
      %p49 = scmp.ne.s32.totalorder %s35, %s36
      %p50 = scmp.eq.s32.totalorder %s28, 1
      %p51 = por %p49, %p50
      %p53 = scmp.ne.s32.totalorder %s36, %s52
      %p54 = scmp.eq.s32.totalorder %s28, 0
      %p55 = por %p53, %p54
      %s56 = ssub.s32 %s22, %s29
      %p57 = scmp.eq.s32.totalorder %s56, 0
      %s59 = sadd.s32 %s58, 1
      %s60 = scalar_select %p57, %s58, %s59
      %p63 = pneg %p57
      %p64 = scmp.eq.s32.totalorder %s22, 1
      %p65 = por %p63, %p64
      %p66 = scmp.ne.s32.totalorder %s58, %s61
      %p67 = scmp.eq.s32.totalorder %s22, 0
      %p68 = por %p66, %p67
      %p69 = scmp.ne.s32.totalorder %s58, %s61
      %p70 = scmp.eq.s32.totalorder %s27, 1
      %p71 = por %p69, %p70
      %p72 = scmp.ne.s32.totalorder %s61, %s62
      %p73 = scmp.eq.s32.totalorder %s27, 0
      %p74 = por %p72, %p73
      %p75 = scmp.ne.s32.totalorder %s61, %s62
      %p76 = scmp.eq.s32.totalorder %s28, 1
      %p77 = por %p75, %p76
      %p79 = scmp.ne.s32.totalorder %s62, %s78
      %p80 = scmp.eq.s32.totalorder %s28, 0
      %p81 = por %p79, %p80
      %s83 = sadd.s32 %s82, 1
      %p86 = scmp.eq.s32.totalorder %s22, 1
      %p87 = scmp.ne.s32.totalorder %s82, %s84
      %p88 = scmp.eq.s32.totalorder %s22, 0
      %p89 = por %p87, %p88
      %p90 = scmp.ne.s32.totalorder %s82, %s84
      %p91 = scmp.eq.s32.totalorder %s27, 1
      %p92 = por %p90, %p91
      %p93 = scmp.ne.s32.totalorder %s84, %s85
      %p94 = scmp.eq.s32.totalorder %s27, 0
      %p95 = por %p93, %p94
      %p96 = scmp.ne.s32.totalorder %s84, %s85
      %p97 = scmp.eq.s32.totalorder %s28, 1
      %p98 = por %p96, %p97
      %p100 = scmp.ne.s32.totalorder %s85, %s99
      %p101 = scmp.eq.s32.totalorder %s28, 0
      %p102 = por %p100, %p101
      %s104 = sadd.s32 %s103, 1
      %p107 = scmp.eq.s32.totalorder %s22, 1
      %p108 = scmp.ne.s32.totalorder %s103, %s105
      %p109 = scmp.eq.s32.totalorder %s22, 0
      %p110 = por %p108, %p109
      %p111 = scmp.ne.s32.totalorder %s103, %s105
      %p112 = scmp.eq.s32.totalorder %s27, 1
      %p113 = por %p111, %p112
      %p114 = scmp.ne.s32.totalorder %s105, %s106
      %p115 = scmp.eq.s32.totalorder %s27, 0
      %p116 = por %p114, %p115
      %p117 = scmp.ne.s32.totalorder %s105, %s106
      %p118 = scmp.eq.s32.totalorder %s28, 1
      %p119 = por %p117, %p118
      %p121 = scmp.ne.s32.totalorder %s106, %s120
      %p122 = scmp.eq.s32.totalorder %s28, 0
      %p123 = por %p121, %p122
      %s125 = sadd.s32 %s124, 1
      %p128 = scmp.eq.s32.totalorder %s22, 1
      %p129 = scmp.ne.s32.totalorder %s124, %s126
      %p130 = scmp.eq.s32.totalorder %s22, 0
      %p131 = por %p129, %p130
      %p132 = scmp.ne.s32.totalorder %s124, %s126
      %p133 = scmp.eq.s32.totalorder %s27, 1
      %p134 = por %p132, %p133
      %p135 = scmp.ne.s32.totalorder %s126, %s127
      %p136 = scmp.eq.s32.totalorder %s27, 0
      %p137 = por %p135, %p136
      %p138 = scmp.ne.s32.totalorder %s126, %s127
      %p139 = scmp.eq.s32.totalorder %s28, 1
      %p140 = por %p138, %p139
      %p142 = scmp.ne.s32.totalorder %s127, %s141
      %p143 = scmp.eq.s32.totalorder %s28, 0
      %p144 = por %p142, %p143
      %s146 = sadd.s32 %s145, 1
      %p149 = scmp.eq.s32.totalorder %s22, 1
      %p150 = scmp.ne.s32.totalorder %s145, %s147
      %p151 = scmp.eq.s32.totalorder %s22, 0
      %p152 = por %p150, %p151
      %p153 = scmp.ne.s32.totalorder %s145, %s147
      %p154 = scmp.eq.s32.totalorder %s27, 1
      %p155 = por %p153, %p154
      %p156 = scmp.ne.s32.totalorder %s147, %s148
      %p157 = scmp.eq.s32.totalorder %s27, 0
      %p158 = por %p156, %p157
      %p159 = scmp.ne.s32.totalorder %s147, %s148
      %p160 = scmp.eq.s32.totalorder %s28, 1
      %p161 = por %p159, %p160
      %p163 = scmp.ne.s32.totalorder %s148, %s162
      %p164 = scmp.eq.s32.totalorder %s28, 0
      %p165 = por %p163, %p164
      %s167 = sadd.s32 %s166, 1
      %p170 = scmp.eq.s32.totalorder %s22, 1
      %p171 = scmp.ne.s32.totalorder %s166, %s168
      %p172 = scmp.eq.s32.totalorder %s22, 0
      %p173 = por %p171, %p172
      %p174 = scmp.ne.s32.totalorder %s166, %s168
      %p175 = scmp.eq.s32.totalorder %s27, 1
      %p176 = por %p174, %p175
      %p177 = scmp.ne.s32.totalorder %s168, %s169
      %p178 = scmp.eq.s32.totalorder %s27, 0
      %p179 = por %p177, %p178
      %p180 = scmp.ne.s32.totalorder %s168, %s169
      %p181 = scmp.eq.s32.totalorder %s28, 1
      %p182 = por %p180, %p181
      %p184 = scmp.ne.s32.totalorder %s169, %s183
      %p185 = scmp.eq.s32.totalorder %s28, 0
      %p186 = por %p184, %p185
      %s188 = sadd.s32 %s187, 1
      %p191 = scmp.eq.s32.totalorder %s22, 1
      %p192 = scmp.ne.s32.totalorder %s187, %s189
      %p193 = scmp.eq.s32.totalorder %s22, 0
      %p194 = por %p192, %p193
      %p195 = scmp.ne.s32.totalorder %s187, %s189
      %p196 = scmp.eq.s32.totalorder %s27, 1
      %p197 = por %p195, %p196
      %p198 = scmp.ne.s32.totalorder %s189, %s190
      %p199 = scmp.eq.s32.totalorder %s27, 0
      %p200 = por %p198, %p199
      %p201 = scmp.ne.s32.totalorder %s189, %s190
      %p202 = scmp.eq.s32.totalorder %s28, 1
      %p203 = por %p201, %p202
      %p205 = scmp.ne.s32.totalorder %s190, %s204
      %p206 = scmp.eq.s32.totalorder %s28, 0
      %p207 = por %p205, %p206
      %s209 = sadd.s32 %s208, 1
      %p212 = scmp.eq.s32.totalorder %s22, 1
      %p213 = scmp.ne.s32.totalorder %s208, %s210
      %p214 = scmp.eq.s32.totalorder %s22, 0
      %p215 = por %p213, %p214
      %p216 = scmp.ne.s32.totalorder %s208, %s210
      %p217 = scmp.eq.s32.totalorder %s27, 1
      %p218 = por %p216, %p217
      %p219 = scmp.ne.s32.totalorder %s210, %s211
      %p220 = scmp.eq.s32.totalorder %s27, 0
      %p221 = por %p219, %p220
      %p222 = scmp.ne.s32.totalorder %s210, %s211
      %p223 = scmp.eq.s32.totalorder %s28, 1
      %p224 = por %p222, %p223
      %p226 = scmp.ne.s32.totalorder %s211, %s225
      %p227 = scmp.eq.s32.totalorder %s28, 0
      %p228 = por %p226, %p227
      %s230 = sadd.s32 %s229, 1
      %p233 = scmp.eq.s32.totalorder %s22, 1
      %p234 = scmp.ne.s32.totalorder %s229, %s231
      %p235 = scmp.eq.s32.totalorder %s22, 0
      %p236 = por %p234, %p235
      %p237 = scmp.ne.s32.totalorder %s229, %s231
      %p238 = scmp.eq.s32.totalorder %s27, 1
      %p239 = por %p237, %p238
      %p240 = scmp.ne.s32.totalorder %s231, %s232
      %p241 = scmp.eq.s32.totalorder %s27, 0
      %p242 = por %p240, %p241
      %p243 = scmp.ne.s32.totalorder %s231, %s232
      %p244 = scmp.eq.s32.totalorder %s28, 1
      %p245 = por %p243, %p244
      %p247 = scmp.ne.s32.totalorder %s232, %s246
      %p248 = scmp.eq.s32.totalorder %s28, 0
      %p249 = por %p247, %p248
      %s251 = sadd.s32 %s250, 1
      %p254 = scmp.eq.s32.totalorder %s22, 1
      %p255 = scmp.ne.s32.totalorder %s250, %s252
      %p256 = scmp.eq.s32.totalorder %s22, 0
      %p257 = por %p255, %p256
      %p258 = scmp.ne.s32.totalorder %s250, %s252
      %p259 = scmp.eq.s32.totalorder %s27, 1
      %p260 = por %p258, %p259
      %p261 = scmp.ne.s32.totalorder %s252, %s253
      %p262 = scmp.eq.s32.totalorder %s27, 0
      %p263 = por %p261, %p262
      %p264 = scmp.ne.s32.totalorder %s252, %s253
      %p265 = scmp.eq.s32.totalorder %s28, 1
      %p266 = por %p264, %p265
      %p268 = scmp.ne.s32.totalorder %s253, %s267
      %p269 = scmp.eq.s32.totalorder %s28, 0
      %p270 = por %p268, %p269
      %s272 = sadd.s32 %s271, 1
      %p275 = scmp.eq.s32.totalorder %s22, 1
      %p276 = scmp.ne.s32.totalorder %s271, %s273
      %p277 = scmp.eq.s32.totalorder %s22, 0
      %p278 = por %p276, %p277
      %p279 = scmp.ne.s32.totalorder %s271, %s273
      %p280 = scmp.eq.s32.totalorder %s27, 1
      %p281 = por %p279, %p280
      %p282 = scmp.ne.s32.totalorder %s273, %s274
      %p283 = scmp.eq.s32.totalorder %s27, 0
      %p284 = por %p282, %p283
      %p285 = scmp.ne.s32.totalorder %s273, %s274
      %p286 = scmp.eq.s32.totalorder %s28, 1
      %p287 = por %p285, %p286
      %p289 = scmp.ne.s32.totalorder %s274, %s288
      %p290 = scmp.eq.s32.totalorder %s28, 0
      %p291 = por %p289, %p290
      %s293 = sadd.s32 %s292, 1
      %p296 = scmp.eq.s32.totalorder %s22, 1
      %p297 = scmp.ne.s32.totalorder %s292, %s294
      %p298 = scmp.eq.s32.totalorder %s22, 0
      %p299 = por %p297, %p298
      %p300 = scmp.ne.s32.totalorder %s292, %s294
      %p301 = scmp.eq.s32.totalorder %s27, 1
      %p302 = por %p300, %p301
      %p303 = scmp.ne.s32.totalorder %s294, %s295
      %p304 = scmp.eq.s32.totalorder %s27, 0
      %p305 = por %p303, %p304
      %p306 = scmp.ne.s32.totalorder %s294, %s295
      %p307 = scmp.eq.s32.totalorder %s28, 1
      %p308 = por %p306, %p307
      %p310 = scmp.ne.s32.totalorder %s295, %s309
      %p311 = scmp.eq.s32.totalorder %s28, 0
      %p312 = por %p310, %p311
      %s314 = sadd.s32 %s313, 1
      %p317 = scmp.eq.s32.totalorder %s22, 1
      %p318 = scmp.ne.s32.totalorder %s313, %s315
      %p319 = scmp.eq.s32.totalorder %s22, 0
      %p320 = por %p318, %p319
      %p321 = scmp.ne.s32.totalorder %s313, %s315
      %p322 = scmp.eq.s32.totalorder %s27, 1
      %p323 = por %p321, %p322
      %p324 = scmp.ne.s32.totalorder %s315, %s316
      %p325 = scmp.eq.s32.totalorder %s27, 0
      %p326 = por %p324, %p325
      %p327 = scmp.ne.s32.totalorder %s315, %s316
      %p328 = scmp.eq.s32.totalorder %s28, 1
      %p329 = por %p327, %p328
      %p331 = scmp.ne.s32.totalorder %s316, %s330
      %p332 = scmp.eq.s32.totalorder %s28, 0
      %p333 = por %p331, %p332
      %s334 = ssub.s32 %s22, %s29
      %p335 = scmp.eq.s32.totalorder %s334, 0
      %s337 = sadd.s32 %s336, 1
      %s338 = scalar_select %p335, %s336, %s337
      %p341 = pneg %p335
      %p342 = scmp.eq.s32.totalorder %s22, 1
      %p343 = por %p341, %p342
      %p344 = scmp.ne.s32.totalorder %s336, %s339
      %p345 = scmp.eq.s32.totalorder %s22, 0
      %p346 = por %p344, %p345
      %p347 = scmp.ne.s32.totalorder %s336, %s339
      %p348 = scmp.eq.s32.totalorder %s27, 1
      %p349 = por %p347, %p348
      %p350 = scmp.ne.s32.totalorder %s339, %s340
      %p351 = scmp.eq.s32.totalorder %s27, 0
      %p352 = por %p350, %p351
      %p353 = scmp.ne.s32.totalorder %s339, %s340
      %p354 = scmp.eq.s32.totalorder %s28, 1
      %p355 = por %p353, %p354
      %p357 = scmp.ne.s32.totalorder %s340, %s356
      %p358 = scmp.eq.s32.totalorder %s28, 0
      %p359 = por %p357, %p358
      %p360 = scmp.le.s32.totalorder 1, %s22
      %p361 = scmp.lt.s32.totalorder %s22, 3
      %p362 = pnand %p360, %p361
      %p363 = pneg %p362
      // Predicated region
      $region9: #{bert_forward.2} parent=5 // pred_check
        _
      $region10: #{bert_forward.2} parent=5 // pred_check_branch
        %365 = sbr.rel (%p362) target = $region12
      $region11: #{bert_forward.2} parent=5 // pred_region
        %s366 = ssub.s32 %s22, 1
        // Predicated region
        $region13: #{bert_forward.2} parent=11 // pred_check
          %p367 = pneg %p95
        $region14: #{bert_forward.2} parent=11 // pred_check_branch
          %369 = sbr.rel (%p367) target = $region16
        $region15: #{bert_forward.2} parent=11 // pred_region
          _
        $region16: #{bert_forward.2} parent=11 // pred_fallthru
          _
        // Predicated region
        $region17: #{bert_forward.2} parent=11 // pred_check
          %p370 = pneg %p116
        $region18: #{bert_forward.2} parent=11 // pred_check_branch
          %372 = sbr.rel (%p370) target = $region20
        $region19: #{bert_forward.2} parent=11 // pred_region
          _
        $region20: #{bert_forward.2} parent=11 // pred_fallthru
          _
        // Predicated region
        $region21: #{bert_forward.2} parent=11 // pred_check
          %p373 = pneg %p137
        $region22: #{bert_forward.2} parent=11 // pred_check_branch
          %375 = sbr.rel (%p373) target = $region24
        $region23: #{bert_forward.2} parent=11 // pred_region
          _
        $region24: #{bert_forward.2} parent=11 // pred_fallthru
          _
        // Predicated region
        $region25: #{bert_forward.2} parent=11 // pred_check
          %p376 = pneg %p158
        $region26: #{bert_forward.2} parent=11 // pred_check_branch
          %378 = sbr.rel (%p376) target = $region28
        $region27: #{bert_forward.2} parent=11 // pred_region
          _
        $region28: #{bert_forward.2} parent=11 // pred_fallthru
          _
        // Predicated region
        $region29: #{bert_forward.2} parent=11 // pred_check
          %p379 = pneg %p179
        $region30: #{bert_forward.2} parent=11 // pred_check_branch
          %381 = sbr.rel (%p379) target = $region32
        $region31: #{bert_forward.2} parent=11 // pred_region
          _
        $region32: #{bert_forward.2} parent=11 // pred_fallthru
          _
        // Predicated region
        $region33: #{bert_forward.2} parent=11 // pred_check
          %p382 = pneg %p200
        $region34: #{bert_forward.2} parent=11 // pred_check_branch
          %384 = sbr.rel (%p382) target = $region36
        $region35: #{bert_forward.2} parent=11 // pred_region
          _
        $region36: #{bert_forward.2} parent=11 // pred_fallthru
          _
        // Predicated region
        $region37: #{bert_forward.2} parent=11 // pred_check
          %p385 = pneg %p221
        $region38: #{bert_forward.2} parent=11 // pred_check_branch
          %387 = sbr.rel (%p385) target = $region40
        $region39: #{bert_forward.2} parent=11 // pred_region
          _
        $region40: #{bert_forward.2} parent=11 // pred_fallthru
          _
        // Predicated region
        $region41: #{bert_forward.2} parent=11 // pred_check
          %p388 = pneg %p242
        $region42: #{bert_forward.2} parent=11 // pred_check_branch
          %390 = sbr.rel (%p388) target = $region44
        $region43: #{bert_forward.2} parent=11 // pred_region
          %s392 = ssub.s32 32, 32
          %393 = vsyncadd [#allocation3], %s392
          %s395 = sshll.u32 [#allocation2], 4
          %s396 = int_to_ptr.vmem [resolvable:$true] %s395
          %398 = dma.hbm_to_vmem [thread:$0]  %s9, 32, %s396, [#allocation3]
        $region44: #{bert_forward.2} parent=11 // pred_fallthru
          _
        // Predicated region
        $region45: #{bert_forward.2} parent=11 // pred_check
          %p399 = pneg %p263
        $region46: #{bert_forward.2} parent=11 // pred_check_branch
          %401 = sbr.rel (%p399) target = $region48
        $region47: #{bert_forward.2} parent=11 // pred_region
          %s403 = ssub.s32 2048, 2048
          %404 = vsyncadd [#allocation5], %s403
          %s405 = sshll.u32 [#allocation4], 4
          %s406 = int_to_ptr.vmem [resolvable:$true] %s405
          %411 = dma.hbm_to_vmem [thread:$0]  %s10, 2048, %s406, [#allocation5], 64, 64, 4
        $region48: #{bert_forward.2} parent=11 // pred_fallthru
          _
        // Predicated region
        $region49: #{bert_forward.2} parent=11 // pred_check
          %p412 = pneg %p284
        $region50: #{bert_forward.2} parent=11 // pred_check_branch
          %414 = sbr.rel (%p412) target = $region52
        $region51: #{bert_forward.2} parent=11 // pred_region
          _
        $region52: #{bert_forward.2} parent=11 // pred_fallthru
          _
        // Predicated region
        $region53: #{bert_forward.2} parent=11 // pred_check
          %p415 = pneg %p305
        $region54: #{bert_forward.2} parent=11 // pred_check_branch
          %417 = sbr.rel (%p415) target = $region56
        $region55: #{bert_forward.2} parent=11 // pred_region
          _
        $region56: #{bert_forward.2} parent=11 // pred_fallthru
          _
        // Predicated region
        $region57: #{bert_forward.2} parent=11 // pred_check
          %p418 = pneg %p326
        $region58: #{bert_forward.2} parent=11 // pred_check_branch
          %420 = sbr.rel (%p418) target = $region60
        $region59: #{bert_forward.2} parent=11 // pred_region
          _
        $region60: #{bert_forward.2} parent=11 // pred_fallthru
          _
      $region12: #{bert_forward.2} parent=5 // pred_fallthru
        _
      %p421 = scmp.lt.s32.totalorder %s22, 2
      // Predicated region
      $region61: #{bert_forward.2} parent=5 // pred_check
        %p422 = pneg %p421
      $region62: #{bert_forward.2} parent=5 // pred_check_branch
        %424 = sbr.rel (%p422) target = $region64
      $region63: #{bert_forward.2} parent=5 // pred_region
        // Predicated region
        $region65: #{bert_forward.2} parent=63 // pred_check
          %p425 = pneg %p42
        $region66: #{bert_forward.2} parent=63 // pred_check_branch
          %427 = sbr.rel (%p425) target = $region68
        $region67: #{bert_forward.2} parent=63 // pred_region
          %p428 = scmp.lt.s32.totalorder %s22, 1
          %s429 = scalar_select %p428, %s22, 1
          %s430 = smul.addr %s429, 16
          %s431 = smul.addr %s430, 4
          %s432 = scalar_lea.vmem %s0, %s431
        $region68: #{bert_forward.2} parent=63 // pred_fallthru
          _
        // Predicated region
        $region69: #{bert_forward.2} parent=63 // pred_check
          %p433 = pneg %p68
        $region70: #{bert_forward.2} parent=63 // pred_check_branch
          %435 = sbr.rel (%p433) target = $region72
        $region71: #{bert_forward.2} parent=63 // pred_region
          %p436 = scmp.lt.s32.totalorder %s22, 1
          %s437 = scalar_select %p436, %s22, 1
          %s438 = scalar_lea.vmem %s1, %s437
        $region72: #{bert_forward.2} parent=63 // pred_fallthru
          _
      $region64: #{bert_forward.2} parent=5 // pred_fallthru
        _
      %p439 = scmp.le.s32.totalorder 1, %s22
      %p440 = scmp.lt.s32.totalorder %s22, 3
      %p441 = pnand %p439, %p440
      %p442 = pneg %p441
      // Predicated region
      $region73: #{bert_forward.2} parent=5 // pred_check
        _
      $region74: #{bert_forward.2} parent=5 // pred_check_branch
        %444 = sbr.rel (%p441) target = $region76
      $region75: #{bert_forward.2} parent=5 // pred_region
        %s445 = ssub.s32 %s22, 1
        // Predicated region
        $region77: #{bert_forward.2} parent=75 // pred_check
          %p446 = pneg %p242
        $region78: #{bert_forward.2} parent=75 // pred_check_branch
          %448 = sbr.rel (%p446) target = $region80
        $region79: #{bert_forward.2} parent=75 // pred_region
          %449 = dma.done [#allocation3], 32
        $region80: #{bert_forward.2} parent=75 // pred_fallthru
          _
        // Predicated region
        $region81: #{bert_forward.2} parent=75 // pred_check
          %p450 = pneg %p263
        $region82: #{bert_forward.2} parent=75 // pred_check_branch
          %452 = sbr.rel (%p450) target = $region84
        $region83: #{bert_forward.2} parent=75 // pred_region
          %453 = dma.done [#allocation5], 2048
        $region84: #{bert_forward.2} parent=75 // pred_fallthru
          _
        %p454 = scmp.lt.s32.totalorder %s27, 1
        %s455 = scalar_select %p454, %s27, 1
        %s456 = smul.addr %s455, 16
        %s457 = smul.addr %s456, 4
        %s458 = scalar_lea.vmem %s0, %s457
        %p459 = pneg %p48
        %p460 = pneg %p45
        %p461 = scmp.lt.s32.totalorder %s27, 1
        %s462 = scalar_select %p461, %s27, 1
        %s463 = scalar_lea.vmem %s1, %s462
        %p464 = pneg %p74
        %p465 = pneg %p71
        %p466 = pneg %p95
        %p467 = pneg %p92
        %p468 = pneg %p116
        %p469 = pneg %p113
        %p470 = pneg %p137
        %p471 = pneg %p134
        %p472 = pneg %p158
        %p473 = pneg %p155
        %p474 = pneg %p179
        %p475 = pneg %p176
        %p476 = pneg %p200
        %p477 = pneg %p197
        %p478 = pneg %p221
        %p479 = pneg %p218
        %p480 = pneg %p242
        %p481 = pneg %p239
        %p482 = pneg %p263
        %p483 = pneg %p260
        %p484 = pneg %p284
        %p485 = pneg %p281
        %p486 = pneg %p305
        %p487 = pneg %p302
        %p488 = pneg %p326
        %p489 = pneg %p323
        %p490 = pneg %p352
        %p491 = pneg %p349
        %p492 = scmp.lt.s32.totalorder %s27, 1
        %s493 = scalar_select %p492, %s27, 1
        %s494 = smul.addr %s493, 16
        %s495 = smul.addr %s494, 4
        %s496 = scalar_lea.vmem %s14, %s495
        %p497 = scmp.lt.s32.totalorder %s27, 1
        %s498 = scalar_select %p497, %s27, 1
        %s499 = smul.addr %s498, 16
        %s500 = smul.addr %s499, 4
        %s501 = scalar_lea.vmem %s0, %s500
        %p502 = scmp.lt.s32.totalorder %s27, 1
        %s503 = scalar_select %p502, %s27, 1
        %s504 = scalar_lea.vmem %s1, %s503
        %p505 = scmp.lt.s32.totalorder %s27, 1
        %s506 = scalar_select %p505, %s27, 1
        %s507 = smul.addr %s506, 16
        %s508 = smul.addr %s507, 4
        %s509 = scalar_lea.vmem %s14, %s508
        %v511 = vld [vmem:[%s501] sm:$0xf]
        %v512 = vld [vmem:[%s501 + $0x4] sm:$0xf]
        %v513 = vld [vmem:[%s501 + $0x8] sm:$0xf]
        %v514 = vld [vmem:[%s501 + $0xc] sm:$0xf]
        %v515 = vld [vmem:[%s501 + $0x10] sm:$0xf]
        %v516 = vld [vmem:[%s501 + $0x14] sm:$0xf]
        %v517 = vld [vmem:[%s501 + $0x18] sm:$0xf]
        %v518 = vld [vmem:[%s501 + $0x1c] sm:$0xf]
        %v519 = vld [vmem:[%s501 + $0x20] sm:$0xf]
        %v520 = vld [vmem:[%s501 + $0x24] sm:$0xf]
        %v521 = vld [vmem:[%s501 + $0x28] sm:$0xf]
        %v522 = vld [vmem:[%s501 + $0x2c] sm:$0xf]
        %v523 = vld [vmem:[%s501 + $0x30] sm:$0xf]
        %v524 = vld [vmem:[%s501 + $0x34] sm:$0xf]
        %v525 = vld [vmem:[%s501 + $0x38] sm:$0xf]
        %v526 = vld [vmem:[%s501 + $0x3c] sm:$0xf]
        %v527 = vunpack.c.l.bf16 %v511
        %v528 = vunpack.c.l.bf16 %v512
        %v529 = vunpack.c.l.bf16 %v513
        %v530 = vunpack.c.l.bf16 %v514
        %v531 = vunpack.c.l.bf16 %v515
        %v532 = vunpack.c.l.bf16 %v516
        %v533 = vunpack.c.l.bf16 %v517
        %v534 = vunpack.c.l.bf16 %v518
        %v535 = vunpack.c.l.bf16 %v519
        %v536 = vunpack.c.l.bf16 %v520
        %v537 = vunpack.c.l.bf16 %v521
        %v538 = vunpack.c.l.bf16 %v522
        %v539 = vunpack.c.l.bf16 %v523
        %v540 = vunpack.c.l.bf16 %v524
        %v541 = vunpack.c.l.bf16 %v525
        %v542 = vunpack.c.l.bf16 %v526
        %v543 = vld [vmem:[%s2] sm:$0xff]
        %v544 = vld [vmem:[%s2 + $0x8] sm:$0xf]
        %v545 = vld [vmem:[%s2 + $0xc] sm:$0xff]
        %v546 = vld [vmem:[%s2 + $0x14] sm:$0xf]
        %v547 = vld [vmem:[%s2 + $0x18] sm:$0xff]
        %v548 = vld [vmem:[%s2 + $0x20] sm:$0xf]
        %v549 = vld [vmem:[%s2 + $0x24] sm:$0xff]
        %v550 = vld [vmem:[%s2 + $0x2c] sm:$0xf]
        %v551 = vld [vmem:[%s2 + $0x30] sm:$0xff]
        %v552 = vld [vmem:[%s2 + $0x38] sm:$0xf]
        %v553 = vld [vmem:[%s2 + $0x3c] sm:$0xff]
        %v554 = vld [vmem:[%s2 + $0x44] sm:$0xf]
        %v555 = vld [vmem:[%s2 + $0x48] sm:$0xff]
        %v556 = vld [vmem:[%s2 + $0x50] sm:$0xf]
        %v557 = vld [vmem:[%s2 + $0x54] sm:$0xff]
        %v558 = vld [vmem:[%s2 + $0x5c] sm:$0xf]
        %v559 = vld [vmem:[%s2 + $0x60] sm:$0xff]
        %v560 = vld [vmem:[%s2 + $0x68] sm:$0xf]
        %v561 = vld [vmem:[%s2 + $0x6c] sm:$0xff]
        %v562 = vld [vmem:[%s2 + $0x74] sm:$0xf]
        %v563 = vld [vmem:[%s2 + $0x78] sm:$0xff]
        %v564 = vld [vmem:[%s2 + $0x80] sm:$0xf]
        %v565 = vld [vmem:[%s2 + $0x84] sm:$0xff]
        %v566 = vld [vmem:[%s2 + $0x8c] sm:$0xf]
        %v567 = vld [vmem:[%s2 + $0x90] sm:$0xff]
        %v568 = vld [vmem:[%s2 + $0x98] sm:$0xf]
        %v569 = vld [vmem:[%s2 + $0x9c] sm:$0xff]
        %v570 = vld [vmem:[%s2 + $0xa4] sm:$0xf]
        %v571 = vld [vmem:[%s2 + $0xa8] sm:$0xff]
        %v572 = vld [vmem:[%s2 + $0xb0] sm:$0xf]
        %v573 = vld [vmem:[%s2 + $0xb4] sm:$0xff]
        %v574 = vld [vmem:[%s2 + $0xbc] sm:$0xf]
        %v575 = vld [vmem:[%s3] sm:$0x7]
        %v577 = vlaneseq
        %v578 = vshrl.u32 %v577, 7
        %v579 = vsub.s32 0, %v578
        %v580 = vrot.slane %v575, %v579
        %v581 = vlaneseq
        %v582 = vshrl.u32 %v581, 7
        %v583 = vsub.s32 1, %v582
        %v584 = vrot.slane %v575, %v583
        %v585 = vlaneseq
        %v586 = vshrl.u32 %v585, 7
        %v587 = vsub.s32 2, %v586
        %v588 = vrot.slane %v575, %v587
        %v608 = vunpack.c.l.b16 %v511
        %v609 = vunpack.c.l.b16 %v512
        %v610 = vunpack.c.l.b16 %v513
        %v611 = vunpack.c.l.b16 %v514
        %v612 = vunpack.c.l.b16 %v515
        %v613 = vunpack.c.l.b16 %v516
        %v614 = vunpack.c.l.b16 %v517
        %v615 = vunpack.c.l.b16 %v518
        %v616 = vunpack.c.l.b16 %v519
        %v617 = vunpack.c.l.b16 %v520
        %v618 = vunpack.c.l.b16 %v521
        %v619 = vunpack.c.l.b16 %v522
        %v620 = vunpack.c.l.b16 %v523
        %v621 = vunpack.c.l.b16 %v524
        %v622 = vunpack.c.l.b16 %v525
        %v623 = vunpack.c.l.b16 %v526
        %v624 = vpack.c.b16 %v609, %v608
        %v625 = vpack.c.b16 %v611, %v610
        %v626 = vpack.c.b16 %v613, %v612
        %v627 = vpack.c.b16 %v615, %v614
        %v628 = vpack.c.b16 %v617, %v616
        %v629 = vpack.c.b16 %v619, %v618
        %v630 = vpack.c.b16 %v621, %v620
        %v631 = vpack.c.b16 %v623, %v622
        %v672 = vunpack.c.l.b16 %v543
        %v673 = vunpack.c.h.b16 %v543
        %v674 = vunpack.c.l.b16 %v544
        %v675 = vunpack.c.l.b16 %v545
        %v676 = vunpack.c.h.b16 %v545
        %v677 = vunpack.c.l.b16 %v546
        %v678 = vunpack.c.l.b16 %v547
        %v679 = vunpack.c.h.b16 %v547
        %v680 = vunpack.c.l.b16 %v548
        %v681 = vunpack.c.l.b16 %v549
        %v682 = vunpack.c.h.b16 %v549
        %v683 = vunpack.c.l.b16 %v550
        %v684 = vunpack.c.l.b16 %v551
        %v685 = vunpack.c.h.b16 %v551
        %v686 = vunpack.c.l.b16 %v552
        %v687 = vunpack.c.l.b16 %v553
        %v688 = vunpack.c.h.b16 %v553
        %v689 = vunpack.c.l.b16 %v554
        %v690 = vunpack.c.l.b16 %v555
        %v691 = vunpack.c.h.b16 %v555
        %v692 = vunpack.c.l.b16 %v556
        %v693 = vunpack.c.l.b16 %v557
        %v694 = vunpack.c.h.b16 %v557
        %v695 = vunpack.c.l.b16 %v558
        %v696 = vunpack.c.l.b16 %v559
        %v697 = vunpack.c.h.b16 %v559
        %v698 = vunpack.c.l.b16 %v560
        %v699 = vunpack.c.l.b16 %v561
        %v700 = vunpack.c.h.b16 %v561
        %v701 = vunpack.c.l.b16 %v562
        %v702 = vunpack.c.l.b16 %v563
        %v703 = vunpack.c.h.b16 %v563
        %v704 = vunpack.c.l.b16 %v564
        %v705 = vunpack.c.l.b16 %v565
        %v706 = vunpack.c.h.b16 %v565
        %v707 = vunpack.c.l.b16 %v566
        %v708 = vunpack.c.l.b16 %v567
        %v709 = vunpack.c.h.b16 %v567
        %v710 = vunpack.c.l.b16 %v568
        %v711 = vunpack.c.l.b16 %v569
        %v712 = vunpack.c.h.b16 %v569
        %v713 = vunpack.c.l.b16 %v570
        %v714 = vunpack.c.l.b16 %v571
        %v715 = vunpack.c.h.b16 %v571
        %v716 = vunpack.c.l.b16 %v572
        %v717 = vunpack.c.l.b16 %v573
        %v718 = vunpack.c.h.b16 %v573
        %v719 = vunpack.c.l.b16 %v574
        %v720 = vpack.c.b16 %v675, %v672
        %v721 = vpack.c.b16 %v676, %v673
        %v722 = vpack.c.b16 %v677, %v674
        %v723 = vpack.c.b16 %v681, %v678
        %v724 = vpack.c.b16 %v682, %v679
        %v725 = vpack.c.b16 %v683, %v680
        %v726 = vpack.c.b16 %v687, %v684
        %v727 = vpack.c.b16 %v688, %v685
        %v728 = vpack.c.b16 %v689, %v686
        %v729 = vpack.c.b16 %v693, %v690
        %v730 = vpack.c.b16 %v694, %v691
        %v731 = vpack.c.b16 %v695, %v692
        %v732 = vpack.c.b16 %v699, %v696
        %v733 = vpack.c.b16 %v700, %v697
        %v734 = vpack.c.b16 %v701, %v698
        %v735 = vpack.c.b16 %v705, %v702
        %v736 = vpack.c.b16 %v706, %v703
        %v737 = vpack.c.b16 %v707, %v704
        %v738 = vpack.c.b16 %v711, %v708
        %v739 = vpack.c.b16 %v712, %v709
        %v740 = vpack.c.b16 %v713, %v710
        %v741 = vpack.c.b16 %v717, %v714
        %v742 = vpack.c.b16 %v718, %v715
        %v743 = vpack.c.b16 %v719, %v716
        %768 = vmatprep.subr.bf16.mxu0 %v742
        %769 = vmatpush1.bf16.msra.mxu0 %v741
        %770 = vmatprep.subr.bf16.mxu0 %v739
        %771 = vmatpush1.bf16.msra.mxu0 %v738
        %772 = vmatprep.subr.bf16.mxu0 %v736
        %773 = vmatpush1.bf16.msra.mxu0 %v735
        %774 = vmatprep.subr.bf16.mxu0 %v733
        %775 = vmatpush1.bf16.msra.mxu0 %v732
        %776 = vmatprep.subr.bf16.mxu0 %v730
        %777 = vmatpush1.bf16.msra.mxu0 %v729
        %778 = vmatprep.subr.bf16.mxu0 %v727
        %779 = vmatpush1.bf16.msra.mxu0 %v726
        %780 = vmatprep.subr.bf16.mxu0 %v724
        %781 = vmatpush1.bf16.msra.mxu0 %v723
        %782 = vmatprep.subr.bf16.mxu0 %v721
        %783 = vmatpush1.bf16.msra.mxu0 %v720
        %784 = vmatprep.subr.bf16.mxu0 0
        %785 = vmatpush2.bf16.msra.mxu0 0
        %786 = vmatprep.subr.bf16.mxu0 0
        %787 = vmatpush2.bf16.msra.mxu0 0
        %788 = vmatprep.subr.bf16.mxu0 0
        %789 = vmatpush2.bf16.msra.mxu0 0
        %790 = vmatprep.subr.bf16.mxu0 0
        %791 = vmatpush2.bf16.msra.mxu0 0
        %792 = vmatprep.subr.bf16.mxu0 0
        %793 = vmatpush2.bf16.msra.mxu0 0
        %794 = vmatprep.subr.bf16.mxu0 0
        %795 = vmatpush2.bf16.msra.mxu0 0
        %796 = vmatprep.subr.bf16.mxu0 0
        %797 = vmatpush2.bf16.msra.mxu0 0
        %798 = vmatprep.subr.bf16.mxu0 0
        %799 = vmatpush2.bf16.msra.mxu0 0
        %800 = vmatprep.mubr.bf16.mxu0 0
        %801 = vmatmul.mubr.bf16.gmra.mxu0 %v624
        %v802 = vpop.f32.mrf.mxu0
        %v803 = vadd.f32 %v580, %v802
        %v804 = vpop.f32.mrf.mxu0
        %v805 = vadd.f32 %v584, %v804
        %v806 = vpop.f32.mrf.mxu0
        %v807 = vadd.f32 %v580, %v806
        %v808 = vpop.f32.mrf.mxu0
        %v809 = vadd.f32 %v584, %v808
        %810 = vmatprep.mubr.bf16.mxu0 0
        %811 = vmatmul.mubr.bf16.gmra.mxu0 %v625
        %v812 = vpop.f32.mrf.mxu0
        %v813 = vadd.f32 %v580, %v812
        %v814 = vpop.f32.mrf.mxu0
        %v815 = vadd.f32 %v584, %v814
        %v816 = vpop.f32.mrf.mxu0
        %v817 = vadd.f32 %v580, %v816
        %v818 = vpop.f32.mrf.mxu0
        %v819 = vadd.f32 %v584, %v818
        %820 = vmatprep.mubr.bf16.mxu0 0
        %821 = vmatmul.mubr.bf16.gmra.mxu0 %v626
        %v822 = vpop.f32.mrf.mxu0
        %v823 = vadd.f32 %v580, %v822
        %v824 = vpop.f32.mrf.mxu0
        %v825 = vadd.f32 %v584, %v824
        %v826 = vpop.f32.mrf.mxu0
        %v827 = vadd.f32 %v580, %v826
        %v828 = vpop.f32.mrf.mxu0
        %v829 = vadd.f32 %v584, %v828
        %830 = vmatprep.mubr.bf16.mxu0 0
        %831 = vmatmul.mubr.bf16.gmra.mxu0 %v627
        %v832 = vpop.f32.mrf.mxu0
        %v833 = vadd.f32 %v580, %v832
        %v834 = vpop.f32.mrf.mxu0
        %v835 = vadd.f32 %v584, %v834
        %v836 = vpop.f32.mrf.mxu0
        %v837 = vadd.f32 %v580, %v836
        %v838 = vpop.f32.mrf.mxu0
        %v839 = vadd.f32 %v584, %v838
        %840 = vmatprep.mubr.bf16.mxu0 0
        %841 = vmatmul.mubr.bf16.gmra.mxu0 %v628
        %v842 = vpop.f32.mrf.mxu0
        %v843 = vadd.f32 %v580, %v842
        %v844 = vpop.f32.mrf.mxu0
        %v845 = vadd.f32 %v584, %v844
        %v846 = vpop.f32.mrf.mxu0
        %v847 = vadd.f32 %v580, %v846
        %v848 = vpop.f32.mrf.mxu0
        %v849 = vadd.f32 %v584, %v848
        %850 = vmatprep.mubr.bf16.mxu0 0
        %851 = vmatmul.mubr.bf16.gmra.mxu0 %v629
        %v852 = vpop.f32.mrf.mxu0
        %v853 = vadd.f32 %v580, %v852
        %v854 = vpop.f32.mrf.mxu0
        %v855 = vadd.f32 %v584, %v854
        %v856 = vpop.f32.mrf.mxu0
        %v857 = vadd.f32 %v580, %v856
        %v858 = vpop.f32.mrf.mxu0
        %v859 = vadd.f32 %v584, %v858
        %860 = vmatprep.mubr.bf16.mxu0 0
        %861 = vmatmul.mubr.bf16.gmra.mxu0 %v630
        %v862 = vpop.f32.mrf.mxu0
        %v863 = vadd.f32 %v580, %v862
        %v864 = vpop.f32.mrf.mxu0
        %v865 = vadd.f32 %v584, %v864
        %v866 = vpop.f32.mrf.mxu0
        %v867 = vadd.f32 %v580, %v866
        %v868 = vpop.f32.mrf.mxu0
        %v869 = vadd.f32 %v584, %v868
        %870 = vmatprep.mubr.bf16.mxu0 0
        %871 = vmatmul.mubr.bf16.gmra.mxu0 %v631
        %v872 = vpop.f32.mrf.mxu0
        %v873 = vadd.f32 %v580, %v872
        %v874 = vpop.f32.mrf.mxu0
        %v875 = vadd.f32 %v584, %v874
        %v876 = vpop.f32.mrf.mxu0
        %v877 = vadd.f32 %v580, %v876
        %v878 = vpop.f32.mrf.mxu0
        %v879 = vadd.f32 %v584, %v878
        %880 = vdwg.mxu0
        %881 = vmatprep.subr.bf16.mxu0 0
        %882 = vmatpush1.bf16.msra.mxu0 %v743
        %883 = vmatprep.subr.bf16.mxu0 0
        %884 = vmatpush1.bf16.msra.mxu0 %v740
        %885 = vmatprep.subr.bf16.mxu0 0
        %886 = vmatpush1.bf16.msra.mxu0 %v737
        %887 = vmatprep.subr.bf16.mxu0 0
        %888 = vmatpush1.bf16.msra.mxu0 %v734
        %889 = vmatprep.subr.bf16.mxu0 0
        %890 = vmatpush1.bf16.msra.mxu0 %v731
        %891 = vmatprep.subr.bf16.mxu0 0
        %892 = vmatpush1.bf16.msra.mxu0 %v728
        %893 = vmatprep.subr.bf16.mxu0 0
        %894 = vmatpush1.bf16.msra.mxu0 %v725
        %895 = vmatprep.subr.bf16.mxu0 0
        %896 = vmatpush1.bf16.msra.mxu0 %v722
        %897 = vmatprep.subr.bf16.mxu0 0
        %898 = vmatpush2.bf16.msra.mxu0 0
        %899 = vmatprep.subr.bf16.mxu0 0
        %900 = vmatpush2.bf16.msra.mxu0 0
        %901 = vmatprep.subr.bf16.mxu0 0
        %902 = vmatpush2.bf16.msra.mxu0 0
        %903 = vmatprep.subr.bf16.mxu0 0
        %904 = vmatpush2.bf16.msra.mxu0 0
        %905 = vmatprep.subr.bf16.mxu0 0
        %906 = vmatpush2.bf16.msra.mxu0 0
        %907 = vmatprep.subr.bf16.mxu0 0
        %908 = vmatpush2.bf16.msra.mxu0 0
        %909 = vmatprep.subr.bf16.mxu0 0
        %910 = vmatpush2.bf16.msra.mxu0 0
        %911 = vmatprep.subr.bf16.mxu0 0
        %912 = vmatpush2.bf16.msra.mxu0 0
        %913 = vmatprep.mubr.bf16.mxu0 0
        %914 = vmatmul.mubr.bf16.gmra.mxu0 %v624
        %v915 = vpop.f32.mrf.mxu0
        %v916 = vadd.f32 %v588, %v915
        %v917 = vpop.f32.mrf.mxu0
        %v918 = vpop.f32.mrf.mxu0
        %v919 = vadd.f32 %v588, %v918
        %v920 = vpop.f32.mrf.mxu0
        %921 = vmatprep.mubr.bf16.mxu0 0
        %922 = vmatmul.mubr.bf16.gmra.mxu0 %v625
        %v923 = vpop.f32.mrf.mxu0
        %v924 = vadd.f32 %v588, %v923
        %v925 = vpop.f32.mrf.mxu0
        %v926 = vpop.f32.mrf.mxu0
        %v927 = vadd.f32 %v588, %v926
        %v928 = vpop.f32.mrf.mxu0
        %929 = vmatprep.mubr.bf16.mxu0 0
        %930 = vmatmul.mubr.bf16.gmra.mxu0 %v626
        %v931 = vpop.f32.mrf.mxu0
        %v932 = vadd.f32 %v588, %v931
        %v933 = vpop.f32.mrf.mxu0
        %v934 = vpop.f32.mrf.mxu0
        %v935 = vadd.f32 %v588, %v934
        %v936 = vpop.f32.mrf.mxu0
        %937 = vmatprep.mubr.bf16.mxu0 0
        %938 = vmatmul.mubr.bf16.gmra.mxu0 %v627
        %v939 = vpop.f32.mrf.mxu0
        %v940 = vadd.f32 %v588, %v939
        %v941 = vpop.f32.mrf.mxu0
        %v942 = vpop.f32.mrf.mxu0
        %v943 = vadd.f32 %v588, %v942
        %v944 = vpop.f32.mrf.mxu0
        %945 = vmatprep.mubr.bf16.mxu0 0
        %946 = vmatmul.mubr.bf16.gmra.mxu0 %v628
        %v947 = vpop.f32.mrf.mxu0
        %v948 = vadd.f32 %v588, %v947
        %v949 = vpop.f32.mrf.mxu0
        %v950 = vpop.f32.mrf.mxu0
        %v951 = vadd.f32 %v588, %v950
        %v952 = vpop.f32.mrf.mxu0
        %953 = vmatprep.mubr.bf16.mxu0 0
        %954 = vmatmul.mubr.bf16.gmra.mxu0 %v629
        %v955 = vpop.f32.mrf.mxu0
        %v956 = vadd.f32 %v588, %v955
        %v957 = vpop.f32.mrf.mxu0
        %v958 = vpop.f32.mrf.mxu0
        %v959 = vadd.f32 %v588, %v958
        %v960 = vpop.f32.mrf.mxu0
        %961 = vmatprep.mubr.bf16.mxu0 0
        %962 = vmatmul.mubr.bf16.gmra.mxu0 %v630
        %v963 = vpop.f32.mrf.mxu0
        %v964 = vadd.f32 %v588, %v963
        %v965 = vpop.f32.mrf.mxu0
        %v966 = vpop.f32.mrf.mxu0
        %v967 = vadd.f32 %v588, %v966
        %v968 = vpop.f32.mrf.mxu0
        %969 = vmatprep.mubr.bf16.mxu0 0
        %970 = vmatmul.mubr.bf16.gmra.mxu0 %v631
        %v971 = vpop.f32.mrf.mxu0
        %v972 = vadd.f32 %v588, %v971
        %v973 = vpop.f32.mrf.mxu0
        %v974 = vpop.f32.mrf.mxu0
        %v975 = vadd.f32 %v588, %v974
        %v976 = vpop.f32.mrf.mxu0
        %977 = vdwg.mxu0
        %v978 = vld [vmem:[%s504] sm:$0x1]
        %v979 = vpack.c.bf16 %v807, %v803
        %v980 = vpack.c.bf16 %v817, %v813
        %v981 = vpack.c.bf16 %v827, %v823
        %v982 = vpack.c.bf16 %v837, %v833
        %v983 = vpack.c.bf16 %v847, %v843
        %v984 = vpack.c.bf16 %v857, %v853
        %v985 = vpack.c.bf16 %v867, %v863
        %v986 = vpack.c.bf16 %v877, %v873
        %v987 = vpack.c.bf16 %v809, %v805
        %v988 = vpack.c.bf16 %v819, %v815
        %v989 = vpack.c.bf16 %v829, %v825
        %v990 = vpack.c.bf16 %v839, %v835
        %v991 = vpack.c.bf16 %v849, %v845
        %v992 = vpack.c.bf16 %v859, %v855
        %v993 = vpack.c.bf16 %v869, %v865
        %v994 = vpack.c.bf16 %v879, %v875
        %v995 = vpack.c.bf16 %v919, %v916
        %v996 = vpack.c.bf16 %v927, %v924
        %v997 = vpack.c.bf16 %v935, %v932
        %v998 = vpack.c.bf16 %v943, %v940
        %v999 = vpack.c.bf16 %v951, %v948
        %v1000 = vpack.c.bf16 %v959, %v956
        %v1001 = vpack.c.bf16 %v967, %v964
        %v1002 = vpack.c.bf16 %v975, %v972
        %v1004 = vlaneseq
        %v1005 = vshrl.u32 %v1004, 7
        %v1006 = vsub.s32 0, %v1005
        %v1007 = vrot.slane %v978, %v1006
        %vm1009 = vcmask 261120
        %v1011 = vsel %vm1009, %v979, 0
        %v1014 = vsel %vm1009, %v980, 0
        %v1017 = vsel %vm1009, %v981, 0
        %v1020 = vsel %vm1009, %v982, 0
        %v1023 = vsel %vm1009, %v983, 0
        %v1026 = vsel %vm1009, %v984, 0
        %v1029 = vsel %vm1009, %v985, 0
        %v1032 = vsel %vm1009, %v986, 0
        %v1035 = vsel %vm1009, %v987, 0
        %v1038 = vsel %vm1009, %v988, 0
        %v1041 = vsel %vm1009, %v989, 0
        %v1044 = vsel %vm1009, %v990, 0
        %v1047 = vsel %vm1009, %v991, 0
        %v1050 = vsel %vm1009, %v992, 0
        %v1053 = vsel %vm1009, %v993, 0
        %v1056 = vsel %vm1009, %v994, 0
        %1058 = vmatprep.subr.bf16.mxu0 0
        %1059 = vmatpush1.bf16.xpose.msra.mxu0 %v1056
        %1060 = vmatprep.subr.bf16.mxu0 0
        %1061 = vmatpush1.bf16.xpose.msra.mxu0 %v1053
        %1062 = vmatprep.subr.bf16.mxu0 0
        %1063 = vmatpush1.bf16.xpose.msra.mxu0 %v1050
        %1064 = vmatprep.subr.bf16.mxu0 0
        %1065 = vmatpush1.bf16.xpose.msra.mxu0 %v1047
        %1066 = vmatprep.subr.bf16.mxu0 0
        %1067 = vmatpush1.bf16.xpose.msra.mxu0 %v1044
        %1068 = vmatprep.subr.bf16.mxu0 0
        %1069 = vmatpush1.bf16.xpose.msra.mxu0 %v1041
        %1070 = vmatprep.subr.bf16.mxu0 0
        %1071 = vmatpush1.bf16.xpose.msra.mxu0 %v1038
        %1072 = vmatprep.subr.bf16.mxu0 0
        %1073 = vmatpush1.bf16.xpose.msra.mxu0 %v1035
        %1074 = vmatprep.subr.bf16.mxu0 0
        %1075 = vmatpush2.bf16.xpose.msra.mxu0 0
        %1076 = vmatprep.subr.bf16.mxu0 0
        %1077 = vmatpush2.bf16.xpose.msra.mxu0 0
        %1078 = vmatprep.subr.bf16.mxu0 0
        %1079 = vmatpush2.bf16.xpose.msra.mxu0 0
        %1080 = vmatprep.subr.bf16.mxu0 0
        %1081 = vmatpush2.bf16.xpose.msra.mxu0 0
        %1082 = vmatprep.subr.bf16.mxu0 0
        %1083 = vmatpush2.bf16.xpose.msra.mxu0 0
        %1084 = vmatprep.subr.bf16.mxu0 0
        %1085 = vmatpush2.bf16.xpose.msra.mxu0 0
        %1086 = vmatprep.subr.bf16.mxu0 0
        %1087 = vmatpush2.bf16.xpose.msra.mxu0 0
        %1088 = vmatprep.subr.bf16.mxu0 0
        %1089 = vmatpush2.bf16.xpose.msra.mxu0 0
        %1090 = vmatprep.mubr.bf16.mxu0 0
        %1091 = vmatmul.mubr.bf16.gmra.mxu0 %v1011
        %v1092 = vpop.f32.mrf.mxu0
        %v1093 = vadd.f32 %v1007, %v1092
        %v1094 = vpop.f32.mrf.mxu0
        %v1095 = vpop.f32.mrf.mxu0
        %v1096 = vadd.f32 %v1007, %v1095
        %v1097 = vpop.f32.mrf.mxu0
        %1098 = vmatprep.mubr.bf16.mxu0 0
        %1099 = vmatmul.mubr.bf16.gmra.mxu0 %v1014
        %v1100 = vpop.f32.mrf.mxu0
        %v1101 = vadd.f32 %v1007, %v1100
        %v1102 = vpop.f32.mrf.mxu0
        %v1103 = vpop.f32.mrf.mxu0
        %v1104 = vadd.f32 %v1007, %v1103
        %v1105 = vpop.f32.mrf.mxu0
        %1106 = vmatprep.mubr.bf16.mxu0 0
        %1107 = vmatmul.mubr.bf16.gmra.mxu0 %v1017
        %v1108 = vpop.f32.mrf.mxu0
        %v1109 = vadd.f32 %v1007, %v1108
        %v1110 = vpop.f32.mrf.mxu0
        %v1111 = vpop.f32.mrf.mxu0
        %v1112 = vadd.f32 %v1007, %v1111
        %v1113 = vpop.f32.mrf.mxu0
        %1114 = vmatprep.mubr.bf16.mxu0 0
        %1115 = vmatmul.mubr.bf16.gmra.mxu0 %v1020
        %v1116 = vpop.f32.mrf.mxu0
        %v1117 = vadd.f32 %v1007, %v1116
        %v1118 = vpop.f32.mrf.mxu0
        %v1119 = vpop.f32.mrf.mxu0
        %v1120 = vadd.f32 %v1007, %v1119
        %v1121 = vpop.f32.mrf.mxu0
        %1122 = vmatprep.mubr.bf16.mxu0 0
        %1123 = vmatmul.mubr.bf16.gmra.mxu0 %v1023
        %v1124 = vpop.f32.mrf.mxu0
        %v1125 = vadd.f32 %v1007, %v1124
        %v1126 = vpop.f32.mrf.mxu0
        %v1127 = vpop.f32.mrf.mxu0
        %v1128 = vadd.f32 %v1007, %v1127
        %v1129 = vpop.f32.mrf.mxu0
        %1130 = vmatprep.mubr.bf16.mxu0 0
        %1131 = vmatmul.mubr.bf16.gmra.mxu0 %v1026
        %v1132 = vpop.f32.mrf.mxu0
        %v1133 = vadd.f32 %v1007, %v1132
        %v1134 = vpop.f32.mrf.mxu0
        %v1135 = vpop.f32.mrf.mxu0
        %v1136 = vadd.f32 %v1007, %v1135
        %v1137 = vpop.f32.mrf.mxu0
        %1138 = vmatprep.mubr.bf16.mxu0 0
        %1139 = vmatmul.mubr.bf16.gmra.mxu0 %v1029
        %v1140 = vpop.f32.mrf.mxu0
        %v1141 = vadd.f32 %v1007, %v1140
        %v1142 = vpop.f32.mrf.mxu0
        %v1143 = vpop.f32.mrf.mxu0
        %v1144 = vadd.f32 %v1007, %v1143
        %v1145 = vpop.f32.mrf.mxu0
        %1146 = vmatprep.mubr.bf16.mxu0 0
        %1147 = vmatmul.mubr.bf16.gmra.mxu0 %v1032
        %v1148 = vpop.f32.mrf.mxu0
        %v1149 = vadd.f32 %v1007, %v1148
        %v1150 = vpop.f32.mrf.mxu0
        %v1151 = vpop.f32.mrf.mxu0
        %v1152 = vadd.f32 %v1007, %v1151
        %v1153 = vpop.f32.mrf.mxu0
        %1154 = vdwg.mxu0
        %1155 = vmax.xlane.f32.xlu0 %v1093
        %v1156 = vpop.xlane.xlu0 %1155
        %1157 = vmax.xlane.f32.xlu0 %v1096
        %v1158 = vpop.xlane.xlu0 %1157
        %1159 = vmax.xlane.f32.xlu0 %v1101
        %v1160 = vpop.xlane.xlu0 %1159
        %1161 = vmax.xlane.f32.xlu0 %v1104
        %v1162 = vpop.xlane.xlu0 %1161
        %1163 = vmax.xlane.f32.xlu0 %v1109
        %v1164 = vpop.xlane.xlu0 %1163
        %1165 = vmax.xlane.f32.xlu0 %v1112
        %v1166 = vpop.xlane.xlu0 %1165
        %1167 = vmax.xlane.f32.xlu0 %v1117
        %v1168 = vpop.xlane.xlu0 %1167
        %1169 = vmax.xlane.f32.xlu0 %v1120
        %v1170 = vpop.xlane.xlu0 %1169
        %1171 = vmax.xlane.f32.xlu0 %v1125
        %v1172 = vpop.xlane.xlu0 %1171
        %1173 = vmax.xlane.f32.xlu0 %v1128
        %v1174 = vpop.xlane.xlu0 %1173
        %1175 = vmax.xlane.f32.xlu0 %v1133
        %v1176 = vpop.xlane.xlu0 %1175
        %1177 = vmax.xlane.f32.xlu0 %v1136
        %v1178 = vpop.xlane.xlu0 %1177
        %1179 = vmax.xlane.f32.xlu0 %v1141
        %v1180 = vpop.xlane.xlu0 %1179
        %1181 = vmax.xlane.f32.xlu0 %v1144
        %v1182 = vpop.xlane.xlu0 %1181
        %1183 = vmax.xlane.f32.xlu0 %v1149
        %v1184 = vpop.xlane.xlu0 %1183
        %1185 = vmax.xlane.f32.xlu0 %v1152
        %v1186 = vpop.xlane.xlu0 %1185
        %v1187 = vsub.f32 %v1093, %v1156
        %v1188 = vsub.f32 %v1096, %v1158
        %v1189 = vsub.f32 %v1101, %v1160
        %v1190 = vsub.f32 %v1104, %v1162
        %v1191 = vsub.f32 %v1109, %v1164
        %v1192 = vsub.f32 %v1112, %v1166
        %v1193 = vsub.f32 %v1117, %v1168
        %v1194 = vsub.f32 %v1120, %v1170
        %v1195 = vsub.f32 %v1125, %v1172
        %v1196 = vsub.f32 %v1128, %v1174
        %v1197 = vsub.f32 %v1133, %v1176
        %v1198 = vsub.f32 %v1136, %v1178
        %v1199 = vsub.f32 %v1141, %v1180
        %v1200 = vsub.f32 %v1144, %v1182
        %v1201 = vsub.f32 %v1149, %v1184
        %v1202 = vsub.f32 %v1152, %v1186
        %v1203 = vmul.f32 %v1187, 1.442695
        %v1204 = vpow.pop %v1203
        %v1205 = vmul.f32 %v1188, 1.442695
        %v1206 = vpow.pop %v1205
        %v1207 = vmul.f32 %v1189, 1.442695
        %v1208 = vpow.pop %v1207
        %v1209 = vmul.f32 %v1190, 1.442695
        %v1210 = vpow.pop %v1209
        %v1211 = vmul.f32 %v1191, 1.442695
        %v1212 = vpow.pop %v1211
        %v1213 = vmul.f32 %v1192, 1.442695
        %v1214 = vpow.pop %v1213
        %v1215 = vmul.f32 %v1193, 1.442695
        %v1216 = vpow.pop %v1215
        %v1217 = vmul.f32 %v1194, 1.442695
        %v1218 = vpow.pop %v1217
        %v1219 = vmul.f32 %v1195, 1.442695
        %v1220 = vpow.pop %v1219
        %v1221 = vmul.f32 %v1196, 1.442695
        %v1222 = vpow.pop %v1221
        %v1223 = vmul.f32 %v1197, 1.442695
        %v1224 = vpow.pop %v1223
        %v1225 = vmul.f32 %v1198, 1.442695
        %v1226 = vpow.pop %v1225
        %v1227 = vmul.f32 %v1199, 1.442695
        %v1228 = vpow.pop %v1227
        %v1229 = vmul.f32 %v1200, 1.442695
        %v1230 = vpow.pop %v1229
        %v1231 = vmul.f32 %v1201, 1.442695
        %v1232 = vpow.pop %v1231
        %v1233 = vmul.f32 %v1202, 1.442695
        %v1234 = vpow.pop %v1233
        %1235 = vadd.xlane.f32.xlu0 %v1204
        %v1236 = vpop.xlane.xlu0 %1235
        %1237 = vadd.xlane.f32.xlu0 %v1206
        %v1238 = vpop.xlane.xlu0 %1237
        %1239 = vadd.xlane.f32.xlu0 %v1208
        %v1240 = vpop.xlane.xlu0 %1239
        %1241 = vadd.xlane.f32.xlu0 %v1210
        %v1242 = vpop.xlane.xlu0 %1241
        %1243 = vadd.xlane.f32.xlu0 %v1212
        %v1244 = vpop.xlane.xlu0 %1243
        %1245 = vadd.xlane.f32.xlu0 %v1214
        %v1246 = vpop.xlane.xlu0 %1245
        %1247 = vadd.xlane.f32.xlu0 %v1216
        %v1248 = vpop.xlane.xlu0 %1247
        %1249 = vadd.xlane.f32.xlu0 %v1218
        %v1250 = vpop.xlane.xlu0 %1249
        %1251 = vadd.xlane.f32.xlu0 %v1220
        %v1252 = vpop.xlane.xlu0 %1251
        %1253 = vadd.xlane.f32.xlu0 %v1222
        %v1254 = vpop.xlane.xlu0 %1253
        %1255 = vadd.xlane.f32.xlu0 %v1224
        %v1256 = vpop.xlane.xlu0 %1255
        %1257 = vadd.xlane.f32.xlu0 %v1226
        %v1258 = vpop.xlane.xlu0 %1257
        %1259 = vadd.xlane.f32.xlu0 %v1228
        %v1260 = vpop.xlane.xlu0 %1259
        %1261 = vadd.xlane.f32.xlu0 %v1230
        %v1262 = vpop.xlane.xlu0 %1261
        %1263 = vadd.xlane.f32.xlu0 %v1232
        %v1264 = vpop.xlane.xlu0 %1263
        %1265 = vadd.xlane.f32.xlu0 %v1234
        %v1266 = vpop.xlane.xlu0 %1265
        %v1267 = vrcp.pop %v1236
        %v1268 = vrcp.pop %v1238
        %v1269 = vrcp.pop %v1240
        %v1270 = vrcp.pop %v1242
        %v1271 = vrcp.pop %v1244
        %v1272 = vrcp.pop %v1246
        %v1273 = vrcp.pop %v1248
        %v1274 = vrcp.pop %v1250
        %v1275 = vrcp.pop %v1252
        %v1276 = vrcp.pop %v1254
        %v1277 = vrcp.pop %v1256
        %v1278 = vrcp.pop %v1258
        %v1279 = vrcp.pop %v1260
        %v1280 = vrcp.pop %v1262
        %v1281 = vrcp.pop %v1264
        %v1282 = vrcp.pop %v1266
        %v1283 = vmul.f32 %v1204, %v1267
        %v1284 = vmul.f32 %v1206, %v1268
        %v1285 = vmul.f32 %v1208, %v1269
        %v1286 = vmul.f32 %v1210, %v1270
        %v1287 = vmul.f32 %v1212, %v1271
        %v1288 = vmul.f32 %v1214, %v1272
        %v1289 = vmul.f32 %v1216, %v1273
        %v1290 = vmul.f32 %v1218, %v1274
        %v1291 = vmul.f32 %v1220, %v1275
        %v1292 = vmul.f32 %v1222, %v1276
        %v1293 = vmul.f32 %v1224, %v1277
        %v1294 = vmul.f32 %v1226, %v1278
        %v1295 = vmul.f32 %v1228, %v1279
        %v1296 = vmul.f32 %v1230, %v1280
        %v1297 = vmul.f32 %v1232, %v1281
        %v1298 = vmul.f32 %v1234, %v1282
        %v1299 = vpack.c.bf16 %v1284, %v1283
        %v1300 = vpack.c.bf16 %v1286, %v1285
        %v1301 = vpack.c.bf16 %v1288, %v1287
        %v1302 = vpack.c.bf16 %v1290, %v1289
        %v1303 = vpack.c.bf16 %v1292, %v1291
        %v1304 = vpack.c.bf16 %v1294, %v1293
        %v1305 = vpack.c.bf16 %v1296, %v1295
        %v1306 = vpack.c.bf16 %v1298, %v1297
        %1307 = vmatprep.subr.bf16.mxu0 0
        %1308 = vmatpush1.bf16.msra.mxu0 %v1002
        %1309 = vmatprep.subr.bf16.mxu0 0
        %1310 = vmatpush1.bf16.msra.mxu0 %v1001
        %1311 = vmatprep.subr.bf16.mxu0 0
        %1312 = vmatpush1.bf16.msra.mxu0 %v1000
        %1313 = vmatprep.subr.bf16.mxu0 0
        %1314 = vmatpush1.bf16.msra.mxu0 %v999
        %1315 = vmatprep.subr.bf16.mxu0 0
        %1316 = vmatpush1.bf16.msra.mxu0 %v998
        %1317 = vmatprep.subr.bf16.mxu0 0
        %1318 = vmatpush1.bf16.msra.mxu0 %v997
        %1319 = vmatprep.subr.bf16.mxu0 0
        %1320 = vmatpush1.bf16.msra.mxu0 %v996
        %1321 = vmatprep.subr.bf16.mxu0 0
        %1322 = vmatpush1.bf16.msra.mxu0 %v995
        %1323 = vmatprep.subr.bf16.mxu0 0
        %1324 = vmatpush2.bf16.msra.mxu0 0
        %1325 = vmatprep.subr.bf16.mxu0 0
        %1326 = vmatpush2.bf16.msra.mxu0 0
        %1327 = vmatprep.subr.bf16.mxu0 0
        %1328 = vmatpush2.bf16.msra.mxu0 0
        %1329 = vmatprep.subr.bf16.mxu0 0
        %1330 = vmatpush2.bf16.msra.mxu0 0
        %1331 = vmatprep.subr.bf16.mxu0 0
        %1332 = vmatpush2.bf16.msra.mxu0 0
        %1333 = vmatprep.subr.bf16.mxu0 0
        %1334 = vmatpush2.bf16.msra.mxu0 0
        %1335 = vmatprep.subr.bf16.mxu0 0
        %1336 = vmatpush2.bf16.msra.mxu0 0
        %1337 = vmatprep.subr.bf16.mxu0 0
        %1338 = vmatpush2.bf16.msra.mxu0 0
        %1339 = vmatprep.mubr.bf16.mxu0 0
        %1340 = vmatmul.mubr.bf16.gmra.mxu0 %v1299
        %v1341 = vpop.f32.mrf.mxu0
        %v1342 = vadd.f32 0.0, %v1341
        %v1343 = vpop.f32.mrf.mxu0
        %v1344 = vpop.f32.mrf.mxu0
        %v1345 = vadd.f32 0.0, %v1344
        %v1346 = vpop.f32.mrf.mxu0
        %1347 = vmatprep.mubr.bf16.mxu0 0
        %1348 = vmatmul.mubr.bf16.gmra.mxu0 %v1300
        %v1349 = vpop.f32.mrf.mxu0
        %v1350 = vadd.f32 0.0, %v1349
        %v1351 = vpop.f32.mrf.mxu0
        %v1352 = vpop.f32.mrf.mxu0
        %v1353 = vadd.f32 0.0, %v1352
        %v1354 = vpop.f32.mrf.mxu0
        %1355 = vmatprep.mubr.bf16.mxu0 0
        %1356 = vmatmul.mubr.bf16.gmra.mxu0 %v1301
        %v1357 = vpop.f32.mrf.mxu0
        %v1358 = vadd.f32 0.0, %v1357
        %v1359 = vpop.f32.mrf.mxu0
        %v1360 = vpop.f32.mrf.mxu0
        %v1361 = vadd.f32 0.0, %v1360
        %v1362 = vpop.f32.mrf.mxu0
        %1363 = vmatprep.mubr.bf16.mxu0 0
        %1364 = vmatmul.mubr.bf16.gmra.mxu0 %v1302
        %v1365 = vpop.f32.mrf.mxu0
        %v1366 = vadd.f32 0.0, %v1365
        %v1367 = vpop.f32.mrf.mxu0
        %v1368 = vpop.f32.mrf.mxu0
        %v1369 = vadd.f32 0.0, %v1368
        %v1370 = vpop.f32.mrf.mxu0
        %1371 = vmatprep.mubr.bf16.mxu0 0
        %1372 = vmatmul.mubr.bf16.gmra.mxu0 %v1303
        %v1373 = vpop.f32.mrf.mxu0
        %v1374 = vadd.f32 0.0, %v1373
        %v1375 = vpop.f32.mrf.mxu0
        %v1376 = vpop.f32.mrf.mxu0
        %v1377 = vadd.f32 0.0, %v1376
        %v1378 = vpop.f32.mrf.mxu0
        %1379 = vmatprep.mubr.bf16.mxu0 0
        %1380 = vmatmul.mubr.bf16.gmra.mxu0 %v1304
        %v1381 = vpop.f32.mrf.mxu0
        %v1382 = vadd.f32 0.0, %v1381
        %v1383 = vpop.f32.mrf.mxu0
        %v1384 = vpop.f32.mrf.mxu0
        %v1385 = vadd.f32 0.0, %v1384
        %v1386 = vpop.f32.mrf.mxu0
        %1387 = vmatprep.mubr.bf16.mxu0 0
        %1388 = vmatmul.mubr.bf16.gmra.mxu0 %v1305
        %v1389 = vpop.f32.mrf.mxu0
        %v1390 = vadd.f32 0.0, %v1389
        %v1391 = vpop.f32.mrf.mxu0
        %v1392 = vpop.f32.mrf.mxu0
        %v1393 = vadd.f32 0.0, %v1392
        %v1394 = vpop.f32.mrf.mxu0
        %1395 = vmatprep.mubr.bf16.mxu0 0
        %1396 = vmatmul.mubr.bf16.gmra.mxu0 %v1306
        %v1397 = vpop.f32.mrf.mxu0
        %v1398 = vadd.f32 0.0, %v1397
        %v1399 = vpop.f32.mrf.mxu0
        %v1400 = vpop.f32.mrf.mxu0
        %v1401 = vadd.f32 0.0, %v1400
        %v1402 = vpop.f32.mrf.mxu0
        %1403 = vdwg.mxu0
        %1412 = vrot.lane.b32.xlu0 %v979, 96
        %v1413 = vpop.permute.xlu0 %1412
        %1414 = vrot.lane.b32.xlu0 %v980, 96
        %v1415 = vpop.permute.xlu0 %1414
        %1416 = vrot.lane.b32.xlu0 %v981, 96
        %v1417 = vpop.permute.xlu0 %1416
        %1418 = vrot.lane.b32.xlu0 %v982, 96
        %v1419 = vpop.permute.xlu0 %1418
        %1420 = vrot.lane.b32.xlu0 %v983, 96
        %v1421 = vpop.permute.xlu0 %1420
        %1422 = vrot.lane.b32.xlu0 %v984, 96
        %v1423 = vpop.permute.xlu0 %1422
        %1424 = vrot.lane.b32.xlu0 %v985, 96
        %v1425 = vpop.permute.xlu0 %1424
        %1426 = vrot.lane.b32.xlu0 %v986, 96
        %v1427 = vpop.permute.xlu0 %1426
        %1436 = vrot.lane.b32.xlu0 %v987, 96
        %v1437 = vpop.permute.xlu0 %1436
        %1438 = vrot.lane.b32.xlu0 %v988, 96
        %v1439 = vpop.permute.xlu0 %1438
        %1440 = vrot.lane.b32.xlu0 %v989, 96
        %v1441 = vpop.permute.xlu0 %1440
        %1442 = vrot.lane.b32.xlu0 %v990, 96
        %v1443 = vpop.permute.xlu0 %1442
        %1444 = vrot.lane.b32.xlu0 %v991, 96
        %v1445 = vpop.permute.xlu0 %1444
        %1446 = vrot.lane.b32.xlu0 %v992, 96
        %v1447 = vpop.permute.xlu0 %1446
        %1448 = vrot.lane.b32.xlu0 %v993, 96
        %v1449 = vpop.permute.xlu0 %1448
        %1450 = vrot.lane.b32.xlu0 %v994, 96
        %v1451 = vpop.permute.xlu0 %1450
        %v1453 = vsel %vm1009, %v1413, 0
        %v1456 = vsel %vm1009, %v1415, 0
        %v1459 = vsel %vm1009, %v1417, 0
        %v1462 = vsel %vm1009, %v1419, 0
        %v1465 = vsel %vm1009, %v1421, 0
        %v1468 = vsel %vm1009, %v1423, 0
        %v1471 = vsel %vm1009, %v1425, 0
        %v1474 = vsel %vm1009, %v1427, 0
        %v1477 = vsel %vm1009, %v1437, 0
        %v1480 = vsel %vm1009, %v1439, 0
        %v1483 = vsel %vm1009, %v1441, 0
        %v1486 = vsel %vm1009, %v1443, 0
        %v1489 = vsel %vm1009, %v1445, 0
        %v1492 = vsel %vm1009, %v1447, 0
        %v1495 = vsel %vm1009, %v1449, 0
        %v1498 = vsel %vm1009, %v1451, 0
        %1500 = vmatprep.subr.bf16.mxu0 0
        %1501 = vmatpush1.bf16.xpose.msra.mxu0 %v1498
        %1502 = vmatprep.subr.bf16.mxu0 0
        %1503 = vmatpush1.bf16.xpose.msra.mxu0 %v1495
        %1504 = vmatprep.subr.bf16.mxu0 0
        %1505 = vmatpush1.bf16.xpose.msra.mxu0 %v1492
        %1506 = vmatprep.subr.bf16.mxu0 0
        %1507 = vmatpush1.bf16.xpose.msra.mxu0 %v1489
        %1508 = vmatprep.subr.bf16.mxu0 0
        %1509 = vmatpush1.bf16.xpose.msra.mxu0 %v1486
        %1510 = vmatprep.subr.bf16.mxu0 0
        %1511 = vmatpush1.bf16.xpose.msra.mxu0 %v1483
        %1512 = vmatprep.subr.bf16.mxu0 0
        %1513 = vmatpush1.bf16.xpose.msra.mxu0 %v1480
        %1514 = vmatprep.subr.bf16.mxu0 0
        %1515 = vmatpush1.bf16.xpose.msra.mxu0 %v1477
        %1516 = vmatprep.subr.bf16.mxu0 0
        %1517 = vmatpush2.bf16.xpose.msra.mxu0 0
        %1518 = vmatprep.subr.bf16.mxu0 0
        %1519 = vmatpush2.bf16.xpose.msra.mxu0 0
        %1520 = vmatprep.subr.bf16.mxu0 0
        %1521 = vmatpush2.bf16.xpose.msra.mxu0 0
        %1522 = vmatprep.subr.bf16.mxu0 0
        %1523 = vmatpush2.bf16.xpose.msra.mxu0 0
        %1524 = vmatprep.subr.bf16.mxu0 0
        %1525 = vmatpush2.bf16.xpose.msra.mxu0 0
        %1526 = vmatprep.subr.bf16.mxu0 0
        %1527 = vmatpush2.bf16.xpose.msra.mxu0 0
        %1528 = vmatprep.subr.bf16.mxu0 0
        %1529 = vmatpush2.bf16.xpose.msra.mxu0 0
        %1530 = vmatprep.subr.bf16.mxu0 0
        %1531 = vmatpush2.bf16.xpose.msra.mxu0 0
        %1532 = vmatprep.mubr.bf16.mxu0 0
        %1533 = vmatmul.mubr.bf16.gmra.mxu0 %v1453
        %v1534 = vpop.f32.mrf.mxu0
        %v1535 = vadd.f32 %v1007, %v1534
        %v1536 = vpop.f32.mrf.mxu0
        %v1537 = vpop.f32.mrf.mxu0
        %v1538 = vadd.f32 %v1007, %v1537
        %v1539 = vpop.f32.mrf.mxu0
        %1540 = vmatprep.mubr.bf16.mxu0 0
        %1541 = vmatmul.mubr.bf16.gmra.mxu0 %v1456
        %v1542 = vpop.f32.mrf.mxu0
        %v1543 = vadd.f32 %v1007, %v1542
        %v1544 = vpop.f32.mrf.mxu0
        %v1545 = vpop.f32.mrf.mxu0
        %v1546 = vadd.f32 %v1007, %v1545
        %v1547 = vpop.f32.mrf.mxu0
        %1548 = vmatprep.mubr.bf16.mxu0 0
        %1549 = vmatmul.mubr.bf16.gmra.mxu0 %v1459
        %v1550 = vpop.f32.mrf.mxu0
        %v1551 = vadd.f32 %v1007, %v1550
        %v1552 = vpop.f32.mrf.mxu0
        %v1553 = vpop.f32.mrf.mxu0
        %v1554 = vadd.f32 %v1007, %v1553
        %v1555 = vpop.f32.mrf.mxu0
        %1556 = vmatprep.mubr.bf16.mxu0 0
        %1557 = vmatmul.mubr.bf16.gmra.mxu0 %v1462
        %v1558 = vpop.f32.mrf.mxu0
        %v1559 = vadd.f32 %v1007, %v1558
        %v1560 = vpop.f32.mrf.mxu0
        %v1561 = vpop.f32.mrf.mxu0
        %v1562 = vadd.f32 %v1007, %v1561
        %v1563 = vpop.f32.mrf.mxu0
        %1564 = vmatprep.mubr.bf16.mxu0 0
        %1565 = vmatmul.mubr.bf16.gmra.mxu0 %v1465
        %v1566 = vpop.f32.mrf.mxu0
        %v1567 = vadd.f32 %v1007, %v1566
        %v1568 = vpop.f32.mrf.mxu0
        %v1569 = vpop.f32.mrf.mxu0
        %v1570 = vadd.f32 %v1007, %v1569
        %v1571 = vpop.f32.mrf.mxu0
        %1572 = vmatprep.mubr.bf16.mxu0 0
        %1573 = vmatmul.mubr.bf16.gmra.mxu0 %v1468
        %v1574 = vpop.f32.mrf.mxu0
        %v1575 = vadd.f32 %v1007, %v1574
        %v1576 = vpop.f32.mrf.mxu0
        %v1577 = vpop.f32.mrf.mxu0
        %v1578 = vadd.f32 %v1007, %v1577
        %v1579 = vpop.f32.mrf.mxu0
        %1580 = vmatprep.mubr.bf16.mxu0 0
        %1581 = vmatmul.mubr.bf16.gmra.mxu0 %v1471
        %v1582 = vpop.f32.mrf.mxu0
        %v1583 = vadd.f32 %v1007, %v1582
        %v1584 = vpop.f32.mrf.mxu0
        %v1585 = vpop.f32.mrf.mxu0
        %v1586 = vadd.f32 %v1007, %v1585
        %v1587 = vpop.f32.mrf.mxu0
        %1588 = vmatprep.mubr.bf16.mxu0 0
        %1589 = vmatmul.mubr.bf16.gmra.mxu0 %v1474
        %v1590 = vpop.f32.mrf.mxu0
        %v1591 = vadd.f32 %v1007, %v1590
        %v1592 = vpop.f32.mrf.mxu0
        %v1593 = vpop.f32.mrf.mxu0
        %v1594 = vadd.f32 %v1007, %v1593
        %v1595 = vpop.f32.mrf.mxu0
        %1596 = vdwg.mxu0
        %1597 = vmax.xlane.f32.xlu0 %v1535
        %v1598 = vpop.xlane.xlu0 %1597
        %1599 = vmax.xlane.f32.xlu0 %v1538
        %v1600 = vpop.xlane.xlu0 %1599
        %1601 = vmax.xlane.f32.xlu0 %v1543
        %v1602 = vpop.xlane.xlu0 %1601
        %1603 = vmax.xlane.f32.xlu0 %v1546
        %v1604 = vpop.xlane.xlu0 %1603
        %1605 = vmax.xlane.f32.xlu0 %v1551
        %v1606 = vpop.xlane.xlu0 %1605
        %1607 = vmax.xlane.f32.xlu0 %v1554
        %v1608 = vpop.xlane.xlu0 %1607
        %1609 = vmax.xlane.f32.xlu0 %v1559
        %v1610 = vpop.xlane.xlu0 %1609
        %1611 = vmax.xlane.f32.xlu0 %v1562
        %v1612 = vpop.xlane.xlu0 %1611
        %1613 = vmax.xlane.f32.xlu0 %v1567
        %v1614 = vpop.xlane.xlu0 %1613
        %1615 = vmax.xlane.f32.xlu0 %v1570
        %v1616 = vpop.xlane.xlu0 %1615
        %1617 = vmax.xlane.f32.xlu0 %v1575
        %v1618 = vpop.xlane.xlu0 %1617
        %1619 = vmax.xlane.f32.xlu0 %v1578
        %v1620 = vpop.xlane.xlu0 %1619
        %1621 = vmax.xlane.f32.xlu0 %v1583
        %v1622 = vpop.xlane.xlu0 %1621
        %1623 = vmax.xlane.f32.xlu0 %v1586
        %v1624 = vpop.xlane.xlu0 %1623
        %1625 = vmax.xlane.f32.xlu0 %v1591
        %v1626 = vpop.xlane.xlu0 %1625
        %1627 = vmax.xlane.f32.xlu0 %v1594
        %v1628 = vpop.xlane.xlu0 %1627
        %v1629 = vsub.f32 %v1535, %v1598
        %v1630 = vsub.f32 %v1538, %v1600
        %v1631 = vsub.f32 %v1543, %v1602
        %v1632 = vsub.f32 %v1546, %v1604
        %v1633 = vsub.f32 %v1551, %v1606
        %v1634 = vsub.f32 %v1554, %v1608
        %v1635 = vsub.f32 %v1559, %v1610
        %v1636 = vsub.f32 %v1562, %v1612
        %v1637 = vsub.f32 %v1567, %v1614
        %v1638 = vsub.f32 %v1570, %v1616
        %v1639 = vsub.f32 %v1575, %v1618
        %v1640 = vsub.f32 %v1578, %v1620
        %v1641 = vsub.f32 %v1583, %v1622
        %v1642 = vsub.f32 %v1586, %v1624
        %v1643 = vsub.f32 %v1591, %v1626
        %v1644 = vsub.f32 %v1594, %v1628
        %v1645 = vmul.f32 %v1629, 1.442695
        %v1646 = vpow.pop %v1645
        %v1647 = vmul.f32 %v1630, 1.442695
        %v1648 = vpow.pop %v1647
        %v1649 = vmul.f32 %v1631, 1.442695
        %v1650 = vpow.pop %v1649
        %v1651 = vmul.f32 %v1632, 1.442695
        %v1652 = vpow.pop %v1651
        %v1653 = vmul.f32 %v1633, 1.442695
        %v1654 = vpow.pop %v1653
        %v1655 = vmul.f32 %v1634, 1.442695
        %v1656 = vpow.pop %v1655
        %v1657 = vmul.f32 %v1635, 1.442695
        %v1658 = vpow.pop %v1657
        %v1659 = vmul.f32 %v1636, 1.442695
        %v1660 = vpow.pop %v1659
        %v1661 = vmul.f32 %v1637, 1.442695
        %v1662 = vpow.pop %v1661
        %v1663 = vmul.f32 %v1638, 1.442695
        %v1664 = vpow.pop %v1663
        %v1665 = vmul.f32 %v1639, 1.442695
        %v1666 = vpow.pop %v1665
        %v1667 = vmul.f32 %v1640, 1.442695
        %v1668 = vpow.pop %v1667
        %v1669 = vmul.f32 %v1641, 1.442695
        %v1670 = vpow.pop %v1669
        %v1671 = vmul.f32 %v1642, 1.442695
        %v1672 = vpow.pop %v1671
        %v1673 = vmul.f32 %v1643, 1.442695
        %v1674 = vpow.pop %v1673
        %v1675 = vmul.f32 %v1644, 1.442695
        %v1676 = vpow.pop %v1675
        %1677 = vadd.xlane.f32.xlu0 %v1646
        %v1678 = vpop.xlane.xlu0 %1677
        %1679 = vadd.xlane.f32.xlu0 %v1648
        %v1680 = vpop.xlane.xlu0 %1679
        %1681 = vadd.xlane.f32.xlu0 %v1650
        %v1682 = vpop.xlane.xlu0 %1681
        %1683 = vadd.xlane.f32.xlu0 %v1652
        %v1684 = vpop.xlane.xlu0 %1683
        %1685 = vadd.xlane.f32.xlu0 %v1654
        %v1686 = vpop.xlane.xlu0 %1685
        %1687 = vadd.xlane.f32.xlu0 %v1656
        %v1688 = vpop.xlane.xlu0 %1687
        %1689 = vadd.xlane.f32.xlu0 %v1658
        %v1690 = vpop.xlane.xlu0 %1689
        %1691 = vadd.xlane.f32.xlu0 %v1660
        %v1692 = vpop.xlane.xlu0 %1691
        %1693 = vadd.xlane.f32.xlu0 %v1662
        %v1694 = vpop.xlane.xlu0 %1693
        %1695 = vadd.xlane.f32.xlu0 %v1664
        %v1696 = vpop.xlane.xlu0 %1695
        %1697 = vadd.xlane.f32.xlu0 %v1666
        %v1698 = vpop.xlane.xlu0 %1697
        %1699 = vadd.xlane.f32.xlu0 %v1668
        %v1700 = vpop.xlane.xlu0 %1699
        %1701 = vadd.xlane.f32.xlu0 %v1670
        %v1702 = vpop.xlane.xlu0 %1701
        %1703 = vadd.xlane.f32.xlu0 %v1672
        %v1704 = vpop.xlane.xlu0 %1703
        %1705 = vadd.xlane.f32.xlu0 %v1674
        %v1706 = vpop.xlane.xlu0 %1705
        %1707 = vadd.xlane.f32.xlu0 %v1676
        %v1708 = vpop.xlane.xlu0 %1707
        %v1709 = vrcp.pop %v1678
        %v1710 = vrcp.pop %v1680
        %v1711 = vrcp.pop %v1682
        %v1712 = vrcp.pop %v1684
        %v1713 = vrcp.pop %v1686
        %v1714 = vrcp.pop %v1688
        %v1715 = vrcp.pop %v1690
        %v1716 = vrcp.pop %v1692
        %v1717 = vrcp.pop %v1694
        %v1718 = vrcp.pop %v1696
        %v1719 = vrcp.pop %v1698
        %v1720 = vrcp.pop %v1700
        %v1721 = vrcp.pop %v1702
        %v1722 = vrcp.pop %v1704
        %v1723 = vrcp.pop %v1706
        %v1724 = vrcp.pop %v1708
        %v1725 = vmul.f32 %v1646, %v1709
        %v1726 = vmul.f32 %v1648, %v1710
        %v1727 = vmul.f32 %v1650, %v1711
        %v1728 = vmul.f32 %v1652, %v1712
        %v1729 = vmul.f32 %v1654, %v1713
        %v1730 = vmul.f32 %v1656, %v1714
        %v1731 = vmul.f32 %v1658, %v1715
        %v1732 = vmul.f32 %v1660, %v1716
        %v1733 = vmul.f32 %v1662, %v1717
        %v1734 = vmul.f32 %v1664, %v1718
        %v1735 = vmul.f32 %v1666, %v1719
        %v1736 = vmul.f32 %v1668, %v1720
        %v1737 = vmul.f32 %v1670, %v1721
        %v1738 = vmul.f32 %v1672, %v1722
        %v1739 = vmul.f32 %v1674, %v1723
        %v1740 = vmul.f32 %v1676, %v1724
        %v1741 = vpack.c.bf16 %v1726, %v1725
        %v1742 = vpack.c.bf16 %v1728, %v1727
        %v1743 = vpack.c.bf16 %v1730, %v1729
        %v1744 = vpack.c.bf16 %v1732, %v1731
        %v1745 = vpack.c.bf16 %v1734, %v1733
        %v1746 = vpack.c.bf16 %v1736, %v1735
        %v1747 = vpack.c.bf16 %v1738, %v1737
        %v1748 = vpack.c.bf16 %v1740, %v1739
        %1757 = vrot.lane.b32.xlu0 %v995, 96
        %v1758 = vpop.permute.xlu0 %1757
        %1759 = vrot.lane.b32.xlu0 %v996, 96
        %v1760 = vpop.permute.xlu0 %1759
        %1761 = vrot.lane.b32.xlu0 %v997, 96
        %v1762 = vpop.permute.xlu0 %1761
        %1763 = vrot.lane.b32.xlu0 %v998, 96
        %v1764 = vpop.permute.xlu0 %1763
        %1765 = vrot.lane.b32.xlu0 %v999, 96
        %v1766 = vpop.permute.xlu0 %1765
        %1767 = vrot.lane.b32.xlu0 %v1000, 96
        %v1768 = vpop.permute.xlu0 %1767
        %1769 = vrot.lane.b32.xlu0 %v1001, 96
        %v1770 = vpop.permute.xlu0 %1769
        %1771 = vrot.lane.b32.xlu0 %v1002, 96
        %v1772 = vpop.permute.xlu0 %1771
        %1781 = vmatprep.subr.bf16.mxu0 0
        %1782 = vmatpush1.bf16.msra.mxu0 %v1772
        %1783 = vmatprep.subr.bf16.mxu0 0
        %1784 = vmatpush1.bf16.msra.mxu0 %v1770
        %1785 = vmatprep.subr.bf16.mxu0 0
        %1786 = vmatpush1.bf16.msra.mxu0 %v1768
        %1787 = vmatprep.subr.bf16.mxu0 0
        %1788 = vmatpush1.bf16.msra.mxu0 %v1766
        %1789 = vmatprep.subr.bf16.mxu0 0
        %1790 = vmatpush1.bf16.msra.mxu0 %v1764
        %1791 = vmatprep.subr.bf16.mxu0 0
        %1792 = vmatpush1.bf16.msra.mxu0 %v1762
        %1793 = vmatprep.subr.bf16.mxu0 0
        %1794 = vmatpush1.bf16.msra.mxu0 %v1760
        %1795 = vmatprep.subr.bf16.mxu0 0
        %1796 = vmatpush1.bf16.msra.mxu0 %v1758
        %1797 = vmatprep.subr.bf16.mxu0 0
        %1798 = vmatpush2.bf16.msra.mxu0 0
        %1799 = vmatprep.subr.bf16.mxu0 0
        %1800 = vmatpush2.bf16.msra.mxu0 0
        %1801 = vmatprep.subr.bf16.mxu0 0
        %1802 = vmatpush2.bf16.msra.mxu0 0
        %1803 = vmatprep.subr.bf16.mxu0 0
        %1804 = vmatpush2.bf16.msra.mxu0 0
        %1805 = vmatprep.subr.bf16.mxu0 0
        %1806 = vmatpush2.bf16.msra.mxu0 0
        %1807 = vmatprep.subr.bf16.mxu0 0
        %1808 = vmatpush2.bf16.msra.mxu0 0
        %1809 = vmatprep.subr.bf16.mxu0 0
        %1810 = vmatpush2.bf16.msra.mxu0 0
        %1811 = vmatprep.subr.bf16.mxu0 0
        %1812 = vmatpush2.bf16.msra.mxu0 0
        %1813 = vmatprep.mubr.bf16.mxu0 0
        %1814 = vmatmul.mubr.bf16.gmra.mxu0 %v1741
        %v1815 = vpop.f32.mrf.mxu0
        %v1816 = vadd.f32 0.0, %v1815
        %v1817 = vpop.f32.mrf.mxu0
        %v1818 = vpop.f32.mrf.mxu0
        %v1819 = vadd.f32 0.0, %v1818
        %v1820 = vpop.f32.mrf.mxu0
        %1821 = vmatprep.mubr.bf16.mxu0 0
        %1822 = vmatmul.mubr.bf16.gmra.mxu0 %v1742
        %v1823 = vpop.f32.mrf.mxu0
        %v1824 = vadd.f32 0.0, %v1823
        %v1825 = vpop.f32.mrf.mxu0
        %v1826 = vpop.f32.mrf.mxu0
        %v1827 = vadd.f32 0.0, %v1826
        %v1828 = vpop.f32.mrf.mxu0
        %1829 = vmatprep.mubr.bf16.mxu0 0
        %1830 = vmatmul.mubr.bf16.gmra.mxu0 %v1743
        %v1831 = vpop.f32.mrf.mxu0
        %v1832 = vadd.f32 0.0, %v1831
        %v1833 = vpop.f32.mrf.mxu0
        %v1834 = vpop.f32.mrf.mxu0
        %v1835 = vadd.f32 0.0, %v1834
        %v1836 = vpop.f32.mrf.mxu0
        %1837 = vmatprep.mubr.bf16.mxu0 0
        %1838 = vmatmul.mubr.bf16.gmra.mxu0 %v1744
        %v1839 = vpop.f32.mrf.mxu0
        %v1840 = vadd.f32 0.0, %v1839
        %v1841 = vpop.f32.mrf.mxu0
        %v1842 = vpop.f32.mrf.mxu0
        %v1843 = vadd.f32 0.0, %v1842
        %v1844 = vpop.f32.mrf.mxu0
        %1845 = vmatprep.mubr.bf16.mxu0 0
        %1846 = vmatmul.mubr.bf16.gmra.mxu0 %v1745
        %v1847 = vpop.f32.mrf.mxu0
        %v1848 = vadd.f32 0.0, %v1847
        %v1849 = vpop.f32.mrf.mxu0
        %v1850 = vpop.f32.mrf.mxu0
        %v1851 = vadd.f32 0.0, %v1850
        %v1852 = vpop.f32.mrf.mxu0
        %1853 = vmatprep.mubr.bf16.mxu0 0
        %1854 = vmatmul.mubr.bf16.gmra.mxu0 %v1746
        %v1855 = vpop.f32.mrf.mxu0
        %v1856 = vadd.f32 0.0, %v1855
        %v1857 = vpop.f32.mrf.mxu0
        %v1858 = vpop.f32.mrf.mxu0
        %v1859 = vadd.f32 0.0, %v1858
        %v1860 = vpop.f32.mrf.mxu0
        %1861 = vmatprep.mubr.bf16.mxu0 0
        %1862 = vmatmul.mubr.bf16.gmra.mxu0 %v1747
        %v1863 = vpop.f32.mrf.mxu0
        %v1864 = vadd.f32 0.0, %v1863
        %v1865 = vpop.f32.mrf.mxu0
        %v1866 = vpop.f32.mrf.mxu0
        %v1867 = vadd.f32 0.0, %v1866
        %v1868 = vpop.f32.mrf.mxu0
        %1869 = vmatprep.mubr.bf16.mxu0 0
        %1870 = vmatmul.mubr.bf16.gmra.mxu0 %v1748
        %v1871 = vpop.f32.mrf.mxu0
        %v1872 = vadd.f32 0.0, %v1871
        %v1873 = vpop.f32.mrf.mxu0
        %v1874 = vpop.f32.mrf.mxu0
        %v1875 = vadd.f32 0.0, %v1874
        %v1876 = vpop.f32.mrf.mxu0
        %1877 = vdwg.mxu0
        %1878 = vrot.lane.b32.xlu0 %v979, 64
        %v1879 = vpop.permute.xlu0 %1878
        %1880 = vrot.lane.b32.xlu0 %v980, 64
        %v1881 = vpop.permute.xlu0 %1880
        %1882 = vrot.lane.b32.xlu0 %v981, 64
        %v1883 = vpop.permute.xlu0 %1882
        %1884 = vrot.lane.b32.xlu0 %v982, 64
        %v1885 = vpop.permute.xlu0 %1884
        %1886 = vrot.lane.b32.xlu0 %v983, 64
        %v1887 = vpop.permute.xlu0 %1886
        %1888 = vrot.lane.b32.xlu0 %v984, 64
        %v1889 = vpop.permute.xlu0 %1888
        %1890 = vrot.lane.b32.xlu0 %v985, 64
        %v1891 = vpop.permute.xlu0 %1890
        %1892 = vrot.lane.b32.xlu0 %v986, 64
        %v1893 = vpop.permute.xlu0 %1892
        %1894 = vrot.lane.b32.xlu0 %v987, 64
        %v1895 = vpop.permute.xlu0 %1894
        %1896 = vrot.lane.b32.xlu0 %v988, 64
        %v1897 = vpop.permute.xlu0 %1896
        %1898 = vrot.lane.b32.xlu0 %v989, 64
        %v1899 = vpop.permute.xlu0 %1898
        %1900 = vrot.lane.b32.xlu0 %v990, 64
        %v1901 = vpop.permute.xlu0 %1900
        %1902 = vrot.lane.b32.xlu0 %v991, 64
        %v1903 = vpop.permute.xlu0 %1902
        %1904 = vrot.lane.b32.xlu0 %v992, 64
        %v1905 = vpop.permute.xlu0 %1904
        %1906 = vrot.lane.b32.xlu0 %v993, 64
        %v1907 = vpop.permute.xlu0 %1906
        %1908 = vrot.lane.b32.xlu0 %v994, 64
        %v1909 = vpop.permute.xlu0 %1908
        %v1911 = vsel %vm1009, %v1879, 0
        %v1914 = vsel %vm1009, %v1881, 0
        %v1917 = vsel %vm1009, %v1883, 0
        %v1920 = vsel %vm1009, %v1885, 0
        %v1923 = vsel %vm1009, %v1887, 0
        %v1926 = vsel %vm1009, %v1889, 0
        %v1929 = vsel %vm1009, %v1891, 0
        %v1932 = vsel %vm1009, %v1893, 0
        %v1935 = vsel %vm1009, %v1895, 0
        %v1938 = vsel %vm1009, %v1897, 0
        %v1941 = vsel %vm1009, %v1899, 0
        %v1944 = vsel %vm1009, %v1901, 0
        %v1947 = vsel %vm1009, %v1903, 0
        %v1950 = vsel %vm1009, %v1905, 0
        %v1953 = vsel %vm1009, %v1907, 0
        %v1956 = vsel %vm1009, %v1909, 0
        %1958 = vmatprep.subr.bf16.mxu0 0
        %1959 = vmatpush1.bf16.xpose.msra.mxu0 %v1956
        %1960 = vmatprep.subr.bf16.mxu0 0
        %1961 = vmatpush1.bf16.xpose.msra.mxu0 %v1953
        %1962 = vmatprep.subr.bf16.mxu0 0
        %1963 = vmatpush1.bf16.xpose.msra.mxu0 %v1950
        %1964 = vmatprep.subr.bf16.mxu0 0
        %1965 = vmatpush1.bf16.xpose.msra.mxu0 %v1947
        %1966 = vmatprep.subr.bf16.mxu0 0
        %1967 = vmatpush1.bf16.xpose.msra.mxu0 %v1944
        %1968 = vmatprep.subr.bf16.mxu0 0
        %1969 = vmatpush1.bf16.xpose.msra.mxu0 %v1941
        %1970 = vmatprep.subr.bf16.mxu0 0
        %1971 = vmatpush1.bf16.xpose.msra.mxu0 %v1938
        %1972 = vmatprep.subr.bf16.mxu0 0
        %1973 = vmatpush1.bf16.xpose.msra.mxu0 %v1935
        %1974 = vmatprep.subr.bf16.mxu0 0
        %1975 = vmatpush2.bf16.xpose.msra.mxu0 0
        %1976 = vmatprep.subr.bf16.mxu0 0
        %1977 = vmatpush2.bf16.xpose.msra.mxu0 0
        %1978 = vmatprep.subr.bf16.mxu0 0
        %1979 = vmatpush2.bf16.xpose.msra.mxu0 0
        %1980 = vmatprep.subr.bf16.mxu0 0
        %1981 = vmatpush2.bf16.xpose.msra.mxu0 0
        %1982 = vmatprep.subr.bf16.mxu0 0
        %1983 = vmatpush2.bf16.xpose.msra.mxu0 0
        %1984 = vmatprep.subr.bf16.mxu0 0
        %1985 = vmatpush2.bf16.xpose.msra.mxu0 0
        %1986 = vmatprep.subr.bf16.mxu0 0
        %1987 = vmatpush2.bf16.xpose.msra.mxu0 0
        %1988 = vmatprep.subr.bf16.mxu0 0
        %1989 = vmatpush2.bf16.xpose.msra.mxu0 0
        %1990 = vmatprep.mubr.bf16.mxu0 0
        %1991 = vmatmul.mubr.bf16.gmra.mxu0 %v1911
        %v1992 = vpop.f32.mrf.mxu0
        %v1993 = vadd.f32 %v1007, %v1992
        %v1994 = vpop.f32.mrf.mxu0
        %v1995 = vpop.f32.mrf.mxu0
        %v1996 = vadd.f32 %v1007, %v1995
        %v1997 = vpop.f32.mrf.mxu0
        %1998 = vmatprep.mubr.bf16.mxu0 0
        %1999 = vmatmul.mubr.bf16.gmra.mxu0 %v1914
        %v2000 = vpop.f32.mrf.mxu0
        %v2001 = vadd.f32 %v1007, %v2000
        %v2002 = vpop.f32.mrf.mxu0
        %v2003 = vpop.f32.mrf.mxu0
        %v2004 = vadd.f32 %v1007, %v2003
        %v2005 = vpop.f32.mrf.mxu0
        %2006 = vmatprep.mubr.bf16.mxu0 0
        %2007 = vmatmul.mubr.bf16.gmra.mxu0 %v1917
        %v2008 = vpop.f32.mrf.mxu0
        %v2009 = vadd.f32 %v1007, %v2008
        %v2010 = vpop.f32.mrf.mxu0
        %v2011 = vpop.f32.mrf.mxu0
        %v2012 = vadd.f32 %v1007, %v2011
        %v2013 = vpop.f32.mrf.mxu0
        %2014 = vmatprep.mubr.bf16.mxu0 0
        %2015 = vmatmul.mubr.bf16.gmra.mxu0 %v1920
        %v2016 = vpop.f32.mrf.mxu0
        %v2017 = vadd.f32 %v1007, %v2016
        %v2018 = vpop.f32.mrf.mxu0
        %v2019 = vpop.f32.mrf.mxu0
        %v2020 = vadd.f32 %v1007, %v2019
        %v2021 = vpop.f32.mrf.mxu0
        %2022 = vmatprep.mubr.bf16.mxu0 0
        %2023 = vmatmul.mubr.bf16.gmra.mxu0 %v1923
        %v2024 = vpop.f32.mrf.mxu0
        %v2025 = vadd.f32 %v1007, %v2024
        %v2026 = vpop.f32.mrf.mxu0
        %v2027 = vpop.f32.mrf.mxu0
        %v2028 = vadd.f32 %v1007, %v2027
        %v2029 = vpop.f32.mrf.mxu0
        %2030 = vmatprep.mubr.bf16.mxu0 0
        %2031 = vmatmul.mubr.bf16.gmra.mxu0 %v1926
        %v2032 = vpop.f32.mrf.mxu0
        %v2033 = vadd.f32 %v1007, %v2032
        %v2034 = vpop.f32.mrf.mxu0
        %v2035 = vpop.f32.mrf.mxu0
        %v2036 = vadd.f32 %v1007, %v2035
        %v2037 = vpop.f32.mrf.mxu0
        %2038 = vmatprep.mubr.bf16.mxu0 0
        %2039 = vmatmul.mubr.bf16.gmra.mxu0 %v1929
        %v2040 = vpop.f32.mrf.mxu0
        %v2041 = vadd.f32 %v1007, %v2040
        %v2042 = vpop.f32.mrf.mxu0
        %v2043 = vpop.f32.mrf.mxu0
        %v2044 = vadd.f32 %v1007, %v2043
        %v2045 = vpop.f32.mrf.mxu0
        %2046 = vmatprep.mubr.bf16.mxu0 0
        %2047 = vmatmul.mubr.bf16.gmra.mxu0 %v1932
        %v2048 = vpop.f32.mrf.mxu0
        %v2049 = vadd.f32 %v1007, %v2048
        %v2050 = vpop.f32.mrf.mxu0
        %v2051 = vpop.f32.mrf.mxu0
        %v2052 = vadd.f32 %v1007, %v2051
        %v2053 = vpop.f32.mrf.mxu0
        %2054 = vdwg.mxu0
        %2055 = vmax.xlane.f32.xlu0 %v1993
        %v2056 = vpop.xlane.xlu0 %2055
        %2057 = vmax.xlane.f32.xlu0 %v1996
        %v2058 = vpop.xlane.xlu0 %2057
        %2059 = vmax.xlane.f32.xlu0 %v2001
        %v2060 = vpop.xlane.xlu0 %2059
        %2061 = vmax.xlane.f32.xlu0 %v2004
        %v2062 = vpop.xlane.xlu0 %2061
        %2063 = vmax.xlane.f32.xlu0 %v2009
        %v2064 = vpop.xlane.xlu0 %2063
        %2065 = vmax.xlane.f32.xlu0 %v2012
        %v2066 = vpop.xlane.xlu0 %2065
        %2067 = vmax.xlane.f32.xlu0 %v2017
        %v2068 = vpop.xlane.xlu0 %2067
        %2069 = vmax.xlane.f32.xlu0 %v2020
        %v2070 = vpop.xlane.xlu0 %2069
        %2071 = vmax.xlane.f32.xlu0 %v2025
        %v2072 = vpop.xlane.xlu0 %2071
        %2073 = vmax.xlane.f32.xlu0 %v2028
        %v2074 = vpop.xlane.xlu0 %2073
        %2075 = vmax.xlane.f32.xlu0 %v2033
        %v2076 = vpop.xlane.xlu0 %2075
        %2077 = vmax.xlane.f32.xlu0 %v2036
        %v2078 = vpop.xlane.xlu0 %2077
        %2079 = vmax.xlane.f32.xlu0 %v2041
        %v2080 = vpop.xlane.xlu0 %2079
        %2081 = vmax.xlane.f32.xlu0 %v2044
        %v2082 = vpop.xlane.xlu0 %2081
        %2083 = vmax.xlane.f32.xlu0 %v2049
        %v2084 = vpop.xlane.xlu0 %2083
        %2085 = vmax.xlane.f32.xlu0 %v2052
        %v2086 = vpop.xlane.xlu0 %2085
        %v2087 = vsub.f32 %v1993, %v2056
        %v2088 = vsub.f32 %v1996, %v2058
        %v2089 = vsub.f32 %v2001, %v2060
        %v2090 = vsub.f32 %v2004, %v2062
        %v2091 = vsub.f32 %v2009, %v2064
        %v2092 = vsub.f32 %v2012, %v2066
        %v2093 = vsub.f32 %v2017, %v2068
        %v2094 = vsub.f32 %v2020, %v2070
        %v2095 = vsub.f32 %v2025, %v2072
        %v2096 = vsub.f32 %v2028, %v2074
        %v2097 = vsub.f32 %v2033, %v2076
        %v2098 = vsub.f32 %v2036, %v2078
        %v2099 = vsub.f32 %v2041, %v2080
        %v2100 = vsub.f32 %v2044, %v2082
        %v2101 = vsub.f32 %v2049, %v2084
        %v2102 = vsub.f32 %v2052, %v2086
        %v2103 = vmul.f32 %v2087, 1.442695
        %v2104 = vpow.pop %v2103
        %v2105 = vmul.f32 %v2088, 1.442695
        %v2106 = vpow.pop %v2105
        %v2107 = vmul.f32 %v2089, 1.442695
        %v2108 = vpow.pop %v2107
        %v2109 = vmul.f32 %v2090, 1.442695
        %v2110 = vpow.pop %v2109
        %v2111 = vmul.f32 %v2091, 1.442695
        %v2112 = vpow.pop %v2111
        %v2113 = vmul.f32 %v2092, 1.442695
        %v2114 = vpow.pop %v2113
        %v2115 = vmul.f32 %v2093, 1.442695
        %v2116 = vpow.pop %v2115
        %v2117 = vmul.f32 %v2094, 1.442695
        %v2118 = vpow.pop %v2117
        %v2119 = vmul.f32 %v2095, 1.442695
        %v2120 = vpow.pop %v2119
        %v2121 = vmul.f32 %v2096, 1.442695
        %v2122 = vpow.pop %v2121
        %v2123 = vmul.f32 %v2097, 1.442695
        %v2124 = vpow.pop %v2123
        %v2125 = vmul.f32 %v2098, 1.442695
        %v2126 = vpow.pop %v2125
        %v2127 = vmul.f32 %v2099, 1.442695
        %v2128 = vpow.pop %v2127
        %v2129 = vmul.f32 %v2100, 1.442695
        %v2130 = vpow.pop %v2129
        %v2131 = vmul.f32 %v2101, 1.442695
        %v2132 = vpow.pop %v2131
        %v2133 = vmul.f32 %v2102, 1.442695
        %v2134 = vpow.pop %v2133
        %2135 = vadd.xlane.f32.xlu0 %v2104
        %v2136 = vpop.xlane.xlu0 %2135
        %2137 = vadd.xlane.f32.xlu0 %v2106
        %v2138 = vpop.xlane.xlu0 %2137
        %2139 = vadd.xlane.f32.xlu0 %v2108
        %v2140 = vpop.xlane.xlu0 %2139
        %2141 = vadd.xlane.f32.xlu0 %v2110
        %v2142 = vpop.xlane.xlu0 %2141
        %2143 = vadd.xlane.f32.xlu0 %v2112
        %v2144 = vpop.xlane.xlu0 %2143
        %2145 = vadd.xlane.f32.xlu0 %v2114
        %v2146 = vpop.xlane.xlu0 %2145
        %2147 = vadd.xlane.f32.xlu0 %v2116
        %v2148 = vpop.xlane.xlu0 %2147
        %2149 = vadd.xlane.f32.xlu0 %v2118
        %v2150 = vpop.xlane.xlu0 %2149
        %2151 = vadd.xlane.f32.xlu0 %v2120
        %v2152 = vpop.xlane.xlu0 %2151
        %2153 = vadd.xlane.f32.xlu0 %v2122
        %v2154 = vpop.xlane.xlu0 %2153
        %2155 = vadd.xlane.f32.xlu0 %v2124
        %v2156 = vpop.xlane.xlu0 %2155
        %2157 = vadd.xlane.f32.xlu0 %v2126
        %v2158 = vpop.xlane.xlu0 %2157
        %2159 = vadd.xlane.f32.xlu0 %v2128
        %v2160 = vpop.xlane.xlu0 %2159
        %2161 = vadd.xlane.f32.xlu0 %v2130
        %v2162 = vpop.xlane.xlu0 %2161
        %2163 = vadd.xlane.f32.xlu0 %v2132
        %v2164 = vpop.xlane.xlu0 %2163
        %2165 = vadd.xlane.f32.xlu0 %v2134
        %v2166 = vpop.xlane.xlu0 %2165
        %v2167 = vrcp.pop %v2136
        %v2168 = vrcp.pop %v2138
        %v2169 = vrcp.pop %v2140
        %v2170 = vrcp.pop %v2142
        %v2171 = vrcp.pop %v2144
        %v2172 = vrcp.pop %v2146
        %v2173 = vrcp.pop %v2148
        %v2174 = vrcp.pop %v2150
        %v2175 = vrcp.pop %v2152
        %v2176 = vrcp.pop %v2154
        %v2177 = vrcp.pop %v2156
        %v2178 = vrcp.pop %v2158
        %v2179 = vrcp.pop %v2160
        %v2180 = vrcp.pop %v2162
        %v2181 = vrcp.pop %v2164
        %v2182 = vrcp.pop %v2166
        %v2183 = vmul.f32 %v2104, %v2167
        %v2184 = vmul.f32 %v2106, %v2168
        %v2185 = vmul.f32 %v2108, %v2169
        %v2186 = vmul.f32 %v2110, %v2170
        %v2187 = vmul.f32 %v2112, %v2171
        %v2188 = vmul.f32 %v2114, %v2172
        %v2189 = vmul.f32 %v2116, %v2173
        %v2190 = vmul.f32 %v2118, %v2174
        %v2191 = vmul.f32 %v2120, %v2175
        %v2192 = vmul.f32 %v2122, %v2176
        %v2193 = vmul.f32 %v2124, %v2177
        %v2194 = vmul.f32 %v2126, %v2178
        %v2195 = vmul.f32 %v2128, %v2179
        %v2196 = vmul.f32 %v2130, %v2180
        %v2197 = vmul.f32 %v2132, %v2181
        %v2198 = vmul.f32 %v2134, %v2182
        %v2199 = vpack.c.bf16 %v2184, %v2183
        %v2200 = vpack.c.bf16 %v2186, %v2185
        %v2201 = vpack.c.bf16 %v2188, %v2187
        %v2202 = vpack.c.bf16 %v2190, %v2189
        %v2203 = vpack.c.bf16 %v2192, %v2191
        %v2204 = vpack.c.bf16 %v2194, %v2193
        %v2205 = vpack.c.bf16 %v2196, %v2195
        %v2206 = vpack.c.bf16 %v2198, %v2197
        %2207 = vrot.lane.b32.xlu0 %v995, 64
        %v2208 = vpop.permute.xlu0 %2207
        %2209 = vrot.lane.b32.xlu0 %v996, 64
        %v2210 = vpop.permute.xlu0 %2209
        %2211 = vrot.lane.b32.xlu0 %v997, 64
        %v2212 = vpop.permute.xlu0 %2211
        %2213 = vrot.lane.b32.xlu0 %v998, 64
        %v2214 = vpop.permute.xlu0 %2213
        %2215 = vrot.lane.b32.xlu0 %v999, 64
        %v2216 = vpop.permute.xlu0 %2215
        %2217 = vrot.lane.b32.xlu0 %v1000, 64
        %v2218 = vpop.permute.xlu0 %2217
        %2219 = vrot.lane.b32.xlu0 %v1001, 64
        %v2220 = vpop.permute.xlu0 %2219
        %2221 = vrot.lane.b32.xlu0 %v1002, 64
        %v2222 = vpop.permute.xlu0 %2221
        %2231 = vmatprep.subr.bf16.mxu0 0
        %2232 = vmatpush1.bf16.msra.mxu0 %v2222
        %2233 = vmatprep.subr.bf16.mxu0 0
        %2234 = vmatpush1.bf16.msra.mxu0 %v2220
        %2235 = vmatprep.subr.bf16.mxu0 0
        %2236 = vmatpush1.bf16.msra.mxu0 %v2218
        %2237 = vmatprep.subr.bf16.mxu0 0
        %2238 = vmatpush1.bf16.msra.mxu0 %v2216
        %2239 = vmatprep.subr.bf16.mxu0 0
        %2240 = vmatpush1.bf16.msra.mxu0 %v2214
        %2241 = vmatprep.subr.bf16.mxu0 0
        %2242 = vmatpush1.bf16.msra.mxu0 %v2212
        %2243 = vmatprep.subr.bf16.mxu0 0
        %2244 = vmatpush1.bf16.msra.mxu0 %v2210
        %2245 = vmatprep.subr.bf16.mxu0 0
        %2246 = vmatpush1.bf16.msra.mxu0 %v2208
        %2247 = vmatprep.subr.bf16.mxu0 0
        %2248 = vmatpush2.bf16.msra.mxu0 0
        %2249 = vmatprep.subr.bf16.mxu0 0
        %2250 = vmatpush2.bf16.msra.mxu0 0
        %2251 = vmatprep.subr.bf16.mxu0 0
        %2252 = vmatpush2.bf16.msra.mxu0 0
        %2253 = vmatprep.subr.bf16.mxu0 0
        %2254 = vmatpush2.bf16.msra.mxu0 0
        %2255 = vmatprep.subr.bf16.mxu0 0
        %2256 = vmatpush2.bf16.msra.mxu0 0
        %2257 = vmatprep.subr.bf16.mxu0 0
        %2258 = vmatpush2.bf16.msra.mxu0 0
        %2259 = vmatprep.subr.bf16.mxu0 0
        %2260 = vmatpush2.bf16.msra.mxu0 0
        %2261 = vmatprep.subr.bf16.mxu0 0
        %2262 = vmatpush2.bf16.msra.mxu0 0
        %2263 = vmatprep.mubr.bf16.mxu0 0
        %2264 = vmatmul.mubr.bf16.gmra.mxu0 %v2199
        %v2265 = vpop.f32.mrf.mxu0
        %v2266 = vadd.f32 0.0, %v2265
        %v2267 = vpop.f32.mrf.mxu0
        %v2268 = vpop.f32.mrf.mxu0
        %v2269 = vadd.f32 0.0, %v2268
        %v2270 = vpop.f32.mrf.mxu0
        %2271 = vmatprep.mubr.bf16.mxu0 0
        %2272 = vmatmul.mubr.bf16.gmra.mxu0 %v2200
        %v2273 = vpop.f32.mrf.mxu0
        %v2274 = vadd.f32 0.0, %v2273
        %v2275 = vpop.f32.mrf.mxu0
        %v2276 = vpop.f32.mrf.mxu0
        %v2277 = vadd.f32 0.0, %v2276
        %v2278 = vpop.f32.mrf.mxu0
        %2279 = vmatprep.mubr.bf16.mxu0 0
        %2280 = vmatmul.mubr.bf16.gmra.mxu0 %v2201
        %v2281 = vpop.f32.mrf.mxu0
        %v2282 = vadd.f32 0.0, %v2281
        %v2283 = vpop.f32.mrf.mxu0
        %v2284 = vpop.f32.mrf.mxu0
        %v2285 = vadd.f32 0.0, %v2284
        %v2286 = vpop.f32.mrf.mxu0
        %2287 = vmatprep.mubr.bf16.mxu0 0
        %2288 = vmatmul.mubr.bf16.gmra.mxu0 %v2202
        %v2289 = vpop.f32.mrf.mxu0
        %v2290 = vadd.f32 0.0, %v2289
        %v2291 = vpop.f32.mrf.mxu0
        %v2292 = vpop.f32.mrf.mxu0
        %v2293 = vadd.f32 0.0, %v2292
        %v2294 = vpop.f32.mrf.mxu0
        %2295 = vmatprep.mubr.bf16.mxu0 0
        %2296 = vmatmul.mubr.bf16.gmra.mxu0 %v2203
        %v2297 = vpop.f32.mrf.mxu0
        %v2298 = vadd.f32 0.0, %v2297
        %v2299 = vpop.f32.mrf.mxu0
        %v2300 = vpop.f32.mrf.mxu0
        %v2301 = vadd.f32 0.0, %v2300
        %v2302 = vpop.f32.mrf.mxu0
        %2303 = vmatprep.mubr.bf16.mxu0 0
        %2304 = vmatmul.mubr.bf16.gmra.mxu0 %v2204
        %v2305 = vpop.f32.mrf.mxu0
        %v2306 = vadd.f32 0.0, %v2305
        %v2307 = vpop.f32.mrf.mxu0
        %v2308 = vpop.f32.mrf.mxu0
        %v2309 = vadd.f32 0.0, %v2308
        %v2310 = vpop.f32.mrf.mxu0
        %2311 = vmatprep.mubr.bf16.mxu0 0
        %2312 = vmatmul.mubr.bf16.gmra.mxu0 %v2205
        %v2313 = vpop.f32.mrf.mxu0
        %v2314 = vadd.f32 0.0, %v2313
        %v2315 = vpop.f32.mrf.mxu0
        %v2316 = vpop.f32.mrf.mxu0
        %v2317 = vadd.f32 0.0, %v2316
        %v2318 = vpop.f32.mrf.mxu0
        %2319 = vmatprep.mubr.bf16.mxu0 0
        %2320 = vmatmul.mubr.bf16.gmra.mxu0 %v2206
        %v2321 = vpop.f32.mrf.mxu0
        %v2322 = vadd.f32 0.0, %v2321
        %v2323 = vpop.f32.mrf.mxu0
        %v2324 = vpop.f32.mrf.mxu0
        %v2325 = vadd.f32 0.0, %v2324
        %v2326 = vpop.f32.mrf.mxu0
        %2327 = vdwg.mxu0
        %2328 = vrot.lane.b32.xlu0 %v979, 32
        %v2329 = vpop.permute.xlu0 %2328
        %2330 = vrot.lane.b32.xlu0 %v980, 32
        %v2331 = vpop.permute.xlu0 %2330
        %2332 = vrot.lane.b32.xlu0 %v981, 32
        %v2333 = vpop.permute.xlu0 %2332
        %2334 = vrot.lane.b32.xlu0 %v982, 32
        %v2335 = vpop.permute.xlu0 %2334
        %2336 = vrot.lane.b32.xlu0 %v983, 32
        %v2337 = vpop.permute.xlu0 %2336
        %2338 = vrot.lane.b32.xlu0 %v984, 32
        %v2339 = vpop.permute.xlu0 %2338
        %2340 = vrot.lane.b32.xlu0 %v985, 32
        %v2341 = vpop.permute.xlu0 %2340
        %2342 = vrot.lane.b32.xlu0 %v986, 32
        %v2343 = vpop.permute.xlu0 %2342
        %2344 = vrot.lane.b32.xlu0 %v987, 32
        %v2345 = vpop.permute.xlu0 %2344
        %2346 = vrot.lane.b32.xlu0 %v988, 32
        %v2347 = vpop.permute.xlu0 %2346
        %2348 = vrot.lane.b32.xlu0 %v989, 32
        %v2349 = vpop.permute.xlu0 %2348
        %2350 = vrot.lane.b32.xlu0 %v990, 32
        %v2351 = vpop.permute.xlu0 %2350
        %2352 = vrot.lane.b32.xlu0 %v991, 32
        %v2353 = vpop.permute.xlu0 %2352
        %2354 = vrot.lane.b32.xlu0 %v992, 32
        %v2355 = vpop.permute.xlu0 %2354
        %2356 = vrot.lane.b32.xlu0 %v993, 32
        %v2357 = vpop.permute.xlu0 %2356
        %2358 = vrot.lane.b32.xlu0 %v994, 32
        %v2359 = vpop.permute.xlu0 %2358
        %v2361 = vsel %vm1009, %v2329, 0
        %v2364 = vsel %vm1009, %v2331, 0
        %v2367 = vsel %vm1009, %v2333, 0
        %v2370 = vsel %vm1009, %v2335, 0
        %v2373 = vsel %vm1009, %v2337, 0
        %v2376 = vsel %vm1009, %v2339, 0
        %v2379 = vsel %vm1009, %v2341, 0
        %v2382 = vsel %vm1009, %v2343, 0
        %v2385 = vsel %vm1009, %v2345, 0
        %v2388 = vsel %vm1009, %v2347, 0
        %v2391 = vsel %vm1009, %v2349, 0
        %v2394 = vsel %vm1009, %v2351, 0
        %v2397 = vsel %vm1009, %v2353, 0
        %v2400 = vsel %vm1009, %v2355, 0
        %v2403 = vsel %vm1009, %v2357, 0
        %v2406 = vsel %vm1009, %v2359, 0
        %2408 = vmatprep.subr.bf16.mxu0 0
        %2409 = vmatpush1.bf16.xpose.msra.mxu0 %v2406
        %2410 = vmatprep.subr.bf16.mxu0 0
        %2411 = vmatpush1.bf16.xpose.msra.mxu0 %v2403
        %2412 = vmatprep.subr.bf16.mxu0 0
        %2413 = vmatpush1.bf16.xpose.msra.mxu0 %v2400
        %2414 = vmatprep.subr.bf16.mxu0 0
        %2415 = vmatpush1.bf16.xpose.msra.mxu0 %v2397
        %2416 = vmatprep.subr.bf16.mxu0 0
        %2417 = vmatpush1.bf16.xpose.msra.mxu0 %v2394
        %2418 = vmatprep.subr.bf16.mxu0 0
        %2419 = vmatpush1.bf16.xpose.msra.mxu0 %v2391
        %2420 = vmatprep.subr.bf16.mxu0 0
        %2421 = vmatpush1.bf16.xpose.msra.mxu0 %v2388
        %2422 = vmatprep.subr.bf16.mxu0 0
        %2423 = vmatpush1.bf16.xpose.msra.mxu0 %v2385
        %2424 = vmatprep.subr.bf16.mxu0 0
        %2425 = vmatpush2.bf16.xpose.msra.mxu0 0
        %2426 = vmatprep.subr.bf16.mxu0 0
        %2427 = vmatpush2.bf16.xpose.msra.mxu0 0
        %2428 = vmatprep.subr.bf16.mxu0 0
        %2429 = vmatpush2.bf16.xpose.msra.mxu0 0
        %2430 = vmatprep.subr.bf16.mxu0 0
        %2431 = vmatpush2.bf16.xpose.msra.mxu0 0
        %2432 = vmatprep.subr.bf16.mxu0 0
        %2433 = vmatpush2.bf16.xpose.msra.mxu0 0
        %2434 = vmatprep.subr.bf16.mxu0 0
        %2435 = vmatpush2.bf16.xpose.msra.mxu0 0
        %2436 = vmatprep.subr.bf16.mxu0 0
        %2437 = vmatpush2.bf16.xpose.msra.mxu0 0
        %2438 = vmatprep.subr.bf16.mxu0 0
        %2439 = vmatpush2.bf16.xpose.msra.mxu0 0
        %2440 = vmatprep.mubr.bf16.mxu0 0
        %2441 = vmatmul.mubr.bf16.gmra.mxu0 %v2361
        %v2442 = vpop.f32.mrf.mxu0
        %v2443 = vadd.f32 %v1007, %v2442
        %v2444 = vpop.f32.mrf.mxu0
        %v2445 = vpop.f32.mrf.mxu0
        %v2446 = vadd.f32 %v1007, %v2445
        %v2447 = vpop.f32.mrf.mxu0
        %2448 = vmatprep.mubr.bf16.mxu0 0
        %2449 = vmatmul.mubr.bf16.gmra.mxu0 %v2364
        %v2450 = vpop.f32.mrf.mxu0
        %v2451 = vadd.f32 %v1007, %v2450
        %v2452 = vpop.f32.mrf.mxu0
        %v2453 = vpop.f32.mrf.mxu0
        %v2454 = vadd.f32 %v1007, %v2453
        %v2455 = vpop.f32.mrf.mxu0
        %2456 = vmatprep.mubr.bf16.mxu0 0
        %2457 = vmatmul.mubr.bf16.gmra.mxu0 %v2367
        %v2458 = vpop.f32.mrf.mxu0
        %v2459 = vadd.f32 %v1007, %v2458
        %v2460 = vpop.f32.mrf.mxu0
        %v2461 = vpop.f32.mrf.mxu0
        %v2462 = vadd.f32 %v1007, %v2461
        %v2463 = vpop.f32.mrf.mxu0
        %2464 = vmatprep.mubr.bf16.mxu0 0
        %2465 = vmatmul.mubr.bf16.gmra.mxu0 %v2370
        %v2466 = vpop.f32.mrf.mxu0
        %v2467 = vadd.f32 %v1007, %v2466
        %v2468 = vpop.f32.mrf.mxu0
        %v2469 = vpop.f32.mrf.mxu0
        %v2470 = vadd.f32 %v1007, %v2469
        %v2471 = vpop.f32.mrf.mxu0
        %2472 = vmatprep.mubr.bf16.mxu0 0
        %2473 = vmatmul.mubr.bf16.gmra.mxu0 %v2373
        %v2474 = vpop.f32.mrf.mxu0
        %v2475 = vadd.f32 %v1007, %v2474
        %v2476 = vpop.f32.mrf.mxu0
        %v2477 = vpop.f32.mrf.mxu0
        %v2478 = vadd.f32 %v1007, %v2477
        %v2479 = vpop.f32.mrf.mxu0
        %2480 = vmatprep.mubr.bf16.mxu0 0
        %2481 = vmatmul.mubr.bf16.gmra.mxu0 %v2376
        %v2482 = vpop.f32.mrf.mxu0
        %v2483 = vadd.f32 %v1007, %v2482
        %v2484 = vpop.f32.mrf.mxu0
        %v2485 = vpop.f32.mrf.mxu0
        %v2486 = vadd.f32 %v1007, %v2485
        %v2487 = vpop.f32.mrf.mxu0
        %2488 = vmatprep.mubr.bf16.mxu0 0
        %2489 = vmatmul.mubr.bf16.gmra.mxu0 %v2379
        %v2490 = vpop.f32.mrf.mxu0
        %v2491 = vadd.f32 %v1007, %v2490
        %v2492 = vpop.f32.mrf.mxu0
        %v2493 = vpop.f32.mrf.mxu0
        %v2494 = vadd.f32 %v1007, %v2493
        %v2495 = vpop.f32.mrf.mxu0
        %2496 = vmatprep.mubr.bf16.mxu0 0
        %2497 = vmatmul.mubr.bf16.gmra.mxu0 %v2382
        %v2498 = vpop.f32.mrf.mxu0
        %v2499 = vadd.f32 %v1007, %v2498
        %v2500 = vpop.f32.mrf.mxu0
        %v2501 = vpop.f32.mrf.mxu0
        %v2502 = vadd.f32 %v1007, %v2501
        %v2503 = vpop.f32.mrf.mxu0
        %2504 = vdwg.mxu0
        %2505 = vmax.xlane.f32.xlu0 %v2443
        %v2506 = vpop.xlane.xlu0 %2505
        %2507 = vmax.xlane.f32.xlu0 %v2446
        %v2508 = vpop.xlane.xlu0 %2507
        %2509 = vmax.xlane.f32.xlu0 %v2451
        %v2510 = vpop.xlane.xlu0 %2509
        %2511 = vmax.xlane.f32.xlu0 %v2454
        %v2512 = vpop.xlane.xlu0 %2511
        %2513 = vmax.xlane.f32.xlu0 %v2459
        %v2514 = vpop.xlane.xlu0 %2513
        %2515 = vmax.xlane.f32.xlu0 %v2462
        %v2516 = vpop.xlane.xlu0 %2515
        %2517 = vmax.xlane.f32.xlu0 %v2467
        %v2518 = vpop.xlane.xlu0 %2517
        %2519 = vmax.xlane.f32.xlu0 %v2470
        %v2520 = vpop.xlane.xlu0 %2519
        %2521 = vmax.xlane.f32.xlu0 %v2475
        %v2522 = vpop.xlane.xlu0 %2521
        %2523 = vmax.xlane.f32.xlu0 %v2478
        %v2524 = vpop.xlane.xlu0 %2523
        %2525 = vmax.xlane.f32.xlu0 %v2483
        %v2526 = vpop.xlane.xlu0 %2525
        %2527 = vmax.xlane.f32.xlu0 %v2486
        %v2528 = vpop.xlane.xlu0 %2527
        %2529 = vmax.xlane.f32.xlu0 %v2491
        %v2530 = vpop.xlane.xlu0 %2529
        %2531 = vmax.xlane.f32.xlu0 %v2494
        %v2532 = vpop.xlane.xlu0 %2531
        %2533 = vmax.xlane.f32.xlu0 %v2499
        %v2534 = vpop.xlane.xlu0 %2533
        %2535 = vmax.xlane.f32.xlu0 %v2502
        %v2536 = vpop.xlane.xlu0 %2535
        %v2537 = vsub.f32 %v2443, %v2506
        %v2538 = vsub.f32 %v2446, %v2508
        %v2539 = vsub.f32 %v2451, %v2510
        %v2540 = vsub.f32 %v2454, %v2512
        %v2541 = vsub.f32 %v2459, %v2514
        %v2542 = vsub.f32 %v2462, %v2516
        %v2543 = vsub.f32 %v2467, %v2518
        %v2544 = vsub.f32 %v2470, %v2520
        %v2545 = vsub.f32 %v2475, %v2522
        %v2546 = vsub.f32 %v2478, %v2524
        %v2547 = vsub.f32 %v2483, %v2526
        %v2548 = vsub.f32 %v2486, %v2528
        %v2549 = vsub.f32 %v2491, %v2530
        %v2550 = vsub.f32 %v2494, %v2532
        %v2551 = vsub.f32 %v2499, %v2534
        %v2552 = vsub.f32 %v2502, %v2536
        %v2553 = vmul.f32 %v2537, 1.442695
        %v2554 = vpow.pop %v2553
        %v2555 = vmul.f32 %v2538, 1.442695
        %v2556 = vpow.pop %v2555
        %v2557 = vmul.f32 %v2539, 1.442695
        %v2558 = vpow.pop %v2557
        %v2559 = vmul.f32 %v2540, 1.442695
        %v2560 = vpow.pop %v2559
        %v2561 = vmul.f32 %v2541, 1.442695
        %v2562 = vpow.pop %v2561
        %v2563 = vmul.f32 %v2542, 1.442695
        %v2564 = vpow.pop %v2563
        %v2565 = vmul.f32 %v2543, 1.442695
        %v2566 = vpow.pop %v2565
        %v2567 = vmul.f32 %v2544, 1.442695
        %v2568 = vpow.pop %v2567
        %v2569 = vmul.f32 %v2545, 1.442695
        %v2570 = vpow.pop %v2569
        %v2571 = vmul.f32 %v2546, 1.442695
        %v2572 = vpow.pop %v2571
        %v2573 = vmul.f32 %v2547, 1.442695
        %v2574 = vpow.pop %v2573
        %v2575 = vmul.f32 %v2548, 1.442695
        %v2576 = vpow.pop %v2575
        %v2577 = vmul.f32 %v2549, 1.442695
        %v2578 = vpow.pop %v2577
        %v2579 = vmul.f32 %v2550, 1.442695
        %v2580 = vpow.pop %v2579
        %v2581 = vmul.f32 %v2551, 1.442695
        %v2582 = vpow.pop %v2581
        %v2583 = vmul.f32 %v2552, 1.442695
        %v2584 = vpow.pop %v2583
        %2585 = vadd.xlane.f32.xlu0 %v2554
        %v2586 = vpop.xlane.xlu0 %2585
        %2587 = vadd.xlane.f32.xlu0 %v2556
        %v2588 = vpop.xlane.xlu0 %2587
        %2589 = vadd.xlane.f32.xlu0 %v2558
        %v2590 = vpop.xlane.xlu0 %2589
        %2591 = vadd.xlane.f32.xlu0 %v2560
        %v2592 = vpop.xlane.xlu0 %2591
        %2593 = vadd.xlane.f32.xlu0 %v2562
        %v2594 = vpop.xlane.xlu0 %2593
        %2595 = vadd.xlane.f32.xlu0 %v2564
        %v2596 = vpop.xlane.xlu0 %2595
        %2597 = vadd.xlane.f32.xlu0 %v2566
        %v2598 = vpop.xlane.xlu0 %2597
        %2599 = vadd.xlane.f32.xlu0 %v2568
        %v2600 = vpop.xlane.xlu0 %2599
        %2601 = vadd.xlane.f32.xlu0 %v2570
        %v2602 = vpop.xlane.xlu0 %2601
        %2603 = vadd.xlane.f32.xlu0 %v2572
        %v2604 = vpop.xlane.xlu0 %2603
        %2605 = vadd.xlane.f32.xlu0 %v2574
        %v2606 = vpop.xlane.xlu0 %2605
        %2607 = vadd.xlane.f32.xlu0 %v2576
        %v2608 = vpop.xlane.xlu0 %2607
        %2609 = vadd.xlane.f32.xlu0 %v2578
        %v2610 = vpop.xlane.xlu0 %2609
        %2611 = vadd.xlane.f32.xlu0 %v2580
        %v2612 = vpop.xlane.xlu0 %2611
        %2613 = vadd.xlane.f32.xlu0 %v2582
        %v2614 = vpop.xlane.xlu0 %2613
        %2615 = vadd.xlane.f32.xlu0 %v2584
        %v2616 = vpop.xlane.xlu0 %2615
        %v2617 = vrcp.pop %v2586
        %v2618 = vrcp.pop %v2588
        %v2619 = vrcp.pop %v2590
        %v2620 = vrcp.pop %v2592
        %v2621 = vrcp.pop %v2594
        %v2622 = vrcp.pop %v2596
        %v2623 = vrcp.pop %v2598
        %v2624 = vrcp.pop %v2600
        %v2625 = vrcp.pop %v2602
        %v2626 = vrcp.pop %v2604
        %v2627 = vrcp.pop %v2606
        %v2628 = vrcp.pop %v2608
        %v2629 = vrcp.pop %v2610
        %v2630 = vrcp.pop %v2612
        %v2631 = vrcp.pop %v2614
        %v2632 = vrcp.pop %v2616
        %v2633 = vmul.f32 %v2554, %v2617
        %v2634 = vmul.f32 %v2556, %v2618
        %v2635 = vmul.f32 %v2558, %v2619
        %v2636 = vmul.f32 %v2560, %v2620
        %v2637 = vmul.f32 %v2562, %v2621
        %v2638 = vmul.f32 %v2564, %v2622
        %v2639 = vmul.f32 %v2566, %v2623
        %v2640 = vmul.f32 %v2568, %v2624
        %v2641 = vmul.f32 %v2570, %v2625
        %v2642 = vmul.f32 %v2572, %v2626
        %v2643 = vmul.f32 %v2574, %v2627
        %v2644 = vmul.f32 %v2576, %v2628
        %v2645 = vmul.f32 %v2578, %v2629
        %v2646 = vmul.f32 %v2580, %v2630
        %v2647 = vmul.f32 %v2582, %v2631
        %v2648 = vmul.f32 %v2584, %v2632
        %v2649 = vpack.c.bf16 %v2634, %v2633
        %v2650 = vpack.c.bf16 %v2636, %v2635
        %v2651 = vpack.c.bf16 %v2638, %v2637
        %v2652 = vpack.c.bf16 %v2640, %v2639
        %v2653 = vpack.c.bf16 %v2642, %v2641
        %v2654 = vpack.c.bf16 %v2644, %v2643
        %v2655 = vpack.c.bf16 %v2646, %v2645
        %v2656 = vpack.c.bf16 %v2648, %v2647
        %2657 = vrot.lane.b32.xlu0 %v995, 32
        %v2658 = vpop.permute.xlu0 %2657
        %2659 = vrot.lane.b32.xlu0 %v996, 32
        %v2660 = vpop.permute.xlu0 %2659
        %2661 = vrot.lane.b32.xlu0 %v997, 32
        %v2662 = vpop.permute.xlu0 %2661
        %2663 = vrot.lane.b32.xlu0 %v998, 32
        %v2664 = vpop.permute.xlu0 %2663
        %2665 = vrot.lane.b32.xlu0 %v999, 32
        %v2666 = vpop.permute.xlu0 %2665
        %2667 = vrot.lane.b32.xlu0 %v1000, 32
        %v2668 = vpop.permute.xlu0 %2667
        %2669 = vrot.lane.b32.xlu0 %v1001, 32
        %v2670 = vpop.permute.xlu0 %2669
        %2671 = vrot.lane.b32.xlu0 %v1002, 32
        %v2672 = vpop.permute.xlu0 %2671
        %2681 = vmatprep.subr.bf16.mxu0 0
        %2682 = vmatpush1.bf16.msra.mxu0 %v2672
        %2683 = vmatprep.subr.bf16.mxu0 0
        %2684 = vmatpush1.bf16.msra.mxu0 %v2670
        %2685 = vmatprep.subr.bf16.mxu0 0
        %2686 = vmatpush1.bf16.msra.mxu0 %v2668
        %2687 = vmatprep.subr.bf16.mxu0 0
        %2688 = vmatpush1.bf16.msra.mxu0 %v2666
        %2689 = vmatprep.subr.bf16.mxu0 0
        %2690 = vmatpush1.bf16.msra.mxu0 %v2664
        %2691 = vmatprep.subr.bf16.mxu0 0
        %2692 = vmatpush1.bf16.msra.mxu0 %v2662
        %2693 = vmatprep.subr.bf16.mxu0 0
        %2694 = vmatpush1.bf16.msra.mxu0 %v2660
        %2695 = vmatprep.subr.bf16.mxu0 0
        %2696 = vmatpush1.bf16.msra.mxu0 %v2658
        %2697 = vmatprep.subr.bf16.mxu0 0
        %2698 = vmatpush2.bf16.msra.mxu0 0
        %2699 = vmatprep.subr.bf16.mxu0 0
        %2700 = vmatpush2.bf16.msra.mxu0 0
        %2701 = vmatprep.subr.bf16.mxu0 0
        %2702 = vmatpush2.bf16.msra.mxu0 0
        %2703 = vmatprep.subr.bf16.mxu0 0
        %2704 = vmatpush2.bf16.msra.mxu0 0
        %2705 = vmatprep.subr.bf16.mxu0 0
        %2706 = vmatpush2.bf16.msra.mxu0 0
        %2707 = vmatprep.subr.bf16.mxu0 0
        %2708 = vmatpush2.bf16.msra.mxu0 0
        %2709 = vmatprep.subr.bf16.mxu0 0
        %2710 = vmatpush2.bf16.msra.mxu0 0
        %2711 = vmatprep.subr.bf16.mxu0 0
        %2712 = vmatpush2.bf16.msra.mxu0 0
        %2713 = vmatprep.mubr.bf16.mxu0 0
        %2714 = vmatmul.mubr.bf16.gmra.mxu0 %v2649
        %v2715 = vpop.f32.mrf.mxu0
        %v2716 = vadd.f32 0.0, %v2715
        %v2717 = vpop.f32.mrf.mxu0
        %v2718 = vpop.f32.mrf.mxu0
        %v2719 = vadd.f32 0.0, %v2718
        %v2720 = vpop.f32.mrf.mxu0
        %2721 = vmatprep.mubr.bf16.mxu0 0
        %2722 = vmatmul.mubr.bf16.gmra.mxu0 %v2650
        %v2723 = vpop.f32.mrf.mxu0
        %v2724 = vadd.f32 0.0, %v2723
        %v2725 = vpop.f32.mrf.mxu0
        %v2726 = vpop.f32.mrf.mxu0
        %v2727 = vadd.f32 0.0, %v2726
        %v2728 = vpop.f32.mrf.mxu0
        %2729 = vmatprep.mubr.bf16.mxu0 0
        %2730 = vmatmul.mubr.bf16.gmra.mxu0 %v2651
        %v2731 = vpop.f32.mrf.mxu0
        %v2732 = vadd.f32 0.0, %v2731
        %v2733 = vpop.f32.mrf.mxu0
        %v2734 = vpop.f32.mrf.mxu0
        %v2735 = vadd.f32 0.0, %v2734
        %v2736 = vpop.f32.mrf.mxu0
        %2737 = vmatprep.mubr.bf16.mxu0 0
        %2738 = vmatmul.mubr.bf16.gmra.mxu0 %v2652
        %v2739 = vpop.f32.mrf.mxu0
        %v2740 = vadd.f32 0.0, %v2739
        %v2741 = vpop.f32.mrf.mxu0
        %v2742 = vpop.f32.mrf.mxu0
        %v2743 = vadd.f32 0.0, %v2742
        %v2744 = vpop.f32.mrf.mxu0
        %2745 = vmatprep.mubr.bf16.mxu0 0
        %2746 = vmatmul.mubr.bf16.gmra.mxu0 %v2653
        %v2747 = vpop.f32.mrf.mxu0
        %v2748 = vadd.f32 0.0, %v2747
        %v2749 = vpop.f32.mrf.mxu0
        %v2750 = vpop.f32.mrf.mxu0
        %v2751 = vadd.f32 0.0, %v2750
        %v2752 = vpop.f32.mrf.mxu0
        %2753 = vmatprep.mubr.bf16.mxu0 0
        %2754 = vmatmul.mubr.bf16.gmra.mxu0 %v2654
        %v2755 = vpop.f32.mrf.mxu0
        %v2756 = vadd.f32 0.0, %v2755
        %v2757 = vpop.f32.mrf.mxu0
        %v2758 = vpop.f32.mrf.mxu0
        %v2759 = vadd.f32 0.0, %v2758
        %v2760 = vpop.f32.mrf.mxu0
        %2761 = vmatprep.mubr.bf16.mxu0 0
        %2762 = vmatmul.mubr.bf16.gmra.mxu0 %v2655
        %v2763 = vpop.f32.mrf.mxu0
        %v2764 = vadd.f32 0.0, %v2763
        %v2765 = vpop.f32.mrf.mxu0
        %v2766 = vpop.f32.mrf.mxu0
        %v2767 = vadd.f32 0.0, %v2766
        %v2768 = vpop.f32.mrf.mxu0
        %2769 = vmatprep.mubr.bf16.mxu0 0
        %2770 = vmatmul.mubr.bf16.gmra.mxu0 %v2656
        %v2771 = vpop.f32.mrf.mxu0
        %v2772 = vadd.f32 0.0, %v2771
        %v2773 = vpop.f32.mrf.mxu0
        %v2774 = vpop.f32.mrf.mxu0
        %v2775 = vadd.f32 0.0, %v2774
        %v2776 = vpop.f32.mrf.mxu0
        %2777 = vdwg.mxu0
        %2794 = vrot.lane.b32.xlu0 %v1816, 32
        %v2795 = vpop.permute.xlu0 %2794
        %2796 = vrot.lane.b32.xlu0 %v1819, 32
        %v2797 = vpop.permute.xlu0 %2796
        %2798 = vrot.lane.b32.xlu0 %v1824, 32
        %v2799 = vpop.permute.xlu0 %2798
        %2800 = vrot.lane.b32.xlu0 %v1827, 32
        %v2801 = vpop.permute.xlu0 %2800
        %2802 = vrot.lane.b32.xlu0 %v1832, 32
        %v2803 = vpop.permute.xlu0 %2802
        %2804 = vrot.lane.b32.xlu0 %v1835, 32
        %v2805 = vpop.permute.xlu0 %2804
        %2806 = vrot.lane.b32.xlu0 %v1840, 32
        %v2807 = vpop.permute.xlu0 %2806
        %2808 = vrot.lane.b32.xlu0 %v1843, 32
        %v2809 = vpop.permute.xlu0 %2808
        %2810 = vrot.lane.b32.xlu0 %v1848, 32
        %v2811 = vpop.permute.xlu0 %2810
        %2812 = vrot.lane.b32.xlu0 %v1851, 32
        %v2813 = vpop.permute.xlu0 %2812
        %2814 = vrot.lane.b32.xlu0 %v1856, 32
        %v2815 = vpop.permute.xlu0 %2814
        %2816 = vrot.lane.b32.xlu0 %v1859, 32
        %v2817 = vpop.permute.xlu0 %2816
        %2818 = vrot.lane.b32.xlu0 %v1864, 32
        %v2819 = vpop.permute.xlu0 %2818
        %2820 = vrot.lane.b32.xlu0 %v1867, 32
        %v2821 = vpop.permute.xlu0 %2820
        %2822 = vrot.lane.b32.xlu0 %v1872, 32
        %v2823 = vpop.permute.xlu0 %2822
        %2824 = vrot.lane.b32.xlu0 %v1875, 32
        %v2825 = vpop.permute.xlu0 %2824
        %2858 = vrot.lane.b32.xlu0 %v2266, 64
        %v2859 = vpop.permute.xlu0 %2858
        %2860 = vrot.lane.b32.xlu0 %v2269, 64
        %v2861 = vpop.permute.xlu0 %2860
        %2862 = vrot.lane.b32.xlu0 %v2274, 64
        %v2863 = vpop.permute.xlu0 %2862
        %2864 = vrot.lane.b32.xlu0 %v2277, 64
        %v2865 = vpop.permute.xlu0 %2864
        %2866 = vrot.lane.b32.xlu0 %v2282, 64
        %v2867 = vpop.permute.xlu0 %2866
        %2868 = vrot.lane.b32.xlu0 %v2285, 64
        %v2869 = vpop.permute.xlu0 %2868
        %2870 = vrot.lane.b32.xlu0 %v2290, 64
        %v2871 = vpop.permute.xlu0 %2870
        %2872 = vrot.lane.b32.xlu0 %v2293, 64
        %v2873 = vpop.permute.xlu0 %2872
        %2874 = vrot.lane.b32.xlu0 %v2298, 64
        %v2875 = vpop.permute.xlu0 %2874
        %2876 = vrot.lane.b32.xlu0 %v2301, 64
        %v2877 = vpop.permute.xlu0 %2876
        %2878 = vrot.lane.b32.xlu0 %v2306, 64
        %v2879 = vpop.permute.xlu0 %2878
        %2880 = vrot.lane.b32.xlu0 %v2309, 64
        %v2881 = vpop.permute.xlu0 %2880
        %2882 = vrot.lane.b32.xlu0 %v2314, 64
        %v2883 = vpop.permute.xlu0 %2882
        %2884 = vrot.lane.b32.xlu0 %v2317, 64
        %v2885 = vpop.permute.xlu0 %2884
        %2886 = vrot.lane.b32.xlu0 %v2322, 64
        %v2887 = vpop.permute.xlu0 %2886
        %2888 = vrot.lane.b32.xlu0 %v2325, 64
        %v2889 = vpop.permute.xlu0 %2888
        %2922 = vrot.lane.b32.xlu0 %v2716, 96
        %v2923 = vpop.permute.xlu0 %2922
        %2924 = vrot.lane.b32.xlu0 %v2719, 96
        %v2925 = vpop.permute.xlu0 %2924
        %2926 = vrot.lane.b32.xlu0 %v2724, 96
        %v2927 = vpop.permute.xlu0 %2926
        %2928 = vrot.lane.b32.xlu0 %v2727, 96
        %v2929 = vpop.permute.xlu0 %2928
        %2930 = vrot.lane.b32.xlu0 %v2732, 96
        %v2931 = vpop.permute.xlu0 %2930
        %2932 = vrot.lane.b32.xlu0 %v2735, 96
        %v2933 = vpop.permute.xlu0 %2932
        %2934 = vrot.lane.b32.xlu0 %v2740, 96
        %v2935 = vpop.permute.xlu0 %2934
        %2936 = vrot.lane.b32.xlu0 %v2743, 96
        %v2937 = vpop.permute.xlu0 %2936
        %2938 = vrot.lane.b32.xlu0 %v2748, 96
        %v2939 = vpop.permute.xlu0 %2938
        %2940 = vrot.lane.b32.xlu0 %v2751, 96
        %v2941 = vpop.permute.xlu0 %2940
        %2942 = vrot.lane.b32.xlu0 %v2756, 96
        %v2943 = vpop.permute.xlu0 %2942
        %2944 = vrot.lane.b32.xlu0 %v2759, 96
        %v2945 = vpop.permute.xlu0 %2944
        %2946 = vrot.lane.b32.xlu0 %v2764, 96
        %v2947 = vpop.permute.xlu0 %2946
        %2948 = vrot.lane.b32.xlu0 %v2767, 96
        %v2949 = vpop.permute.xlu0 %2948
        %2950 = vrot.lane.b32.xlu0 %v2772, 96
        %v2951 = vpop.permute.xlu0 %2950
        %2952 = vrot.lane.b32.xlu0 %v2775, 96
        %v2953 = vpop.permute.xlu0 %2952
        %v2970 = vsel %vm1009, %v1342, %v2795
        %v2971 = vsel %vm1009, %v1345, %v2797
        %v2972 = vsel %vm1009, %v1350, %v2799
        %v2973 = vsel %vm1009, %v1353, %v2801
        %v2974 = vsel %vm1009, %v1358, %v2803
        %v2975 = vsel %vm1009, %v1361, %v2805
        %v2976 = vsel %vm1009, %v1366, %v2807
        %v2977 = vsel %vm1009, %v1369, %v2809
        %v2978 = vsel %vm1009, %v1374, %v2811
        %v2979 = vsel %vm1009, %v1377, %v2813
        %v2980 = vsel %vm1009, %v1382, %v2815
        %v2981 = vsel %vm1009, %v1385, %v2817
        %v2982 = vsel %vm1009, %v1390, %v2819
        %v2983 = vsel %vm1009, %v1393, %v2821
        %v2984 = vsel %vm1009, %v1398, %v2823
        %v2985 = vsel %vm1009, %v1401, %v2825
        %vm2986 = vcmask 523264
        %v2987 = vsel %vm2986, %v2970, %v2859
        %v2988 = vsel %vm2986, %v2971, %v2861
        %v2989 = vsel %vm2986, %v2972, %v2863
        %v2990 = vsel %vm2986, %v2973, %v2865
        %v2991 = vsel %vm2986, %v2974, %v2867
        %v2992 = vsel %vm2986, %v2975, %v2869
        %v2993 = vsel %vm2986, %v2976, %v2871
        %v2994 = vsel %vm2986, %v2977, %v2873
        %v2995 = vsel %vm2986, %v2978, %v2875
        %v2996 = vsel %vm2986, %v2979, %v2877
        %v2997 = vsel %vm2986, %v2980, %v2879
        %v2998 = vsel %vm2986, %v2981, %v2881
        %v2999 = vsel %vm2986, %v2982, %v2883
        %v3000 = vsel %vm2986, %v2983, %v2885
        %v3001 = vsel %vm2986, %v2984, %v2887
        %v3002 = vsel %vm2986, %v2985, %v2889
        %vm3003 = vcmask 785408
        %v3004 = vsel %vm3003, %v2987, %v2923
        %v3005 = vsel %vm3003, %v2988, %v2925
        %v3006 = vsel %vm3003, %v2989, %v2927
        %v3007 = vsel %vm3003, %v2990, %v2929
        %v3008 = vsel %vm3003, %v2991, %v2931
        %v3009 = vsel %vm3003, %v2992, %v2933
        %v3010 = vsel %vm3003, %v2993, %v2935
        %v3011 = vsel %vm3003, %v2994, %v2937
        %v3012 = vsel %vm3003, %v2995, %v2939
        %v3013 = vsel %vm3003, %v2996, %v2941
        %v3014 = vsel %vm3003, %v2997, %v2943
        %v3015 = vsel %vm3003, %v2998, %v2945
        %v3016 = vsel %vm3003, %v2999, %v2947
        %v3017 = vsel %vm3003, %v3000, %v2949
        %v3018 = vsel %vm3003, %v3001, %v2951
        %v3019 = vsel %vm3003, %v3002, %v2953
        %v3020 = vpack.c.bf16 %v3005, %v3004
        %v3021 = vpack.c.bf16 %v3007, %v3006
        %v3022 = vpack.c.bf16 %v3009, %v3008
        %v3023 = vpack.c.bf16 %v3011, %v3010
        %v3024 = vpack.c.bf16 %v3013, %v3012
        %v3025 = vpack.c.bf16 %v3015, %v3014
        %v3026 = vpack.c.bf16 %v3017, %v3016
        %v3027 = vpack.c.bf16 %v3019, %v3018
        %v3028 = vld [vmem:[%s4] sm:$0xf]
        %v3029 = vld [vmem:[%s4 + $0x4] sm:$0xf]
        %v3030 = vld [vmem:[%s4 + $0x8] sm:$0xf]
        %v3031 = vld [vmem:[%s4 + $0xc] sm:$0xf]
        %v3032 = vld [vmem:[%s4 + $0x10] sm:$0xf]
        %v3033 = vld [vmem:[%s4 + $0x14] sm:$0xf]
        %v3034 = vld [vmem:[%s4 + $0x18] sm:$0xf]
        %v3035 = vld [vmem:[%s4 + $0x1c] sm:$0xf]
        %v3036 = vld [vmem:[%s4 + $0x20] sm:$0xf]
        %v3037 = vld [vmem:[%s4 + $0x24] sm:$0xf]
        %v3038 = vld [vmem:[%s4 + $0x28] sm:$0xf]
        %v3039 = vld [vmem:[%s4 + $0x2c] sm:$0xf]
        %v3040 = vld [vmem:[%s4 + $0x30] sm:$0xf]
        %v3041 = vld [vmem:[%s4 + $0x34] sm:$0xf]
        %v3042 = vld [vmem:[%s4 + $0x38] sm:$0xf]
        %v3043 = vld [vmem:[%s4 + $0x3c] sm:$0xf]
        %v3044 = vld [vmem:[%s5] sm:$0x1]
        %v3046 = vlaneseq
        %v3047 = vshrl.u32 %v3046, 7
        %v3048 = vsub.s32 0, %v3047
        %v3049 = vrot.slane %v3044, %v3048
        %v3067 = vunpack.c.l.b16 %v3028
        %v3068 = vunpack.c.l.b16 %v3029
        %v3069 = vunpack.c.l.b16 %v3030
        %v3070 = vunpack.c.l.b16 %v3031
        %v3071 = vunpack.c.l.b16 %v3032
        %v3072 = vunpack.c.l.b16 %v3033
        %v3073 = vunpack.c.l.b16 %v3034
        %v3074 = vunpack.c.l.b16 %v3035
        %v3075 = vunpack.c.l.b16 %v3036
        %v3076 = vunpack.c.l.b16 %v3037
        %v3077 = vunpack.c.l.b16 %v3038
        %v3078 = vunpack.c.l.b16 %v3039
        %v3079 = vunpack.c.l.b16 %v3040
        %v3080 = vunpack.c.l.b16 %v3041
        %v3081 = vunpack.c.l.b16 %v3042
        %v3082 = vunpack.c.l.b16 %v3043
        %v3083 = vpack.c.b16 %v3068, %v3067
        %v3084 = vpack.c.b16 %v3070, %v3069
        %v3085 = vpack.c.b16 %v3072, %v3071
        %v3086 = vpack.c.b16 %v3074, %v3073
        %v3087 = vpack.c.b16 %v3076, %v3075
        %v3088 = vpack.c.b16 %v3078, %v3077
        %v3089 = vpack.c.b16 %v3080, %v3079
        %v3090 = vpack.c.b16 %v3082, %v3081
        %3099 = vmatprep.subr.bf16.mxu0 0
        %3100 = vmatpush1.bf16.msra.mxu0 %v3090
        %3101 = vmatprep.subr.bf16.mxu0 0
        %3102 = vmatpush1.bf16.msra.mxu0 %v3089
        %3103 = vmatprep.subr.bf16.mxu0 0
        %3104 = vmatpush1.bf16.msra.mxu0 %v3088
        %3105 = vmatprep.subr.bf16.mxu0 0
        %3106 = vmatpush1.bf16.msra.mxu0 %v3087
        %3107 = vmatprep.subr.bf16.mxu0 0
        %3108 = vmatpush1.bf16.msra.mxu0 %v3086
        %3109 = vmatprep.subr.bf16.mxu0 0
        %3110 = vmatpush1.bf16.msra.mxu0 %v3085
        %3111 = vmatprep.subr.bf16.mxu0 0
        %3112 = vmatpush1.bf16.msra.mxu0 %v3084
        %3113 = vmatprep.subr.bf16.mxu0 0
        %3114 = vmatpush1.bf16.msra.mxu0 %v3083
        %3115 = vmatprep.subr.bf16.mxu0 0
        %3116 = vmatpush2.bf16.msra.mxu0 0
        %3117 = vmatprep.subr.bf16.mxu0 0
        %3118 = vmatpush2.bf16.msra.mxu0 0
        %3119 = vmatprep.subr.bf16.mxu0 0
        %3120 = vmatpush2.bf16.msra.mxu0 0
        %3121 = vmatprep.subr.bf16.mxu0 0
        %3122 = vmatpush2.bf16.msra.mxu0 0
        %3123 = vmatprep.subr.bf16.mxu0 0
        %3124 = vmatpush2.bf16.msra.mxu0 0
        %3125 = vmatprep.subr.bf16.mxu0 0
        %3126 = vmatpush2.bf16.msra.mxu0 0
        %3127 = vmatprep.subr.bf16.mxu0 0
        %3128 = vmatpush2.bf16.msra.mxu0 0
        %3129 = vmatprep.subr.bf16.mxu0 0
        %3130 = vmatpush2.bf16.msra.mxu0 0
        %3131 = vmatprep.mubr.bf16.mxu0 0
        %3132 = vmatmul.mubr.bf16.gmra.mxu0 %v3020
        %v3133 = vpop.f32.mrf.mxu0
        %v3134 = vadd.f32 %v3049, %v3133
        %v3135 = vpop.f32.mrf.mxu0
        %v3136 = vpop.f32.mrf.mxu0
        %v3137 = vadd.f32 %v3049, %v3136
        %v3138 = vpop.f32.mrf.mxu0
        %3139 = vmatprep.mubr.bf16.mxu0 0
        %3140 = vmatmul.mubr.bf16.gmra.mxu0 %v3021
        %v3141 = vpop.f32.mrf.mxu0
        %v3142 = vadd.f32 %v3049, %v3141
        %v3143 = vpop.f32.mrf.mxu0
        %v3144 = vpop.f32.mrf.mxu0
        %v3145 = vadd.f32 %v3049, %v3144
        %v3146 = vpop.f32.mrf.mxu0
        %3147 = vmatprep.mubr.bf16.mxu0 0
        %3148 = vmatmul.mubr.bf16.gmra.mxu0 %v3022
        %v3149 = vpop.f32.mrf.mxu0
        %v3150 = vadd.f32 %v3049, %v3149
        %v3151 = vpop.f32.mrf.mxu0
        %v3152 = vpop.f32.mrf.mxu0
        %v3153 = vadd.f32 %v3049, %v3152
        %v3154 = vpop.f32.mrf.mxu0
        %3155 = vmatprep.mubr.bf16.mxu0 0
        %3156 = vmatmul.mubr.bf16.gmra.mxu0 %v3023
        %v3157 = vpop.f32.mrf.mxu0
        %v3158 = vadd.f32 %v3049, %v3157
        %v3159 = vpop.f32.mrf.mxu0
        %v3160 = vpop.f32.mrf.mxu0
        %v3161 = vadd.f32 %v3049, %v3160
        %v3162 = vpop.f32.mrf.mxu0
        %3163 = vmatprep.mubr.bf16.mxu0 0
        %3164 = vmatmul.mubr.bf16.gmra.mxu0 %v3024
        %v3165 = vpop.f32.mrf.mxu0
        %v3166 = vadd.f32 %v3049, %v3165
        %v3167 = vpop.f32.mrf.mxu0
        %v3168 = vpop.f32.mrf.mxu0
        %v3169 = vadd.f32 %v3049, %v3168
        %v3170 = vpop.f32.mrf.mxu0
        %3171 = vmatprep.mubr.bf16.mxu0 0
        %3172 = vmatmul.mubr.bf16.gmra.mxu0 %v3025
        %v3173 = vpop.f32.mrf.mxu0
        %v3174 = vadd.f32 %v3049, %v3173
        %v3175 = vpop.f32.mrf.mxu0
        %v3176 = vpop.f32.mrf.mxu0
        %v3177 = vadd.f32 %v3049, %v3176
        %v3178 = vpop.f32.mrf.mxu0
        %3179 = vmatprep.mubr.bf16.mxu0 0
        %3180 = vmatmul.mubr.bf16.gmra.mxu0 %v3026
        %v3181 = vpop.f32.mrf.mxu0
        %v3182 = vadd.f32 %v3049, %v3181
        %v3183 = vpop.f32.mrf.mxu0
        %v3184 = vpop.f32.mrf.mxu0
        %v3185 = vadd.f32 %v3049, %v3184
        %v3186 = vpop.f32.mrf.mxu0
        %3187 = vmatprep.mubr.bf16.mxu0 0
        %3188 = vmatmul.mubr.bf16.gmra.mxu0 %v3027
        %v3189 = vpop.f32.mrf.mxu0
        %v3190 = vadd.f32 %v3049, %v3189
        %v3191 = vpop.f32.mrf.mxu0
        %v3192 = vpop.f32.mrf.mxu0
        %v3193 = vadd.f32 %v3049, %v3192
        %v3194 = vpop.f32.mrf.mxu0
        %3195 = vdwg.mxu0
        %v3196 = vadd.f32 %v3134, %v527
        %v3197 = vadd.f32 %v3137, %v528
        %v3198 = vadd.f32 %v3142, %v529
        %v3199 = vadd.f32 %v3145, %v530
        %v3200 = vadd.f32 %v3150, %v531
        %v3201 = vadd.f32 %v3153, %v532
        %v3202 = vadd.f32 %v3158, %v533
        %v3203 = vadd.f32 %v3161, %v534
        %v3204 = vadd.f32 %v3166, %v535
        %v3205 = vadd.f32 %v3169, %v536
        %v3206 = vadd.f32 %v3174, %v537
        %v3207 = vadd.f32 %v3177, %v538
        %v3208 = vadd.f32 %v3182, %v539
        %v3209 = vadd.f32 %v3185, %v540
        %v3210 = vadd.f32 %v3190, %v541
        %v3211 = vadd.f32 %v3193, %v542
        %v3212 = vld [vmem:[%s6] sm:$0x1]
        %v3213 = vld [vmem:[%s7] sm:$0x1]
        %3214 = vadd.xlane.f32.xlu0 %v3196
        %v3215 = vpop.xlane.xlu0 %3214
        %3216 = vadd.xlane.f32.xlu0 %v3197
        %v3217 = vpop.xlane.xlu0 %3216
        %3218 = vadd.xlane.f32.xlu0 %v3198
        %v3219 = vpop.xlane.xlu0 %3218
        %3220 = vadd.xlane.f32.xlu0 %v3199
        %v3221 = vpop.xlane.xlu0 %3220
        %3222 = vadd.xlane.f32.xlu0 %v3200
        %v3223 = vpop.xlane.xlu0 %3222
        %3224 = vadd.xlane.f32.xlu0 %v3201
        %v3225 = vpop.xlane.xlu0 %3224
        %3226 = vadd.xlane.f32.xlu0 %v3202
        %v3227 = vpop.xlane.xlu0 %3226
        %3228 = vadd.xlane.f32.xlu0 %v3203
        %v3229 = vpop.xlane.xlu0 %3228
        %3230 = vadd.xlane.f32.xlu0 %v3204
        %v3231 = vpop.xlane.xlu0 %3230
        %3232 = vadd.xlane.f32.xlu0 %v3205
        %v3233 = vpop.xlane.xlu0 %3232
        %3234 = vadd.xlane.f32.xlu0 %v3206
        %v3235 = vpop.xlane.xlu0 %3234
        %3236 = vadd.xlane.f32.xlu0 %v3207
        %v3237 = vpop.xlane.xlu0 %3236
        %3238 = vadd.xlane.f32.xlu0 %v3208
        %v3239 = vpop.xlane.xlu0 %3238
        %3240 = vadd.xlane.f32.xlu0 %v3209
        %v3241 = vpop.xlane.xlu0 %3240
        %3242 = vadd.xlane.f32.xlu0 %v3210
        %v3243 = vpop.xlane.xlu0 %3242
        %3244 = vadd.xlane.f32.xlu0 %v3211
        %v3245 = vpop.xlane.xlu0 %3244
        %v3246 = vrcp.pop 128.0
        %v3247 = vmul.f32 %v3215, %v3246
        %v3248 = vmul.f32 %v3217, %v3246
        %v3249 = vmul.f32 %v3219, %v3246
        %v3250 = vmul.f32 %v3221, %v3246
        %v3251 = vmul.f32 %v3223, %v3246
        %v3252 = vmul.f32 %v3225, %v3246
        %v3253 = vmul.f32 %v3227, %v3246
        %v3254 = vmul.f32 %v3229, %v3246
        %v3255 = vmul.f32 %v3231, %v3246
        %v3256 = vmul.f32 %v3233, %v3246
        %v3257 = vmul.f32 %v3235, %v3246
        %v3258 = vmul.f32 %v3237, %v3246
        %v3259 = vmul.f32 %v3239, %v3246
        %v3260 = vmul.f32 %v3241, %v3246
        %v3261 = vmul.f32 %v3243, %v3246
        %v3262 = vmul.f32 %v3245, %v3246
        %v3263 = vsub.f32 %v3196, %v3247
        %v3264 = vsub.f32 %v3197, %v3248
        %v3265 = vsub.f32 %v3198, %v3249
        %v3266 = vsub.f32 %v3199, %v3250
        %v3267 = vsub.f32 %v3200, %v3251
        %v3268 = vsub.f32 %v3201, %v3252
        %v3269 = vsub.f32 %v3202, %v3253
        %v3270 = vsub.f32 %v3203, %v3254
        %v3271 = vsub.f32 %v3204, %v3255
        %v3272 = vsub.f32 %v3205, %v3256
        %v3273 = vsub.f32 %v3206, %v3257
        %v3274 = vsub.f32 %v3207, %v3258
        %v3275 = vsub.f32 %v3208, %v3259
        %v3276 = vsub.f32 %v3209, %v3260
        %v3277 = vsub.f32 %v3210, %v3261
        %v3278 = vsub.f32 %v3211, %v3262
        %v3279 = vmul.f32 %v3263, %v3263
        %v3280 = vmul.f32 %v3264, %v3264
        %v3281 = vmul.f32 %v3265, %v3265
        %v3282 = vmul.f32 %v3266, %v3266
        %v3283 = vmul.f32 %v3267, %v3267
        %v3284 = vmul.f32 %v3268, %v3268
        %v3285 = vmul.f32 %v3269, %v3269
        %v3286 = vmul.f32 %v3270, %v3270
        %v3287 = vmul.f32 %v3271, %v3271
        %v3288 = vmul.f32 %v3272, %v3272
        %v3289 = vmul.f32 %v3273, %v3273
        %v3290 = vmul.f32 %v3274, %v3274
        %v3291 = vmul.f32 %v3275, %v3275
        %v3292 = vmul.f32 %v3276, %v3276
        %v3293 = vmul.f32 %v3277, %v3277
        %v3294 = vmul.f32 %v3278, %v3278
        %3295 = vadd.xlane.f32.xlu0 %v3279
        %v3296 = vpop.xlane.xlu0 %3295
        %3297 = vadd.xlane.f32.xlu0 %v3280
        %v3298 = vpop.xlane.xlu0 %3297
        %3299 = vadd.xlane.f32.xlu0 %v3281
        %v3300 = vpop.xlane.xlu0 %3299
        %3301 = vadd.xlane.f32.xlu0 %v3282
        %v3302 = vpop.xlane.xlu0 %3301
        %3303 = vadd.xlane.f32.xlu0 %v3283
        %v3304 = vpop.xlane.xlu0 %3303
        %3305 = vadd.xlane.f32.xlu0 %v3284
        %v3306 = vpop.xlane.xlu0 %3305
        %3307 = vadd.xlane.f32.xlu0 %v3285
        %v3308 = vpop.xlane.xlu0 %3307
        %3309 = vadd.xlane.f32.xlu0 %v3286
        %v3310 = vpop.xlane.xlu0 %3309
        %3311 = vadd.xlane.f32.xlu0 %v3287
        %v3312 = vpop.xlane.xlu0 %3311
        %3313 = vadd.xlane.f32.xlu0 %v3288
        %v3314 = vpop.xlane.xlu0 %3313
        %3315 = vadd.xlane.f32.xlu0 %v3289
        %v3316 = vpop.xlane.xlu0 %3315
        %3317 = vadd.xlane.f32.xlu0 %v3290
        %v3318 = vpop.xlane.xlu0 %3317
        %3319 = vadd.xlane.f32.xlu0 %v3291
        %v3320 = vpop.xlane.xlu0 %3319
        %3321 = vadd.xlane.f32.xlu0 %v3292
        %v3322 = vpop.xlane.xlu0 %3321
        %3323 = vadd.xlane.f32.xlu0 %v3293
        %v3324 = vpop.xlane.xlu0 %3323
        %3325 = vadd.xlane.f32.xlu0 %v3294
        %v3326 = vpop.xlane.xlu0 %3325
        %v3327 = vmul.f32 %v3296, %v3246
        %v3328 = vmul.f32 %v3298, %v3246
        %v3329 = vmul.f32 %v3300, %v3246
        %v3330 = vmul.f32 %v3302, %v3246
        %v3331 = vmul.f32 %v3304, %v3246
        %v3332 = vmul.f32 %v3306, %v3246
        %v3333 = vmul.f32 %v3308, %v3246
        %v3334 = vmul.f32 %v3310, %v3246
        %v3335 = vmul.f32 %v3312, %v3246
        %v3336 = vmul.f32 %v3314, %v3246
        %v3337 = vmul.f32 %v3316, %v3246
        %v3338 = vmul.f32 %v3318, %v3246
        %v3339 = vmul.f32 %v3320, %v3246
        %v3340 = vmul.f32 %v3322, %v3246
        %v3341 = vmul.f32 %v3324, %v3246
        %v3342 = vmul.f32 %v3326, %v3246
        %v3343 = vadd.f32 %v3327, 1e-06
        %v3344 = vadd.f32 %v3328, 1e-06
        %v3345 = vadd.f32 %v3329, 1e-06
        %v3346 = vadd.f32 %v3330, 1e-06
        %v3347 = vadd.f32 %v3331, 1e-06
        %v3348 = vadd.f32 %v3332, 1e-06
        %v3349 = vadd.f32 %v3333, 1e-06
        %v3350 = vadd.f32 %v3334, 1e-06
        %v3351 = vadd.f32 %v3335, 1e-06
        %v3352 = vadd.f32 %v3336, 1e-06
        %v3353 = vadd.f32 %v3337, 1e-06
        %v3354 = vadd.f32 %v3338, 1e-06
        %v3355 = vadd.f32 %v3339, 1e-06
        %v3356 = vadd.f32 %v3340, 1e-06
        %v3357 = vadd.f32 %v3341, 1e-06
        %v3358 = vadd.f32 %v3342, 1e-06
        %v3359 = vrsqrt.pop %v3343
        %v3360 = vrsqrt.pop %v3344
        %v3361 = vrsqrt.pop %v3345
        %v3362 = vrsqrt.pop %v3346
        %v3363 = vrsqrt.pop %v3347
        %v3364 = vrsqrt.pop %v3348
        %v3365 = vrsqrt.pop %v3349
        %v3366 = vrsqrt.pop %v3350
        %v3367 = vrsqrt.pop %v3351
        %v3368 = vrsqrt.pop %v3352
        %v3369 = vrsqrt.pop %v3353
        %v3370 = vrsqrt.pop %v3354
        %v3371 = vrsqrt.pop %v3355
        %v3372 = vrsqrt.pop %v3356
        %v3373 = vrsqrt.pop %v3357
        %v3374 = vrsqrt.pop %v3358
        %v3375 = vmul.f32 %v3263, %v3359
        %v3376 = vmul.f32 %v3264, %v3360
        %v3377 = vmul.f32 %v3265, %v3361
        %v3378 = vmul.f32 %v3266, %v3362
        %v3379 = vmul.f32 %v3267, %v3363
        %v3380 = vmul.f32 %v3268, %v3364
        %v3381 = vmul.f32 %v3269, %v3365
        %v3382 = vmul.f32 %v3270, %v3366
        %v3383 = vmul.f32 %v3271, %v3367
        %v3384 = vmul.f32 %v3272, %v3368
        %v3385 = vmul.f32 %v3273, %v3369
        %v3386 = vmul.f32 %v3274, %v3370
        %v3387 = vmul.f32 %v3275, %v3371
        %v3388 = vmul.f32 %v3276, %v3372
        %v3389 = vmul.f32 %v3277, %v3373
        %v3390 = vmul.f32 %v3278, %v3374
        %v3392 = vlaneseq
        %v3393 = vshrl.u32 %v3392, 7
        %v3394 = vsub.s32 0, %v3393
        %v3395 = vrot.slane %v3212, %v3394
        %v3397 = vmul.f32 %v3375, %v3395
        %v3398 = vmul.f32 %v3376, %v3395
        %v3399 = vmul.f32 %v3377, %v3395
        %v3400 = vmul.f32 %v3378, %v3395
        %v3401 = vmul.f32 %v3379, %v3395
        %v3402 = vmul.f32 %v3380, %v3395
        %v3403 = vmul.f32 %v3381, %v3395
        %v3404 = vmul.f32 %v3382, %v3395
        %v3405 = vmul.f32 %v3383, %v3395
        %v3406 = vmul.f32 %v3384, %v3395
        %v3407 = vmul.f32 %v3385, %v3395
        %v3408 = vmul.f32 %v3386, %v3395
        %v3409 = vmul.f32 %v3387, %v3395
        %v3410 = vmul.f32 %v3388, %v3395
        %v3411 = vmul.f32 %v3389, %v3395
        %v3412 = vmul.f32 %v3390, %v3395
        %v3414 = vlaneseq
        %v3415 = vshrl.u32 %v3414, 7
        %v3416 = vsub.s32 0, %v3415
        %v3417 = vrot.slane %v3213, %v3416
        %v3419 = vadd.f32 %v3397, %v3417
        %v3420 = vadd.f32 %v3398, %v3417
        %v3421 = vadd.f32 %v3399, %v3417
        %v3422 = vadd.f32 %v3400, %v3417
        %v3423 = vadd.f32 %v3401, %v3417
        %v3424 = vadd.f32 %v3402, %v3417
        %v3425 = vadd.f32 %v3403, %v3417
        %v3426 = vadd.f32 %v3404, %v3417
        %v3427 = vadd.f32 %v3405, %v3417
        %v3428 = vadd.f32 %v3406, %v3417
        %v3429 = vadd.f32 %v3407, %v3417
        %v3430 = vadd.f32 %v3408, %v3417
        %v3431 = vadd.f32 %v3409, %v3417
        %v3432 = vadd.f32 %v3410, %v3417
        %v3433 = vadd.f32 %v3411, %v3417
        %v3434 = vadd.f32 %v3412, %v3417
        %v3435 = vpack.c.bf16 %v3420, %v3419
        %v3436 = vpack.c.bf16 %v3422, %v3421
        %v3437 = vpack.c.bf16 %v3424, %v3423
        %v3438 = vpack.c.bf16 %v3426, %v3425
        %v3439 = vpack.c.bf16 %v3428, %v3427
        %v3440 = vpack.c.bf16 %v3430, %v3429
        %v3441 = vpack.c.bf16 %v3432, %v3431
        %v3442 = vpack.c.bf16 %v3434, %v3433
        %v3443 = vld [vmem:[%s8] sm:$0xff]
        %v3444 = vld [vmem:[%s8 + $0x8] sm:$0xff]
        %v3445 = vld [vmem:[%s8 + $0x10] sm:$0xff]
        %v3446 = vld [vmem:[%s8 + $0x18] sm:$0xff]
        %v3447 = vld [vmem:[%s8 + $0x20] sm:$0xff]
        %v3448 = vld [vmem:[%s8 + $0x28] sm:$0xff]
        %v3449 = vld [vmem:[%s8 + $0x30] sm:$0xff]
        %v3450 = vld [vmem:[%s8 + $0x38] sm:$0xff]
        %v3451 = vld [vmem:[%s8 + $0x40] sm:$0xff]
        %v3452 = vld [vmem:[%s8 + $0x48] sm:$0xff]
        %v3453 = vld [vmem:[%s8 + $0x50] sm:$0xff]
        %v3454 = vld [vmem:[%s8 + $0x58] sm:$0xff]
        %v3455 = vld [vmem:[%s8 + $0x60] sm:$0xff]
        %v3456 = vld [vmem:[%s8 + $0x68] sm:$0xff]
        %v3457 = vld [vmem:[%s8 + $0x70] sm:$0xff]
        %v3458 = vld [vmem:[%s8 + $0x78] sm:$0xff]
        %v3459 = vld [vmem:[#allocation2] sm:$0x3]
        %v3461 = vlaneseq
        %v3462 = vshrl.u32 %v3461, 7
        %v3463 = vsub.s32 0, %v3462
        %v3464 = vrot.slane %v3459, %v3463
        %v3465 = vlaneseq
        %v3466 = vshrl.u32 %v3465, 7
        %v3467 = vsub.s32 1, %v3466
        %v3468 = vrot.slane %v3459, %v3467
        %v3487 = vunpack.c.l.b16 %v3443
        %v3488 = vunpack.c.h.b16 %v3443
        %v3489 = vunpack.c.l.b16 %v3444
        %v3490 = vunpack.c.h.b16 %v3444
        %v3491 = vunpack.c.l.b16 %v3445
        %v3492 = vunpack.c.h.b16 %v3445
        %v3493 = vunpack.c.l.b16 %v3446
        %v3494 = vunpack.c.h.b16 %v3446
        %v3495 = vunpack.c.l.b16 %v3447
        %v3496 = vunpack.c.h.b16 %v3447
        %v3497 = vunpack.c.l.b16 %v3448
        %v3498 = vunpack.c.h.b16 %v3448
        %v3499 = vunpack.c.l.b16 %v3449
        %v3500 = vunpack.c.h.b16 %v3449
        %v3501 = vunpack.c.l.b16 %v3450
        %v3502 = vunpack.c.h.b16 %v3450
        %v3503 = vunpack.c.l.b16 %v3451
        %v3504 = vunpack.c.h.b16 %v3451
        %v3505 = vunpack.c.l.b16 %v3452
        %v3506 = vunpack.c.h.b16 %v3452
        %v3507 = vunpack.c.l.b16 %v3453
        %v3508 = vunpack.c.h.b16 %v3453
        %v3509 = vunpack.c.l.b16 %v3454
        %v3510 = vunpack.c.h.b16 %v3454
        %v3511 = vunpack.c.l.b16 %v3455
        %v3512 = vunpack.c.h.b16 %v3455
        %v3513 = vunpack.c.l.b16 %v3456
        %v3514 = vunpack.c.h.b16 %v3456
        %v3515 = vunpack.c.l.b16 %v3457
        %v3516 = vunpack.c.h.b16 %v3457
        %v3517 = vunpack.c.l.b16 %v3458
        %v3518 = vunpack.c.h.b16 %v3458
        %v3519 = vpack.c.b16 %v3489, %v3487
        %v3520 = vpack.c.b16 %v3490, %v3488
        %v3521 = vpack.c.b16 %v3493, %v3491
        %v3522 = vpack.c.b16 %v3494, %v3492
        %v3523 = vpack.c.b16 %v3497, %v3495
        %v3524 = vpack.c.b16 %v3498, %v3496
        %v3525 = vpack.c.b16 %v3501, %v3499
        %v3526 = vpack.c.b16 %v3502, %v3500
        %v3527 = vpack.c.b16 %v3505, %v3503
        %v3528 = vpack.c.b16 %v3506, %v3504
        %v3529 = vpack.c.b16 %v3509, %v3507
        %v3530 = vpack.c.b16 %v3510, %v3508
        %v3531 = vpack.c.b16 %v3513, %v3511
        %v3532 = vpack.c.b16 %v3514, %v3512
        %v3533 = vpack.c.b16 %v3517, %v3515
        %v3534 = vpack.c.b16 %v3518, %v3516
        %3551 = vmatprep.subr.bf16.mxu0 %v3534
        %3552 = vmatpush1.bf16.msra.mxu0 %v3533
        %3553 = vmatprep.subr.bf16.mxu0 %v3532
        %3554 = vmatpush1.bf16.msra.mxu0 %v3531
        %3555 = vmatprep.subr.bf16.mxu0 %v3530
        %3556 = vmatpush1.bf16.msra.mxu0 %v3529
        %3557 = vmatprep.subr.bf16.mxu0 %v3528
        %3558 = vmatpush1.bf16.msra.mxu0 %v3527
        %3559 = vmatprep.subr.bf16.mxu0 %v3526
        %3560 = vmatpush1.bf16.msra.mxu0 %v3525
        %3561 = vmatprep.subr.bf16.mxu0 %v3524
        %3562 = vmatpush1.bf16.msra.mxu0 %v3523
        %3563 = vmatprep.subr.bf16.mxu0 %v3522
        %3564 = vmatpush1.bf16.msra.mxu0 %v3521
        %3565 = vmatprep.subr.bf16.mxu0 %v3520
        %3566 = vmatpush1.bf16.msra.mxu0 %v3519
        %3567 = vmatprep.subr.bf16.mxu0 0
        %3568 = vmatpush2.bf16.msra.mxu0 0
        %3569 = vmatprep.subr.bf16.mxu0 0
        %3570 = vmatpush2.bf16.msra.mxu0 0
        %3571 = vmatprep.subr.bf16.mxu0 0
        %3572 = vmatpush2.bf16.msra.mxu0 0
        %3573 = vmatprep.subr.bf16.mxu0 0
        %3574 = vmatpush2.bf16.msra.mxu0 0
        %3575 = vmatprep.subr.bf16.mxu0 0
        %3576 = vmatpush2.bf16.msra.mxu0 0
        %3577 = vmatprep.subr.bf16.mxu0 0
        %3578 = vmatpush2.bf16.msra.mxu0 0
        %3579 = vmatprep.subr.bf16.mxu0 0
        %3580 = vmatpush2.bf16.msra.mxu0 0
        %3581 = vmatprep.subr.bf16.mxu0 0
        %3582 = vmatpush2.bf16.msra.mxu0 0
        %3583 = vmatprep.mubr.bf16.mxu0 0
        %3584 = vmatmul.mubr.bf16.gmra.mxu0 %v3435
        %v3585 = vpop.f32.mrf.mxu0
        %v3586 = vadd.f32 %v3464, %v3585
        %v3587 = vpop.f32.mrf.mxu0
        %v3588 = vadd.f32 %v3468, %v3587
        %v3589 = vpop.f32.mrf.mxu0
        %v3590 = vadd.f32 %v3464, %v3589
        %v3591 = vpop.f32.mrf.mxu0
        %v3592 = vadd.f32 %v3468, %v3591
        %3593 = vmatprep.mubr.bf16.mxu0 0
        %3594 = vmatmul.mubr.bf16.gmra.mxu0 %v3436
        %v3595 = vpop.f32.mrf.mxu0
        %v3596 = vadd.f32 %v3464, %v3595
        %v3597 = vpop.f32.mrf.mxu0
        %v3598 = vadd.f32 %v3468, %v3597
        %v3599 = vpop.f32.mrf.mxu0
        %v3600 = vadd.f32 %v3464, %v3599
        %v3601 = vpop.f32.mrf.mxu0
        %v3602 = vadd.f32 %v3468, %v3601
        %3603 = vmatprep.mubr.bf16.mxu0 0
        %3604 = vmatmul.mubr.bf16.gmra.mxu0 %v3437
        %v3605 = vpop.f32.mrf.mxu0
        %v3606 = vadd.f32 %v3464, %v3605
        %v3607 = vpop.f32.mrf.mxu0
        %v3608 = vadd.f32 %v3468, %v3607
        %v3609 = vpop.f32.mrf.mxu0
        %v3610 = vadd.f32 %v3464, %v3609
        %v3611 = vpop.f32.mrf.mxu0
        %v3612 = vadd.f32 %v3468, %v3611
        %3613 = vmatprep.mubr.bf16.mxu0 0
        %3614 = vmatmul.mubr.bf16.gmra.mxu0 %v3438
        %v3615 = vpop.f32.mrf.mxu0
        %v3616 = vadd.f32 %v3464, %v3615
        %v3617 = vpop.f32.mrf.mxu0
        %v3618 = vadd.f32 %v3468, %v3617
        %v3619 = vpop.f32.mrf.mxu0
        %v3620 = vadd.f32 %v3464, %v3619
        %v3621 = vpop.f32.mrf.mxu0
        %v3622 = vadd.f32 %v3468, %v3621
        %3623 = vmatprep.mubr.bf16.mxu0 0
        %3624 = vmatmul.mubr.bf16.gmra.mxu0 %v3439
        %v3625 = vpop.f32.mrf.mxu0
        %v3626 = vadd.f32 %v3464, %v3625
        %v3627 = vpop.f32.mrf.mxu0
        %v3628 = vadd.f32 %v3468, %v3627
        %v3629 = vpop.f32.mrf.mxu0
        %v3630 = vadd.f32 %v3464, %v3629
        %v3631 = vpop.f32.mrf.mxu0
        %v3632 = vadd.f32 %v3468, %v3631
        %3633 = vmatprep.mubr.bf16.mxu0 0
        %3634 = vmatmul.mubr.bf16.gmra.mxu0 %v3440
        %v3635 = vpop.f32.mrf.mxu0
        %v3636 = vadd.f32 %v3464, %v3635
        %v3637 = vpop.f32.mrf.mxu0
        %v3638 = vadd.f32 %v3468, %v3637
        %v3639 = vpop.f32.mrf.mxu0
        %v3640 = vadd.f32 %v3464, %v3639
        %v3641 = vpop.f32.mrf.mxu0
        %v3642 = vadd.f32 %v3468, %v3641
        %3643 = vmatprep.mubr.bf16.mxu0 0
        %3644 = vmatmul.mubr.bf16.gmra.mxu0 %v3441
        %v3645 = vpop.f32.mrf.mxu0
        %v3646 = vadd.f32 %v3464, %v3645
        %v3647 = vpop.f32.mrf.mxu0
        %v3648 = vadd.f32 %v3468, %v3647
        %v3649 = vpop.f32.mrf.mxu0
        %v3650 = vadd.f32 %v3464, %v3649
        %v3651 = vpop.f32.mrf.mxu0
        %v3652 = vadd.f32 %v3468, %v3651
        %3653 = vmatprep.mubr.bf16.mxu0 0
        %3654 = vmatmul.mubr.bf16.gmra.mxu0 %v3442
        %v3655 = vpop.f32.mrf.mxu0
        %v3656 = vadd.f32 %v3464, %v3655
        %v3657 = vpop.f32.mrf.mxu0
        %v3658 = vadd.f32 %v3468, %v3657
        %v3659 = vpop.f32.mrf.mxu0
        %v3660 = vadd.f32 %v3464, %v3659
        %v3661 = vpop.f32.mrf.mxu0
        %v3662 = vadd.f32 %v3468, %v3661
        %3663 = vdwg.mxu0
        %v3664 = vmax.f32 %v3586, 0.0
        %v3665 = vmax.f32 %v3588, 0.0
        %v3666 = vmax.f32 %v3590, 0.0
        %v3667 = vmax.f32 %v3592, 0.0
        %v3668 = vmax.f32 %v3596, 0.0
        %v3669 = vmax.f32 %v3598, 0.0
        %v3670 = vmax.f32 %v3600, 0.0
        %v3671 = vmax.f32 %v3602, 0.0
        %v3672 = vmax.f32 %v3606, 0.0
        %v3673 = vmax.f32 %v3608, 0.0
        %v3674 = vmax.f32 %v3610, 0.0
        %v3675 = vmax.f32 %v3612, 0.0
        %v3676 = vmax.f32 %v3616, 0.0
        %v3677 = vmax.f32 %v3618, 0.0
        %v3678 = vmax.f32 %v3620, 0.0
        %v3679 = vmax.f32 %v3622, 0.0
        %v3680 = vmax.f32 %v3626, 0.0
        %v3681 = vmax.f32 %v3628, 0.0
        %v3682 = vmax.f32 %v3630, 0.0
        %v3683 = vmax.f32 %v3632, 0.0
        %v3684 = vmax.f32 %v3636, 0.0
        %v3685 = vmax.f32 %v3638, 0.0
        %v3686 = vmax.f32 %v3640, 0.0
        %v3687 = vmax.f32 %v3642, 0.0
        %v3688 = vmax.f32 %v3646, 0.0
        %v3689 = vmax.f32 %v3648, 0.0
        %v3690 = vmax.f32 %v3650, 0.0
        %v3691 = vmax.f32 %v3652, 0.0
        %v3692 = vmax.f32 %v3656, 0.0
        %v3693 = vmax.f32 %v3658, 0.0
        %v3694 = vmax.f32 %v3660, 0.0
        %v3695 = vmax.f32 %v3662, 0.0
        %v3696 = vpack.c.bf16 %v3666, %v3664
        %v3697 = vpack.c.bf16 %v3667, %v3665
        %v3698 = vpack.c.bf16 %v3670, %v3668
        %v3699 = vpack.c.bf16 %v3671, %v3669
        %v3700 = vpack.c.bf16 %v3674, %v3672
        %v3701 = vpack.c.bf16 %v3675, %v3673
        %v3702 = vpack.c.bf16 %v3678, %v3676
        %v3703 = vpack.c.bf16 %v3679, %v3677
        %v3704 = vpack.c.bf16 %v3682, %v3680
        %v3705 = vpack.c.bf16 %v3683, %v3681
        %v3706 = vpack.c.bf16 %v3686, %v3684
        %v3707 = vpack.c.bf16 %v3687, %v3685
        %v3708 = vpack.c.bf16 %v3690, %v3688
        %v3709 = vpack.c.bf16 %v3691, %v3689
        %v3710 = vpack.c.bf16 %v3694, %v3692
        %v3711 = vpack.c.bf16 %v3695, %v3693
        %v3712 = vld [vmem:[#allocation4] sm:$0xf]
        %v3713 = vld [vmem:[#allocation4 + $0x4] sm:$0xf]
        %v3714 = vld [vmem:[#allocation4 + $0x8] sm:$0xf]
        %v3715 = vld [vmem:[#allocation4 + $0xc] sm:$0xf]
        %v3716 = vld [vmem:[#allocation4 + $0x10] sm:$0xf]
        %v3717 = vld [vmem:[#allocation4 + $0x14] sm:$0xf]
        %v3718 = vld [vmem:[#allocation4 + $0x18] sm:$0xf]
        %v3719 = vld [vmem:[#allocation4 + $0x1c] sm:$0xf]
        %v3720 = vld [vmem:[#allocation4 + $0x20] sm:$0xf]
        %v3721 = vld [vmem:[#allocation4 + $0x24] sm:$0xf]
        %v3722 = vld [vmem:[#allocation4 + $0x28] sm:$0xf]
        %v3723 = vld [vmem:[#allocation4 + $0x2c] sm:$0xf]
        %v3724 = vld [vmem:[#allocation4 + $0x30] sm:$0xf]
        %v3725 = vld [vmem:[#allocation4 + $0x34] sm:$0xf]
        %v3726 = vld [vmem:[#allocation4 + $0x38] sm:$0xf]
        %v3727 = vld [vmem:[#allocation4 + $0x3c] sm:$0xf]
        %v3728 = vld [vmem:[#allocation4 + $0x40] sm:$0xf]
        %v3729 = vld [vmem:[#allocation4 + $0x44] sm:$0xf]
        %v3730 = vld [vmem:[#allocation4 + $0x48] sm:$0xf]
        %v3731 = vld [vmem:[#allocation4 + $0x4c] sm:$0xf]
        %v3732 = vld [vmem:[#allocation4 + $0x50] sm:$0xf]
        %v3733 = vld [vmem:[#allocation4 + $0x54] sm:$0xf]
        %v3734 = vld [vmem:[#allocation4 + $0x58] sm:$0xf]
        %v3735 = vld [vmem:[#allocation4 + $0x5c] sm:$0xf]
        %v3736 = vld [vmem:[#allocation4 + $0x60] sm:$0xf]
        %v3737 = vld [vmem:[#allocation4 + $0x64] sm:$0xf]
        %v3738 = vld [vmem:[#allocation4 + $0x68] sm:$0xf]
        %v3739 = vld [vmem:[#allocation4 + $0x6c] sm:$0xf]
        %v3740 = vld [vmem:[#allocation4 + $0x70] sm:$0xf]
        %v3741 = vld [vmem:[#allocation4 + $0x74] sm:$0xf]
        %v3742 = vld [vmem:[#allocation4 + $0x78] sm:$0xf]
        %v3743 = vld [vmem:[#allocation4 + $0x7c] sm:$0xf]
        %v3744 = vld [vmem:[%s11] sm:$0x1]
        %v3746 = vlaneseq
        %v3747 = vshrl.u32 %v3746, 7
        %v3748 = vsub.s32 0, %v3747
        %v3749 = vrot.slane %v3744, %v3748
        %v3783 = vunpack.c.l.b16 %v3712
        %v3784 = vunpack.c.l.b16 %v3713
        %v3785 = vunpack.c.l.b16 %v3714
        %v3786 = vunpack.c.l.b16 %v3715
        %v3787 = vunpack.c.l.b16 %v3716
        %v3788 = vunpack.c.l.b16 %v3717
        %v3789 = vunpack.c.l.b16 %v3718
        %v3790 = vunpack.c.l.b16 %v3719
        %v3791 = vunpack.c.l.b16 %v3720
        %v3792 = vunpack.c.l.b16 %v3721
        %v3793 = vunpack.c.l.b16 %v3722
        %v3794 = vunpack.c.l.b16 %v3723
        %v3795 = vunpack.c.l.b16 %v3724
        %v3796 = vunpack.c.l.b16 %v3725
        %v3797 = vunpack.c.l.b16 %v3726
        %v3798 = vunpack.c.l.b16 %v3727
        %v3799 = vunpack.c.l.b16 %v3728
        %v3800 = vunpack.c.l.b16 %v3729
        %v3801 = vunpack.c.l.b16 %v3730
        %v3802 = vunpack.c.l.b16 %v3731
        %v3803 = vunpack.c.l.b16 %v3732
        %v3804 = vunpack.c.l.b16 %v3733
        %v3805 = vunpack.c.l.b16 %v3734
        %v3806 = vunpack.c.l.b16 %v3735
        %v3807 = vunpack.c.l.b16 %v3736
        %v3808 = vunpack.c.l.b16 %v3737
        %v3809 = vunpack.c.l.b16 %v3738
        %v3810 = vunpack.c.l.b16 %v3739
        %v3811 = vunpack.c.l.b16 %v3740
        %v3812 = vunpack.c.l.b16 %v3741
        %v3813 = vunpack.c.l.b16 %v3742
        %v3814 = vunpack.c.l.b16 %v3743
        %v3815 = vpack.c.b16 %v3784, %v3783
        %v3816 = vpack.c.b16 %v3786, %v3785
        %v3817 = vpack.c.b16 %v3788, %v3787
        %v3818 = vpack.c.b16 %v3790, %v3789
        %v3819 = vpack.c.b16 %v3792, %v3791
        %v3820 = vpack.c.b16 %v3794, %v3793
        %v3821 = vpack.c.b16 %v3796, %v3795
        %v3822 = vpack.c.b16 %v3798, %v3797
        %v3823 = vpack.c.b16 %v3800, %v3799
        %v3824 = vpack.c.b16 %v3802, %v3801
        %v3825 = vpack.c.b16 %v3804, %v3803
        %v3826 = vpack.c.b16 %v3806, %v3805
        %v3827 = vpack.c.b16 %v3808, %v3807
        %v3828 = vpack.c.b16 %v3810, %v3809
        %v3829 = vpack.c.b16 %v3812, %v3811
        %v3830 = vpack.c.b16 %v3814, %v3813
        %3847 = vmatprep.subr.bf16.mxu0 0
        %3848 = vmatpush1.bf16.msra.mxu0 %v3822
        %3849 = vmatprep.subr.bf16.mxu0 0
        %3850 = vmatpush1.bf16.msra.mxu0 %v3821
        %3851 = vmatprep.subr.bf16.mxu0 0
        %3852 = vmatpush1.bf16.msra.mxu0 %v3820
        %3853 = vmatprep.subr.bf16.mxu0 0
        %3854 = vmatpush1.bf16.msra.mxu0 %v3819
        %3855 = vmatprep.subr.bf16.mxu0 0
        %3856 = vmatpush1.bf16.msra.mxu0 %v3818
        %3857 = vmatprep.subr.bf16.mxu0 0
        %3858 = vmatpush1.bf16.msra.mxu0 %v3817
        %3859 = vmatprep.subr.bf16.mxu0 0
        %3860 = vmatpush1.bf16.msra.mxu0 %v3816
        %3861 = vmatprep.subr.bf16.mxu0 0
        %3862 = vmatpush1.bf16.msra.mxu0 %v3815
        %3863 = vmatprep.subr.bf16.mxu0 0
        %3864 = vmatpush2.bf16.msra.mxu0 %v3830
        %3865 = vmatprep.subr.bf16.mxu0 0
        %3866 = vmatpush2.bf16.msra.mxu0 %v3829
        %3867 = vmatprep.subr.bf16.mxu0 0
        %3868 = vmatpush2.bf16.msra.mxu0 %v3828
        %3869 = vmatprep.subr.bf16.mxu0 0
        %3870 = vmatpush2.bf16.msra.mxu0 %v3827
        %3871 = vmatprep.subr.bf16.mxu0 0
        %3872 = vmatpush2.bf16.msra.mxu0 %v3826
        %3873 = vmatprep.subr.bf16.mxu0 0
        %3874 = vmatpush2.bf16.msra.mxu0 %v3825
        %3875 = vmatprep.subr.bf16.mxu0 0
        %3876 = vmatpush2.bf16.msra.mxu0 %v3824
        %3877 = vmatprep.subr.bf16.mxu0 0
        %3878 = vmatpush2.bf16.msra.mxu0 %v3823
        %3879 = vmatprep.mubr.bf16.mxu0 %v3697
        %3880 = vmatmul.mubr.bf16.gmra.mxu0 %v3696
        %v3881 = vpop.f32.mrf.mxu0
        %v3882 = vadd.f32 %v3749, %v3881
        %v3883 = vpop.f32.mrf.mxu0
        %v3884 = vpop.f32.mrf.mxu0
        %v3885 = vadd.f32 %v3749, %v3884
        %v3886 = vpop.f32.mrf.mxu0
        %3887 = vmatprep.mubr.bf16.mxu0 %v3699
        %3888 = vmatmul.mubr.bf16.gmra.mxu0 %v3698
        %v3889 = vpop.f32.mrf.mxu0
        %v3890 = vadd.f32 %v3749, %v3889
        %v3891 = vpop.f32.mrf.mxu0
        %v3892 = vpop.f32.mrf.mxu0
        %v3893 = vadd.f32 %v3749, %v3892
        %v3894 = vpop.f32.mrf.mxu0
        %3895 = vmatprep.mubr.bf16.mxu0 %v3701
        %3896 = vmatmul.mubr.bf16.gmra.mxu0 %v3700
        %v3897 = vpop.f32.mrf.mxu0
        %v3898 = vadd.f32 %v3749, %v3897
        %v3899 = vpop.f32.mrf.mxu0
        %v3900 = vpop.f32.mrf.mxu0
        %v3901 = vadd.f32 %v3749, %v3900
        %v3902 = vpop.f32.mrf.mxu0
        %3903 = vmatprep.mubr.bf16.mxu0 %v3703
        %3904 = vmatmul.mubr.bf16.gmra.mxu0 %v3702
        %v3905 = vpop.f32.mrf.mxu0
        %v3906 = vadd.f32 %v3749, %v3905
        %v3907 = vpop.f32.mrf.mxu0
        %v3908 = vpop.f32.mrf.mxu0
        %v3909 = vadd.f32 %v3749, %v3908
        %v3910 = vpop.f32.mrf.mxu0
        %3911 = vmatprep.mubr.bf16.mxu0 %v3705
        %3912 = vmatmul.mubr.bf16.gmra.mxu0 %v3704
        %v3913 = vpop.f32.mrf.mxu0
        %v3914 = vadd.f32 %v3749, %v3913
        %v3915 = vpop.f32.mrf.mxu0
        %v3916 = vpop.f32.mrf.mxu0
        %v3917 = vadd.f32 %v3749, %v3916
        %v3918 = vpop.f32.mrf.mxu0
        %3919 = vmatprep.mubr.bf16.mxu0 %v3707
        %3920 = vmatmul.mubr.bf16.gmra.mxu0 %v3706
        %v3921 = vpop.f32.mrf.mxu0
        %v3922 = vadd.f32 %v3749, %v3921
        %v3923 = vpop.f32.mrf.mxu0
        %v3924 = vpop.f32.mrf.mxu0
        %v3925 = vadd.f32 %v3749, %v3924
        %v3926 = vpop.f32.mrf.mxu0
        %3927 = vmatprep.mubr.bf16.mxu0 %v3709
        %3928 = vmatmul.mubr.bf16.gmra.mxu0 %v3708
        %v3929 = vpop.f32.mrf.mxu0
        %v3930 = vadd.f32 %v3749, %v3929
        %v3931 = vpop.f32.mrf.mxu0
        %v3932 = vpop.f32.mrf.mxu0
        %v3933 = vadd.f32 %v3749, %v3932
        %v3934 = vpop.f32.mrf.mxu0
        %3935 = vmatprep.mubr.bf16.mxu0 %v3711
        %3936 = vmatmul.mubr.bf16.gmra.mxu0 %v3710
        %v3937 = vpop.f32.mrf.mxu0
        %v3938 = vadd.f32 %v3749, %v3937
        %v3939 = vpop.f32.mrf.mxu0
        %v3940 = vpop.f32.mrf.mxu0
        %v3941 = vadd.f32 %v3749, %v3940
        %v3942 = vpop.f32.mrf.mxu0
        %3943 = vdwg.mxu0
        %v3944 = vadd.f32 %v3882, %v3419
        %v3945 = vadd.f32 %v3885, %v3420
        %v3946 = vadd.f32 %v3890, %v3421
        %v3947 = vadd.f32 %v3893, %v3422
        %v3948 = vadd.f32 %v3898, %v3423
        %v3949 = vadd.f32 %v3901, %v3424
        %v3950 = vadd.f32 %v3906, %v3425
        %v3951 = vadd.f32 %v3909, %v3426
        %v3952 = vadd.f32 %v3914, %v3427
        %v3953 = vadd.f32 %v3917, %v3428
        %v3954 = vadd.f32 %v3922, %v3429
        %v3955 = vadd.f32 %v3925, %v3430
        %v3956 = vadd.f32 %v3930, %v3431
        %v3957 = vadd.f32 %v3933, %v3432
        %v3958 = vadd.f32 %v3938, %v3433
        %v3959 = vadd.f32 %v3941, %v3434
        %v3960 = vld [vmem:[%s12] sm:$0x1]
        %v3961 = vld [vmem:[%s13] sm:$0x1]
        %3962 = vadd.xlane.f32.xlu0 %v3944
        %v3963 = vpop.xlane.xlu0 %3962
        %3964 = vadd.xlane.f32.xlu0 %v3945
        %v3965 = vpop.xlane.xlu0 %3964
        %3966 = vadd.xlane.f32.xlu0 %v3946
        %v3967 = vpop.xlane.xlu0 %3966
        %3968 = vadd.xlane.f32.xlu0 %v3947
        %v3969 = vpop.xlane.xlu0 %3968
        %3970 = vadd.xlane.f32.xlu0 %v3948
        %v3971 = vpop.xlane.xlu0 %3970
        %3972 = vadd.xlane.f32.xlu0 %v3949
        %v3973 = vpop.xlane.xlu0 %3972
        %3974 = vadd.xlane.f32.xlu0 %v3950
        %v3975 = vpop.xlane.xlu0 %3974
        %3976 = vadd.xlane.f32.xlu0 %v3951
        %v3977 = vpop.xlane.xlu0 %3976
        %3978 = vadd.xlane.f32.xlu0 %v3952
        %v3979 = vpop.xlane.xlu0 %3978
        %3980 = vadd.xlane.f32.xlu0 %v3953
        %v3981 = vpop.xlane.xlu0 %3980
        %3982 = vadd.xlane.f32.xlu0 %v3954
        %v3983 = vpop.xlane.xlu0 %3982
        %3984 = vadd.xlane.f32.xlu0 %v3955
        %v3985 = vpop.xlane.xlu0 %3984
        %3986 = vadd.xlane.f32.xlu0 %v3956
        %v3987 = vpop.xlane.xlu0 %3986
        %3988 = vadd.xlane.f32.xlu0 %v3957
        %v3989 = vpop.xlane.xlu0 %3988
        %3990 = vadd.xlane.f32.xlu0 %v3958
        %v3991 = vpop.xlane.xlu0 %3990
        %3992 = vadd.xlane.f32.xlu0 %v3959
        %v3993 = vpop.xlane.xlu0 %3992
        %v3994 = vmul.f32 %v3963, %v3246
        %v3995 = vmul.f32 %v3965, %v3246
        %v3996 = vmul.f32 %v3967, %v3246
        %v3997 = vmul.f32 %v3969, %v3246
        %v3998 = vmul.f32 %v3971, %v3246
        %v3999 = vmul.f32 %v3973, %v3246
        %v4000 = vmul.f32 %v3975, %v3246
        %v4001 = vmul.f32 %v3977, %v3246
        %v4002 = vmul.f32 %v3979, %v3246
        %v4003 = vmul.f32 %v3981, %v3246
        %v4004 = vmul.f32 %v3983, %v3246
        %v4005 = vmul.f32 %v3985, %v3246
        %v4006 = vmul.f32 %v3987, %v3246
        %v4007 = vmul.f32 %v3989, %v3246
        %v4008 = vmul.f32 %v3991, %v3246
        %v4009 = vmul.f32 %v3993, %v3246
        %v4010 = vsub.f32 %v3944, %v3994
        %v4011 = vsub.f32 %v3945, %v3995
        %v4012 = vsub.f32 %v3946, %v3996
        %v4013 = vsub.f32 %v3947, %v3997
        %v4014 = vsub.f32 %v3948, %v3998
        %v4015 = vsub.f32 %v3949, %v3999
        %v4016 = vsub.f32 %v3950, %v4000
        %v4017 = vsub.f32 %v3951, %v4001
        %v4018 = vsub.f32 %v3952, %v4002
        %v4019 = vsub.f32 %v3953, %v4003
        %v4020 = vsub.f32 %v3954, %v4004
        %v4021 = vsub.f32 %v3955, %v4005
        %v4022 = vsub.f32 %v3956, %v4006
        %v4023 = vsub.f32 %v3957, %v4007
        %v4024 = vsub.f32 %v3958, %v4008
        %v4025 = vsub.f32 %v3959, %v4009
        %v4026 = vmul.f32 %v4010, %v4010
        %v4027 = vmul.f32 %v4011, %v4011
        %v4028 = vmul.f32 %v4012, %v4012
        %v4029 = vmul.f32 %v4013, %v4013
        %v4030 = vmul.f32 %v4014, %v4014
        %v4031 = vmul.f32 %v4015, %v4015
        %v4032 = vmul.f32 %v4016, %v4016
        %v4033 = vmul.f32 %v4017, %v4017
        %v4034 = vmul.f32 %v4018, %v4018
        %v4035 = vmul.f32 %v4019, %v4019
        %v4036 = vmul.f32 %v4020, %v4020
        %v4037 = vmul.f32 %v4021, %v4021
        %v4038 = vmul.f32 %v4022, %v4022
        %v4039 = vmul.f32 %v4023, %v4023
        %v4040 = vmul.f32 %v4024, %v4024
        %v4041 = vmul.f32 %v4025, %v4025
        %4042 = vadd.xlane.f32.xlu0 %v4026
        %v4043 = vpop.xlane.xlu0 %4042
        %4044 = vadd.xlane.f32.xlu0 %v4027
        %v4045 = vpop.xlane.xlu0 %4044
        %4046 = vadd.xlane.f32.xlu0 %v4028
        %v4047 = vpop.xlane.xlu0 %4046
        %4048 = vadd.xlane.f32.xlu0 %v4029
        %v4049 = vpop.xlane.xlu0 %4048
        %4050 = vadd.xlane.f32.xlu0 %v4030
        %v4051 = vpop.xlane.xlu0 %4050
        %4052 = vadd.xlane.f32.xlu0 %v4031
        %v4053 = vpop.xlane.xlu0 %4052
        %4054 = vadd.xlane.f32.xlu0 %v4032
        %v4055 = vpop.xlane.xlu0 %4054
        %4056 = vadd.xlane.f32.xlu0 %v4033
        %v4057 = vpop.xlane.xlu0 %4056
        %4058 = vadd.xlane.f32.xlu0 %v4034
        %v4059 = vpop.xlane.xlu0 %4058
        %4060 = vadd.xlane.f32.xlu0 %v4035
        %v4061 = vpop.xlane.xlu0 %4060
        %4062 = vadd.xlane.f32.xlu0 %v4036
        %v4063 = vpop.xlane.xlu0 %4062
        %4064 = vadd.xlane.f32.xlu0 %v4037
        %v4065 = vpop.xlane.xlu0 %4064
        %4066 = vadd.xlane.f32.xlu0 %v4038
        %v4067 = vpop.xlane.xlu0 %4066
        %4068 = vadd.xlane.f32.xlu0 %v4039
        %v4069 = vpop.xlane.xlu0 %4068
        %4070 = vadd.xlane.f32.xlu0 %v4040
        %v4071 = vpop.xlane.xlu0 %4070
        %4072 = vadd.xlane.f32.xlu0 %v4041
        %v4073 = vpop.xlane.xlu0 %4072
        %v4074 = vmul.f32 %v4043, %v3246
        %v4075 = vmul.f32 %v4045, %v3246
        %v4076 = vmul.f32 %v4047, %v3246
        %v4077 = vmul.f32 %v4049, %v3246
        %v4078 = vmul.f32 %v4051, %v3246
        %v4079 = vmul.f32 %v4053, %v3246
        %v4080 = vmul.f32 %v4055, %v3246
        %v4081 = vmul.f32 %v4057, %v3246
        %v4082 = vmul.f32 %v4059, %v3246
        %v4083 = vmul.f32 %v4061, %v3246
        %v4084 = vmul.f32 %v4063, %v3246
        %v4085 = vmul.f32 %v4065, %v3246
        %v4086 = vmul.f32 %v4067, %v3246
        %v4087 = vmul.f32 %v4069, %v3246
        %v4088 = vmul.f32 %v4071, %v3246
        %v4089 = vmul.f32 %v4073, %v3246
        %v4090 = vadd.f32 %v4074, 1e-06
        %v4091 = vadd.f32 %v4075, 1e-06
        %v4092 = vadd.f32 %v4076, 1e-06
        %v4093 = vadd.f32 %v4077, 1e-06
        %v4094 = vadd.f32 %v4078, 1e-06
        %v4095 = vadd.f32 %v4079, 1e-06
        %v4096 = vadd.f32 %v4080, 1e-06
        %v4097 = vadd.f32 %v4081, 1e-06
        %v4098 = vadd.f32 %v4082, 1e-06
        %v4099 = vadd.f32 %v4083, 1e-06
        %v4100 = vadd.f32 %v4084, 1e-06
        %v4101 = vadd.f32 %v4085, 1e-06
        %v4102 = vadd.f32 %v4086, 1e-06
        %v4103 = vadd.f32 %v4087, 1e-06
        %v4104 = vadd.f32 %v4088, 1e-06
        %v4105 = vadd.f32 %v4089, 1e-06
        %v4106 = vrsqrt.pop %v4090
        %v4107 = vrsqrt.pop %v4091
        %v4108 = vrsqrt.pop %v4092
        %v4109 = vrsqrt.pop %v4093
        %v4110 = vrsqrt.pop %v4094
        %v4111 = vrsqrt.pop %v4095
        %v4112 = vrsqrt.pop %v4096
        %v4113 = vrsqrt.pop %v4097
        %v4114 = vrsqrt.pop %v4098
        %v4115 = vrsqrt.pop %v4099
        %v4116 = vrsqrt.pop %v4100
        %v4117 = vrsqrt.pop %v4101
        %v4118 = vrsqrt.pop %v4102
        %v4119 = vrsqrt.pop %v4103
        %v4120 = vrsqrt.pop %v4104
        %v4121 = vrsqrt.pop %v4105
        %v4122 = vmul.f32 %v4010, %v4106
        %v4123 = vmul.f32 %v4011, %v4107
        %v4124 = vmul.f32 %v4012, %v4108
        %v4125 = vmul.f32 %v4013, %v4109
        %v4126 = vmul.f32 %v4014, %v4110
        %v4127 = vmul.f32 %v4015, %v4111
        %v4128 = vmul.f32 %v4016, %v4112
        %v4129 = vmul.f32 %v4017, %v4113
        %v4130 = vmul.f32 %v4018, %v4114
        %v4131 = vmul.f32 %v4019, %v4115
        %v4132 = vmul.f32 %v4020, %v4116
        %v4133 = vmul.f32 %v4021, %v4117
        %v4134 = vmul.f32 %v4022, %v4118
        %v4135 = vmul.f32 %v4023, %v4119
        %v4136 = vmul.f32 %v4024, %v4120
        %v4137 = vmul.f32 %v4025, %v4121
        %v4139 = vlaneseq
        %v4140 = vshrl.u32 %v4139, 7
        %v4141 = vsub.s32 0, %v4140
        %v4142 = vrot.slane %v3960, %v4141
        %v4144 = vmul.f32 %v4122, %v4142
        %v4145 = vmul.f32 %v4123, %v4142
        %v4146 = vmul.f32 %v4124, %v4142
        %v4147 = vmul.f32 %v4125, %v4142
        %v4148 = vmul.f32 %v4126, %v4142
        %v4149 = vmul.f32 %v4127, %v4142
        %v4150 = vmul.f32 %v4128, %v4142
        %v4151 = vmul.f32 %v4129, %v4142
        %v4152 = vmul.f32 %v4130, %v4142
        %v4153 = vmul.f32 %v4131, %v4142
        %v4154 = vmul.f32 %v4132, %v4142
        %v4155 = vmul.f32 %v4133, %v4142
        %v4156 = vmul.f32 %v4134, %v4142
        %v4157 = vmul.f32 %v4135, %v4142
        %v4158 = vmul.f32 %v4136, %v4142
        %v4159 = vmul.f32 %v4137, %v4142
        %v4161 = vlaneseq
        %v4162 = vshrl.u32 %v4161, 7
        %v4163 = vsub.s32 0, %v4162
        %v4164 = vrot.slane %v3961, %v4163
        %v4166 = vadd.f32 %v4144, %v4164
        %v4167 = vadd.f32 %v4145, %v4164
        %v4168 = vadd.f32 %v4146, %v4164
        %v4169 = vadd.f32 %v4147, %v4164
        %v4170 = vadd.f32 %v4148, %v4164
        %v4171 = vadd.f32 %v4149, %v4164
        %v4172 = vadd.f32 %v4150, %v4164
        %v4173 = vadd.f32 %v4151, %v4164
        %v4174 = vadd.f32 %v4152, %v4164
        %v4175 = vadd.f32 %v4153, %v4164
        %v4176 = vadd.f32 %v4154, %v4164
        %v4177 = vadd.f32 %v4155, %v4164
        %v4178 = vadd.f32 %v4156, %v4164
        %v4179 = vadd.f32 %v4157, %v4164
        %v4180 = vadd.f32 %v4158, %v4164
        %v4181 = vadd.f32 %v4159, %v4164
        %v4182 = vpack.c.bf16 %v4167, %v4166
        %v4183 = vpack.c.bf16 %v4169, %v4168
        %v4184 = vpack.c.bf16 %v4171, %v4170
        %v4185 = vpack.c.bf16 %v4173, %v4172
        %v4186 = vpack.c.bf16 %v4175, %v4174
        %v4187 = vpack.c.bf16 %v4177, %v4176
        %v4188 = vpack.c.bf16 %v4179, %v4178
        %v4189 = vpack.c.bf16 %v4181, %v4180
        %v4198 = vunpack.c.l.b16 %v4182
        %v4199 = vunpack.c.h.b16 %v4182
        %v4200 = vunpack.c.l.b16 %v4183
        %v4201 = vunpack.c.h.b16 %v4183
        %v4202 = vunpack.c.l.b16 %v4184
        %v4203 = vunpack.c.h.b16 %v4184
        %v4204 = vunpack.c.l.b16 %v4185
        %v4205 = vunpack.c.h.b16 %v4185
        %v4206 = vunpack.c.l.b16 %v4186
        %v4207 = vunpack.c.h.b16 %v4186
        %v4208 = vunpack.c.l.b16 %v4187
        %v4209 = vunpack.c.h.b16 %v4187
        %v4210 = vunpack.c.l.b16 %v4188
        %v4211 = vunpack.c.h.b16 %v4188
        %v4212 = vunpack.c.l.b16 %v4189
        %v4213 = vunpack.c.h.b16 %v4189
        %v4214 = vpack.c.b16 %v4198, %v4198
        %v4215 = vpack.c.b16 %v4199, %v4199
        %v4216 = vpack.c.b16 %v4200, %v4200
        %v4217 = vpack.c.b16 %v4201, %v4201
        %v4218 = vpack.c.b16 %v4202, %v4202
        %v4219 = vpack.c.b16 %v4203, %v4203
        %v4220 = vpack.c.b16 %v4204, %v4204
        %v4221 = vpack.c.b16 %v4205, %v4205
        %v4222 = vpack.c.b16 %v4206, %v4206
        %v4223 = vpack.c.b16 %v4207, %v4207
        %v4224 = vpack.c.b16 %v4208, %v4208
        %v4225 = vpack.c.b16 %v4209, %v4209
        %v4226 = vpack.c.b16 %v4210, %v4210
        %v4227 = vpack.c.b16 %v4211, %v4211
        %v4228 = vpack.c.b16 %v4212, %v4212
        %v4229 = vpack.c.b16 %v4213, %v4213
        %4246 = vst [vmem:[%s509] sm:$0xf] %v4214
        %4247 = vst [vmem:[%s509 + $0x4] sm:$0xf] %v4215
        %4248 = vst [vmem:[%s509 + $0x8] sm:$0xf] %v4216
        %4249 = vst [vmem:[%s509 + $0xc] sm:$0xf] %v4217
        %4250 = vst [vmem:[%s509 + $0x10] sm:$0xf] %v4218
        %4251 = vst [vmem:[%s509 + $0x14] sm:$0xf] %v4219
        %4252 = vst [vmem:[%s509 + $0x18] sm:$0xf] %v4220
        %4253 = vst [vmem:[%s509 + $0x1c] sm:$0xf] %v4221
        %4254 = vst [vmem:[%s509 + $0x20] sm:$0xf] %v4222
        %4255 = vst [vmem:[%s509 + $0x24] sm:$0xf] %v4223
        %4256 = vst [vmem:[%s509 + $0x28] sm:$0xf] %v4224
        %4257 = vst [vmem:[%s509 + $0x2c] sm:$0xf] %v4225
        %4258 = vst [vmem:[%s509 + $0x30] sm:$0xf] %v4226
        %4259 = vst [vmem:[%s509 + $0x34] sm:$0xf] %v4227
        %4260 = vst [vmem:[%s509 + $0x38] sm:$0xf] %v4228
        %4261 = vst [vmem:[%s509 + $0x3c] sm:$0xf] %v4229
        %p4262 = scmp.lt.s32.totalorder %s27, 1
        %s4263 = scalar_select %p4262, %s27, 1
        %s4264 = smul.addr %s4263, 16
        %s4265 = smul.addr %s4264, 4
        %s4266 = scalar_lea.vmem %s14, %s4265
        // Predicated region
        $region85: #{bert_forward.2} parent=75 // pred_check
          %p4267 = pneg %p349
        $region86: #{bert_forward.2} parent=75 // pred_check_branch
          %4269 = sbr.rel (%p4267) target = $region88
        $region87: #{bert_forward.2} parent=75 // pred_region
          _
        $region88: #{bert_forward.2} parent=75 // pred_fallthru
          _
      $region76: #{bert_forward.2} parent=5 // pred_fallthru
        _
      %p4270 = scmp.le.s32.totalorder 2, %s22
      // Predicated region
      $region89: #{bert_forward.2} parent=5 // pred_check
        %p4271 = pneg %p4270
      $region90: #{bert_forward.2} parent=5 // pred_check_branch
        %4273 = sbr.rel (%p4271) target = $region92
      $region91: #{bert_forward.2} parent=5 // pred_region
        %s4274 = ssub.s32 %s22, 2
        // Predicated region
        $region93: #{bert_forward.2} parent=91 // pred_check
          %p4275 = pneg %p355
        $region94: #{bert_forward.2} parent=91 // pred_check_branch
          %4277 = sbr.rel (%p4275) target = $region96
        $region95: #{bert_forward.2} parent=91 // pred_region
          %p4278 = scmp.lt.s32.totalorder %s28, 1
          %s4279 = scalar_select %p4278, %s28, 1
          %s4280 = smul.addr %s4279, 16
          %s4281 = smul.addr %s4280, 4
          %s4282 = scalar_lea.vmem %s14, %s4281
        $region96: #{bert_forward.2} parent=91 // pred_fallthru
          _
      $region92: #{bert_forward.2} parent=5 // pred_fallthru
        _
    $region6: #{bert_forward.2} parent=1 // loop_footer
      %s26 = sadd.s32 1, %s22
    $region7: #{bert_forward.2} parent=1 // loop_footer_branch
      %21 = sbr.rel target = $region3
    $region8: #{bert_forward.2} parent=1 // loop_exit
      _
    %4283 = vsyncpa [#allocation3], 1
    %s4284 = scalar_lea.sflag [#allocation3], 1
    %4285 = vsyncpa %s4284, 1
    %4286 = vsyncpa [#allocation5], 1

// kernel: bert_forward.3
$region0: #{bert_forward.3}
  #allocation0 [shape = 'u32[]', space=smem, size = 0x4, offset = 0x4, fixed_abs, tag = 'smem constant byte address 0x4 - core index']
  #allocation1 [shape = 'u32[144,128]{1,0:T(1,128)}', space=vmem, size = 0x12000, scoped, tag = 'internal scratch']
  %s0 = inlined_call_operand.vmem [shape: bf16[2,128,128], index: 0, kind: input, shape index: {}, may-alias: {0,14}]
  %s1 = inlined_call_operand.vmem [shape: f32[2,1,128], index: 1, kind: input, shape index: {}]
  %s2 = inlined_call_operand.vmem [shape: bf16[128,384], index: 2, kind: input, shape index: {}]
  %s3 = inlined_call_operand.vmem [shape: f32[1,384], index: 3, kind: input, shape index: {}]
  %s4 = inlined_call_operand.vmem [shape: bf16[128,128], index: 4, kind: input, shape index: {}]
  %s5 = inlined_call_operand.vmem [shape: f32[1,128], index: 5, kind: input, shape index: {}]
  %s6 = inlined_call_operand.vmem [shape: f32[1,128], index: 6, kind: input, shape index: {}]
  %s7 = inlined_call_operand.vmem [shape: f32[1,128], index: 7, kind: input, shape index: {}]
  %s8 = inlined_call_operand.vmem [shape: bf16[128,256], index: 8, kind: input, shape index: {}]
  %s9 = inlined_call_operand.vmem [shape: f32[1,256], index: 9, kind: input, shape index: {}]
  %s10 = inlined_call_operand.vmem [shape: bf16[256,128], index: 10, kind: input, shape index: {}]
  %s11 = inlined_call_operand.vmem [shape: f32[1,128], index: 11, kind: input, shape index: {}]
  %s12 = inlined_call_operand.vmem [shape: f32[1,128], index: 12, kind: input, shape index: {}]
  %s13 = inlined_call_operand.vmem [shape: f32[1,128], index: 13, kind: input, shape index: {}]
  %s14 = inlined_call_operand.vmem [shape: bf16[2,128,128], index: 14, kind: output, shape index: {}, may-alias: {0,14}]
  %s15 = sld [smem:[#allocation0]]
  $region89: #{bert_forward.3} parent=0
    _
  %s17 = ssub.s32 1, %s15
  %s18 = scalar_select 0, %s17, %s15
  loop: start=0, step=1, limit=4
  $region2: #{bert_forward.3} parent=0 // loop_pre_header
    _
  $region3: #{bert_forward.3} parent=0 // loop_header
    %s20 = sphi 0, %s24
    %p21 = scmp.ge.s32.totalorder %s20, 4
    %s30 = sphi 0, %s32
    %s33 = sphi 0, %s30
    %s34 = sphi 0, %s33
    %s50 = sphi 0, %s34
    %s56 = sphi 0, %s58
    %s59 = sphi 0, %s56
    %s60 = sphi 0, %s59
    %s76 = sphi 0, %s60
    %s80 = sphi 0, %s80
    %s82 = sphi 0, %s80
    %s83 = sphi 0, %s82
    %s97 = sphi 0, %s83
    %s101 = sphi 0, %s101
    %s103 = sphi 0, %s101
    %s104 = sphi 0, %s103
    %s118 = sphi 0, %s104
    %s122 = sphi 0, %s122
    %s124 = sphi 0, %s122
    %s125 = sphi 0, %s124
    %s139 = sphi 0, %s125
    %s143 = sphi 0, %s143
    %s145 = sphi 0, %s143
    %s146 = sphi 0, %s145
    %s160 = sphi 0, %s146
    %s164 = sphi 0, %s164
    %s166 = sphi 0, %s164
    %s167 = sphi 0, %s166
    %s181 = sphi 0, %s167
    %s185 = sphi 0, %s185
    %s187 = sphi 0, %s185
    %s188 = sphi 0, %s187
    %s202 = sphi 0, %s188
    %s206 = sphi 0, %s206
    %s208 = sphi 0, %s206
    %s209 = sphi 0, %s208
    %s223 = sphi 0, %s209
    %s227 = sphi 0, %s227
    %s229 = sphi 0, %s227
    %s230 = sphi 0, %s229
    %s244 = sphi 0, %s230
    %s248 = sphi 0, %s248
    %s250 = sphi 0, %s248
    %s251 = sphi 0, %s250
    %s265 = sphi 0, %s251
    %s269 = sphi 0, %s269
    %s271 = sphi 0, %s269
    %s272 = sphi 0, %s271
    %s286 = sphi 0, %s272
    %s290 = sphi 0, %s290
    %s292 = sphi 0, %s290
    %s293 = sphi 0, %s292
    %s307 = sphi 0, %s293
    %s311 = sphi 0, %s311
    %s313 = sphi 0, %s311
    %s314 = sphi 0, %s313
    %s328 = sphi 0, %s314
    %s334 = sphi 0, %s336
    %s337 = sphi 0, %s334
    %s338 = sphi 0, %s337
    %s354 = sphi 0, %s338
  $region4: #{bert_forward.3} parent=0 // loop_header_branch
    %23 = sbr.rel (%p21) target = $region8
  $region5: #{bert_forward.3} parent=0 // loop_body
    %s25 = ssub.s32 %s20, 1
    %s26 = ssub.s32 %s20, 2
    %s27 = sadd.s32 %s20, 1
    %s28 = ssub.s32 %s20, %s27
    %p29 = scmp.eq.s32.totalorder %s28, 0
    %s31 = sadd.s32 %s30, 1
    %s32 = scalar_select %p29, %s30, %s31
    %p35 = pneg %p29
    %p36 = scmp.eq.s32.totalorder %s20, 1
    %p37 = por %p35, %p36
    %p38 = scmp.ne.s32.totalorder %s30, %s33
    %p39 = scmp.eq.s32.totalorder %s20, 0
    %p40 = por %p38, %p39
    %p41 = scmp.ne.s32.totalorder %s30, %s33
    %p42 = scmp.eq.s32.totalorder %s25, 1
    %p43 = por %p41, %p42
    %p44 = scmp.ne.s32.totalorder %s33, %s34
    %p45 = scmp.eq.s32.totalorder %s25, 0
    %p46 = por %p44, %p45
    %p47 = scmp.ne.s32.totalorder %s33, %s34
    %p48 = scmp.eq.s32.totalorder %s26, 1
    %p49 = por %p47, %p48
    %p51 = scmp.ne.s32.totalorder %s34, %s50
    %p52 = scmp.eq.s32.totalorder %s26, 0
    %p53 = por %p51, %p52
    %s54 = ssub.s32 %s20, %s27
    %p55 = scmp.eq.s32.totalorder %s54, 0
    %s57 = sadd.s32 %s56, 1
    %s58 = scalar_select %p55, %s56, %s57
    %p61 = pneg %p55
    %p62 = scmp.eq.s32.totalorder %s20, 1
    %p63 = por %p61, %p62
    %p64 = scmp.ne.s32.totalorder %s56, %s59
    %p65 = scmp.eq.s32.totalorder %s20, 0
    %p66 = por %p64, %p65
    %p67 = scmp.ne.s32.totalorder %s56, %s59
    %p68 = scmp.eq.s32.totalorder %s25, 1
    %p69 = por %p67, %p68
    %p70 = scmp.ne.s32.totalorder %s59, %s60
    %p71 = scmp.eq.s32.totalorder %s25, 0
    %p72 = por %p70, %p71
    %p73 = scmp.ne.s32.totalorder %s59, %s60
    %p74 = scmp.eq.s32.totalorder %s26, 1
    %p75 = por %p73, %p74
    %p77 = scmp.ne.s32.totalorder %s60, %s76
    %p78 = scmp.eq.s32.totalorder %s26, 0
    %p79 = por %p77, %p78
    %s81 = sadd.s32 %s80, 1
    %p84 = scmp.eq.s32.totalorder %s20, 1
    %p85 = scmp.ne.s32.totalorder %s80, %s82
    %p86 = scmp.eq.s32.totalorder %s20, 0
    %p87 = por %p85, %p86
    %p88 = scmp.ne.s32.totalorder %s80, %s82
    %p89 = scmp.eq.s32.totalorder %s25, 1
    %p90 = por %p88, %p89
    %p91 = scmp.ne.s32.totalorder %s82, %s83
    %p92 = scmp.eq.s32.totalorder %s25, 0
    %p93 = por %p91, %p92
    %p94 = scmp.ne.s32.totalorder %s82, %s83
    %p95 = scmp.eq.s32.totalorder %s26, 1
    %p96 = por %p94, %p95
    %p98 = scmp.ne.s32.totalorder %s83, %s97
    %p99 = scmp.eq.s32.totalorder %s26, 0
    %p100 = por %p98, %p99
    %s102 = sadd.s32 %s101, 1
    %p105 = scmp.eq.s32.totalorder %s20, 1
    %p106 = scmp.ne.s32.totalorder %s101, %s103
    %p107 = scmp.eq.s32.totalorder %s20, 0
    %p108 = por %p106, %p107
    %p109 = scmp.ne.s32.totalorder %s101, %s103
    %p110 = scmp.eq.s32.totalorder %s25, 1
    %p111 = por %p109, %p110
    %p112 = scmp.ne.s32.totalorder %s103, %s104
    %p113 = scmp.eq.s32.totalorder %s25, 0
    %p114 = por %p112, %p113
    %p115 = scmp.ne.s32.totalorder %s103, %s104
    %p116 = scmp.eq.s32.totalorder %s26, 1
    %p117 = por %p115, %p116
    %p119 = scmp.ne.s32.totalorder %s104, %s118
    %p120 = scmp.eq.s32.totalorder %s26, 0
    %p121 = por %p119, %p120
    %s123 = sadd.s32 %s122, 1
    %p126 = scmp.eq.s32.totalorder %s20, 1
    %p127 = scmp.ne.s32.totalorder %s122, %s124
    %p128 = scmp.eq.s32.totalorder %s20, 0
    %p129 = por %p127, %p128
    %p130 = scmp.ne.s32.totalorder %s122, %s124
    %p131 = scmp.eq.s32.totalorder %s25, 1
    %p132 = por %p130, %p131
    %p133 = scmp.ne.s32.totalorder %s124, %s125
    %p134 = scmp.eq.s32.totalorder %s25, 0
    %p135 = por %p133, %p134
    %p136 = scmp.ne.s32.totalorder %s124, %s125
    %p137 = scmp.eq.s32.totalorder %s26, 1
    %p138 = por %p136, %p137
    %p140 = scmp.ne.s32.totalorder %s125, %s139
    %p141 = scmp.eq.s32.totalorder %s26, 0
    %p142 = por %p140, %p141
    %s144 = sadd.s32 %s143, 1
    %p147 = scmp.eq.s32.totalorder %s20, 1
    %p148 = scmp.ne.s32.totalorder %s143, %s145
    %p149 = scmp.eq.s32.totalorder %s20, 0
    %p150 = por %p148, %p149
    %p151 = scmp.ne.s32.totalorder %s143, %s145
    %p152 = scmp.eq.s32.totalorder %s25, 1
    %p153 = por %p151, %p152
    %p154 = scmp.ne.s32.totalorder %s145, %s146
    %p155 = scmp.eq.s32.totalorder %s25, 0
    %p156 = por %p154, %p155
    %p157 = scmp.ne.s32.totalorder %s145, %s146
    %p158 = scmp.eq.s32.totalorder %s26, 1
    %p159 = por %p157, %p158
    %p161 = scmp.ne.s32.totalorder %s146, %s160
    %p162 = scmp.eq.s32.totalorder %s26, 0
    %p163 = por %p161, %p162
    %s165 = sadd.s32 %s164, 1
    %p168 = scmp.eq.s32.totalorder %s20, 1
    %p169 = scmp.ne.s32.totalorder %s164, %s166
    %p170 = scmp.eq.s32.totalorder %s20, 0
    %p171 = por %p169, %p170
    %p172 = scmp.ne.s32.totalorder %s164, %s166
    %p173 = scmp.eq.s32.totalorder %s25, 1
    %p174 = por %p172, %p173
    %p175 = scmp.ne.s32.totalorder %s166, %s167
    %p176 = scmp.eq.s32.totalorder %s25, 0
    %p177 = por %p175, %p176
    %p178 = scmp.ne.s32.totalorder %s166, %s167
    %p179 = scmp.eq.s32.totalorder %s26, 1
    %p180 = por %p178, %p179
    %p182 = scmp.ne.s32.totalorder %s167, %s181
    %p183 = scmp.eq.s32.totalorder %s26, 0
    %p184 = por %p182, %p183
    %s186 = sadd.s32 %s185, 1
    %p189 = scmp.eq.s32.totalorder %s20, 1
    %p190 = scmp.ne.s32.totalorder %s185, %s187
    %p191 = scmp.eq.s32.totalorder %s20, 0
    %p192 = por %p190, %p191
    %p193 = scmp.ne.s32.totalorder %s185, %s187
    %p194 = scmp.eq.s32.totalorder %s25, 1
    %p195 = por %p193, %p194
    %p196 = scmp.ne.s32.totalorder %s187, %s188
    %p197 = scmp.eq.s32.totalorder %s25, 0
    %p198 = por %p196, %p197
    %p199 = scmp.ne.s32.totalorder %s187, %s188
    %p200 = scmp.eq.s32.totalorder %s26, 1
    %p201 = por %p199, %p200
    %p203 = scmp.ne.s32.totalorder %s188, %s202
    %p204 = scmp.eq.s32.totalorder %s26, 0
    %p205 = por %p203, %p204
    %s207 = sadd.s32 %s206, 1
    %p210 = scmp.eq.s32.totalorder %s20, 1
    %p211 = scmp.ne.s32.totalorder %s206, %s208
    %p212 = scmp.eq.s32.totalorder %s20, 0
    %p213 = por %p211, %p212
    %p214 = scmp.ne.s32.totalorder %s206, %s208
    %p215 = scmp.eq.s32.totalorder %s25, 1
    %p216 = por %p214, %p215
    %p217 = scmp.ne.s32.totalorder %s208, %s209
    %p218 = scmp.eq.s32.totalorder %s25, 0
    %p219 = por %p217, %p218
    %p220 = scmp.ne.s32.totalorder %s208, %s209
    %p221 = scmp.eq.s32.totalorder %s26, 1
    %p222 = por %p220, %p221
    %p224 = scmp.ne.s32.totalorder %s209, %s223
    %p225 = scmp.eq.s32.totalorder %s26, 0
    %p226 = por %p224, %p225
    %s228 = sadd.s32 %s227, 1
    %p231 = scmp.eq.s32.totalorder %s20, 1
    %p232 = scmp.ne.s32.totalorder %s227, %s229
    %p233 = scmp.eq.s32.totalorder %s20, 0
    %p234 = por %p232, %p233
    %p235 = scmp.ne.s32.totalorder %s227, %s229
    %p236 = scmp.eq.s32.totalorder %s25, 1
    %p237 = por %p235, %p236
    %p238 = scmp.ne.s32.totalorder %s229, %s230
    %p239 = scmp.eq.s32.totalorder %s25, 0
    %p240 = por %p238, %p239
    %p241 = scmp.ne.s32.totalorder %s229, %s230
    %p242 = scmp.eq.s32.totalorder %s26, 1
    %p243 = por %p241, %p242
    %p245 = scmp.ne.s32.totalorder %s230, %s244
    %p246 = scmp.eq.s32.totalorder %s26, 0
    %p247 = por %p245, %p246
    %s249 = sadd.s32 %s248, 1
    %p252 = scmp.eq.s32.totalorder %s20, 1
    %p253 = scmp.ne.s32.totalorder %s248, %s250
    %p254 = scmp.eq.s32.totalorder %s20, 0
    %p255 = por %p253, %p254
    %p256 = scmp.ne.s32.totalorder %s248, %s250
    %p257 = scmp.eq.s32.totalorder %s25, 1
    %p258 = por %p256, %p257
    %p259 = scmp.ne.s32.totalorder %s250, %s251
    %p260 = scmp.eq.s32.totalorder %s25, 0
    %p261 = por %p259, %p260
    %p262 = scmp.ne.s32.totalorder %s250, %s251
    %p263 = scmp.eq.s32.totalorder %s26, 1
    %p264 = por %p262, %p263
    %p266 = scmp.ne.s32.totalorder %s251, %s265
    %p267 = scmp.eq.s32.totalorder %s26, 0
    %p268 = por %p266, %p267
    %s270 = sadd.s32 %s269, 1
    %p273 = scmp.eq.s32.totalorder %s20, 1
    %p274 = scmp.ne.s32.totalorder %s269, %s271
    %p275 = scmp.eq.s32.totalorder %s20, 0
    %p276 = por %p274, %p275
    %p277 = scmp.ne.s32.totalorder %s269, %s271
    %p278 = scmp.eq.s32.totalorder %s25, 1
    %p279 = por %p277, %p278
    %p280 = scmp.ne.s32.totalorder %s271, %s272
    %p281 = scmp.eq.s32.totalorder %s25, 0
    %p282 = por %p280, %p281
    %p283 = scmp.ne.s32.totalorder %s271, %s272
    %p284 = scmp.eq.s32.totalorder %s26, 1
    %p285 = por %p283, %p284
    %p287 = scmp.ne.s32.totalorder %s272, %s286
    %p288 = scmp.eq.s32.totalorder %s26, 0
    %p289 = por %p287, %p288
    %s291 = sadd.s32 %s290, 1
    %p294 = scmp.eq.s32.totalorder %s20, 1
    %p295 = scmp.ne.s32.totalorder %s290, %s292
    %p296 = scmp.eq.s32.totalorder %s20, 0
    %p297 = por %p295, %p296
    %p298 = scmp.ne.s32.totalorder %s290, %s292
    %p299 = scmp.eq.s32.totalorder %s25, 1
    %p300 = por %p298, %p299
    %p301 = scmp.ne.s32.totalorder %s292, %s293
    %p302 = scmp.eq.s32.totalorder %s25, 0
    %p303 = por %p301, %p302
    %p304 = scmp.ne.s32.totalorder %s292, %s293
    %p305 = scmp.eq.s32.totalorder %s26, 1
    %p306 = por %p304, %p305
    %p308 = scmp.ne.s32.totalorder %s293, %s307
    %p309 = scmp.eq.s32.totalorder %s26, 0
    %p310 = por %p308, %p309
    %s312 = sadd.s32 %s311, 1
    %p315 = scmp.eq.s32.totalorder %s20, 1
    %p316 = scmp.ne.s32.totalorder %s311, %s313
    %p317 = scmp.eq.s32.totalorder %s20, 0
    %p318 = por %p316, %p317
    %p319 = scmp.ne.s32.totalorder %s311, %s313
    %p320 = scmp.eq.s32.totalorder %s25, 1
    %p321 = por %p319, %p320
    %p322 = scmp.ne.s32.totalorder %s313, %s314
    %p323 = scmp.eq.s32.totalorder %s25, 0
    %p324 = por %p322, %p323
    %p325 = scmp.ne.s32.totalorder %s313, %s314
    %p326 = scmp.eq.s32.totalorder %s26, 1
    %p327 = por %p325, %p326
    %p329 = scmp.ne.s32.totalorder %s314, %s328
    %p330 = scmp.eq.s32.totalorder %s26, 0
    %p331 = por %p329, %p330
    %s332 = ssub.s32 %s20, %s27
    %p333 = scmp.eq.s32.totalorder %s332, 0
    %s335 = sadd.s32 %s334, 1
    %s336 = scalar_select %p333, %s334, %s335
    %p339 = pneg %p333
    %p340 = scmp.eq.s32.totalorder %s20, 1
    %p341 = por %p339, %p340
    %p342 = scmp.ne.s32.totalorder %s334, %s337
    %p343 = scmp.eq.s32.totalorder %s20, 0
    %p344 = por %p342, %p343
    %p345 = scmp.ne.s32.totalorder %s334, %s337
    %p346 = scmp.eq.s32.totalorder %s25, 1
    %p347 = por %p345, %p346
    %p348 = scmp.ne.s32.totalorder %s337, %s338
    %p349 = scmp.eq.s32.totalorder %s25, 0
    %p350 = por %p348, %p349
    %p351 = scmp.ne.s32.totalorder %s337, %s338
    %p352 = scmp.eq.s32.totalorder %s26, 1
    %p353 = por %p351, %p352
    %p355 = scmp.ne.s32.totalorder %s338, %s354
    %p356 = scmp.eq.s32.totalorder %s26, 0
    %p357 = por %p355, %p356
    %p358 = scmp.le.s32.totalorder 1, %s20
    %p359 = scmp.lt.s32.totalorder %s20, 3
    %p360 = pnand %p358, %p359
    %p361 = pneg %p360
    // Predicated region
    $region9: #{bert_forward.3} parent=5 // pred_check
      _
    $region10: #{bert_forward.3} parent=5 // pred_check_branch
      %363 = sbr.rel (%p360) target = $region12
    $region11: #{bert_forward.3} parent=5 // pred_region
      %s364 = ssub.s32 %s20, 1
      // Predicated region
      $region13: #{bert_forward.3} parent=11 // pred_check
        %p365 = pneg %p93
      $region14: #{bert_forward.3} parent=11 // pred_check_branch
        %367 = sbr.rel (%p365) target = $region16
      $region15: #{bert_forward.3} parent=11 // pred_region
        _
      $region16: #{bert_forward.3} parent=11 // pred_fallthru
        _
      // Predicated region
      $region17: #{bert_forward.3} parent=11 // pred_check
        %p368 = pneg %p114
      $region18: #{bert_forward.3} parent=11 // pred_check_branch
        %370 = sbr.rel (%p368) target = $region20
      $region19: #{bert_forward.3} parent=11 // pred_region
        _
      $region20: #{bert_forward.3} parent=11 // pred_fallthru
        _
      // Predicated region
      $region21: #{bert_forward.3} parent=11 // pred_check
        %p371 = pneg %p135
      $region22: #{bert_forward.3} parent=11 // pred_check_branch
        %373 = sbr.rel (%p371) target = $region24
      $region23: #{bert_forward.3} parent=11 // pred_region
        _
      $region24: #{bert_forward.3} parent=11 // pred_fallthru
        _
      // Predicated region
      $region25: #{bert_forward.3} parent=11 // pred_check
        %p374 = pneg %p156
      $region26: #{bert_forward.3} parent=11 // pred_check_branch
        %376 = sbr.rel (%p374) target = $region28
      $region27: #{bert_forward.3} parent=11 // pred_region
        _
      $region28: #{bert_forward.3} parent=11 // pred_fallthru
        _
      // Predicated region
      $region29: #{bert_forward.3} parent=11 // pred_check
        %p377 = pneg %p177
      $region30: #{bert_forward.3} parent=11 // pred_check_branch
        %379 = sbr.rel (%p377) target = $region32
      $region31: #{bert_forward.3} parent=11 // pred_region
        _
      $region32: #{bert_forward.3} parent=11 // pred_fallthru
        _
      // Predicated region
      $region33: #{bert_forward.3} parent=11 // pred_check
        %p380 = pneg %p198
      $region34: #{bert_forward.3} parent=11 // pred_check_branch
        %382 = sbr.rel (%p380) target = $region36
      $region35: #{bert_forward.3} parent=11 // pred_region
        _
      $region36: #{bert_forward.3} parent=11 // pred_fallthru
        _
      // Predicated region
      $region37: #{bert_forward.3} parent=11 // pred_check
        %p383 = pneg %p219
      $region38: #{bert_forward.3} parent=11 // pred_check_branch
        %385 = sbr.rel (%p383) target = $region40
      $region39: #{bert_forward.3} parent=11 // pred_region
        _
      $region40: #{bert_forward.3} parent=11 // pred_fallthru
        _
      // Predicated region
      $region41: #{bert_forward.3} parent=11 // pred_check
        %p386 = pneg %p240
      $region42: #{bert_forward.3} parent=11 // pred_check_branch
        %388 = sbr.rel (%p386) target = $region44
      $region43: #{bert_forward.3} parent=11 // pred_region
        _
      $region44: #{bert_forward.3} parent=11 // pred_fallthru
        _
      // Predicated region
      $region45: #{bert_forward.3} parent=11 // pred_check
        %p389 = pneg %p261
      $region46: #{bert_forward.3} parent=11 // pred_check_branch
        %391 = sbr.rel (%p389) target = $region48
      $region47: #{bert_forward.3} parent=11 // pred_region
        _
      $region48: #{bert_forward.3} parent=11 // pred_fallthru
        _
      // Predicated region
      $region49: #{bert_forward.3} parent=11 // pred_check
        %p392 = pneg %p282
      $region50: #{bert_forward.3} parent=11 // pred_check_branch
        %394 = sbr.rel (%p392) target = $region52
      $region51: #{bert_forward.3} parent=11 // pred_region
        _
      $region52: #{bert_forward.3} parent=11 // pred_fallthru
        _
      // Predicated region
      $region53: #{bert_forward.3} parent=11 // pred_check
        %p395 = pneg %p303
      $region54: #{bert_forward.3} parent=11 // pred_check_branch
        %397 = sbr.rel (%p395) target = $region56
      $region55: #{bert_forward.3} parent=11 // pred_region
        _
      $region56: #{bert_forward.3} parent=11 // pred_fallthru
        _
      // Predicated region
      $region57: #{bert_forward.3} parent=11 // pred_check
        %p398 = pneg %p324
      $region58: #{bert_forward.3} parent=11 // pred_check_branch
        %400 = sbr.rel (%p398) target = $region60
      $region59: #{bert_forward.3} parent=11 // pred_region
        _
      $region60: #{bert_forward.3} parent=11 // pred_fallthru
        _
    $region12: #{bert_forward.3} parent=5 // pred_fallthru
      _
    %p401 = scmp.lt.s32.totalorder %s20, 2
    // Predicated region
    $region61: #{bert_forward.3} parent=5 // pred_check
      %p402 = pneg %p401
    $region62: #{bert_forward.3} parent=5 // pred_check_branch
      %404 = sbr.rel (%p402) target = $region64
    $region63: #{bert_forward.3} parent=5 // pred_region
      // Predicated region
      $region65: #{bert_forward.3} parent=63 // pred_check
        %p405 = pneg %p40
      $region66: #{bert_forward.3} parent=63 // pred_check_branch
        %407 = sbr.rel (%p405) target = $region68
      $region67: #{bert_forward.3} parent=63 // pred_region
        %p408 = scmp.lt.s32.totalorder %s20, 1
        %s409 = scalar_select %p408, %s20, 1
        %s410 = smul.addr %s409, 16
        %s411 = smul.addr %s410, 4
        %s412 = scalar_lea.vmem %s0, %s411
      $region68: #{bert_forward.3} parent=63 // pred_fallthru
        _
      // Predicated region
      $region69: #{bert_forward.3} parent=63 // pred_check
        %p413 = pneg %p66
      $region70: #{bert_forward.3} parent=63 // pred_check_branch
        %415 = sbr.rel (%p413) target = $region72
      $region71: #{bert_forward.3} parent=63 // pred_region
        %p416 = scmp.lt.s32.totalorder %s20, 1
        %s417 = scalar_select %p416, %s20, 1
        %s418 = scalar_lea.vmem %s1, %s417
      $region72: #{bert_forward.3} parent=63 // pred_fallthru
        _
    $region64: #{bert_forward.3} parent=5 // pred_fallthru
      _
    %p419 = scmp.le.s32.totalorder 1, %s20
    %p420 = scmp.lt.s32.totalorder %s20, 3
    %p421 = pnand %p419, %p420
    %p422 = pneg %p421
    // Predicated region
    $region73: #{bert_forward.3} parent=5 // pred_check
      _
    $region74: #{bert_forward.3} parent=5 // pred_check_branch
      %424 = sbr.rel (%p421) target = $region76
    $region75: #{bert_forward.3} parent=5 // pred_region
      %s425 = ssub.s32 %s20, 1
      %p426 = scmp.lt.s32.totalorder %s25, 1
      %s427 = scalar_select %p426, %s25, 1
      %s428 = smul.addr %s427, 16
      %s429 = smul.addr %s428, 4
      %s430 = scalar_lea.vmem %s0, %s429
      %p431 = pneg %p46
      %p432 = pneg %p43
      %p433 = scmp.lt.s32.totalorder %s25, 1
      %s434 = scalar_select %p433, %s25, 1
      %s435 = scalar_lea.vmem %s1, %s434
      %p436 = pneg %p72
      %p437 = pneg %p69
      %p438 = pneg %p93
      %p439 = pneg %p90
      %p440 = pneg %p114
      %p441 = pneg %p111
      %p442 = pneg %p135
      %p443 = pneg %p132
      %p444 = pneg %p156
      %p445 = pneg %p153
      %p446 = pneg %p177
      %p447 = pneg %p174
      %p448 = pneg %p198
      %p449 = pneg %p195
      %p450 = pneg %p219
      %p451 = pneg %p216
      %p452 = pneg %p240
      %p453 = pneg %p237
      %p454 = pneg %p261
      %p455 = pneg %p258
      %p456 = pneg %p282
      %p457 = pneg %p279
      %p458 = pneg %p303
      %p459 = pneg %p300
      %p460 = pneg %p324
      %p461 = pneg %p321
      %p462 = pneg %p350
      %p463 = pneg %p347
      %p464 = scmp.lt.s32.totalorder %s25, 1
      %s465 = scalar_select %p464, %s25, 1
      %s466 = smul.addr %s465, 16
      %s467 = smul.addr %s466, 4
      %s468 = scalar_lea.vmem %s14, %s467
      %p469 = scmp.lt.s32.totalorder %s25, 1
      %s470 = scalar_select %p469, %s25, 1
      %s471 = smul.addr %s470, 16
      %s472 = smul.addr %s471, 4
      %s473 = scalar_lea.vmem %s0, %s472
      %p474 = scmp.lt.s32.totalorder %s25, 1
      %s475 = scalar_select %p474, %s25, 1
      %s476 = scalar_lea.vmem %s1, %s475
      %p477 = scmp.lt.s32.totalorder %s25, 1
      %s478 = scalar_select %p477, %s25, 1
      %s479 = smul.addr %s478, 16
      %s480 = smul.addr %s479, 4
      %s481 = scalar_lea.vmem %s14, %s480
      %v483 = vld [vmem:[%s473] sm:$0xf]
      %v484 = vld [vmem:[%s473 + $0x4] sm:$0xf]
      %v485 = vld [vmem:[%s473 + $0x8] sm:$0xf]
      %v486 = vld [vmem:[%s473 + $0xc] sm:$0xf]
      %v487 = vld [vmem:[%s473 + $0x10] sm:$0xf]
      %v488 = vld [vmem:[%s473 + $0x14] sm:$0xf]
      %v489 = vld [vmem:[%s473 + $0x18] sm:$0xf]
      %v490 = vld [vmem:[%s473 + $0x1c] sm:$0xf]
      %v491 = vld [vmem:[%s473 + $0x20] sm:$0xf]
      %v492 = vld [vmem:[%s473 + $0x24] sm:$0xf]
      %v493 = vld [vmem:[%s473 + $0x28] sm:$0xf]
      %v494 = vld [vmem:[%s473 + $0x2c] sm:$0xf]
      %v495 = vld [vmem:[%s473 + $0x30] sm:$0xf]
      %v496 = vld [vmem:[%s473 + $0x34] sm:$0xf]
      %v497 = vld [vmem:[%s473 + $0x38] sm:$0xf]
      %v498 = vld [vmem:[%s473 + $0x3c] sm:$0xf]
      %v499 = vunpack.c.l.bf16 %v483
      %v500 = vunpack.c.l.bf16 %v484
      %v501 = vunpack.c.l.bf16 %v485
      %v502 = vunpack.c.l.bf16 %v486
      %v503 = vunpack.c.l.bf16 %v487
      %v504 = vunpack.c.l.bf16 %v488
      %v505 = vunpack.c.l.bf16 %v489
      %v506 = vunpack.c.l.bf16 %v490
      %v507 = vunpack.c.l.bf16 %v491
      %v508 = vunpack.c.l.bf16 %v492
      %v509 = vunpack.c.l.bf16 %v493
      %v510 = vunpack.c.l.bf16 %v494
      %v511 = vunpack.c.l.bf16 %v495
      %v512 = vunpack.c.l.bf16 %v496
      %v513 = vunpack.c.l.bf16 %v497
      %v514 = vunpack.c.l.bf16 %v498
      %v515 = vld [vmem:[%s2] sm:$0xff]
      %v516 = vld [vmem:[%s2 + $0x8] sm:$0xf]
      %v517 = vld [vmem:[%s2 + $0xc] sm:$0xff]
      %v518 = vld [vmem:[%s2 + $0x14] sm:$0xf]
      %v519 = vld [vmem:[%s2 + $0x18] sm:$0xff]
      %v520 = vld [vmem:[%s2 + $0x20] sm:$0xf]
      %v521 = vld [vmem:[%s2 + $0x24] sm:$0xff]
      %v522 = vld [vmem:[%s2 + $0x2c] sm:$0xf]
      %v523 = vld [vmem:[%s2 + $0x30] sm:$0xff]
      %v524 = vld [vmem:[%s2 + $0x38] sm:$0xf]
      %v525 = vld [vmem:[%s2 + $0x3c] sm:$0xff]
      %v526 = vld [vmem:[%s2 + $0x44] sm:$0xf]
      %v527 = vld [vmem:[%s2 + $0x48] sm:$0xff]
      %v528 = vld [vmem:[%s2 + $0x50] sm:$0xf]
      %v529 = vld [vmem:[%s2 + $0x54] sm:$0xff]
      %v530 = vld [vmem:[%s2 + $0x5c] sm:$0xf]
      %v531 = vld [vmem:[%s2 + $0x60] sm:$0xff]
      %v532 = vld [vmem:[%s2 + $0x68] sm:$0xf]
      %v533 = vld [vmem:[%s2 + $0x6c] sm:$0xff]
      %v534 = vld [vmem:[%s2 + $0x74] sm:$0xf]
      %v535 = vld [vmem:[%s2 + $0x78] sm:$0xff]
      %v536 = vld [vmem:[%s2 + $0x80] sm:$0xf]
      %v537 = vld [vmem:[%s2 + $0x84] sm:$0xff]
      %v538 = vld [vmem:[%s2 + $0x8c] sm:$0xf]
      %v539 = vld [vmem:[%s2 + $0x90] sm:$0xff]
      %v540 = vld [vmem:[%s2 + $0x98] sm:$0xf]
      %v541 = vld [vmem:[%s2 + $0x9c] sm:$0xff]
      %v542 = vld [vmem:[%s2 + $0xa4] sm:$0xf]
      %v543 = vld [vmem:[%s2 + $0xa8] sm:$0xff]
      %v544 = vld [vmem:[%s2 + $0xb0] sm:$0xf]
      %v545 = vld [vmem:[%s2 + $0xb4] sm:$0xff]
      %v546 = vld [vmem:[%s2 + $0xbc] sm:$0xf]
      %v547 = vld [vmem:[%s3] sm:$0x7]
      %v549 = vlaneseq
      %v550 = vshrl.u32 %v549, 7
      %v551 = vsub.s32 0, %v550
      %v552 = vrot.slane %v547, %v551
      %v553 = vlaneseq
      %v554 = vshrl.u32 %v553, 7
      %v555 = vsub.s32 1, %v554
      %v556 = vrot.slane %v547, %v555
      %v557 = vlaneseq
      %v558 = vshrl.u32 %v557, 7
      %v559 = vsub.s32 2, %v558
      %v560 = vrot.slane %v547, %v559
      %v580 = vunpack.c.l.b16 %v483
      %v581 = vunpack.c.l.b16 %v484
      %v582 = vunpack.c.l.b16 %v485
      %v583 = vunpack.c.l.b16 %v486
      %v584 = vunpack.c.l.b16 %v487
      %v585 = vunpack.c.l.b16 %v488
      %v586 = vunpack.c.l.b16 %v489
      %v587 = vunpack.c.l.b16 %v490
      %v588 = vunpack.c.l.b16 %v491
      %v589 = vunpack.c.l.b16 %v492
      %v590 = vunpack.c.l.b16 %v493
      %v591 = vunpack.c.l.b16 %v494
      %v592 = vunpack.c.l.b16 %v495
      %v593 = vunpack.c.l.b16 %v496
      %v594 = vunpack.c.l.b16 %v497
      %v595 = vunpack.c.l.b16 %v498
      %v596 = vpack.c.b16 %v581, %v580
      %v597 = vpack.c.b16 %v583, %v582
      %v598 = vpack.c.b16 %v585, %v584
      %v599 = vpack.c.b16 %v587, %v586
      %v600 = vpack.c.b16 %v589, %v588
      %v601 = vpack.c.b16 %v591, %v590
      %v602 = vpack.c.b16 %v593, %v592
      %v603 = vpack.c.b16 %v595, %v594
      %v644 = vunpack.c.l.b16 %v515
      %v645 = vunpack.c.h.b16 %v515
      %v646 = vunpack.c.l.b16 %v516
      %v647 = vunpack.c.l.b16 %v517
      %v648 = vunpack.c.h.b16 %v517
      %v649 = vunpack.c.l.b16 %v518
      %v650 = vunpack.c.l.b16 %v519
      %v651 = vunpack.c.h.b16 %v519
      %v652 = vunpack.c.l.b16 %v520
      %v653 = vunpack.c.l.b16 %v521
      %v654 = vunpack.c.h.b16 %v521
      %v655 = vunpack.c.l.b16 %v522
      %v656 = vunpack.c.l.b16 %v523
      %v657 = vunpack.c.h.b16 %v523
      %v658 = vunpack.c.l.b16 %v524
      %v659 = vunpack.c.l.b16 %v525
      %v660 = vunpack.c.h.b16 %v525
      %v661 = vunpack.c.l.b16 %v526
      %v662 = vunpack.c.l.b16 %v527
      %v663 = vunpack.c.h.b16 %v527
      %v664 = vunpack.c.l.b16 %v528
      %v665 = vunpack.c.l.b16 %v529
      %v666 = vunpack.c.h.b16 %v529
      %v667 = vunpack.c.l.b16 %v530
      %v668 = vunpack.c.l.b16 %v531
      %v669 = vunpack.c.h.b16 %v531
      %v670 = vunpack.c.l.b16 %v532
      %v671 = vunpack.c.l.b16 %v533
      %v672 = vunpack.c.h.b16 %v533
      %v673 = vunpack.c.l.b16 %v534
      %v674 = vunpack.c.l.b16 %v535
      %v675 = vunpack.c.h.b16 %v535
      %v676 = vunpack.c.l.b16 %v536
      %v677 = vunpack.c.l.b16 %v537
      %v678 = vunpack.c.h.b16 %v537
      %v679 = vunpack.c.l.b16 %v538
      %v680 = vunpack.c.l.b16 %v539
      %v681 = vunpack.c.h.b16 %v539
      %v682 = vunpack.c.l.b16 %v540
      %v683 = vunpack.c.l.b16 %v541
      %v684 = vunpack.c.h.b16 %v541
      %v685 = vunpack.c.l.b16 %v542
      %v686 = vunpack.c.l.b16 %v543
      %v687 = vunpack.c.h.b16 %v543
      %v688 = vunpack.c.l.b16 %v544
      %v689 = vunpack.c.l.b16 %v545
      %v690 = vunpack.c.h.b16 %v545
      %v691 = vunpack.c.l.b16 %v546
      %v692 = vpack.c.b16 %v647, %v644
      %v693 = vpack.c.b16 %v648, %v645
      %v694 = vpack.c.b16 %v649, %v646
      %v695 = vpack.c.b16 %v653, %v650
      %v696 = vpack.c.b16 %v654, %v651
      %v697 = vpack.c.b16 %v655, %v652
      %v698 = vpack.c.b16 %v659, %v656
      %v699 = vpack.c.b16 %v660, %v657
      %v700 = vpack.c.b16 %v661, %v658
      %v701 = vpack.c.b16 %v665, %v662
      %v702 = vpack.c.b16 %v666, %v663
      %v703 = vpack.c.b16 %v667, %v664
      %v704 = vpack.c.b16 %v671, %v668
      %v705 = vpack.c.b16 %v672, %v669
      %v706 = vpack.c.b16 %v673, %v670
      %v707 = vpack.c.b16 %v677, %v674
      %v708 = vpack.c.b16 %v678, %v675
      %v709 = vpack.c.b16 %v679, %v676
      %v710 = vpack.c.b16 %v683, %v680
      %v711 = vpack.c.b16 %v684, %v681
      %v712 = vpack.c.b16 %v685, %v682
      %v713 = vpack.c.b16 %v689, %v686
      %v714 = vpack.c.b16 %v690, %v687
      %v715 = vpack.c.b16 %v691, %v688
      %740 = vmatprep.subr.bf16.mxu0 %v714
      %741 = vmatpush1.bf16.msra.mxu0 %v713
      %742 = vmatprep.subr.bf16.mxu0 %v711
      %743 = vmatpush1.bf16.msra.mxu0 %v710
      %744 = vmatprep.subr.bf16.mxu0 %v708
      %745 = vmatpush1.bf16.msra.mxu0 %v707
      %746 = vmatprep.subr.bf16.mxu0 %v705
      %747 = vmatpush1.bf16.msra.mxu0 %v704
      %748 = vmatprep.subr.bf16.mxu0 %v702
      %749 = vmatpush1.bf16.msra.mxu0 %v701
      %750 = vmatprep.subr.bf16.mxu0 %v699
      %751 = vmatpush1.bf16.msra.mxu0 %v698
      %752 = vmatprep.subr.bf16.mxu0 %v696
      %753 = vmatpush1.bf16.msra.mxu0 %v695
      %754 = vmatprep.subr.bf16.mxu0 %v693
      %755 = vmatpush1.bf16.msra.mxu0 %v692
      %756 = vmatprep.subr.bf16.mxu0 0
      %757 = vmatpush2.bf16.msra.mxu0 0
      %758 = vmatprep.subr.bf16.mxu0 0
      %759 = vmatpush2.bf16.msra.mxu0 0
      %760 = vmatprep.subr.bf16.mxu0 0
      %761 = vmatpush2.bf16.msra.mxu0 0
      %762 = vmatprep.subr.bf16.mxu0 0
      %763 = vmatpush2.bf16.msra.mxu0 0
      %764 = vmatprep.subr.bf16.mxu0 0
      %765 = vmatpush2.bf16.msra.mxu0 0
      %766 = vmatprep.subr.bf16.mxu0 0
      %767 = vmatpush2.bf16.msra.mxu0 0
      %768 = vmatprep.subr.bf16.mxu0 0
      %769 = vmatpush2.bf16.msra.mxu0 0
      %770 = vmatprep.subr.bf16.mxu0 0
      %771 = vmatpush2.bf16.msra.mxu0 0
      %772 = vmatprep.mubr.bf16.mxu0 0
      %773 = vmatmul.mubr.bf16.gmra.mxu0 %v596
      %v774 = vpop.f32.mrf.mxu0
      %v775 = vadd.f32 %v552, %v774
      %v776 = vpop.f32.mrf.mxu0
      %v777 = vadd.f32 %v556, %v776
      %v778 = vpop.f32.mrf.mxu0
      %v779 = vadd.f32 %v552, %v778
      %v780 = vpop.f32.mrf.mxu0
      %v781 = vadd.f32 %v556, %v780
      %782 = vmatprep.mubr.bf16.mxu0 0
      %783 = vmatmul.mubr.bf16.gmra.mxu0 %v597
      %v784 = vpop.f32.mrf.mxu0
      %v785 = vadd.f32 %v552, %v784
      %v786 = vpop.f32.mrf.mxu0
      %v787 = vadd.f32 %v556, %v786
      %v788 = vpop.f32.mrf.mxu0
      %v789 = vadd.f32 %v552, %v788
      %v790 = vpop.f32.mrf.mxu0
      %v791 = vadd.f32 %v556, %v790
      %792 = vmatprep.mubr.bf16.mxu0 0
      %793 = vmatmul.mubr.bf16.gmra.mxu0 %v598
      %v794 = vpop.f32.mrf.mxu0
      %v795 = vadd.f32 %v552, %v794
      %v796 = vpop.f32.mrf.mxu0
      %v797 = vadd.f32 %v556, %v796
      %v798 = vpop.f32.mrf.mxu0
      %v799 = vadd.f32 %v552, %v798
      %v800 = vpop.f32.mrf.mxu0
      %v801 = vadd.f32 %v556, %v800
      %802 = vmatprep.mubr.bf16.mxu0 0
      %803 = vmatmul.mubr.bf16.gmra.mxu0 %v599
      %v804 = vpop.f32.mrf.mxu0
      %v805 = vadd.f32 %v552, %v804
      %v806 = vpop.f32.mrf.mxu0
      %v807 = vadd.f32 %v556, %v806
      %v808 = vpop.f32.mrf.mxu0
      %v809 = vadd.f32 %v552, %v808
      %v810 = vpop.f32.mrf.mxu0
      %v811 = vadd.f32 %v556, %v810
      %812 = vmatprep.mubr.bf16.mxu0 0
      %813 = vmatmul.mubr.bf16.gmra.mxu0 %v600
      %v814 = vpop.f32.mrf.mxu0
      %v815 = vadd.f32 %v552, %v814
      %v816 = vpop.f32.mrf.mxu0
      %v817 = vadd.f32 %v556, %v816
      %v818 = vpop.f32.mrf.mxu0
      %v819 = vadd.f32 %v552, %v818
      %v820 = vpop.f32.mrf.mxu0
      %v821 = vadd.f32 %v556, %v820
      %822 = vmatprep.mubr.bf16.mxu0 0
      %823 = vmatmul.mubr.bf16.gmra.mxu0 %v601
      %v824 = vpop.f32.mrf.mxu0
      %v825 = vadd.f32 %v552, %v824
      %v826 = vpop.f32.mrf.mxu0
      %v827 = vadd.f32 %v556, %v826
      %v828 = vpop.f32.mrf.mxu0
      %v829 = vadd.f32 %v552, %v828
      %v830 = vpop.f32.mrf.mxu0
      %v831 = vadd.f32 %v556, %v830
      %832 = vmatprep.mubr.bf16.mxu0 0
      %833 = vmatmul.mubr.bf16.gmra.mxu0 %v602
      %v834 = vpop.f32.mrf.mxu0
      %v835 = vadd.f32 %v552, %v834
      %v836 = vpop.f32.mrf.mxu0
      %v837 = vadd.f32 %v556, %v836
      %v838 = vpop.f32.mrf.mxu0
      %v839 = vadd.f32 %v552, %v838
      %v840 = vpop.f32.mrf.mxu0
      %v841 = vadd.f32 %v556, %v840
      %842 = vmatprep.mubr.bf16.mxu0 0
      %843 = vmatmul.mubr.bf16.gmra.mxu0 %v603
      %v844 = vpop.f32.mrf.mxu0
      %v845 = vadd.f32 %v552, %v844
      %v846 = vpop.f32.mrf.mxu0
      %v847 = vadd.f32 %v556, %v846
      %v848 = vpop.f32.mrf.mxu0
      %v849 = vadd.f32 %v552, %v848
      %v850 = vpop.f32.mrf.mxu0
      %v851 = vadd.f32 %v556, %v850
      %852 = vdwg.mxu0
      %853 = vmatprep.subr.bf16.mxu0 0
      %854 = vmatpush1.bf16.msra.mxu0 %v715
      %855 = vmatprep.subr.bf16.mxu0 0
      %856 = vmatpush1.bf16.msra.mxu0 %v712
      %857 = vmatprep.subr.bf16.mxu0 0
      %858 = vmatpush1.bf16.msra.mxu0 %v709
      %859 = vmatprep.subr.bf16.mxu0 0
      %860 = vmatpush1.bf16.msra.mxu0 %v706
      %861 = vmatprep.subr.bf16.mxu0 0
      %862 = vmatpush1.bf16.msra.mxu0 %v703
      %863 = vmatprep.subr.bf16.mxu0 0
      %864 = vmatpush1.bf16.msra.mxu0 %v700
      %865 = vmatprep.subr.bf16.mxu0 0
      %866 = vmatpush1.bf16.msra.mxu0 %v697
      %867 = vmatprep.subr.bf16.mxu0 0
      %868 = vmatpush1.bf16.msra.mxu0 %v694
      %869 = vmatprep.subr.bf16.mxu0 0
      %870 = vmatpush2.bf16.msra.mxu0 0
      %871 = vmatprep.subr.bf16.mxu0 0
      %872 = vmatpush2.bf16.msra.mxu0 0
      %873 = vmatprep.subr.bf16.mxu0 0
      %874 = vmatpush2.bf16.msra.mxu0 0
      %875 = vmatprep.subr.bf16.mxu0 0
      %876 = vmatpush2.bf16.msra.mxu0 0
      %877 = vmatprep.subr.bf16.mxu0 0
      %878 = vmatpush2.bf16.msra.mxu0 0
      %879 = vmatprep.subr.bf16.mxu0 0
      %880 = vmatpush2.bf16.msra.mxu0 0
      %881 = vmatprep.subr.bf16.mxu0 0
      %882 = vmatpush2.bf16.msra.mxu0 0
      %883 = vmatprep.subr.bf16.mxu0 0
      %884 = vmatpush2.bf16.msra.mxu0 0
      %885 = vmatprep.mubr.bf16.mxu0 0
      %886 = vmatmul.mubr.bf16.gmra.mxu0 %v596
      %v887 = vpop.f32.mrf.mxu0
      %v888 = vadd.f32 %v560, %v887
      %v889 = vpop.f32.mrf.mxu0
      %v890 = vpop.f32.mrf.mxu0
      %v891 = vadd.f32 %v560, %v890
      %v892 = vpop.f32.mrf.mxu0
      %893 = vmatprep.mubr.bf16.mxu0 0
      %894 = vmatmul.mubr.bf16.gmra.mxu0 %v597
      %v895 = vpop.f32.mrf.mxu0
      %v896 = vadd.f32 %v560, %v895
      %v897 = vpop.f32.mrf.mxu0
      %v898 = vpop.f32.mrf.mxu0
      %v899 = vadd.f32 %v560, %v898
      %v900 = vpop.f32.mrf.mxu0
      %901 = vmatprep.mubr.bf16.mxu0 0
      %902 = vmatmul.mubr.bf16.gmra.mxu0 %v598
      %v903 = vpop.f32.mrf.mxu0
      %v904 = vadd.f32 %v560, %v903
      %v905 = vpop.f32.mrf.mxu0
      %v906 = vpop.f32.mrf.mxu0
      %v907 = vadd.f32 %v560, %v906
      %v908 = vpop.f32.mrf.mxu0
      %909 = vmatprep.mubr.bf16.mxu0 0
      %910 = vmatmul.mubr.bf16.gmra.mxu0 %v599
      %v911 = vpop.f32.mrf.mxu0
      %v912 = vadd.f32 %v560, %v911
      %v913 = vpop.f32.mrf.mxu0
      %v914 = vpop.f32.mrf.mxu0
      %v915 = vadd.f32 %v560, %v914
      %v916 = vpop.f32.mrf.mxu0
      %917 = vmatprep.mubr.bf16.mxu0 0
      %918 = vmatmul.mubr.bf16.gmra.mxu0 %v600
      %v919 = vpop.f32.mrf.mxu0
      %v920 = vadd.f32 %v560, %v919
      %v921 = vpop.f32.mrf.mxu0
      %v922 = vpop.f32.mrf.mxu0
      %v923 = vadd.f32 %v560, %v922
      %v924 = vpop.f32.mrf.mxu0
      %925 = vmatprep.mubr.bf16.mxu0 0
      %926 = vmatmul.mubr.bf16.gmra.mxu0 %v601
      %v927 = vpop.f32.mrf.mxu0
      %v928 = vadd.f32 %v560, %v927
      %v929 = vpop.f32.mrf.mxu0
      %v930 = vpop.f32.mrf.mxu0
      %v931 = vadd.f32 %v560, %v930
      %v932 = vpop.f32.mrf.mxu0
      %933 = vmatprep.mubr.bf16.mxu0 0
      %934 = vmatmul.mubr.bf16.gmra.mxu0 %v602
      %v935 = vpop.f32.mrf.mxu0
      %v936 = vadd.f32 %v560, %v935
      %v937 = vpop.f32.mrf.mxu0
      %v938 = vpop.f32.mrf.mxu0
      %v939 = vadd.f32 %v560, %v938
      %v940 = vpop.f32.mrf.mxu0
      %941 = vmatprep.mubr.bf16.mxu0 0
      %942 = vmatmul.mubr.bf16.gmra.mxu0 %v603
      %v943 = vpop.f32.mrf.mxu0
      %v944 = vadd.f32 %v560, %v943
      %v945 = vpop.f32.mrf.mxu0
      %v946 = vpop.f32.mrf.mxu0
      %v947 = vadd.f32 %v560, %v946
      %v948 = vpop.f32.mrf.mxu0
      %949 = vdwg.mxu0
      %v950 = vld [vmem:[%s476] sm:$0x1]
      %v951 = vpack.c.bf16 %v779, %v775
      %v952 = vpack.c.bf16 %v789, %v785
      %v953 = vpack.c.bf16 %v799, %v795
      %v954 = vpack.c.bf16 %v809, %v805
      %v955 = vpack.c.bf16 %v819, %v815
      %v956 = vpack.c.bf16 %v829, %v825
      %v957 = vpack.c.bf16 %v839, %v835
      %v958 = vpack.c.bf16 %v849, %v845
      %v959 = vpack.c.bf16 %v781, %v777
      %v960 = vpack.c.bf16 %v791, %v787
      %v961 = vpack.c.bf16 %v801, %v797
      %v962 = vpack.c.bf16 %v811, %v807
      %v963 = vpack.c.bf16 %v821, %v817
      %v964 = vpack.c.bf16 %v831, %v827
      %v965 = vpack.c.bf16 %v841, %v837
      %v966 = vpack.c.bf16 %v851, %v847
      %v967 = vpack.c.bf16 %v891, %v888
      %v968 = vpack.c.bf16 %v899, %v896
      %v969 = vpack.c.bf16 %v907, %v904
      %v970 = vpack.c.bf16 %v915, %v912
      %v971 = vpack.c.bf16 %v923, %v920
      %v972 = vpack.c.bf16 %v931, %v928
      %v973 = vpack.c.bf16 %v939, %v936
      %v974 = vpack.c.bf16 %v947, %v944
      %v976 = vlaneseq
      %v977 = vshrl.u32 %v976, 7
      %v978 = vsub.s32 0, %v977
      %v979 = vrot.slane %v950, %v978
      %vm981 = vcmask 261120
      %v983 = vsel %vm981, %v951, 0
      %v986 = vsel %vm981, %v952, 0
      %v989 = vsel %vm981, %v953, 0
      %v992 = vsel %vm981, %v954, 0
      %v995 = vsel %vm981, %v955, 0
      %v998 = vsel %vm981, %v956, 0
      %v1001 = vsel %vm981, %v957, 0
      %v1004 = vsel %vm981, %v958, 0
      %v1007 = vsel %vm981, %v959, 0
      %v1010 = vsel %vm981, %v960, 0
      %v1013 = vsel %vm981, %v961, 0
      %v1016 = vsel %vm981, %v962, 0
      %v1019 = vsel %vm981, %v963, 0
      %v1022 = vsel %vm981, %v964, 0
      %v1025 = vsel %vm981, %v965, 0
      %v1028 = vsel %vm981, %v966, 0
      %1030 = vmatprep.subr.bf16.mxu0 0
      %1031 = vmatpush1.bf16.xpose.msra.mxu0 %v1028
      %1032 = vmatprep.subr.bf16.mxu0 0
      %1033 = vmatpush1.bf16.xpose.msra.mxu0 %v1025
      %1034 = vmatprep.subr.bf16.mxu0 0
      %1035 = vmatpush1.bf16.xpose.msra.mxu0 %v1022
      %1036 = vmatprep.subr.bf16.mxu0 0
      %1037 = vmatpush1.bf16.xpose.msra.mxu0 %v1019
      %1038 = vmatprep.subr.bf16.mxu0 0
      %1039 = vmatpush1.bf16.xpose.msra.mxu0 %v1016
      %1040 = vmatprep.subr.bf16.mxu0 0
      %1041 = vmatpush1.bf16.xpose.msra.mxu0 %v1013
      %1042 = vmatprep.subr.bf16.mxu0 0
      %1043 = vmatpush1.bf16.xpose.msra.mxu0 %v1010
      %1044 = vmatprep.subr.bf16.mxu0 0
      %1045 = vmatpush1.bf16.xpose.msra.mxu0 %v1007
      %1046 = vmatprep.subr.bf16.mxu0 0
      %1047 = vmatpush2.bf16.xpose.msra.mxu0 0
      %1048 = vmatprep.subr.bf16.mxu0 0
      %1049 = vmatpush2.bf16.xpose.msra.mxu0 0
      %1050 = vmatprep.subr.bf16.mxu0 0
      %1051 = vmatpush2.bf16.xpose.msra.mxu0 0
      %1052 = vmatprep.subr.bf16.mxu0 0
      %1053 = vmatpush2.bf16.xpose.msra.mxu0 0
      %1054 = vmatprep.subr.bf16.mxu0 0
      %1055 = vmatpush2.bf16.xpose.msra.mxu0 0
      %1056 = vmatprep.subr.bf16.mxu0 0
      %1057 = vmatpush2.bf16.xpose.msra.mxu0 0
      %1058 = vmatprep.subr.bf16.mxu0 0
      %1059 = vmatpush2.bf16.xpose.msra.mxu0 0
      %1060 = vmatprep.subr.bf16.mxu0 0
      %1061 = vmatpush2.bf16.xpose.msra.mxu0 0
      %1062 = vmatprep.mubr.bf16.mxu0 0
      %1063 = vmatmul.mubr.bf16.gmra.mxu0 %v983
      %v1064 = vpop.f32.mrf.mxu0
      %v1065 = vadd.f32 %v979, %v1064
      %v1066 = vpop.f32.mrf.mxu0
      %v1067 = vpop.f32.mrf.mxu0
      %v1068 = vadd.f32 %v979, %v1067
      %v1069 = vpop.f32.mrf.mxu0
      %1070 = vmatprep.mubr.bf16.mxu0 0
      %1071 = vmatmul.mubr.bf16.gmra.mxu0 %v986
      %v1072 = vpop.f32.mrf.mxu0
      %v1073 = vadd.f32 %v979, %v1072
      %v1074 = vpop.f32.mrf.mxu0
      %v1075 = vpop.f32.mrf.mxu0
      %v1076 = vadd.f32 %v979, %v1075
      %v1077 = vpop.f32.mrf.mxu0
      %1078 = vmatprep.mubr.bf16.mxu0 0
      %1079 = vmatmul.mubr.bf16.gmra.mxu0 %v989
      %v1080 = vpop.f32.mrf.mxu0
      %v1081 = vadd.f32 %v979, %v1080
      %v1082 = vpop.f32.mrf.mxu0
      %v1083 = vpop.f32.mrf.mxu0
      %v1084 = vadd.f32 %v979, %v1083
      %v1085 = vpop.f32.mrf.mxu0
      %1086 = vmatprep.mubr.bf16.mxu0 0
      %1087 = vmatmul.mubr.bf16.gmra.mxu0 %v992
      %v1088 = vpop.f32.mrf.mxu0
      %v1089 = vadd.f32 %v979, %v1088
      %v1090 = vpop.f32.mrf.mxu0
      %v1091 = vpop.f32.mrf.mxu0
      %v1092 = vadd.f32 %v979, %v1091
      %v1093 = vpop.f32.mrf.mxu0
      %1094 = vmatprep.mubr.bf16.mxu0 0
      %1095 = vmatmul.mubr.bf16.gmra.mxu0 %v995
      %v1096 = vpop.f32.mrf.mxu0
      %v1097 = vadd.f32 %v979, %v1096
      %v1098 = vpop.f32.mrf.mxu0
      %v1099 = vpop.f32.mrf.mxu0
      %v1100 = vadd.f32 %v979, %v1099
      %v1101 = vpop.f32.mrf.mxu0
      %1102 = vmatprep.mubr.bf16.mxu0 0
      %1103 = vmatmul.mubr.bf16.gmra.mxu0 %v998
      %v1104 = vpop.f32.mrf.mxu0
      %v1105 = vadd.f32 %v979, %v1104
      %v1106 = vpop.f32.mrf.mxu0
      %v1107 = vpop.f32.mrf.mxu0
      %v1108 = vadd.f32 %v979, %v1107
      %v1109 = vpop.f32.mrf.mxu0
      %1110 = vmatprep.mubr.bf16.mxu0 0
      %1111 = vmatmul.mubr.bf16.gmra.mxu0 %v1001
      %v1112 = vpop.f32.mrf.mxu0
      %v1113 = vadd.f32 %v979, %v1112
      %v1114 = vpop.f32.mrf.mxu0
      %v1115 = vpop.f32.mrf.mxu0
      %v1116 = vadd.f32 %v979, %v1115
      %v1117 = vpop.f32.mrf.mxu0
      %1118 = vmatprep.mubr.bf16.mxu0 0
      %1119 = vmatmul.mubr.bf16.gmra.mxu0 %v1004
      %v1120 = vpop.f32.mrf.mxu0
      %v1121 = vadd.f32 %v979, %v1120
      %v1122 = vpop.f32.mrf.mxu0
      %v1123 = vpop.f32.mrf.mxu0
      %v1124 = vadd.f32 %v979, %v1123
      %v1125 = vpop.f32.mrf.mxu0
      %1126 = vdwg.mxu0
      %1127 = vmax.xlane.f32.xlu0 %v1065
      %v1128 = vpop.xlane.xlu0 %1127
      %1129 = vmax.xlane.f32.xlu0 %v1068
      %v1130 = vpop.xlane.xlu0 %1129
      %1131 = vmax.xlane.f32.xlu0 %v1073
      %v1132 = vpop.xlane.xlu0 %1131
      %1133 = vmax.xlane.f32.xlu0 %v1076
      %v1134 = vpop.xlane.xlu0 %1133
      %1135 = vmax.xlane.f32.xlu0 %v1081
      %v1136 = vpop.xlane.xlu0 %1135
      %1137 = vmax.xlane.f32.xlu0 %v1084
      %v1138 = vpop.xlane.xlu0 %1137
      %1139 = vmax.xlane.f32.xlu0 %v1089
      %v1140 = vpop.xlane.xlu0 %1139
      %1141 = vmax.xlane.f32.xlu0 %v1092
      %v1142 = vpop.xlane.xlu0 %1141
      %1143 = vmax.xlane.f32.xlu0 %v1097
      %v1144 = vpop.xlane.xlu0 %1143
      %1145 = vmax.xlane.f32.xlu0 %v1100
      %v1146 = vpop.xlane.xlu0 %1145
      %1147 = vmax.xlane.f32.xlu0 %v1105
      %v1148 = vpop.xlane.xlu0 %1147
      %1149 = vmax.xlane.f32.xlu0 %v1108
      %v1150 = vpop.xlane.xlu0 %1149
      %1151 = vmax.xlane.f32.xlu0 %v1113
      %v1152 = vpop.xlane.xlu0 %1151
      %1153 = vmax.xlane.f32.xlu0 %v1116
      %v1154 = vpop.xlane.xlu0 %1153
      %1155 = vmax.xlane.f32.xlu0 %v1121
      %v1156 = vpop.xlane.xlu0 %1155
      %1157 = vmax.xlane.f32.xlu0 %v1124
      %v1158 = vpop.xlane.xlu0 %1157
      %v1159 = vsub.f32 %v1065, %v1128
      %v1160 = vsub.f32 %v1068, %v1130
      %v1161 = vsub.f32 %v1073, %v1132
      %v1162 = vsub.f32 %v1076, %v1134
      %v1163 = vsub.f32 %v1081, %v1136
      %v1164 = vsub.f32 %v1084, %v1138
      %v1165 = vsub.f32 %v1089, %v1140
      %v1166 = vsub.f32 %v1092, %v1142
      %v1167 = vsub.f32 %v1097, %v1144
      %v1168 = vsub.f32 %v1100, %v1146
      %v1169 = vsub.f32 %v1105, %v1148
      %v1170 = vsub.f32 %v1108, %v1150
      %v1171 = vsub.f32 %v1113, %v1152
      %v1172 = vsub.f32 %v1116, %v1154
      %v1173 = vsub.f32 %v1121, %v1156
      %v1174 = vsub.f32 %v1124, %v1158
      %v1175 = vmul.f32 %v1159, 1.442695
      %v1176 = vpow.pop %v1175
      %v1177 = vmul.f32 %v1160, 1.442695
      %v1178 = vpow.pop %v1177
      %v1179 = vmul.f32 %v1161, 1.442695
      %v1180 = vpow.pop %v1179
      %v1181 = vmul.f32 %v1162, 1.442695
      %v1182 = vpow.pop %v1181
      %v1183 = vmul.f32 %v1163, 1.442695
      %v1184 = vpow.pop %v1183
      %v1185 = vmul.f32 %v1164, 1.442695
      %v1186 = vpow.pop %v1185
      %v1187 = vmul.f32 %v1165, 1.442695
      %v1188 = vpow.pop %v1187
      %v1189 = vmul.f32 %v1166, 1.442695
      %v1190 = vpow.pop %v1189
      %v1191 = vmul.f32 %v1167, 1.442695
      %v1192 = vpow.pop %v1191
      %v1193 = vmul.f32 %v1168, 1.442695
      %v1194 = vpow.pop %v1193
      %v1195 = vmul.f32 %v1169, 1.442695
      %v1196 = vpow.pop %v1195
      %v1197 = vmul.f32 %v1170, 1.442695
      %v1198 = vpow.pop %v1197
      %v1199 = vmul.f32 %v1171, 1.442695
      %v1200 = vpow.pop %v1199
      %v1201 = vmul.f32 %v1172, 1.442695
      %v1202 = vpow.pop %v1201
      %v1203 = vmul.f32 %v1173, 1.442695
      %v1204 = vpow.pop %v1203
      %v1205 = vmul.f32 %v1174, 1.442695
      %v1206 = vpow.pop %v1205
      %1207 = vadd.xlane.f32.xlu0 %v1176
      %v1208 = vpop.xlane.xlu0 %1207
      %1209 = vadd.xlane.f32.xlu0 %v1178
      %v1210 = vpop.xlane.xlu0 %1209
      %1211 = vadd.xlane.f32.xlu0 %v1180
      %v1212 = vpop.xlane.xlu0 %1211
      %1213 = vadd.xlane.f32.xlu0 %v1182
      %v1214 = vpop.xlane.xlu0 %1213
      %1215 = vadd.xlane.f32.xlu0 %v1184
      %v1216 = vpop.xlane.xlu0 %1215
      %1217 = vadd.xlane.f32.xlu0 %v1186
      %v1218 = vpop.xlane.xlu0 %1217
      %1219 = vadd.xlane.f32.xlu0 %v1188
      %v1220 = vpop.xlane.xlu0 %1219
      %1221 = vadd.xlane.f32.xlu0 %v1190
      %v1222 = vpop.xlane.xlu0 %1221
      %1223 = vadd.xlane.f32.xlu0 %v1192
      %v1224 = vpop.xlane.xlu0 %1223
      %1225 = vadd.xlane.f32.xlu0 %v1194
      %v1226 = vpop.xlane.xlu0 %1225
      %1227 = vadd.xlane.f32.xlu0 %v1196
      %v1228 = vpop.xlane.xlu0 %1227
      %1229 = vadd.xlane.f32.xlu0 %v1198
      %v1230 = vpop.xlane.xlu0 %1229
      %1231 = vadd.xlane.f32.xlu0 %v1200
      %v1232 = vpop.xlane.xlu0 %1231
      %1233 = vadd.xlane.f32.xlu0 %v1202
      %v1234 = vpop.xlane.xlu0 %1233
      %1235 = vadd.xlane.f32.xlu0 %v1204
      %v1236 = vpop.xlane.xlu0 %1235
      %1237 = vadd.xlane.f32.xlu0 %v1206
      %v1238 = vpop.xlane.xlu0 %1237
      %v1239 = vrcp.pop %v1208
      %v1240 = vrcp.pop %v1210
      %v1241 = vrcp.pop %v1212
      %v1242 = vrcp.pop %v1214
      %v1243 = vrcp.pop %v1216
      %v1244 = vrcp.pop %v1218
      %v1245 = vrcp.pop %v1220
      %v1246 = vrcp.pop %v1222
      %v1247 = vrcp.pop %v1224
      %v1248 = vrcp.pop %v1226
      %v1249 = vrcp.pop %v1228
      %v1250 = vrcp.pop %v1230
      %v1251 = vrcp.pop %v1232
      %v1252 = vrcp.pop %v1234
      %v1253 = vrcp.pop %v1236
      %v1254 = vrcp.pop %v1238
      %v1255 = vmul.f32 %v1176, %v1239
      %v1256 = vmul.f32 %v1178, %v1240
      %v1257 = vmul.f32 %v1180, %v1241
      %v1258 = vmul.f32 %v1182, %v1242
      %v1259 = vmul.f32 %v1184, %v1243
      %v1260 = vmul.f32 %v1186, %v1244
      %v1261 = vmul.f32 %v1188, %v1245
      %v1262 = vmul.f32 %v1190, %v1246
      %v1263 = vmul.f32 %v1192, %v1247
      %v1264 = vmul.f32 %v1194, %v1248
      %v1265 = vmul.f32 %v1196, %v1249
      %v1266 = vmul.f32 %v1198, %v1250
      %v1267 = vmul.f32 %v1200, %v1251
      %v1268 = vmul.f32 %v1202, %v1252
      %v1269 = vmul.f32 %v1204, %v1253
      %v1270 = vmul.f32 %v1206, %v1254
      %v1271 = vpack.c.bf16 %v1256, %v1255
      %v1272 = vpack.c.bf16 %v1258, %v1257
      %v1273 = vpack.c.bf16 %v1260, %v1259
      %v1274 = vpack.c.bf16 %v1262, %v1261
      %v1275 = vpack.c.bf16 %v1264, %v1263
      %v1276 = vpack.c.bf16 %v1266, %v1265
      %v1277 = vpack.c.bf16 %v1268, %v1267
      %v1278 = vpack.c.bf16 %v1270, %v1269
      %1279 = vmatprep.subr.bf16.mxu0 0
      %1280 = vmatpush1.bf16.msra.mxu0 %v974
      %1281 = vmatprep.subr.bf16.mxu0 0
      %1282 = vmatpush1.bf16.msra.mxu0 %v973
      %1283 = vmatprep.subr.bf16.mxu0 0
      %1284 = vmatpush1.bf16.msra.mxu0 %v972
      %1285 = vmatprep.subr.bf16.mxu0 0
      %1286 = vmatpush1.bf16.msra.mxu0 %v971
      %1287 = vmatprep.subr.bf16.mxu0 0
      %1288 = vmatpush1.bf16.msra.mxu0 %v970
      %1289 = vmatprep.subr.bf16.mxu0 0
      %1290 = vmatpush1.bf16.msra.mxu0 %v969
      %1291 = vmatprep.subr.bf16.mxu0 0
      %1292 = vmatpush1.bf16.msra.mxu0 %v968
      %1293 = vmatprep.subr.bf16.mxu0 0
      %1294 = vmatpush1.bf16.msra.mxu0 %v967
      %1295 = vmatprep.subr.bf16.mxu0 0
      %1296 = vmatpush2.bf16.msra.mxu0 0
      %1297 = vmatprep.subr.bf16.mxu0 0
      %1298 = vmatpush2.bf16.msra.mxu0 0
      %1299 = vmatprep.subr.bf16.mxu0 0
      %1300 = vmatpush2.bf16.msra.mxu0 0
      %1301 = vmatprep.subr.bf16.mxu0 0
      %1302 = vmatpush2.bf16.msra.mxu0 0
      %1303 = vmatprep.subr.bf16.mxu0 0
      %1304 = vmatpush2.bf16.msra.mxu0 0
      %1305 = vmatprep.subr.bf16.mxu0 0
      %1306 = vmatpush2.bf16.msra.mxu0 0
      %1307 = vmatprep.subr.bf16.mxu0 0
      %1308 = vmatpush2.bf16.msra.mxu0 0
      %1309 = vmatprep.subr.bf16.mxu0 0
      %1310 = vmatpush2.bf16.msra.mxu0 0
      %1311 = vmatprep.mubr.bf16.mxu0 0
      %1312 = vmatmul.mubr.bf16.gmra.mxu0 %v1271
      %v1313 = vpop.f32.mrf.mxu0
      %v1314 = vadd.f32 0.0, %v1313
      %v1315 = vpop.f32.mrf.mxu0
      %v1316 = vpop.f32.mrf.mxu0
      %v1317 = vadd.f32 0.0, %v1316
      %v1318 = vpop.f32.mrf.mxu0
      %1319 = vmatprep.mubr.bf16.mxu0 0
      %1320 = vmatmul.mubr.bf16.gmra.mxu0 %v1272
      %v1321 = vpop.f32.mrf.mxu0
      %v1322 = vadd.f32 0.0, %v1321
      %v1323 = vpop.f32.mrf.mxu0
      %v1324 = vpop.f32.mrf.mxu0
      %v1325 = vadd.f32 0.0, %v1324
      %v1326 = vpop.f32.mrf.mxu0
      %1327 = vmatprep.mubr.bf16.mxu0 0
      %1328 = vmatmul.mubr.bf16.gmra.mxu0 %v1273
      %v1329 = vpop.f32.mrf.mxu0
      %v1330 = vadd.f32 0.0, %v1329
      %v1331 = vpop.f32.mrf.mxu0
      %v1332 = vpop.f32.mrf.mxu0
      %v1333 = vadd.f32 0.0, %v1332
      %v1334 = vpop.f32.mrf.mxu0
      %1335 = vmatprep.mubr.bf16.mxu0 0
      %1336 = vmatmul.mubr.bf16.gmra.mxu0 %v1274
      %v1337 = vpop.f32.mrf.mxu0
      %v1338 = vadd.f32 0.0, %v1337
      %v1339 = vpop.f32.mrf.mxu0
      %v1340 = vpop.f32.mrf.mxu0
      %v1341 = vadd.f32 0.0, %v1340
      %v1342 = vpop.f32.mrf.mxu0
      %1343 = vmatprep.mubr.bf16.mxu0 0
      %1344 = vmatmul.mubr.bf16.gmra.mxu0 %v1275
      %v1345 = vpop.f32.mrf.mxu0
      %v1346 = vadd.f32 0.0, %v1345
      %v1347 = vpop.f32.mrf.mxu0
      %v1348 = vpop.f32.mrf.mxu0
      %v1349 = vadd.f32 0.0, %v1348
      %v1350 = vpop.f32.mrf.mxu0
      %1351 = vmatprep.mubr.bf16.mxu0 0
      %1352 = vmatmul.mubr.bf16.gmra.mxu0 %v1276
      %v1353 = vpop.f32.mrf.mxu0
      %v1354 = vadd.f32 0.0, %v1353
      %v1355 = vpop.f32.mrf.mxu0
      %v1356 = vpop.f32.mrf.mxu0
      %v1357 = vadd.f32 0.0, %v1356
      %v1358 = vpop.f32.mrf.mxu0
      %1359 = vmatprep.mubr.bf16.mxu0 0
      %1360 = vmatmul.mubr.bf16.gmra.mxu0 %v1277
      %v1361 = vpop.f32.mrf.mxu0
      %v1362 = vadd.f32 0.0, %v1361
      %v1363 = vpop.f32.mrf.mxu0
      %v1364 = vpop.f32.mrf.mxu0
      %v1365 = vadd.f32 0.0, %v1364
      %v1366 = vpop.f32.mrf.mxu0
      %1367 = vmatprep.mubr.bf16.mxu0 0
      %1368 = vmatmul.mubr.bf16.gmra.mxu0 %v1278
      %v1369 = vpop.f32.mrf.mxu0
      %v1370 = vadd.f32 0.0, %v1369
      %v1371 = vpop.f32.mrf.mxu0
      %v1372 = vpop.f32.mrf.mxu0
      %v1373 = vadd.f32 0.0, %v1372
      %v1374 = vpop.f32.mrf.mxu0
      %1375 = vdwg.mxu0
      %1384 = vrot.lane.b32.xlu0 %v951, 96
      %v1385 = vpop.permute.xlu0 %1384
      %1386 = vrot.lane.b32.xlu0 %v952, 96
      %v1387 = vpop.permute.xlu0 %1386
      %1388 = vrot.lane.b32.xlu0 %v953, 96
      %v1389 = vpop.permute.xlu0 %1388
      %1390 = vrot.lane.b32.xlu0 %v954, 96
      %v1391 = vpop.permute.xlu0 %1390
      %1392 = vrot.lane.b32.xlu0 %v955, 96
      %v1393 = vpop.permute.xlu0 %1392
      %1394 = vrot.lane.b32.xlu0 %v956, 96
      %v1395 = vpop.permute.xlu0 %1394
      %1396 = vrot.lane.b32.xlu0 %v957, 96
      %v1397 = vpop.permute.xlu0 %1396
      %1398 = vrot.lane.b32.xlu0 %v958, 96
      %v1399 = vpop.permute.xlu0 %1398
      %1408 = vrot.lane.b32.xlu0 %v959, 96
      %v1409 = vpop.permute.xlu0 %1408
      %1410 = vrot.lane.b32.xlu0 %v960, 96
      %v1411 = vpop.permute.xlu0 %1410
      %1412 = vrot.lane.b32.xlu0 %v961, 96
      %v1413 = vpop.permute.xlu0 %1412
      %1414 = vrot.lane.b32.xlu0 %v962, 96
      %v1415 = vpop.permute.xlu0 %1414
      %1416 = vrot.lane.b32.xlu0 %v963, 96
      %v1417 = vpop.permute.xlu0 %1416
      %1418 = vrot.lane.b32.xlu0 %v964, 96
      %v1419 = vpop.permute.xlu0 %1418
      %1420 = vrot.lane.b32.xlu0 %v965, 96
      %v1421 = vpop.permute.xlu0 %1420
      %1422 = vrot.lane.b32.xlu0 %v966, 96
      %v1423 = vpop.permute.xlu0 %1422
      %v1425 = vsel %vm981, %v1385, 0
      %v1428 = vsel %vm981, %v1387, 0
      %v1431 = vsel %vm981, %v1389, 0
      %v1434 = vsel %vm981, %v1391, 0
      %v1437 = vsel %vm981, %v1393, 0
      %v1440 = vsel %vm981, %v1395, 0
      %v1443 = vsel %vm981, %v1397, 0
      %v1446 = vsel %vm981, %v1399, 0
      %v1449 = vsel %vm981, %v1409, 0
      %v1452 = vsel %vm981, %v1411, 0
      %v1455 = vsel %vm981, %v1413, 0
      %v1458 = vsel %vm981, %v1415, 0
      %v1461 = vsel %vm981, %v1417, 0
      %v1464 = vsel %vm981, %v1419, 0
      %v1467 = vsel %vm981, %v1421, 0
      %v1470 = vsel %vm981, %v1423, 0
      %1472 = vmatprep.subr.bf16.mxu0 0
      %1473 = vmatpush1.bf16.xpose.msra.mxu0 %v1470
      %1474 = vmatprep.subr.bf16.mxu0 0
      %1475 = vmatpush1.bf16.xpose.msra.mxu0 %v1467
      %1476 = vmatprep.subr.bf16.mxu0 0
      %1477 = vmatpush1.bf16.xpose.msra.mxu0 %v1464
      %1478 = vmatprep.subr.bf16.mxu0 0
      %1479 = vmatpush1.bf16.xpose.msra.mxu0 %v1461
      %1480 = vmatprep.subr.bf16.mxu0 0
      %1481 = vmatpush1.bf16.xpose.msra.mxu0 %v1458
      %1482 = vmatprep.subr.bf16.mxu0 0
      %1483 = vmatpush1.bf16.xpose.msra.mxu0 %v1455
      %1484 = vmatprep.subr.bf16.mxu0 0
      %1485 = vmatpush1.bf16.xpose.msra.mxu0 %v1452
      %1486 = vmatprep.subr.bf16.mxu0 0
      %1487 = vmatpush1.bf16.xpose.msra.mxu0 %v1449
      %1488 = vmatprep.subr.bf16.mxu0 0
      %1489 = vmatpush2.bf16.xpose.msra.mxu0 0
      %1490 = vmatprep.subr.bf16.mxu0 0
      %1491 = vmatpush2.bf16.xpose.msra.mxu0 0
      %1492 = vmatprep.subr.bf16.mxu0 0
      %1493 = vmatpush2.bf16.xpose.msra.mxu0 0
      %1494 = vmatprep.subr.bf16.mxu0 0
      %1495 = vmatpush2.bf16.xpose.msra.mxu0 0
      %1496 = vmatprep.subr.bf16.mxu0 0
      %1497 = vmatpush2.bf16.xpose.msra.mxu0 0
      %1498 = vmatprep.subr.bf16.mxu0 0
      %1499 = vmatpush2.bf16.xpose.msra.mxu0 0
      %1500 = vmatprep.subr.bf16.mxu0 0
      %1501 = vmatpush2.bf16.xpose.msra.mxu0 0
      %1502 = vmatprep.subr.bf16.mxu0 0
      %1503 = vmatpush2.bf16.xpose.msra.mxu0 0
      %1504 = vmatprep.mubr.bf16.mxu0 0
      %1505 = vmatmul.mubr.bf16.gmra.mxu0 %v1425
      %v1506 = vpop.f32.mrf.mxu0
      %v1507 = vadd.f32 %v979, %v1506
      %v1508 = vpop.f32.mrf.mxu0
      %v1509 = vpop.f32.mrf.mxu0
      %v1510 = vadd.f32 %v979, %v1509
      %v1511 = vpop.f32.mrf.mxu0
      %1512 = vmatprep.mubr.bf16.mxu0 0
      %1513 = vmatmul.mubr.bf16.gmra.mxu0 %v1428
      %v1514 = vpop.f32.mrf.mxu0
      %v1515 = vadd.f32 %v979, %v1514
      %v1516 = vpop.f32.mrf.mxu0
      %v1517 = vpop.f32.mrf.mxu0
      %v1518 = vadd.f32 %v979, %v1517
      %v1519 = vpop.f32.mrf.mxu0
      %1520 = vmatprep.mubr.bf16.mxu0 0
      %1521 = vmatmul.mubr.bf16.gmra.mxu0 %v1431
      %v1522 = vpop.f32.mrf.mxu0
      %v1523 = vadd.f32 %v979, %v1522
      %v1524 = vpop.f32.mrf.mxu0
      %v1525 = vpop.f32.mrf.mxu0
      %v1526 = vadd.f32 %v979, %v1525
      %v1527 = vpop.f32.mrf.mxu0
      %1528 = vmatprep.mubr.bf16.mxu0 0
      %1529 = vmatmul.mubr.bf16.gmra.mxu0 %v1434
      %v1530 = vpop.f32.mrf.mxu0
      %v1531 = vadd.f32 %v979, %v1530
      %v1532 = vpop.f32.mrf.mxu0
      %v1533 = vpop.f32.mrf.mxu0
      %v1534 = vadd.f32 %v979, %v1533
      %v1535 = vpop.f32.mrf.mxu0
      %1536 = vmatprep.mubr.bf16.mxu0 0
      %1537 = vmatmul.mubr.bf16.gmra.mxu0 %v1437
      %v1538 = vpop.f32.mrf.mxu0
      %v1539 = vadd.f32 %v979, %v1538
      %v1540 = vpop.f32.mrf.mxu0
      %v1541 = vpop.f32.mrf.mxu0
      %v1542 = vadd.f32 %v979, %v1541
      %v1543 = vpop.f32.mrf.mxu0
      %1544 = vmatprep.mubr.bf16.mxu0 0
      %1545 = vmatmul.mubr.bf16.gmra.mxu0 %v1440
      %v1546 = vpop.f32.mrf.mxu0
      %v1547 = vadd.f32 %v979, %v1546
      %v1548 = vpop.f32.mrf.mxu0
      %v1549 = vpop.f32.mrf.mxu0
      %v1550 = vadd.f32 %v979, %v1549
      %v1551 = vpop.f32.mrf.mxu0
      %1552 = vmatprep.mubr.bf16.mxu0 0
      %1553 = vmatmul.mubr.bf16.gmra.mxu0 %v1443
      %v1554 = vpop.f32.mrf.mxu0
      %v1555 = vadd.f32 %v979, %v1554
      %v1556 = vpop.f32.mrf.mxu0
      %v1557 = vpop.f32.mrf.mxu0
      %v1558 = vadd.f32 %v979, %v1557
      %v1559 = vpop.f32.mrf.mxu0
      %1560 = vmatprep.mubr.bf16.mxu0 0
      %1561 = vmatmul.mubr.bf16.gmra.mxu0 %v1446
      %v1562 = vpop.f32.mrf.mxu0
      %v1563 = vadd.f32 %v979, %v1562
      %v1564 = vpop.f32.mrf.mxu0
      %v1565 = vpop.f32.mrf.mxu0
      %v1566 = vadd.f32 %v979, %v1565
      %v1567 = vpop.f32.mrf.mxu0
      %1568 = vdwg.mxu0
      %1569 = vmax.xlane.f32.xlu0 %v1507
      %v1570 = vpop.xlane.xlu0 %1569
      %1571 = vmax.xlane.f32.xlu0 %v1510
      %v1572 = vpop.xlane.xlu0 %1571
      %1573 = vmax.xlane.f32.xlu0 %v1515
      %v1574 = vpop.xlane.xlu0 %1573
      %1575 = vmax.xlane.f32.xlu0 %v1518
      %v1576 = vpop.xlane.xlu0 %1575
      %1577 = vmax.xlane.f32.xlu0 %v1523
      %v1578 = vpop.xlane.xlu0 %1577
      %1579 = vmax.xlane.f32.xlu0 %v1526
      %v1580 = vpop.xlane.xlu0 %1579
      %1581 = vmax.xlane.f32.xlu0 %v1531
      %v1582 = vpop.xlane.xlu0 %1581
      %1583 = vmax.xlane.f32.xlu0 %v1534
      %v1584 = vpop.xlane.xlu0 %1583
      %1585 = vmax.xlane.f32.xlu0 %v1539
      %v1586 = vpop.xlane.xlu0 %1585
      %1587 = vmax.xlane.f32.xlu0 %v1542
      %v1588 = vpop.xlane.xlu0 %1587
      %1589 = vmax.xlane.f32.xlu0 %v1547
      %v1590 = vpop.xlane.xlu0 %1589
      %1591 = vmax.xlane.f32.xlu0 %v1550
      %v1592 = vpop.xlane.xlu0 %1591
      %1593 = vmax.xlane.f32.xlu0 %v1555
      %v1594 = vpop.xlane.xlu0 %1593
      %1595 = vmax.xlane.f32.xlu0 %v1558
      %v1596 = vpop.xlane.xlu0 %1595
      %1597 = vmax.xlane.f32.xlu0 %v1563
      %v1598 = vpop.xlane.xlu0 %1597
      %1599 = vmax.xlane.f32.xlu0 %v1566
      %v1600 = vpop.xlane.xlu0 %1599
      %v1601 = vsub.f32 %v1507, %v1570
      %v1602 = vsub.f32 %v1510, %v1572
      %v1603 = vsub.f32 %v1515, %v1574
      %v1604 = vsub.f32 %v1518, %v1576
      %v1605 = vsub.f32 %v1523, %v1578
      %v1606 = vsub.f32 %v1526, %v1580
      %v1607 = vsub.f32 %v1531, %v1582
      %v1608 = vsub.f32 %v1534, %v1584
      %v1609 = vsub.f32 %v1539, %v1586
      %v1610 = vsub.f32 %v1542, %v1588
      %v1611 = vsub.f32 %v1547, %v1590
      %v1612 = vsub.f32 %v1550, %v1592
      %v1613 = vsub.f32 %v1555, %v1594
      %v1614 = vsub.f32 %v1558, %v1596
      %v1615 = vsub.f32 %v1563, %v1598
      %v1616 = vsub.f32 %v1566, %v1600
      %v1617 = vmul.f32 %v1601, 1.442695
      %v1618 = vpow.pop %v1617
      %v1619 = vmul.f32 %v1602, 1.442695
      %v1620 = vpow.pop %v1619
      %v1621 = vmul.f32 %v1603, 1.442695
      %v1622 = vpow.pop %v1621
      %v1623 = vmul.f32 %v1604, 1.442695
      %v1624 = vpow.pop %v1623
      %v1625 = vmul.f32 %v1605, 1.442695
      %v1626 = vpow.pop %v1625
      %v1627 = vmul.f32 %v1606, 1.442695
      %v1628 = vpow.pop %v1627
      %v1629 = vmul.f32 %v1607, 1.442695
      %v1630 = vpow.pop %v1629
      %v1631 = vmul.f32 %v1608, 1.442695
      %v1632 = vpow.pop %v1631
      %v1633 = vmul.f32 %v1609, 1.442695
      %v1634 = vpow.pop %v1633
      %v1635 = vmul.f32 %v1610, 1.442695
      %v1636 = vpow.pop %v1635
      %v1637 = vmul.f32 %v1611, 1.442695
      %v1638 = vpow.pop %v1637
      %v1639 = vmul.f32 %v1612, 1.442695
      %v1640 = vpow.pop %v1639
      %v1641 = vmul.f32 %v1613, 1.442695
      %v1642 = vpow.pop %v1641
      %v1643 = vmul.f32 %v1614, 1.442695
      %v1644 = vpow.pop %v1643
      %v1645 = vmul.f32 %v1615, 1.442695
      %v1646 = vpow.pop %v1645
      %v1647 = vmul.f32 %v1616, 1.442695
      %v1648 = vpow.pop %v1647
      %1649 = vadd.xlane.f32.xlu0 %v1618
      %v1650 = vpop.xlane.xlu0 %1649
      %1651 = vadd.xlane.f32.xlu0 %v1620
      %v1652 = vpop.xlane.xlu0 %1651
      %1653 = vadd.xlane.f32.xlu0 %v1622
      %v1654 = vpop.xlane.xlu0 %1653
      %1655 = vadd.xlane.f32.xlu0 %v1624
      %v1656 = vpop.xlane.xlu0 %1655
      %1657 = vadd.xlane.f32.xlu0 %v1626
      %v1658 = vpop.xlane.xlu0 %1657
      %1659 = vadd.xlane.f32.xlu0 %v1628
      %v1660 = vpop.xlane.xlu0 %1659
      %1661 = vadd.xlane.f32.xlu0 %v1630
      %v1662 = vpop.xlane.xlu0 %1661
      %1663 = vadd.xlane.f32.xlu0 %v1632
      %v1664 = vpop.xlane.xlu0 %1663
      %1665 = vadd.xlane.f32.xlu0 %v1634
      %v1666 = vpop.xlane.xlu0 %1665
      %1667 = vadd.xlane.f32.xlu0 %v1636
      %v1668 = vpop.xlane.xlu0 %1667
      %1669 = vadd.xlane.f32.xlu0 %v1638
      %v1670 = vpop.xlane.xlu0 %1669
      %1671 = vadd.xlane.f32.xlu0 %v1640
      %v1672 = vpop.xlane.xlu0 %1671
      %1673 = vadd.xlane.f32.xlu0 %v1642
      %v1674 = vpop.xlane.xlu0 %1673
      %1675 = vadd.xlane.f32.xlu0 %v1644
      %v1676 = vpop.xlane.xlu0 %1675
      %1677 = vadd.xlane.f32.xlu0 %v1646
      %v1678 = vpop.xlane.xlu0 %1677
      %1679 = vadd.xlane.f32.xlu0 %v1648
      %v1680 = vpop.xlane.xlu0 %1679
      %v1681 = vrcp.pop %v1650
      %v1682 = vrcp.pop %v1652
      %v1683 = vrcp.pop %v1654
      %v1684 = vrcp.pop %v1656
      %v1685 = vrcp.pop %v1658
      %v1686 = vrcp.pop %v1660
      %v1687 = vrcp.pop %v1662
      %v1688 = vrcp.pop %v1664
      %v1689 = vrcp.pop %v1666
      %v1690 = vrcp.pop %v1668
      %v1691 = vrcp.pop %v1670
      %v1692 = vrcp.pop %v1672
      %v1693 = vrcp.pop %v1674
      %v1694 = vrcp.pop %v1676
      %v1695 = vrcp.pop %v1678
      %v1696 = vrcp.pop %v1680
      %v1697 = vmul.f32 %v1618, %v1681
      %v1698 = vmul.f32 %v1620, %v1682
      %v1699 = vmul.f32 %v1622, %v1683
      %v1700 = vmul.f32 %v1624, %v1684
      %v1701 = vmul.f32 %v1626, %v1685
      %v1702 = vmul.f32 %v1628, %v1686
      %v1703 = vmul.f32 %v1630, %v1687
      %v1704 = vmul.f32 %v1632, %v1688
      %v1705 = vmul.f32 %v1634, %v1689
      %v1706 = vmul.f32 %v1636, %v1690
      %v1707 = vmul.f32 %v1638, %v1691
      %v1708 = vmul.f32 %v1640, %v1692
      %v1709 = vmul.f32 %v1642, %v1693
      %v1710 = vmul.f32 %v1644, %v1694
      %v1711 = vmul.f32 %v1646, %v1695
      %v1712 = vmul.f32 %v1648, %v1696
      %v1713 = vpack.c.bf16 %v1698, %v1697
      %v1714 = vpack.c.bf16 %v1700, %v1699
      %v1715 = vpack.c.bf16 %v1702, %v1701
      %v1716 = vpack.c.bf16 %v1704, %v1703
      %v1717 = vpack.c.bf16 %v1706, %v1705
      %v1718 = vpack.c.bf16 %v1708, %v1707
      %v1719 = vpack.c.bf16 %v1710, %v1709
      %v1720 = vpack.c.bf16 %v1712, %v1711
      %1729 = vrot.lane.b32.xlu0 %v967, 96
      %v1730 = vpop.permute.xlu0 %1729
      %1731 = vrot.lane.b32.xlu0 %v968, 96
      %v1732 = vpop.permute.xlu0 %1731
      %1733 = vrot.lane.b32.xlu0 %v969, 96
      %v1734 = vpop.permute.xlu0 %1733
      %1735 = vrot.lane.b32.xlu0 %v970, 96
      %v1736 = vpop.permute.xlu0 %1735
      %1737 = vrot.lane.b32.xlu0 %v971, 96
      %v1738 = vpop.permute.xlu0 %1737
      %1739 = vrot.lane.b32.xlu0 %v972, 96
      %v1740 = vpop.permute.xlu0 %1739
      %1741 = vrot.lane.b32.xlu0 %v973, 96
      %v1742 = vpop.permute.xlu0 %1741
      %1743 = vrot.lane.b32.xlu0 %v974, 96
      %v1744 = vpop.permute.xlu0 %1743
      %1753 = vmatprep.subr.bf16.mxu0 0
      %1754 = vmatpush1.bf16.msra.mxu0 %v1744
      %1755 = vmatprep.subr.bf16.mxu0 0
      %1756 = vmatpush1.bf16.msra.mxu0 %v1742
      %1757 = vmatprep.subr.bf16.mxu0 0
      %1758 = vmatpush1.bf16.msra.mxu0 %v1740
      %1759 = vmatprep.subr.bf16.mxu0 0
      %1760 = vmatpush1.bf16.msra.mxu0 %v1738
      %1761 = vmatprep.subr.bf16.mxu0 0
      %1762 = vmatpush1.bf16.msra.mxu0 %v1736
      %1763 = vmatprep.subr.bf16.mxu0 0
      %1764 = vmatpush1.bf16.msra.mxu0 %v1734
      %1765 = vmatprep.subr.bf16.mxu0 0
      %1766 = vmatpush1.bf16.msra.mxu0 %v1732
      %1767 = vmatprep.subr.bf16.mxu0 0
      %1768 = vmatpush1.bf16.msra.mxu0 %v1730
      %1769 = vmatprep.subr.bf16.mxu0 0
      %1770 = vmatpush2.bf16.msra.mxu0 0
      %1771 = vmatprep.subr.bf16.mxu0 0
      %1772 = vmatpush2.bf16.msra.mxu0 0
      %1773 = vmatprep.subr.bf16.mxu0 0
      %1774 = vmatpush2.bf16.msra.mxu0 0
      %1775 = vmatprep.subr.bf16.mxu0 0
      %1776 = vmatpush2.bf16.msra.mxu0 0
      %1777 = vmatprep.subr.bf16.mxu0 0
      %1778 = vmatpush2.bf16.msra.mxu0 0
      %1779 = vmatprep.subr.bf16.mxu0 0
      %1780 = vmatpush2.bf16.msra.mxu0 0
      %1781 = vmatprep.subr.bf16.mxu0 0
      %1782 = vmatpush2.bf16.msra.mxu0 0
      %1783 = vmatprep.subr.bf16.mxu0 0
      %1784 = vmatpush2.bf16.msra.mxu0 0
      %1785 = vmatprep.mubr.bf16.mxu0 0
      %1786 = vmatmul.mubr.bf16.gmra.mxu0 %v1713
      %v1787 = vpop.f32.mrf.mxu0
      %v1788 = vadd.f32 0.0, %v1787
      %v1789 = vpop.f32.mrf.mxu0
      %v1790 = vpop.f32.mrf.mxu0
      %v1791 = vadd.f32 0.0, %v1790
      %v1792 = vpop.f32.mrf.mxu0
      %1793 = vmatprep.mubr.bf16.mxu0 0
      %1794 = vmatmul.mubr.bf16.gmra.mxu0 %v1714
      %v1795 = vpop.f32.mrf.mxu0
      %v1796 = vadd.f32 0.0, %v1795
      %v1797 = vpop.f32.mrf.mxu0
      %v1798 = vpop.f32.mrf.mxu0
      %v1799 = vadd.f32 0.0, %v1798
      %v1800 = vpop.f32.mrf.mxu0
      %1801 = vmatprep.mubr.bf16.mxu0 0
      %1802 = vmatmul.mubr.bf16.gmra.mxu0 %v1715
      %v1803 = vpop.f32.mrf.mxu0
      %v1804 = vadd.f32 0.0, %v1803
      %v1805 = vpop.f32.mrf.mxu0
      %v1806 = vpop.f32.mrf.mxu0
      %v1807 = vadd.f32 0.0, %v1806
      %v1808 = vpop.f32.mrf.mxu0
      %1809 = vmatprep.mubr.bf16.mxu0 0
      %1810 = vmatmul.mubr.bf16.gmra.mxu0 %v1716
      %v1811 = vpop.f32.mrf.mxu0
      %v1812 = vadd.f32 0.0, %v1811
      %v1813 = vpop.f32.mrf.mxu0
      %v1814 = vpop.f32.mrf.mxu0
      %v1815 = vadd.f32 0.0, %v1814
      %v1816 = vpop.f32.mrf.mxu0
      %1817 = vmatprep.mubr.bf16.mxu0 0
      %1818 = vmatmul.mubr.bf16.gmra.mxu0 %v1717
      %v1819 = vpop.f32.mrf.mxu0
      %v1820 = vadd.f32 0.0, %v1819
      %v1821 = vpop.f32.mrf.mxu0
      %v1822 = vpop.f32.mrf.mxu0
      %v1823 = vadd.f32 0.0, %v1822
      %v1824 = vpop.f32.mrf.mxu0
      %1825 = vmatprep.mubr.bf16.mxu0 0
      %1826 = vmatmul.mubr.bf16.gmra.mxu0 %v1718
      %v1827 = vpop.f32.mrf.mxu0
      %v1828 = vadd.f32 0.0, %v1827
      %v1829 = vpop.f32.mrf.mxu0
      %v1830 = vpop.f32.mrf.mxu0
      %v1831 = vadd.f32 0.0, %v1830
      %v1832 = vpop.f32.mrf.mxu0
      %1833 = vmatprep.mubr.bf16.mxu0 0
      %1834 = vmatmul.mubr.bf16.gmra.mxu0 %v1719
      %v1835 = vpop.f32.mrf.mxu0
      %v1836 = vadd.f32 0.0, %v1835
      %v1837 = vpop.f32.mrf.mxu0
      %v1838 = vpop.f32.mrf.mxu0
      %v1839 = vadd.f32 0.0, %v1838
      %v1840 = vpop.f32.mrf.mxu0
      %1841 = vmatprep.mubr.bf16.mxu0 0
      %1842 = vmatmul.mubr.bf16.gmra.mxu0 %v1720
      %v1843 = vpop.f32.mrf.mxu0
      %v1844 = vadd.f32 0.0, %v1843
      %v1845 = vpop.f32.mrf.mxu0
      %v1846 = vpop.f32.mrf.mxu0
      %v1847 = vadd.f32 0.0, %v1846
      %v1848 = vpop.f32.mrf.mxu0
      %1849 = vdwg.mxu0
      %1850 = vrot.lane.b32.xlu0 %v951, 64
      %v1851 = vpop.permute.xlu0 %1850
      %1852 = vrot.lane.b32.xlu0 %v952, 64
      %v1853 = vpop.permute.xlu0 %1852
      %1854 = vrot.lane.b32.xlu0 %v953, 64
      %v1855 = vpop.permute.xlu0 %1854
      %1856 = vrot.lane.b32.xlu0 %v954, 64
      %v1857 = vpop.permute.xlu0 %1856
      %1858 = vrot.lane.b32.xlu0 %v955, 64
      %v1859 = vpop.permute.xlu0 %1858
      %1860 = vrot.lane.b32.xlu0 %v956, 64
      %v1861 = vpop.permute.xlu0 %1860
      %1862 = vrot.lane.b32.xlu0 %v957, 64
      %v1863 = vpop.permute.xlu0 %1862
      %1864 = vrot.lane.b32.xlu0 %v958, 64
      %v1865 = vpop.permute.xlu0 %1864
      %1866 = vrot.lane.b32.xlu0 %v959, 64
      %v1867 = vpop.permute.xlu0 %1866
      %1868 = vrot.lane.b32.xlu0 %v960, 64
      %v1869 = vpop.permute.xlu0 %1868
      %1870 = vrot.lane.b32.xlu0 %v961, 64
      %v1871 = vpop.permute.xlu0 %1870
      %1872 = vrot.lane.b32.xlu0 %v962, 64
      %v1873 = vpop.permute.xlu0 %1872
      %1874 = vrot.lane.b32.xlu0 %v963, 64
      %v1875 = vpop.permute.xlu0 %1874
      %1876 = vrot.lane.b32.xlu0 %v964, 64
      %v1877 = vpop.permute.xlu0 %1876
      %1878 = vrot.lane.b32.xlu0 %v965, 64
      %v1879 = vpop.permute.xlu0 %1878
      %1880 = vrot.lane.b32.xlu0 %v966, 64
      %v1881 = vpop.permute.xlu0 %1880
      %v1883 = vsel %vm981, %v1851, 0
      %v1886 = vsel %vm981, %v1853, 0
      %v1889 = vsel %vm981, %v1855, 0
      %v1892 = vsel %vm981, %v1857, 0
      %v1895 = vsel %vm981, %v1859, 0
      %v1898 = vsel %vm981, %v1861, 0
      %v1901 = vsel %vm981, %v1863, 0
      %v1904 = vsel %vm981, %v1865, 0
      %v1907 = vsel %vm981, %v1867, 0
      %v1910 = vsel %vm981, %v1869, 0
      %v1913 = vsel %vm981, %v1871, 0
      %v1916 = vsel %vm981, %v1873, 0
      %v1919 = vsel %vm981, %v1875, 0
      %v1922 = vsel %vm981, %v1877, 0
      %v1925 = vsel %vm981, %v1879, 0
      %v1928 = vsel %vm981, %v1881, 0
      %1930 = vmatprep.subr.bf16.mxu0 0
      %1931 = vmatpush1.bf16.xpose.msra.mxu0 %v1928
      %1932 = vmatprep.subr.bf16.mxu0 0
      %1933 = vmatpush1.bf16.xpose.msra.mxu0 %v1925
      %1934 = vmatprep.subr.bf16.mxu0 0
      %1935 = vmatpush1.bf16.xpose.msra.mxu0 %v1922
      %1936 = vmatprep.subr.bf16.mxu0 0
      %1937 = vmatpush1.bf16.xpose.msra.mxu0 %v1919
      %1938 = vmatprep.subr.bf16.mxu0 0
      %1939 = vmatpush1.bf16.xpose.msra.mxu0 %v1916
      %1940 = vmatprep.subr.bf16.mxu0 0
      %1941 = vmatpush1.bf16.xpose.msra.mxu0 %v1913
      %1942 = vmatprep.subr.bf16.mxu0 0
      %1943 = vmatpush1.bf16.xpose.msra.mxu0 %v1910
      %1944 = vmatprep.subr.bf16.mxu0 0
      %1945 = vmatpush1.bf16.xpose.msra.mxu0 %v1907
      %1946 = vmatprep.subr.bf16.mxu0 0
      %1947 = vmatpush2.bf16.xpose.msra.mxu0 0
      %1948 = vmatprep.subr.bf16.mxu0 0
      %1949 = vmatpush2.bf16.xpose.msra.mxu0 0
      %1950 = vmatprep.subr.bf16.mxu0 0
      %1951 = vmatpush2.bf16.xpose.msra.mxu0 0
      %1952 = vmatprep.subr.bf16.mxu0 0
      %1953 = vmatpush2.bf16.xpose.msra.mxu0 0
      %1954 = vmatprep.subr.bf16.mxu0 0
      %1955 = vmatpush2.bf16.xpose.msra.mxu0 0
      %1956 = vmatprep.subr.bf16.mxu0 0
      %1957 = vmatpush2.bf16.xpose.msra.mxu0 0
      %1958 = vmatprep.subr.bf16.mxu0 0
      %1959 = vmatpush2.bf16.xpose.msra.mxu0 0
      %1960 = vmatprep.subr.bf16.mxu0 0
      %1961 = vmatpush2.bf16.xpose.msra.mxu0 0
      %1962 = vmatprep.mubr.bf16.mxu0 0
      %1963 = vmatmul.mubr.bf16.gmra.mxu0 %v1883
      %v1964 = vpop.f32.mrf.mxu0
      %v1965 = vadd.f32 %v979, %v1964
      %v1966 = vpop.f32.mrf.mxu0
      %v1967 = vpop.f32.mrf.mxu0
      %v1968 = vadd.f32 %v979, %v1967
      %v1969 = vpop.f32.mrf.mxu0
      %1970 = vmatprep.mubr.bf16.mxu0 0
      %1971 = vmatmul.mubr.bf16.gmra.mxu0 %v1886
      %v1972 = vpop.f32.mrf.mxu0
      %v1973 = vadd.f32 %v979, %v1972
      %v1974 = vpop.f32.mrf.mxu0
      %v1975 = vpop.f32.mrf.mxu0
      %v1976 = vadd.f32 %v979, %v1975
      %v1977 = vpop.f32.mrf.mxu0
      %1978 = vmatprep.mubr.bf16.mxu0 0
      %1979 = vmatmul.mubr.bf16.gmra.mxu0 %v1889
      %v1980 = vpop.f32.mrf.mxu0
      %v1981 = vadd.f32 %v979, %v1980
      %v1982 = vpop.f32.mrf.mxu0
      %v1983 = vpop.f32.mrf.mxu0
      %v1984 = vadd.f32 %v979, %v1983
      %v1985 = vpop.f32.mrf.mxu0
      %1986 = vmatprep.mubr.bf16.mxu0 0
      %1987 = vmatmul.mubr.bf16.gmra.mxu0 %v1892
      %v1988 = vpop.f32.mrf.mxu0
      %v1989 = vadd.f32 %v979, %v1988
      %v1990 = vpop.f32.mrf.mxu0
      %v1991 = vpop.f32.mrf.mxu0
      %v1992 = vadd.f32 %v979, %v1991
      %v1993 = vpop.f32.mrf.mxu0
      %1994 = vmatprep.mubr.bf16.mxu0 0
      %1995 = vmatmul.mubr.bf16.gmra.mxu0 %v1895
      %v1996 = vpop.f32.mrf.mxu0
      %v1997 = vadd.f32 %v979, %v1996
      %v1998 = vpop.f32.mrf.mxu0
      %v1999 = vpop.f32.mrf.mxu0
      %v2000 = vadd.f32 %v979, %v1999
      %v2001 = vpop.f32.mrf.mxu0
      %2002 = vmatprep.mubr.bf16.mxu0 0
      %2003 = vmatmul.mubr.bf16.gmra.mxu0 %v1898
      %v2004 = vpop.f32.mrf.mxu0
      %v2005 = vadd.f32 %v979, %v2004
      %v2006 = vpop.f32.mrf.mxu0
      %v2007 = vpop.f32.mrf.mxu0
      %v2008 = vadd.f32 %v979, %v2007
      %v2009 = vpop.f32.mrf.mxu0
      %2010 = vmatprep.mubr.bf16.mxu0 0
      %2011 = vmatmul.mubr.bf16.gmra.mxu0 %v1901
      %v2012 = vpop.f32.mrf.mxu0
      %v2013 = vadd.f32 %v979, %v2012
      %v2014 = vpop.f32.mrf.mxu0
      %v2015 = vpop.f32.mrf.mxu0
      %v2016 = vadd.f32 %v979, %v2015
      %v2017 = vpop.f32.mrf.mxu0
      %2018 = vmatprep.mubr.bf16.mxu0 0
      %2019 = vmatmul.mubr.bf16.gmra.mxu0 %v1904
      %v2020 = vpop.f32.mrf.mxu0
      %v2021 = vadd.f32 %v979, %v2020
      %v2022 = vpop.f32.mrf.mxu0
      %v2023 = vpop.f32.mrf.mxu0
      %v2024 = vadd.f32 %v979, %v2023
      %v2025 = vpop.f32.mrf.mxu0
      %2026 = vdwg.mxu0
      %2027 = vmax.xlane.f32.xlu0 %v1965
      %v2028 = vpop.xlane.xlu0 %2027
      %2029 = vmax.xlane.f32.xlu0 %v1968
      %v2030 = vpop.xlane.xlu0 %2029
      %2031 = vmax.xlane.f32.xlu0 %v1973
      %v2032 = vpop.xlane.xlu0 %2031
      %2033 = vmax.xlane.f32.xlu0 %v1976
      %v2034 = vpop.xlane.xlu0 %2033
      %2035 = vmax.xlane.f32.xlu0 %v1981
      %v2036 = vpop.xlane.xlu0 %2035
      %2037 = vmax.xlane.f32.xlu0 %v1984
      %v2038 = vpop.xlane.xlu0 %2037
      %2039 = vmax.xlane.f32.xlu0 %v1989
      %v2040 = vpop.xlane.xlu0 %2039
      %2041 = vmax.xlane.f32.xlu0 %v1992
      %v2042 = vpop.xlane.xlu0 %2041
      %2043 = vmax.xlane.f32.xlu0 %v1997
      %v2044 = vpop.xlane.xlu0 %2043
      %2045 = vmax.xlane.f32.xlu0 %v2000
      %v2046 = vpop.xlane.xlu0 %2045
      %2047 = vmax.xlane.f32.xlu0 %v2005
      %v2048 = vpop.xlane.xlu0 %2047
      %2049 = vmax.xlane.f32.xlu0 %v2008
      %v2050 = vpop.xlane.xlu0 %2049
      %2051 = vmax.xlane.f32.xlu0 %v2013
      %v2052 = vpop.xlane.xlu0 %2051
      %2053 = vmax.xlane.f32.xlu0 %v2016
      %v2054 = vpop.xlane.xlu0 %2053
      %2055 = vmax.xlane.f32.xlu0 %v2021
      %v2056 = vpop.xlane.xlu0 %2055
      %2057 = vmax.xlane.f32.xlu0 %v2024
      %v2058 = vpop.xlane.xlu0 %2057
      %v2059 = vsub.f32 %v1965, %v2028
      %v2060 = vsub.f32 %v1968, %v2030
      %v2061 = vsub.f32 %v1973, %v2032
      %v2062 = vsub.f32 %v1976, %v2034
      %v2063 = vsub.f32 %v1981, %v2036
      %v2064 = vsub.f32 %v1984, %v2038
      %v2065 = vsub.f32 %v1989, %v2040
      %v2066 = vsub.f32 %v1992, %v2042
      %v2067 = vsub.f32 %v1997, %v2044
      %v2068 = vsub.f32 %v2000, %v2046
      %v2069 = vsub.f32 %v2005, %v2048
      %v2070 = vsub.f32 %v2008, %v2050
      %v2071 = vsub.f32 %v2013, %v2052
      %v2072 = vsub.f32 %v2016, %v2054
      %v2073 = vsub.f32 %v2021, %v2056
      %v2074 = vsub.f32 %v2024, %v2058
      %v2075 = vmul.f32 %v2059, 1.442695
      %v2076 = vpow.pop %v2075
      %v2077 = vmul.f32 %v2060, 1.442695
      %v2078 = vpow.pop %v2077
      %v2079 = vmul.f32 %v2061, 1.442695
      %v2080 = vpow.pop %v2079
      %v2081 = vmul.f32 %v2062, 1.442695
      %v2082 = vpow.pop %v2081
      %v2083 = vmul.f32 %v2063, 1.442695
      %v2084 = vpow.pop %v2083
      %v2085 = vmul.f32 %v2064, 1.442695
      %v2086 = vpow.pop %v2085
      %v2087 = vmul.f32 %v2065, 1.442695
      %v2088 = vpow.pop %v2087
      %v2089 = vmul.f32 %v2066, 1.442695
      %v2090 = vpow.pop %v2089
      %v2091 = vmul.f32 %v2067, 1.442695
      %v2092 = vpow.pop %v2091
      %v2093 = vmul.f32 %v2068, 1.442695
      %v2094 = vpow.pop %v2093
      %v2095 = vmul.f32 %v2069, 1.442695
      %v2096 = vpow.pop %v2095
      %v2097 = vmul.f32 %v2070, 1.442695
      %v2098 = vpow.pop %v2097
      %v2099 = vmul.f32 %v2071, 1.442695
      %v2100 = vpow.pop %v2099
      %v2101 = vmul.f32 %v2072, 1.442695
      %v2102 = vpow.pop %v2101
      %v2103 = vmul.f32 %v2073, 1.442695
      %v2104 = vpow.pop %v2103
      %v2105 = vmul.f32 %v2074, 1.442695
      %v2106 = vpow.pop %v2105
      %2107 = vadd.xlane.f32.xlu0 %v2076
      %v2108 = vpop.xlane.xlu0 %2107
      %2109 = vadd.xlane.f32.xlu0 %v2078
      %v2110 = vpop.xlane.xlu0 %2109
      %2111 = vadd.xlane.f32.xlu0 %v2080
      %v2112 = vpop.xlane.xlu0 %2111
      %2113 = vadd.xlane.f32.xlu0 %v2082
      %v2114 = vpop.xlane.xlu0 %2113
      %2115 = vadd.xlane.f32.xlu0 %v2084
      %v2116 = vpop.xlane.xlu0 %2115
      %2117 = vadd.xlane.f32.xlu0 %v2086
      %v2118 = vpop.xlane.xlu0 %2117
      %2119 = vadd.xlane.f32.xlu0 %v2088
      %v2120 = vpop.xlane.xlu0 %2119
      %2121 = vadd.xlane.f32.xlu0 %v2090
      %v2122 = vpop.xlane.xlu0 %2121
      %2123 = vadd.xlane.f32.xlu0 %v2092
      %v2124 = vpop.xlane.xlu0 %2123
      %2125 = vadd.xlane.f32.xlu0 %v2094
      %v2126 = vpop.xlane.xlu0 %2125
      %2127 = vadd.xlane.f32.xlu0 %v2096
      %v2128 = vpop.xlane.xlu0 %2127
      %2129 = vadd.xlane.f32.xlu0 %v2098
      %v2130 = vpop.xlane.xlu0 %2129
      %2131 = vadd.xlane.f32.xlu0 %v2100
      %v2132 = vpop.xlane.xlu0 %2131
      %2133 = vadd.xlane.f32.xlu0 %v2102
      %v2134 = vpop.xlane.xlu0 %2133
      %2135 = vadd.xlane.f32.xlu0 %v2104
      %v2136 = vpop.xlane.xlu0 %2135
      %2137 = vadd.xlane.f32.xlu0 %v2106
      %v2138 = vpop.xlane.xlu0 %2137
      %v2139 = vrcp.pop %v2108
      %v2140 = vrcp.pop %v2110
      %v2141 = vrcp.pop %v2112
      %v2142 = vrcp.pop %v2114
      %v2143 = vrcp.pop %v2116
      %v2144 = vrcp.pop %v2118
      %v2145 = vrcp.pop %v2120
      %v2146 = vrcp.pop %v2122
      %v2147 = vrcp.pop %v2124
      %v2148 = vrcp.pop %v2126
      %v2149 = vrcp.pop %v2128
      %v2150 = vrcp.pop %v2130
      %v2151 = vrcp.pop %v2132
      %v2152 = vrcp.pop %v2134
      %v2153 = vrcp.pop %v2136
      %v2154 = vrcp.pop %v2138
      %v2155 = vmul.f32 %v2076, %v2139
      %v2156 = vmul.f32 %v2078, %v2140
      %v2157 = vmul.f32 %v2080, %v2141
      %v2158 = vmul.f32 %v2082, %v2142
      %v2159 = vmul.f32 %v2084, %v2143
      %v2160 = vmul.f32 %v2086, %v2144
      %v2161 = vmul.f32 %v2088, %v2145
      %v2162 = vmul.f32 %v2090, %v2146
      %v2163 = vmul.f32 %v2092, %v2147
      %v2164 = vmul.f32 %v2094, %v2148
      %v2165 = vmul.f32 %v2096, %v2149
      %v2166 = vmul.f32 %v2098, %v2150
      %v2167 = vmul.f32 %v2100, %v2151
      %v2168 = vmul.f32 %v2102, %v2152
      %v2169 = vmul.f32 %v2104, %v2153
      %v2170 = vmul.f32 %v2106, %v2154
      %v2171 = vpack.c.bf16 %v2156, %v2155
      %v2172 = vpack.c.bf16 %v2158, %v2157
      %v2173 = vpack.c.bf16 %v2160, %v2159
      %v2174 = vpack.c.bf16 %v2162, %v2161
      %v2175 = vpack.c.bf16 %v2164, %v2163
      %v2176 = vpack.c.bf16 %v2166, %v2165
      %v2177 = vpack.c.bf16 %v2168, %v2167
      %v2178 = vpack.c.bf16 %v2170, %v2169
      %2179 = vrot.lane.b32.xlu0 %v967, 64
      %v2180 = vpop.permute.xlu0 %2179
      %2181 = vrot.lane.b32.xlu0 %v968, 64
      %v2182 = vpop.permute.xlu0 %2181
      %2183 = vrot.lane.b32.xlu0 %v969, 64
      %v2184 = vpop.permute.xlu0 %2183
      %2185 = vrot.lane.b32.xlu0 %v970, 64
      %v2186 = vpop.permute.xlu0 %2185
      %2187 = vrot.lane.b32.xlu0 %v971, 64
      %v2188 = vpop.permute.xlu0 %2187
      %2189 = vrot.lane.b32.xlu0 %v972, 64
      %v2190 = vpop.permute.xlu0 %2189
      %2191 = vrot.lane.b32.xlu0 %v973, 64
      %v2192 = vpop.permute.xlu0 %2191
      %2193 = vrot.lane.b32.xlu0 %v974, 64
      %v2194 = vpop.permute.xlu0 %2193
      %2203 = vmatprep.subr.bf16.mxu0 0
      %2204 = vmatpush1.bf16.msra.mxu0 %v2194
      %2205 = vmatprep.subr.bf16.mxu0 0
      %2206 = vmatpush1.bf16.msra.mxu0 %v2192
      %2207 = vmatprep.subr.bf16.mxu0 0
      %2208 = vmatpush1.bf16.msra.mxu0 %v2190
      %2209 = vmatprep.subr.bf16.mxu0 0
      %2210 = vmatpush1.bf16.msra.mxu0 %v2188
      %2211 = vmatprep.subr.bf16.mxu0 0
      %2212 = vmatpush1.bf16.msra.mxu0 %v2186
      %2213 = vmatprep.subr.bf16.mxu0 0
      %2214 = vmatpush1.bf16.msra.mxu0 %v2184
      %2215 = vmatprep.subr.bf16.mxu0 0
      %2216 = vmatpush1.bf16.msra.mxu0 %v2182
      %2217 = vmatprep.subr.bf16.mxu0 0
      %2218 = vmatpush1.bf16.msra.mxu0 %v2180
      %2219 = vmatprep.subr.bf16.mxu0 0
      %2220 = vmatpush2.bf16.msra.mxu0 0
      %2221 = vmatprep.subr.bf16.mxu0 0
      %2222 = vmatpush2.bf16.msra.mxu0 0
      %2223 = vmatprep.subr.bf16.mxu0 0
      %2224 = vmatpush2.bf16.msra.mxu0 0
      %2225 = vmatprep.subr.bf16.mxu0 0
      %2226 = vmatpush2.bf16.msra.mxu0 0
      %2227 = vmatprep.subr.bf16.mxu0 0
      %2228 = vmatpush2.bf16.msra.mxu0 0
      %2229 = vmatprep.subr.bf16.mxu0 0
      %2230 = vmatpush2.bf16.msra.mxu0 0
      %2231 = vmatprep.subr.bf16.mxu0 0
      %2232 = vmatpush2.bf16.msra.mxu0 0
      %2233 = vmatprep.subr.bf16.mxu0 0
      %2234 = vmatpush2.bf16.msra.mxu0 0
      %2235 = vmatprep.mubr.bf16.mxu0 0
      %2236 = vmatmul.mubr.bf16.gmra.mxu0 %v2171
      %v2237 = vpop.f32.mrf.mxu0
      %v2238 = vadd.f32 0.0, %v2237
      %v2239 = vpop.f32.mrf.mxu0
      %v2240 = vpop.f32.mrf.mxu0
      %v2241 = vadd.f32 0.0, %v2240
      %v2242 = vpop.f32.mrf.mxu0
      %2243 = vmatprep.mubr.bf16.mxu0 0
      %2244 = vmatmul.mubr.bf16.gmra.mxu0 %v2172
      %v2245 = vpop.f32.mrf.mxu0
      %v2246 = vadd.f32 0.0, %v2245
      %v2247 = vpop.f32.mrf.mxu0
      %v2248 = vpop.f32.mrf.mxu0
      %v2249 = vadd.f32 0.0, %v2248
      %v2250 = vpop.f32.mrf.mxu0
      %2251 = vmatprep.mubr.bf16.mxu0 0
      %2252 = vmatmul.mubr.bf16.gmra.mxu0 %v2173
      %v2253 = vpop.f32.mrf.mxu0
      %v2254 = vadd.f32 0.0, %v2253
      %v2255 = vpop.f32.mrf.mxu0
      %v2256 = vpop.f32.mrf.mxu0
      %v2257 = vadd.f32 0.0, %v2256
      %v2258 = vpop.f32.mrf.mxu0
      %2259 = vmatprep.mubr.bf16.mxu0 0
      %2260 = vmatmul.mubr.bf16.gmra.mxu0 %v2174
      %v2261 = vpop.f32.mrf.mxu0
      %v2262 = vadd.f32 0.0, %v2261
      %v2263 = vpop.f32.mrf.mxu0
      %v2264 = vpop.f32.mrf.mxu0
      %v2265 = vadd.f32 0.0, %v2264
      %v2266 = vpop.f32.mrf.mxu0
      %2267 = vmatprep.mubr.bf16.mxu0 0
      %2268 = vmatmul.mubr.bf16.gmra.mxu0 %v2175
      %v2269 = vpop.f32.mrf.mxu0
      %v2270 = vadd.f32 0.0, %v2269
      %v2271 = vpop.f32.mrf.mxu0
      %v2272 = vpop.f32.mrf.mxu0
      %v2273 = vadd.f32 0.0, %v2272
      %v2274 = vpop.f32.mrf.mxu0
      %2275 = vmatprep.mubr.bf16.mxu0 0
      %2276 = vmatmul.mubr.bf16.gmra.mxu0 %v2176
      %v2277 = vpop.f32.mrf.mxu0
      %v2278 = vadd.f32 0.0, %v2277
      %v2279 = vpop.f32.mrf.mxu0
      %v2280 = vpop.f32.mrf.mxu0
      %v2281 = vadd.f32 0.0, %v2280
      %v2282 = vpop.f32.mrf.mxu0
      %2283 = vmatprep.mubr.bf16.mxu0 0
      %2284 = vmatmul.mubr.bf16.gmra.mxu0 %v2177
      %v2285 = vpop.f32.mrf.mxu0
      %v2286 = vadd.f32 0.0, %v2285
      %v2287 = vpop.f32.mrf.mxu0
      %v2288 = vpop.f32.mrf.mxu0
      %v2289 = vadd.f32 0.0, %v2288
      %v2290 = vpop.f32.mrf.mxu0
      %2291 = vmatprep.mubr.bf16.mxu0 0
      %2292 = vmatmul.mubr.bf16.gmra.mxu0 %v2178
      %v2293 = vpop.f32.mrf.mxu0
      %v2294 = vadd.f32 0.0, %v2293
      %v2295 = vpop.f32.mrf.mxu0
      %v2296 = vpop.f32.mrf.mxu0
      %v2297 = vadd.f32 0.0, %v2296
      %v2298 = vpop.f32.mrf.mxu0
      %2299 = vdwg.mxu0
      %2300 = vrot.lane.b32.xlu0 %v951, 32
      %v2301 = vpop.permute.xlu0 %2300
      %2302 = vrot.lane.b32.xlu0 %v952, 32
      %v2303 = vpop.permute.xlu0 %2302
      %2304 = vrot.lane.b32.xlu0 %v953, 32
      %v2305 = vpop.permute.xlu0 %2304
      %2306 = vrot.lane.b32.xlu0 %v954, 32
      %v2307 = vpop.permute.xlu0 %2306
      %2308 = vrot.lane.b32.xlu0 %v955, 32
      %v2309 = vpop.permute.xlu0 %2308
      %2310 = vrot.lane.b32.xlu0 %v956, 32
      %v2311 = vpop.permute.xlu0 %2310
      %2312 = vrot.lane.b32.xlu0 %v957, 32
      %v2313 = vpop.permute.xlu0 %2312
      %2314 = vrot.lane.b32.xlu0 %v958, 32
      %v2315 = vpop.permute.xlu0 %2314
      %2316 = vrot.lane.b32.xlu0 %v959, 32
      %v2317 = vpop.permute.xlu0 %2316
      %2318 = vrot.lane.b32.xlu0 %v960, 32
      %v2319 = vpop.permute.xlu0 %2318
      %2320 = vrot.lane.b32.xlu0 %v961, 32
      %v2321 = vpop.permute.xlu0 %2320
      %2322 = vrot.lane.b32.xlu0 %v962, 32
      %v2323 = vpop.permute.xlu0 %2322
      %2324 = vrot.lane.b32.xlu0 %v963, 32
      %v2325 = vpop.permute.xlu0 %2324
      %2326 = vrot.lane.b32.xlu0 %v964, 32
      %v2327 = vpop.permute.xlu0 %2326
      %2328 = vrot.lane.b32.xlu0 %v965, 32
      %v2329 = vpop.permute.xlu0 %2328
      %2330 = vrot.lane.b32.xlu0 %v966, 32
      %v2331 = vpop.permute.xlu0 %2330
      %v2333 = vsel %vm981, %v2301, 0
      %v2336 = vsel %vm981, %v2303, 0
      %v2339 = vsel %vm981, %v2305, 0
      %v2342 = vsel %vm981, %v2307, 0
      %v2345 = vsel %vm981, %v2309, 0
      %v2348 = vsel %vm981, %v2311, 0
      %v2351 = vsel %vm981, %v2313, 0
      %v2354 = vsel %vm981, %v2315, 0
      %v2357 = vsel %vm981, %v2317, 0
      %v2360 = vsel %vm981, %v2319, 0
      %v2363 = vsel %vm981, %v2321, 0
      %v2366 = vsel %vm981, %v2323, 0
      %v2369 = vsel %vm981, %v2325, 0
      %v2372 = vsel %vm981, %v2327, 0
      %v2375 = vsel %vm981, %v2329, 0
      %v2378 = vsel %vm981, %v2331, 0
      %2380 = vmatprep.subr.bf16.mxu0 0
      %2381 = vmatpush1.bf16.xpose.msra.mxu0 %v2378
      %2382 = vmatprep.subr.bf16.mxu0 0
      %2383 = vmatpush1.bf16.xpose.msra.mxu0 %v2375
      %2384 = vmatprep.subr.bf16.mxu0 0
      %2385 = vmatpush1.bf16.xpose.msra.mxu0 %v2372
      %2386 = vmatprep.subr.bf16.mxu0 0
      %2387 = vmatpush1.bf16.xpose.msra.mxu0 %v2369
      %2388 = vmatprep.subr.bf16.mxu0 0
      %2389 = vmatpush1.bf16.xpose.msra.mxu0 %v2366
      %2390 = vmatprep.subr.bf16.mxu0 0
      %2391 = vmatpush1.bf16.xpose.msra.mxu0 %v2363
      %2392 = vmatprep.subr.bf16.mxu0 0
      %2393 = vmatpush1.bf16.xpose.msra.mxu0 %v2360
      %2394 = vmatprep.subr.bf16.mxu0 0
      %2395 = vmatpush1.bf16.xpose.msra.mxu0 %v2357
      %2396 = vmatprep.subr.bf16.mxu0 0
      %2397 = vmatpush2.bf16.xpose.msra.mxu0 0
      %2398 = vmatprep.subr.bf16.mxu0 0
      %2399 = vmatpush2.bf16.xpose.msra.mxu0 0
      %2400 = vmatprep.subr.bf16.mxu0 0
      %2401 = vmatpush2.bf16.xpose.msra.mxu0 0
      %2402 = vmatprep.subr.bf16.mxu0 0
      %2403 = vmatpush2.bf16.xpose.msra.mxu0 0
      %2404 = vmatprep.subr.bf16.mxu0 0
      %2405 = vmatpush2.bf16.xpose.msra.mxu0 0
      %2406 = vmatprep.subr.bf16.mxu0 0
      %2407 = vmatpush2.bf16.xpose.msra.mxu0 0
      %2408 = vmatprep.subr.bf16.mxu0 0
      %2409 = vmatpush2.bf16.xpose.msra.mxu0 0
      %2410 = vmatprep.subr.bf16.mxu0 0
      %2411 = vmatpush2.bf16.xpose.msra.mxu0 0
      %2412 = vmatprep.mubr.bf16.mxu0 0
      %2413 = vmatmul.mubr.bf16.gmra.mxu0 %v2333
      %v2414 = vpop.f32.mrf.mxu0
      %v2415 = vadd.f32 %v979, %v2414
      %v2416 = vpop.f32.mrf.mxu0
      %v2417 = vpop.f32.mrf.mxu0
      %v2418 = vadd.f32 %v979, %v2417
      %v2419 = vpop.f32.mrf.mxu0
      %2420 = vmatprep.mubr.bf16.mxu0 0
      %2421 = vmatmul.mubr.bf16.gmra.mxu0 %v2336
      %v2422 = vpop.f32.mrf.mxu0
      %v2423 = vadd.f32 %v979, %v2422
      %v2424 = vpop.f32.mrf.mxu0
      %v2425 = vpop.f32.mrf.mxu0
      %v2426 = vadd.f32 %v979, %v2425
      %v2427 = vpop.f32.mrf.mxu0
      %2428 = vmatprep.mubr.bf16.mxu0 0
      %2429 = vmatmul.mubr.bf16.gmra.mxu0 %v2339
      %v2430 = vpop.f32.mrf.mxu0
      %v2431 = vadd.f32 %v979, %v2430
      %v2432 = vpop.f32.mrf.mxu0
      %v2433 = vpop.f32.mrf.mxu0
      %v2434 = vadd.f32 %v979, %v2433
      %v2435 = vpop.f32.mrf.mxu0
      %2436 = vmatprep.mubr.bf16.mxu0 0
      %2437 = vmatmul.mubr.bf16.gmra.mxu0 %v2342
      %v2438 = vpop.f32.mrf.mxu0
      %v2439 = vadd.f32 %v979, %v2438
      %v2440 = vpop.f32.mrf.mxu0
      %v2441 = vpop.f32.mrf.mxu0
      %v2442 = vadd.f32 %v979, %v2441
      %v2443 = vpop.f32.mrf.mxu0
      %2444 = vmatprep.mubr.bf16.mxu0 0
      %2445 = vmatmul.mubr.bf16.gmra.mxu0 %v2345
      %v2446 = vpop.f32.mrf.mxu0
      %v2447 = vadd.f32 %v979, %v2446
      %v2448 = vpop.f32.mrf.mxu0
      %v2449 = vpop.f32.mrf.mxu0
      %v2450 = vadd.f32 %v979, %v2449
      %v2451 = vpop.f32.mrf.mxu0
      %2452 = vmatprep.mubr.bf16.mxu0 0
      %2453 = vmatmul.mubr.bf16.gmra.mxu0 %v2348
      %v2454 = vpop.f32.mrf.mxu0
      %v2455 = vadd.f32 %v979, %v2454
      %v2456 = vpop.f32.mrf.mxu0
      %v2457 = vpop.f32.mrf.mxu0
      %v2458 = vadd.f32 %v979, %v2457
      %v2459 = vpop.f32.mrf.mxu0
      %2460 = vmatprep.mubr.bf16.mxu0 0
      %2461 = vmatmul.mubr.bf16.gmra.mxu0 %v2351
      %v2462 = vpop.f32.mrf.mxu0
      %v2463 = vadd.f32 %v979, %v2462
      %v2464 = vpop.f32.mrf.mxu0
      %v2465 = vpop.f32.mrf.mxu0
      %v2466 = vadd.f32 %v979, %v2465
      %v2467 = vpop.f32.mrf.mxu0
      %2468 = vmatprep.mubr.bf16.mxu0 0
      %2469 = vmatmul.mubr.bf16.gmra.mxu0 %v2354
      %v2470 = vpop.f32.mrf.mxu0
      %v2471 = vadd.f32 %v979, %v2470
      %v2472 = vpop.f32.mrf.mxu0
      %v2473 = vpop.f32.mrf.mxu0
      %v2474 = vadd.f32 %v979, %v2473
      %v2475 = vpop.f32.mrf.mxu0
      %2476 = vdwg.mxu0
      %2477 = vmax.xlane.f32.xlu0 %v2415
      %v2478 = vpop.xlane.xlu0 %2477
      %2479 = vmax.xlane.f32.xlu0 %v2418
      %v2480 = vpop.xlane.xlu0 %2479
      %2481 = vmax.xlane.f32.xlu0 %v2423
      %v2482 = vpop.xlane.xlu0 %2481
      %2483 = vmax.xlane.f32.xlu0 %v2426
      %v2484 = vpop.xlane.xlu0 %2483
      %2485 = vmax.xlane.f32.xlu0 %v2431
      %v2486 = vpop.xlane.xlu0 %2485
      %2487 = vmax.xlane.f32.xlu0 %v2434
      %v2488 = vpop.xlane.xlu0 %2487
      %2489 = vmax.xlane.f32.xlu0 %v2439
      %v2490 = vpop.xlane.xlu0 %2489
      %2491 = vmax.xlane.f32.xlu0 %v2442
      %v2492 = vpop.xlane.xlu0 %2491
      %2493 = vmax.xlane.f32.xlu0 %v2447
      %v2494 = vpop.xlane.xlu0 %2493
      %2495 = vmax.xlane.f32.xlu0 %v2450
      %v2496 = vpop.xlane.xlu0 %2495
      %2497 = vmax.xlane.f32.xlu0 %v2455
      %v2498 = vpop.xlane.xlu0 %2497
      %2499 = vmax.xlane.f32.xlu0 %v2458
      %v2500 = vpop.xlane.xlu0 %2499
      %2501 = vmax.xlane.f32.xlu0 %v2463
      %v2502 = vpop.xlane.xlu0 %2501
      %2503 = vmax.xlane.f32.xlu0 %v2466
      %v2504 = vpop.xlane.xlu0 %2503
      %2505 = vmax.xlane.f32.xlu0 %v2471
      %v2506 = vpop.xlane.xlu0 %2505
      %2507 = vmax.xlane.f32.xlu0 %v2474
      %v2508 = vpop.xlane.xlu0 %2507
      %v2509 = vsub.f32 %v2415, %v2478
      %v2510 = vsub.f32 %v2418, %v2480
      %v2511 = vsub.f32 %v2423, %v2482
      %v2512 = vsub.f32 %v2426, %v2484
      %v2513 = vsub.f32 %v2431, %v2486
      %v2514 = vsub.f32 %v2434, %v2488
      %v2515 = vsub.f32 %v2439, %v2490
      %v2516 = vsub.f32 %v2442, %v2492
      %v2517 = vsub.f32 %v2447, %v2494
      %v2518 = vsub.f32 %v2450, %v2496
      %v2519 = vsub.f32 %v2455, %v2498
      %v2520 = vsub.f32 %v2458, %v2500
      %v2521 = vsub.f32 %v2463, %v2502
      %v2522 = vsub.f32 %v2466, %v2504
      %v2523 = vsub.f32 %v2471, %v2506
      %v2524 = vsub.f32 %v2474, %v2508
      %v2525 = vmul.f32 %v2509, 1.442695
      %v2526 = vpow.pop %v2525
      %v2527 = vmul.f32 %v2510, 1.442695
      %v2528 = vpow.pop %v2527
      %v2529 = vmul.f32 %v2511, 1.442695
      %v2530 = vpow.pop %v2529
      %v2531 = vmul.f32 %v2512, 1.442695
      %v2532 = vpow.pop %v2531
      %v2533 = vmul.f32 %v2513, 1.442695
      %v2534 = vpow.pop %v2533
      %v2535 = vmul.f32 %v2514, 1.442695
      %v2536 = vpow.pop %v2535
      %v2537 = vmul.f32 %v2515, 1.442695
      %v2538 = vpow.pop %v2537
      %v2539 = vmul.f32 %v2516, 1.442695
      %v2540 = vpow.pop %v2539
      %v2541 = vmul.f32 %v2517, 1.442695
      %v2542 = vpow.pop %v2541
      %v2543 = vmul.f32 %v2518, 1.442695
      %v2544 = vpow.pop %v2543
      %v2545 = vmul.f32 %v2519, 1.442695
      %v2546 = vpow.pop %v2545
      %v2547 = vmul.f32 %v2520, 1.442695
      %v2548 = vpow.pop %v2547
      %v2549 = vmul.f32 %v2521, 1.442695
      %v2550 = vpow.pop %v2549
      %v2551 = vmul.f32 %v2522, 1.442695
      %v2552 = vpow.pop %v2551
      %v2553 = vmul.f32 %v2523, 1.442695
      %v2554 = vpow.pop %v2553
      %v2555 = vmul.f32 %v2524, 1.442695
      %v2556 = vpow.pop %v2555
      %2557 = vadd.xlane.f32.xlu0 %v2526
      %v2558 = vpop.xlane.xlu0 %2557
      %2559 = vadd.xlane.f32.xlu0 %v2528
      %v2560 = vpop.xlane.xlu0 %2559
      %2561 = vadd.xlane.f32.xlu0 %v2530
      %v2562 = vpop.xlane.xlu0 %2561
      %2563 = vadd.xlane.f32.xlu0 %v2532
      %v2564 = vpop.xlane.xlu0 %2563
      %2565 = vadd.xlane.f32.xlu0 %v2534
      %v2566 = vpop.xlane.xlu0 %2565
      %2567 = vadd.xlane.f32.xlu0 %v2536
      %v2568 = vpop.xlane.xlu0 %2567
      %2569 = vadd.xlane.f32.xlu0 %v2538
      %v2570 = vpop.xlane.xlu0 %2569
      %2571 = vadd.xlane.f32.xlu0 %v2540
      %v2572 = vpop.xlane.xlu0 %2571
      %2573 = vadd.xlane.f32.xlu0 %v2542
      %v2574 = vpop.xlane.xlu0 %2573
      %2575 = vadd.xlane.f32.xlu0 %v2544
      %v2576 = vpop.xlane.xlu0 %2575
      %2577 = vadd.xlane.f32.xlu0 %v2546
      %v2578 = vpop.xlane.xlu0 %2577
      %2579 = vadd.xlane.f32.xlu0 %v2548
      %v2580 = vpop.xlane.xlu0 %2579
      %2581 = vadd.xlane.f32.xlu0 %v2550
      %v2582 = vpop.xlane.xlu0 %2581
      %2583 = vadd.xlane.f32.xlu0 %v2552
      %v2584 = vpop.xlane.xlu0 %2583
      %2585 = vadd.xlane.f32.xlu0 %v2554
      %v2586 = vpop.xlane.xlu0 %2585
      %2587 = vadd.xlane.f32.xlu0 %v2556
      %v2588 = vpop.xlane.xlu0 %2587
      %v2589 = vrcp.pop %v2558
      %v2590 = vrcp.pop %v2560
      %v2591 = vrcp.pop %v2562
      %v2592 = vrcp.pop %v2564
      %v2593 = vrcp.pop %v2566
      %v2594 = vrcp.pop %v2568
      %v2595 = vrcp.pop %v2570
      %v2596 = vrcp.pop %v2572
      %v2597 = vrcp.pop %v2574
      %v2598 = vrcp.pop %v2576
      %v2599 = vrcp.pop %v2578
      %v2600 = vrcp.pop %v2580
      %v2601 = vrcp.pop %v2582
      %v2602 = vrcp.pop %v2584
      %v2603 = vrcp.pop %v2586
      %v2604 = vrcp.pop %v2588
      %v2605 = vmul.f32 %v2526, %v2589
      %v2606 = vmul.f32 %v2528, %v2590
      %v2607 = vmul.f32 %v2530, %v2591
      %v2608 = vmul.f32 %v2532, %v2592
      %v2609 = vmul.f32 %v2534, %v2593
      %v2610 = vmul.f32 %v2536, %v2594
      %v2611 = vmul.f32 %v2538, %v2595
      %v2612 = vmul.f32 %v2540, %v2596
      %v2613 = vmul.f32 %v2542, %v2597
      %v2614 = vmul.f32 %v2544, %v2598
      %v2615 = vmul.f32 %v2546, %v2599
      %v2616 = vmul.f32 %v2548, %v2600
      %v2617 = vmul.f32 %v2550, %v2601
      %v2618 = vmul.f32 %v2552, %v2602
      %v2619 = vmul.f32 %v2554, %v2603
      %v2620 = vmul.f32 %v2556, %v2604
      %v2621 = vpack.c.bf16 %v2606, %v2605
      %v2622 = vpack.c.bf16 %v2608, %v2607
      %v2623 = vpack.c.bf16 %v2610, %v2609
      %v2624 = vpack.c.bf16 %v2612, %v2611
      %v2625 = vpack.c.bf16 %v2614, %v2613
      %v2626 = vpack.c.bf16 %v2616, %v2615
      %v2627 = vpack.c.bf16 %v2618, %v2617
      %v2628 = vpack.c.bf16 %v2620, %v2619
      %2629 = vrot.lane.b32.xlu0 %v967, 32
      %v2630 = vpop.permute.xlu0 %2629
      %2631 = vrot.lane.b32.xlu0 %v968, 32
      %v2632 = vpop.permute.xlu0 %2631
      %2633 = vrot.lane.b32.xlu0 %v969, 32
      %v2634 = vpop.permute.xlu0 %2633
      %2635 = vrot.lane.b32.xlu0 %v970, 32
      %v2636 = vpop.permute.xlu0 %2635
      %2637 = vrot.lane.b32.xlu0 %v971, 32
      %v2638 = vpop.permute.xlu0 %2637
      %2639 = vrot.lane.b32.xlu0 %v972, 32
      %v2640 = vpop.permute.xlu0 %2639
      %2641 = vrot.lane.b32.xlu0 %v973, 32
      %v2642 = vpop.permute.xlu0 %2641
      %2643 = vrot.lane.b32.xlu0 %v974, 32
      %v2644 = vpop.permute.xlu0 %2643
      %2653 = vmatprep.subr.bf16.mxu0 0
      %2654 = vmatpush1.bf16.msra.mxu0 %v2644
      %2655 = vmatprep.subr.bf16.mxu0 0
      %2656 = vmatpush1.bf16.msra.mxu0 %v2642
      %2657 = vmatprep.subr.bf16.mxu0 0
      %2658 = vmatpush1.bf16.msra.mxu0 %v2640
      %2659 = vmatprep.subr.bf16.mxu0 0
      %2660 = vmatpush1.bf16.msra.mxu0 %v2638
      %2661 = vmatprep.subr.bf16.mxu0 0
      %2662 = vmatpush1.bf16.msra.mxu0 %v2636
      %2663 = vmatprep.subr.bf16.mxu0 0
      %2664 = vmatpush1.bf16.msra.mxu0 %v2634
      %2665 = vmatprep.subr.bf16.mxu0 0
      %2666 = vmatpush1.bf16.msra.mxu0 %v2632
      %2667 = vmatprep.subr.bf16.mxu0 0
      %2668 = vmatpush1.bf16.msra.mxu0 %v2630
      %2669 = vmatprep.subr.bf16.mxu0 0
      %2670 = vmatpush2.bf16.msra.mxu0 0
      %2671 = vmatprep.subr.bf16.mxu0 0
      %2672 = vmatpush2.bf16.msra.mxu0 0
      %2673 = vmatprep.subr.bf16.mxu0 0
      %2674 = vmatpush2.bf16.msra.mxu0 0
      %2675 = vmatprep.subr.bf16.mxu0 0
      %2676 = vmatpush2.bf16.msra.mxu0 0
      %2677 = vmatprep.subr.bf16.mxu0 0
      %2678 = vmatpush2.bf16.msra.mxu0 0
      %2679 = vmatprep.subr.bf16.mxu0 0
      %2680 = vmatpush2.bf16.msra.mxu0 0
      %2681 = vmatprep.subr.bf16.mxu0 0
      %2682 = vmatpush2.bf16.msra.mxu0 0
      %2683 = vmatprep.subr.bf16.mxu0 0
      %2684 = vmatpush2.bf16.msra.mxu0 0
      %2685 = vmatprep.mubr.bf16.mxu0 0
      %2686 = vmatmul.mubr.bf16.gmra.mxu0 %v2621
      %v2687 = vpop.f32.mrf.mxu0
      %v2688 = vadd.f32 0.0, %v2687
      %v2689 = vpop.f32.mrf.mxu0
      %v2690 = vpop.f32.mrf.mxu0
      %v2691 = vadd.f32 0.0, %v2690
      %v2692 = vpop.f32.mrf.mxu0
      %2693 = vmatprep.mubr.bf16.mxu0 0
      %2694 = vmatmul.mubr.bf16.gmra.mxu0 %v2622
      %v2695 = vpop.f32.mrf.mxu0
      %v2696 = vadd.f32 0.0, %v2695
      %v2697 = vpop.f32.mrf.mxu0
      %v2698 = vpop.f32.mrf.mxu0
      %v2699 = vadd.f32 0.0, %v2698
      %v2700 = vpop.f32.mrf.mxu0
      %2701 = vmatprep.mubr.bf16.mxu0 0
      %2702 = vmatmul.mubr.bf16.gmra.mxu0 %v2623
      %v2703 = vpop.f32.mrf.mxu0
      %v2704 = vadd.f32 0.0, %v2703
      %v2705 = vpop.f32.mrf.mxu0
      %v2706 = vpop.f32.mrf.mxu0
      %v2707 = vadd.f32 0.0, %v2706
      %v2708 = vpop.f32.mrf.mxu0
      %2709 = vmatprep.mubr.bf16.mxu0 0
      %2710 = vmatmul.mubr.bf16.gmra.mxu0 %v2624
      %v2711 = vpop.f32.mrf.mxu0
      %v2712 = vadd.f32 0.0, %v2711
      %v2713 = vpop.f32.mrf.mxu0
      %v2714 = vpop.f32.mrf.mxu0
      %v2715 = vadd.f32 0.0, %v2714
      %v2716 = vpop.f32.mrf.mxu0
      %2717 = vmatprep.mubr.bf16.mxu0 0
      %2718 = vmatmul.mubr.bf16.gmra.mxu0 %v2625
      %v2719 = vpop.f32.mrf.mxu0
      %v2720 = vadd.f32 0.0, %v2719
      %v2721 = vpop.f32.mrf.mxu0
      %v2722 = vpop.f32.mrf.mxu0
      %v2723 = vadd.f32 0.0, %v2722
      %v2724 = vpop.f32.mrf.mxu0
      %2725 = vmatprep.mubr.bf16.mxu0 0
      %2726 = vmatmul.mubr.bf16.gmra.mxu0 %v2626
      %v2727 = vpop.f32.mrf.mxu0
      %v2728 = vadd.f32 0.0, %v2727
      %v2729 = vpop.f32.mrf.mxu0
      %v2730 = vpop.f32.mrf.mxu0
      %v2731 = vadd.f32 0.0, %v2730
      %v2732 = vpop.f32.mrf.mxu0
      %2733 = vmatprep.mubr.bf16.mxu0 0
      %2734 = vmatmul.mubr.bf16.gmra.mxu0 %v2627
      %v2735 = vpop.f32.mrf.mxu0
      %v2736 = vadd.f32 0.0, %v2735
      %v2737 = vpop.f32.mrf.mxu0
      %v2738 = vpop.f32.mrf.mxu0
      %v2739 = vadd.f32 0.0, %v2738
      %v2740 = vpop.f32.mrf.mxu0
      %2741 = vmatprep.mubr.bf16.mxu0 0
      %2742 = vmatmul.mubr.bf16.gmra.mxu0 %v2628
      %v2743 = vpop.f32.mrf.mxu0
      %v2744 = vadd.f32 0.0, %v2743
      %v2745 = vpop.f32.mrf.mxu0
      %v2746 = vpop.f32.mrf.mxu0
      %v2747 = vadd.f32 0.0, %v2746
      %v2748 = vpop.f32.mrf.mxu0
      %2749 = vdwg.mxu0
      %2766 = vrot.lane.b32.xlu0 %v1788, 32
      %v2767 = vpop.permute.xlu0 %2766
      %2768 = vrot.lane.b32.xlu0 %v1791, 32
      %v2769 = vpop.permute.xlu0 %2768
      %2770 = vrot.lane.b32.xlu0 %v1796, 32
      %v2771 = vpop.permute.xlu0 %2770
      %2772 = vrot.lane.b32.xlu0 %v1799, 32
      %v2773 = vpop.permute.xlu0 %2772
      %2774 = vrot.lane.b32.xlu0 %v1804, 32
      %v2775 = vpop.permute.xlu0 %2774
      %2776 = vrot.lane.b32.xlu0 %v1807, 32
      %v2777 = vpop.permute.xlu0 %2776
      %2778 = vrot.lane.b32.xlu0 %v1812, 32
      %v2779 = vpop.permute.xlu0 %2778
      %2780 = vrot.lane.b32.xlu0 %v1815, 32
      %v2781 = vpop.permute.xlu0 %2780
      %2782 = vrot.lane.b32.xlu0 %v1820, 32
      %v2783 = vpop.permute.xlu0 %2782
      %2784 = vrot.lane.b32.xlu0 %v1823, 32
      %v2785 = vpop.permute.xlu0 %2784
      %2786 = vrot.lane.b32.xlu0 %v1828, 32
      %v2787 = vpop.permute.xlu0 %2786
      %2788 = vrot.lane.b32.xlu0 %v1831, 32
      %v2789 = vpop.permute.xlu0 %2788
      %2790 = vrot.lane.b32.xlu0 %v1836, 32
      %v2791 = vpop.permute.xlu0 %2790
      %2792 = vrot.lane.b32.xlu0 %v1839, 32
      %v2793 = vpop.permute.xlu0 %2792
      %2794 = vrot.lane.b32.xlu0 %v1844, 32
      %v2795 = vpop.permute.xlu0 %2794
      %2796 = vrot.lane.b32.xlu0 %v1847, 32
      %v2797 = vpop.permute.xlu0 %2796
      %2830 = vrot.lane.b32.xlu0 %v2238, 64
      %v2831 = vpop.permute.xlu0 %2830
      %2832 = vrot.lane.b32.xlu0 %v2241, 64
      %v2833 = vpop.permute.xlu0 %2832
      %2834 = vrot.lane.b32.xlu0 %v2246, 64
      %v2835 = vpop.permute.xlu0 %2834
      %2836 = vrot.lane.b32.xlu0 %v2249, 64
      %v2837 = vpop.permute.xlu0 %2836
      %2838 = vrot.lane.b32.xlu0 %v2254, 64
      %v2839 = vpop.permute.xlu0 %2838
      %2840 = vrot.lane.b32.xlu0 %v2257, 64
      %v2841 = vpop.permute.xlu0 %2840
      %2842 = vrot.lane.b32.xlu0 %v2262, 64
      %v2843 = vpop.permute.xlu0 %2842
      %2844 = vrot.lane.b32.xlu0 %v2265, 64
      %v2845 = vpop.permute.xlu0 %2844
      %2846 = vrot.lane.b32.xlu0 %v2270, 64
      %v2847 = vpop.permute.xlu0 %2846
      %2848 = vrot.lane.b32.xlu0 %v2273, 64
      %v2849 = vpop.permute.xlu0 %2848
      %2850 = vrot.lane.b32.xlu0 %v2278, 64
      %v2851 = vpop.permute.xlu0 %2850
      %2852 = vrot.lane.b32.xlu0 %v2281, 64
      %v2853 = vpop.permute.xlu0 %2852
      %2854 = vrot.lane.b32.xlu0 %v2286, 64
      %v2855 = vpop.permute.xlu0 %2854
      %2856 = vrot.lane.b32.xlu0 %v2289, 64
      %v2857 = vpop.permute.xlu0 %2856
      %2858 = vrot.lane.b32.xlu0 %v2294, 64
      %v2859 = vpop.permute.xlu0 %2858
      %2860 = vrot.lane.b32.xlu0 %v2297, 64
      %v2861 = vpop.permute.xlu0 %2860
      %2894 = vrot.lane.b32.xlu0 %v2688, 96
      %v2895 = vpop.permute.xlu0 %2894
      %2896 = vrot.lane.b32.xlu0 %v2691, 96
      %v2897 = vpop.permute.xlu0 %2896
      %2898 = vrot.lane.b32.xlu0 %v2696, 96
      %v2899 = vpop.permute.xlu0 %2898
      %2900 = vrot.lane.b32.xlu0 %v2699, 96
      %v2901 = vpop.permute.xlu0 %2900
      %2902 = vrot.lane.b32.xlu0 %v2704, 96
      %v2903 = vpop.permute.xlu0 %2902
      %2904 = vrot.lane.b32.xlu0 %v2707, 96
      %v2905 = vpop.permute.xlu0 %2904
      %2906 = vrot.lane.b32.xlu0 %v2712, 96
      %v2907 = vpop.permute.xlu0 %2906
      %2908 = vrot.lane.b32.xlu0 %v2715, 96
      %v2909 = vpop.permute.xlu0 %2908
      %2910 = vrot.lane.b32.xlu0 %v2720, 96
      %v2911 = vpop.permute.xlu0 %2910
      %2912 = vrot.lane.b32.xlu0 %v2723, 96
      %v2913 = vpop.permute.xlu0 %2912
      %2914 = vrot.lane.b32.xlu0 %v2728, 96
      %v2915 = vpop.permute.xlu0 %2914
      %2916 = vrot.lane.b32.xlu0 %v2731, 96
      %v2917 = vpop.permute.xlu0 %2916
      %2918 = vrot.lane.b32.xlu0 %v2736, 96
      %v2919 = vpop.permute.xlu0 %2918
      %2920 = vrot.lane.b32.xlu0 %v2739, 96
      %v2921 = vpop.permute.xlu0 %2920
      %2922 = vrot.lane.b32.xlu0 %v2744, 96
      %v2923 = vpop.permute.xlu0 %2922
      %2924 = vrot.lane.b32.xlu0 %v2747, 96
      %v2925 = vpop.permute.xlu0 %2924
      %v2942 = vsel %vm981, %v1314, %v2767
      %v2943 = vsel %vm981, %v1317, %v2769
      %v2944 = vsel %vm981, %v1322, %v2771
      %v2945 = vsel %vm981, %v1325, %v2773
      %v2946 = vsel %vm981, %v1330, %v2775
      %v2947 = vsel %vm981, %v1333, %v2777
      %v2948 = vsel %vm981, %v1338, %v2779
      %v2949 = vsel %vm981, %v1341, %v2781
      %v2950 = vsel %vm981, %v1346, %v2783
      %v2951 = vsel %vm981, %v1349, %v2785
      %v2952 = vsel %vm981, %v1354, %v2787
      %v2953 = vsel %vm981, %v1357, %v2789
      %v2954 = vsel %vm981, %v1362, %v2791
      %v2955 = vsel %vm981, %v1365, %v2793
      %v2956 = vsel %vm981, %v1370, %v2795
      %v2957 = vsel %vm981, %v1373, %v2797
      %vm2958 = vcmask 523264
      %v2959 = vsel %vm2958, %v2942, %v2831
      %v2960 = vsel %vm2958, %v2943, %v2833
      %v2961 = vsel %vm2958, %v2944, %v2835
      %v2962 = vsel %vm2958, %v2945, %v2837
      %v2963 = vsel %vm2958, %v2946, %v2839
      %v2964 = vsel %vm2958, %v2947, %v2841
      %v2965 = vsel %vm2958, %v2948, %v2843
      %v2966 = vsel %vm2958, %v2949, %v2845
      %v2967 = vsel %vm2958, %v2950, %v2847
      %v2968 = vsel %vm2958, %v2951, %v2849
      %v2969 = vsel %vm2958, %v2952, %v2851
      %v2970 = vsel %vm2958, %v2953, %v2853
      %v2971 = vsel %vm2958, %v2954, %v2855
      %v2972 = vsel %vm2958, %v2955, %v2857
      %v2973 = vsel %vm2958, %v2956, %v2859
      %v2974 = vsel %vm2958, %v2957, %v2861
      %vm2975 = vcmask 785408
      %v2976 = vsel %vm2975, %v2959, %v2895
      %v2977 = vsel %vm2975, %v2960, %v2897
      %v2978 = vsel %vm2975, %v2961, %v2899
      %v2979 = vsel %vm2975, %v2962, %v2901
      %v2980 = vsel %vm2975, %v2963, %v2903
      %v2981 = vsel %vm2975, %v2964, %v2905
      %v2982 = vsel %vm2975, %v2965, %v2907
      %v2983 = vsel %vm2975, %v2966, %v2909
      %v2984 = vsel %vm2975, %v2967, %v2911
      %v2985 = vsel %vm2975, %v2968, %v2913
      %v2986 = vsel %vm2975, %v2969, %v2915
      %v2987 = vsel %vm2975, %v2970, %v2917
      %v2988 = vsel %vm2975, %v2971, %v2919
      %v2989 = vsel %vm2975, %v2972, %v2921
      %v2990 = vsel %vm2975, %v2973, %v2923
      %v2991 = vsel %vm2975, %v2974, %v2925
      %v2992 = vpack.c.bf16 %v2977, %v2976
      %v2993 = vpack.c.bf16 %v2979, %v2978
      %v2994 = vpack.c.bf16 %v2981, %v2980
      %v2995 = vpack.c.bf16 %v2983, %v2982
      %v2996 = vpack.c.bf16 %v2985, %v2984
      %v2997 = vpack.c.bf16 %v2987, %v2986
      %v2998 = vpack.c.bf16 %v2989, %v2988
      %v2999 = vpack.c.bf16 %v2991, %v2990
      %v3000 = vld [vmem:[%s4] sm:$0xf]
      %v3001 = vld [vmem:[%s4 + $0x4] sm:$0xf]
      %v3002 = vld [vmem:[%s4 + $0x8] sm:$0xf]
      %v3003 = vld [vmem:[%s4 + $0xc] sm:$0xf]
      %v3004 = vld [vmem:[%s4 + $0x10] sm:$0xf]
      %v3005 = vld [vmem:[%s4 + $0x14] sm:$0xf]
      %v3006 = vld [vmem:[%s4 + $0x18] sm:$0xf]
      %v3007 = vld [vmem:[%s4 + $0x1c] sm:$0xf]
      %v3008 = vld [vmem:[%s4 + $0x20] sm:$0xf]
      %v3009 = vld [vmem:[%s4 + $0x24] sm:$0xf]
      %v3010 = vld [vmem:[%s4 + $0x28] sm:$0xf]
      %v3011 = vld [vmem:[%s4 + $0x2c] sm:$0xf]
      %v3012 = vld [vmem:[%s4 + $0x30] sm:$0xf]
      %v3013 = vld [vmem:[%s4 + $0x34] sm:$0xf]
      %v3014 = vld [vmem:[%s4 + $0x38] sm:$0xf]
      %v3015 = vld [vmem:[%s4 + $0x3c] sm:$0xf]
      %v3016 = vld [vmem:[%s5] sm:$0x1]
      %v3018 = vlaneseq
      %v3019 = vshrl.u32 %v3018, 7
      %v3020 = vsub.s32 0, %v3019
      %v3021 = vrot.slane %v3016, %v3020
      %v3039 = vunpack.c.l.b16 %v3000
      %v3040 = vunpack.c.l.b16 %v3001
      %v3041 = vunpack.c.l.b16 %v3002
      %v3042 = vunpack.c.l.b16 %v3003
      %v3043 = vunpack.c.l.b16 %v3004
      %v3044 = vunpack.c.l.b16 %v3005
      %v3045 = vunpack.c.l.b16 %v3006
      %v3046 = vunpack.c.l.b16 %v3007
      %v3047 = vunpack.c.l.b16 %v3008
      %v3048 = vunpack.c.l.b16 %v3009
      %v3049 = vunpack.c.l.b16 %v3010
      %v3050 = vunpack.c.l.b16 %v3011
      %v3051 = vunpack.c.l.b16 %v3012
      %v3052 = vunpack.c.l.b16 %v3013
      %v3053 = vunpack.c.l.b16 %v3014
      %v3054 = vunpack.c.l.b16 %v3015
      %v3055 = vpack.c.b16 %v3040, %v3039
      %v3056 = vpack.c.b16 %v3042, %v3041
      %v3057 = vpack.c.b16 %v3044, %v3043
      %v3058 = vpack.c.b16 %v3046, %v3045
      %v3059 = vpack.c.b16 %v3048, %v3047
      %v3060 = vpack.c.b16 %v3050, %v3049
      %v3061 = vpack.c.b16 %v3052, %v3051
      %v3062 = vpack.c.b16 %v3054, %v3053
      %3071 = vmatprep.subr.bf16.mxu0 0
      %3072 = vmatpush1.bf16.msra.mxu0 %v3062
      %3073 = vmatprep.subr.bf16.mxu0 0
      %3074 = vmatpush1.bf16.msra.mxu0 %v3061
      %3075 = vmatprep.subr.bf16.mxu0 0
      %3076 = vmatpush1.bf16.msra.mxu0 %v3060
      %3077 = vmatprep.subr.bf16.mxu0 0
      %3078 = vmatpush1.bf16.msra.mxu0 %v3059
      %3079 = vmatprep.subr.bf16.mxu0 0
      %3080 = vmatpush1.bf16.msra.mxu0 %v3058
      %3081 = vmatprep.subr.bf16.mxu0 0
      %3082 = vmatpush1.bf16.msra.mxu0 %v3057
      %3083 = vmatprep.subr.bf16.mxu0 0
      %3084 = vmatpush1.bf16.msra.mxu0 %v3056
      %3085 = vmatprep.subr.bf16.mxu0 0
      %3086 = vmatpush1.bf16.msra.mxu0 %v3055
      %3087 = vmatprep.subr.bf16.mxu0 0
      %3088 = vmatpush2.bf16.msra.mxu0 0
      %3089 = vmatprep.subr.bf16.mxu0 0
      %3090 = vmatpush2.bf16.msra.mxu0 0
      %3091 = vmatprep.subr.bf16.mxu0 0
      %3092 = vmatpush2.bf16.msra.mxu0 0
      %3093 = vmatprep.subr.bf16.mxu0 0
      %3094 = vmatpush2.bf16.msra.mxu0 0
      %3095 = vmatprep.subr.bf16.mxu0 0
      %3096 = vmatpush2.bf16.msra.mxu0 0
      %3097 = vmatprep.subr.bf16.mxu0 0
      %3098 = vmatpush2.bf16.msra.mxu0 0
      %3099 = vmatprep.subr.bf16.mxu0 0
      %3100 = vmatpush2.bf16.msra.mxu0 0
      %3101 = vmatprep.subr.bf16.mxu0 0
      %3102 = vmatpush2.bf16.msra.mxu0 0
      %3103 = vmatprep.mubr.bf16.mxu0 0
      %3104 = vmatmul.mubr.bf16.gmra.mxu0 %v2992
      %v3105 = vpop.f32.mrf.mxu0
      %v3106 = vadd.f32 %v3021, %v3105
      %v3107 = vpop.f32.mrf.mxu0
      %v3108 = vpop.f32.mrf.mxu0
      %v3109 = vadd.f32 %v3021, %v3108
      %v3110 = vpop.f32.mrf.mxu0
      %3111 = vmatprep.mubr.bf16.mxu0 0
      %3112 = vmatmul.mubr.bf16.gmra.mxu0 %v2993
      %v3113 = vpop.f32.mrf.mxu0
      %v3114 = vadd.f32 %v3021, %v3113
      %v3115 = vpop.f32.mrf.mxu0
      %v3116 = vpop.f32.mrf.mxu0
      %v3117 = vadd.f32 %v3021, %v3116
      %v3118 = vpop.f32.mrf.mxu0
      %3119 = vmatprep.mubr.bf16.mxu0 0
      %3120 = vmatmul.mubr.bf16.gmra.mxu0 %v2994
      %v3121 = vpop.f32.mrf.mxu0
      %v3122 = vadd.f32 %v3021, %v3121
      %v3123 = vpop.f32.mrf.mxu0
      %v3124 = vpop.f32.mrf.mxu0
      %v3125 = vadd.f32 %v3021, %v3124
      %v3126 = vpop.f32.mrf.mxu0
      %3127 = vmatprep.mubr.bf16.mxu0 0
      %3128 = vmatmul.mubr.bf16.gmra.mxu0 %v2995
      %v3129 = vpop.f32.mrf.mxu0
      %v3130 = vadd.f32 %v3021, %v3129
      %v3131 = vpop.f32.mrf.mxu0
      %v3132 = vpop.f32.mrf.mxu0
      %v3133 = vadd.f32 %v3021, %v3132
      %v3134 = vpop.f32.mrf.mxu0
      %3135 = vmatprep.mubr.bf16.mxu0 0
      %3136 = vmatmul.mubr.bf16.gmra.mxu0 %v2996
      %v3137 = vpop.f32.mrf.mxu0
      %v3138 = vadd.f32 %v3021, %v3137
      %v3139 = vpop.f32.mrf.mxu0
      %v3140 = vpop.f32.mrf.mxu0
      %v3141 = vadd.f32 %v3021, %v3140
      %v3142 = vpop.f32.mrf.mxu0
      %3143 = vmatprep.mubr.bf16.mxu0 0
      %3144 = vmatmul.mubr.bf16.gmra.mxu0 %v2997
      %v3145 = vpop.f32.mrf.mxu0
      %v3146 = vadd.f32 %v3021, %v3145
      %v3147 = vpop.f32.mrf.mxu0
      %v3148 = vpop.f32.mrf.mxu0
      %v3149 = vadd.f32 %v3021, %v3148
      %v3150 = vpop.f32.mrf.mxu0
      %3151 = vmatprep.mubr.bf16.mxu0 0
      %3152 = vmatmul.mubr.bf16.gmra.mxu0 %v2998
      %v3153 = vpop.f32.mrf.mxu0
      %v3154 = vadd.f32 %v3021, %v3153
      %v3155 = vpop.f32.mrf.mxu0
      %v3156 = vpop.f32.mrf.mxu0
      %v3157 = vadd.f32 %v3021, %v3156
      %v3158 = vpop.f32.mrf.mxu0
      %3159 = vmatprep.mubr.bf16.mxu0 0
      %3160 = vmatmul.mubr.bf16.gmra.mxu0 %v2999
      %v3161 = vpop.f32.mrf.mxu0
      %v3162 = vadd.f32 %v3021, %v3161
      %v3163 = vpop.f32.mrf.mxu0
      %v3164 = vpop.f32.mrf.mxu0
      %v3165 = vadd.f32 %v3021, %v3164
      %v3166 = vpop.f32.mrf.mxu0
      %3167 = vdwg.mxu0
      %v3168 = vadd.f32 %v3106, %v499
      %v3169 = vadd.f32 %v3109, %v500
      %v3170 = vadd.f32 %v3114, %v501
      %v3171 = vadd.f32 %v3117, %v502
      %v3172 = vadd.f32 %v3122, %v503
      %v3173 = vadd.f32 %v3125, %v504
      %v3174 = vadd.f32 %v3130, %v505
      %v3175 = vadd.f32 %v3133, %v506
      %v3176 = vadd.f32 %v3138, %v507
      %v3177 = vadd.f32 %v3141, %v508
      %v3178 = vadd.f32 %v3146, %v509
      %v3179 = vadd.f32 %v3149, %v510
      %v3180 = vadd.f32 %v3154, %v511
      %v3181 = vadd.f32 %v3157, %v512
      %v3182 = vadd.f32 %v3162, %v513
      %v3183 = vadd.f32 %v3165, %v514
      %v3184 = vld [vmem:[%s6] sm:$0x1]
      %v3185 = vld [vmem:[%s7] sm:$0x1]
      %3186 = vadd.xlane.f32.xlu0 %v3168
      %v3187 = vpop.xlane.xlu0 %3186
      %3188 = vadd.xlane.f32.xlu0 %v3169
      %v3189 = vpop.xlane.xlu0 %3188
      %3190 = vadd.xlane.f32.xlu0 %v3170
      %v3191 = vpop.xlane.xlu0 %3190
      %3192 = vadd.xlane.f32.xlu0 %v3171
      %v3193 = vpop.xlane.xlu0 %3192
      %3194 = vadd.xlane.f32.xlu0 %v3172
      %v3195 = vpop.xlane.xlu0 %3194
      %3196 = vadd.xlane.f32.xlu0 %v3173
      %v3197 = vpop.xlane.xlu0 %3196
      %3198 = vadd.xlane.f32.xlu0 %v3174
      %v3199 = vpop.xlane.xlu0 %3198
      %3200 = vadd.xlane.f32.xlu0 %v3175
      %v3201 = vpop.xlane.xlu0 %3200
      %3202 = vadd.xlane.f32.xlu0 %v3176
      %v3203 = vpop.xlane.xlu0 %3202
      %3204 = vadd.xlane.f32.xlu0 %v3177
      %v3205 = vpop.xlane.xlu0 %3204
      %3206 = vadd.xlane.f32.xlu0 %v3178
      %v3207 = vpop.xlane.xlu0 %3206
      %3208 = vadd.xlane.f32.xlu0 %v3179
      %v3209 = vpop.xlane.xlu0 %3208
      %3210 = vadd.xlane.f32.xlu0 %v3180
      %v3211 = vpop.xlane.xlu0 %3210
      %3212 = vadd.xlane.f32.xlu0 %v3181
      %v3213 = vpop.xlane.xlu0 %3212
      %3214 = vadd.xlane.f32.xlu0 %v3182
      %v3215 = vpop.xlane.xlu0 %3214
      %3216 = vadd.xlane.f32.xlu0 %v3183
      %v3217 = vpop.xlane.xlu0 %3216
      %v3218 = vrcp.pop 128.0
      %v3219 = vmul.f32 %v3187, %v3218
      %v3220 = vmul.f32 %v3189, %v3218
      %v3221 = vmul.f32 %v3191, %v3218
      %v3222 = vmul.f32 %v3193, %v3218
      %v3223 = vmul.f32 %v3195, %v3218
      %v3224 = vmul.f32 %v3197, %v3218
      %v3225 = vmul.f32 %v3199, %v3218
      %v3226 = vmul.f32 %v3201, %v3218
      %v3227 = vmul.f32 %v3203, %v3218
      %v3228 = vmul.f32 %v3205, %v3218
      %v3229 = vmul.f32 %v3207, %v3218
      %v3230 = vmul.f32 %v3209, %v3218
      %v3231 = vmul.f32 %v3211, %v3218
      %v3232 = vmul.f32 %v3213, %v3218
      %v3233 = vmul.f32 %v3215, %v3218
      %v3234 = vmul.f32 %v3217, %v3218
      %v3235 = vsub.f32 %v3168, %v3219
      %v3236 = vsub.f32 %v3169, %v3220
      %v3237 = vsub.f32 %v3170, %v3221
      %v3238 = vsub.f32 %v3171, %v3222
      %v3239 = vsub.f32 %v3172, %v3223
      %v3240 = vsub.f32 %v3173, %v3224
      %v3241 = vsub.f32 %v3174, %v3225
      %v3242 = vsub.f32 %v3175, %v3226
      %v3243 = vsub.f32 %v3176, %v3227
      %v3244 = vsub.f32 %v3177, %v3228
      %v3245 = vsub.f32 %v3178, %v3229
      %v3246 = vsub.f32 %v3179, %v3230
      %v3247 = vsub.f32 %v3180, %v3231
      %v3248 = vsub.f32 %v3181, %v3232
      %v3249 = vsub.f32 %v3182, %v3233
      %v3250 = vsub.f32 %v3183, %v3234
      %v3251 = vmul.f32 %v3235, %v3235
      %v3252 = vmul.f32 %v3236, %v3236
      %v3253 = vmul.f32 %v3237, %v3237
      %v3254 = vmul.f32 %v3238, %v3238
      %v3255 = vmul.f32 %v3239, %v3239
      %v3256 = vmul.f32 %v3240, %v3240
      %v3257 = vmul.f32 %v3241, %v3241
      %v3258 = vmul.f32 %v3242, %v3242
      %v3259 = vmul.f32 %v3243, %v3243
      %v3260 = vmul.f32 %v3244, %v3244
      %v3261 = vmul.f32 %v3245, %v3245
      %v3262 = vmul.f32 %v3246, %v3246
      %v3263 = vmul.f32 %v3247, %v3247
      %v3264 = vmul.f32 %v3248, %v3248
      %v3265 = vmul.f32 %v3249, %v3249
      %v3266 = vmul.f32 %v3250, %v3250
      %3267 = vadd.xlane.f32.xlu0 %v3251
      %v3268 = vpop.xlane.xlu0 %3267
      %3269 = vadd.xlane.f32.xlu0 %v3252
      %v3270 = vpop.xlane.xlu0 %3269
      %3271 = vadd.xlane.f32.xlu0 %v3253
      %v3272 = vpop.xlane.xlu0 %3271
      %3273 = vadd.xlane.f32.xlu0 %v3254
      %v3274 = vpop.xlane.xlu0 %3273
      %3275 = vadd.xlane.f32.xlu0 %v3255
      %v3276 = vpop.xlane.xlu0 %3275
      %3277 = vadd.xlane.f32.xlu0 %v3256
      %v3278 = vpop.xlane.xlu0 %3277
      %3279 = vadd.xlane.f32.xlu0 %v3257
      %v3280 = vpop.xlane.xlu0 %3279
      %3281 = vadd.xlane.f32.xlu0 %v3258
      %v3282 = vpop.xlane.xlu0 %3281
      %3283 = vadd.xlane.f32.xlu0 %v3259
      %v3284 = vpop.xlane.xlu0 %3283
      %3285 = vadd.xlane.f32.xlu0 %v3260
      %v3286 = vpop.xlane.xlu0 %3285
      %3287 = vadd.xlane.f32.xlu0 %v3261
      %v3288 = vpop.xlane.xlu0 %3287
      %3289 = vadd.xlane.f32.xlu0 %v3262
      %v3290 = vpop.xlane.xlu0 %3289
      %3291 = vadd.xlane.f32.xlu0 %v3263
      %v3292 = vpop.xlane.xlu0 %3291
      %3293 = vadd.xlane.f32.xlu0 %v3264
      %v3294 = vpop.xlane.xlu0 %3293
      %3295 = vadd.xlane.f32.xlu0 %v3265
      %v3296 = vpop.xlane.xlu0 %3295
      %3297 = vadd.xlane.f32.xlu0 %v3266
      %v3298 = vpop.xlane.xlu0 %3297
      %v3299 = vmul.f32 %v3268, %v3218
      %v3300 = vmul.f32 %v3270, %v3218
      %v3301 = vmul.f32 %v3272, %v3218
      %v3302 = vmul.f32 %v3274, %v3218
      %v3303 = vmul.f32 %v3276, %v3218
      %v3304 = vmul.f32 %v3278, %v3218
      %v3305 = vmul.f32 %v3280, %v3218
      %v3306 = vmul.f32 %v3282, %v3218
      %v3307 = vmul.f32 %v3284, %v3218
      %v3308 = vmul.f32 %v3286, %v3218
      %v3309 = vmul.f32 %v3288, %v3218
      %v3310 = vmul.f32 %v3290, %v3218
      %v3311 = vmul.f32 %v3292, %v3218
      %v3312 = vmul.f32 %v3294, %v3218
      %v3313 = vmul.f32 %v3296, %v3218
      %v3314 = vmul.f32 %v3298, %v3218
      %v3315 = vadd.f32 %v3299, 1e-06
      %v3316 = vadd.f32 %v3300, 1e-06
      %v3317 = vadd.f32 %v3301, 1e-06
      %v3318 = vadd.f32 %v3302, 1e-06
      %v3319 = vadd.f32 %v3303, 1e-06
      %v3320 = vadd.f32 %v3304, 1e-06
      %v3321 = vadd.f32 %v3305, 1e-06
      %v3322 = vadd.f32 %v3306, 1e-06
      %v3323 = vadd.f32 %v3307, 1e-06
      %v3324 = vadd.f32 %v3308, 1e-06
      %v3325 = vadd.f32 %v3309, 1e-06
      %v3326 = vadd.f32 %v3310, 1e-06
      %v3327 = vadd.f32 %v3311, 1e-06
      %v3328 = vadd.f32 %v3312, 1e-06
      %v3329 = vadd.f32 %v3313, 1e-06
      %v3330 = vadd.f32 %v3314, 1e-06
      %v3331 = vrsqrt.pop %v3315
      %v3332 = vrsqrt.pop %v3316
      %v3333 = vrsqrt.pop %v3317
      %v3334 = vrsqrt.pop %v3318
      %v3335 = vrsqrt.pop %v3319
      %v3336 = vrsqrt.pop %v3320
      %v3337 = vrsqrt.pop %v3321
      %v3338 = vrsqrt.pop %v3322
      %v3339 = vrsqrt.pop %v3323
      %v3340 = vrsqrt.pop %v3324
      %v3341 = vrsqrt.pop %v3325
      %v3342 = vrsqrt.pop %v3326
      %v3343 = vrsqrt.pop %v3327
      %v3344 = vrsqrt.pop %v3328
      %v3345 = vrsqrt.pop %v3329
      %v3346 = vrsqrt.pop %v3330
      %v3347 = vmul.f32 %v3235, %v3331
      %v3348 = vmul.f32 %v3236, %v3332
      %v3349 = vmul.f32 %v3237, %v3333
      %v3350 = vmul.f32 %v3238, %v3334
      %v3351 = vmul.f32 %v3239, %v3335
      %v3352 = vmul.f32 %v3240, %v3336
      %v3353 = vmul.f32 %v3241, %v3337
      %v3354 = vmul.f32 %v3242, %v3338
      %v3355 = vmul.f32 %v3243, %v3339
      %v3356 = vmul.f32 %v3244, %v3340
      %v3357 = vmul.f32 %v3245, %v3341
      %v3358 = vmul.f32 %v3246, %v3342
      %v3359 = vmul.f32 %v3247, %v3343
      %v3360 = vmul.f32 %v3248, %v3344
      %v3361 = vmul.f32 %v3249, %v3345
      %v3362 = vmul.f32 %v3250, %v3346
      %v3364 = vlaneseq
      %v3365 = vshrl.u32 %v3364, 7
      %v3366 = vsub.s32 0, %v3365
      %v3367 = vrot.slane %v3184, %v3366
      %v3369 = vmul.f32 %v3347, %v3367
      %v3370 = vmul.f32 %v3348, %v3367
      %v3371 = vmul.f32 %v3349, %v3367
      %v3372 = vmul.f32 %v3350, %v3367
      %v3373 = vmul.f32 %v3351, %v3367
      %v3374 = vmul.f32 %v3352, %v3367
      %v3375 = vmul.f32 %v3353, %v3367
      %v3376 = vmul.f32 %v3354, %v3367
      %v3377 = vmul.f32 %v3355, %v3367
      %v3378 = vmul.f32 %v3356, %v3367
      %v3379 = vmul.f32 %v3357, %v3367
      %v3380 = vmul.f32 %v3358, %v3367
      %v3381 = vmul.f32 %v3359, %v3367
      %v3382 = vmul.f32 %v3360, %v3367
      %v3383 = vmul.f32 %v3361, %v3367
      %v3384 = vmul.f32 %v3362, %v3367
      %v3386 = vlaneseq
      %v3387 = vshrl.u32 %v3386, 7
      %v3388 = vsub.s32 0, %v3387
      %v3389 = vrot.slane %v3185, %v3388
      %v3391 = vadd.f32 %v3369, %v3389
      %v3392 = vadd.f32 %v3370, %v3389
      %v3393 = vadd.f32 %v3371, %v3389
      %v3394 = vadd.f32 %v3372, %v3389
      %v3395 = vadd.f32 %v3373, %v3389
      %v3396 = vadd.f32 %v3374, %v3389
      %v3397 = vadd.f32 %v3375, %v3389
      %v3398 = vadd.f32 %v3376, %v3389
      %v3399 = vadd.f32 %v3377, %v3389
      %v3400 = vadd.f32 %v3378, %v3389
      %v3401 = vadd.f32 %v3379, %v3389
      %v3402 = vadd.f32 %v3380, %v3389
      %v3403 = vadd.f32 %v3381, %v3389
      %v3404 = vadd.f32 %v3382, %v3389
      %v3405 = vadd.f32 %v3383, %v3389
      %v3406 = vadd.f32 %v3384, %v3389
      %v3407 = vpack.c.bf16 %v3392, %v3391
      %v3408 = vpack.c.bf16 %v3394, %v3393
      %v3409 = vpack.c.bf16 %v3396, %v3395
      %v3410 = vpack.c.bf16 %v3398, %v3397
      %v3411 = vpack.c.bf16 %v3400, %v3399
      %v3412 = vpack.c.bf16 %v3402, %v3401
      %v3413 = vpack.c.bf16 %v3404, %v3403
      %v3414 = vpack.c.bf16 %v3406, %v3405
      %v3415 = vld [vmem:[%s8] sm:$0xff]
      %v3416 = vld [vmem:[%s8 + $0x8] sm:$0xff]
      %v3417 = vld [vmem:[%s8 + $0x10] sm:$0xff]
      %v3418 = vld [vmem:[%s8 + $0x18] sm:$0xff]
      %v3419 = vld [vmem:[%s8 + $0x20] sm:$0xff]
      %v3420 = vld [vmem:[%s8 + $0x28] sm:$0xff]
      %v3421 = vld [vmem:[%s8 + $0x30] sm:$0xff]
      %v3422 = vld [vmem:[%s8 + $0x38] sm:$0xff]
      %v3423 = vld [vmem:[%s8 + $0x40] sm:$0xff]
      %v3424 = vld [vmem:[%s8 + $0x48] sm:$0xff]
      %v3425 = vld [vmem:[%s8 + $0x50] sm:$0xff]
      %v3426 = vld [vmem:[%s8 + $0x58] sm:$0xff]
      %v3427 = vld [vmem:[%s8 + $0x60] sm:$0xff]
      %v3428 = vld [vmem:[%s8 + $0x68] sm:$0xff]
      %v3429 = vld [vmem:[%s8 + $0x70] sm:$0xff]
      %v3430 = vld [vmem:[%s8 + $0x78] sm:$0xff]
      %v3431 = vld [vmem:[%s9] sm:$0x3]
      %v3433 = vlaneseq
      %v3434 = vshrl.u32 %v3433, 7
      %v3435 = vsub.s32 0, %v3434
      %v3436 = vrot.slane %v3431, %v3435
      %v3437 = vlaneseq
      %v3438 = vshrl.u32 %v3437, 7
      %v3439 = vsub.s32 1, %v3438
      %v3440 = vrot.slane %v3431, %v3439
      %v3459 = vunpack.c.l.b16 %v3415
      %v3460 = vunpack.c.h.b16 %v3415
      %v3461 = vunpack.c.l.b16 %v3416
      %v3462 = vunpack.c.h.b16 %v3416
      %v3463 = vunpack.c.l.b16 %v3417
      %v3464 = vunpack.c.h.b16 %v3417
      %v3465 = vunpack.c.l.b16 %v3418
      %v3466 = vunpack.c.h.b16 %v3418
      %v3467 = vunpack.c.l.b16 %v3419
      %v3468 = vunpack.c.h.b16 %v3419
      %v3469 = vunpack.c.l.b16 %v3420
      %v3470 = vunpack.c.h.b16 %v3420
      %v3471 = vunpack.c.l.b16 %v3421
      %v3472 = vunpack.c.h.b16 %v3421
      %v3473 = vunpack.c.l.b16 %v3422
      %v3474 = vunpack.c.h.b16 %v3422
      %v3475 = vunpack.c.l.b16 %v3423
      %v3476 = vunpack.c.h.b16 %v3423
      %v3477 = vunpack.c.l.b16 %v3424
      %v3478 = vunpack.c.h.b16 %v3424
      %v3479 = vunpack.c.l.b16 %v3425
      %v3480 = vunpack.c.h.b16 %v3425
      %v3481 = vunpack.c.l.b16 %v3426
      %v3482 = vunpack.c.h.b16 %v3426
      %v3483 = vunpack.c.l.b16 %v3427
      %v3484 = vunpack.c.h.b16 %v3427
      %v3485 = vunpack.c.l.b16 %v3428
      %v3486 = vunpack.c.h.b16 %v3428
      %v3487 = vunpack.c.l.b16 %v3429
      %v3488 = vunpack.c.h.b16 %v3429
      %v3489 = vunpack.c.l.b16 %v3430
      %v3490 = vunpack.c.h.b16 %v3430
      %v3491 = vpack.c.b16 %v3461, %v3459
      %v3492 = vpack.c.b16 %v3462, %v3460
      %v3493 = vpack.c.b16 %v3465, %v3463
      %v3494 = vpack.c.b16 %v3466, %v3464
      %v3495 = vpack.c.b16 %v3469, %v3467
      %v3496 = vpack.c.b16 %v3470, %v3468
      %v3497 = vpack.c.b16 %v3473, %v3471
      %v3498 = vpack.c.b16 %v3474, %v3472
      %v3499 = vpack.c.b16 %v3477, %v3475
      %v3500 = vpack.c.b16 %v3478, %v3476
      %v3501 = vpack.c.b16 %v3481, %v3479
      %v3502 = vpack.c.b16 %v3482, %v3480
      %v3503 = vpack.c.b16 %v3485, %v3483
      %v3504 = vpack.c.b16 %v3486, %v3484
      %v3505 = vpack.c.b16 %v3489, %v3487
      %v3506 = vpack.c.b16 %v3490, %v3488
      %3523 = vmatprep.subr.bf16.mxu0 %v3506
      %3524 = vmatpush1.bf16.msra.mxu0 %v3505
      %3525 = vmatprep.subr.bf16.mxu0 %v3504
      %3526 = vmatpush1.bf16.msra.mxu0 %v3503
      %3527 = vmatprep.subr.bf16.mxu0 %v3502
      %3528 = vmatpush1.bf16.msra.mxu0 %v3501
      %3529 = vmatprep.subr.bf16.mxu0 %v3500
      %3530 = vmatpush1.bf16.msra.mxu0 %v3499
      %3531 = vmatprep.subr.bf16.mxu0 %v3498
      %3532 = vmatpush1.bf16.msra.mxu0 %v3497
      %3533 = vmatprep.subr.bf16.mxu0 %v3496
      %3534 = vmatpush1.bf16.msra.mxu0 %v3495
      %3535 = vmatprep.subr.bf16.mxu0 %v3494
      %3536 = vmatpush1.bf16.msra.mxu0 %v3493
      %3537 = vmatprep.subr.bf16.mxu0 %v3492
      %3538 = vmatpush1.bf16.msra.mxu0 %v3491
      %3539 = vmatprep.subr.bf16.mxu0 0
      %3540 = vmatpush2.bf16.msra.mxu0 0
      %3541 = vmatprep.subr.bf16.mxu0 0
      %3542 = vmatpush2.bf16.msra.mxu0 0
      %3543 = vmatprep.subr.bf16.mxu0 0
      %3544 = vmatpush2.bf16.msra.mxu0 0
      %3545 = vmatprep.subr.bf16.mxu0 0
      %3546 = vmatpush2.bf16.msra.mxu0 0
      %3547 = vmatprep.subr.bf16.mxu0 0
      %3548 = vmatpush2.bf16.msra.mxu0 0
      %3549 = vmatprep.subr.bf16.mxu0 0
      %3550 = vmatpush2.bf16.msra.mxu0 0
      %3551 = vmatprep.subr.bf16.mxu0 0
      %3552 = vmatpush2.bf16.msra.mxu0 0
      %3553 = vmatprep.subr.bf16.mxu0 0
      %3554 = vmatpush2.bf16.msra.mxu0 0
      %3555 = vmatprep.mubr.bf16.mxu0 0
      %3556 = vmatmul.mubr.bf16.gmra.mxu0 %v3407
      %v3557 = vpop.f32.mrf.mxu0
      %v3558 = vadd.f32 %v3436, %v3557
      %v3559 = vpop.f32.mrf.mxu0
      %v3560 = vadd.f32 %v3440, %v3559
      %v3561 = vpop.f32.mrf.mxu0
      %v3562 = vadd.f32 %v3436, %v3561
      %v3563 = vpop.f32.mrf.mxu0
      %v3564 = vadd.f32 %v3440, %v3563
      %3565 = vmatprep.mubr.bf16.mxu0 0
      %3566 = vmatmul.mubr.bf16.gmra.mxu0 %v3408
      %v3567 = vpop.f32.mrf.mxu0
      %v3568 = vadd.f32 %v3436, %v3567
      %v3569 = vpop.f32.mrf.mxu0
      %v3570 = vadd.f32 %v3440, %v3569
      %v3571 = vpop.f32.mrf.mxu0
      %v3572 = vadd.f32 %v3436, %v3571
      %v3573 = vpop.f32.mrf.mxu0
      %v3574 = vadd.f32 %v3440, %v3573
      %3575 = vmatprep.mubr.bf16.mxu0 0
      %3576 = vmatmul.mubr.bf16.gmra.mxu0 %v3409
      %v3577 = vpop.f32.mrf.mxu0
      %v3578 = vadd.f32 %v3436, %v3577
      %v3579 = vpop.f32.mrf.mxu0
      %v3580 = vadd.f32 %v3440, %v3579
      %v3581 = vpop.f32.mrf.mxu0
      %v3582 = vadd.f32 %v3436, %v3581
      %v3583 = vpop.f32.mrf.mxu0
      %v3584 = vadd.f32 %v3440, %v3583
      %3585 = vmatprep.mubr.bf16.mxu0 0
      %3586 = vmatmul.mubr.bf16.gmra.mxu0 %v3410
      %v3587 = vpop.f32.mrf.mxu0
      %v3588 = vadd.f32 %v3436, %v3587
      %v3589 = vpop.f32.mrf.mxu0
      %v3590 = vadd.f32 %v3440, %v3589
      %v3591 = vpop.f32.mrf.mxu0
      %v3592 = vadd.f32 %v3436, %v3591
      %v3593 = vpop.f32.mrf.mxu0
      %v3594 = vadd.f32 %v3440, %v3593
      %3595 = vmatprep.mubr.bf16.mxu0 0
      %3596 = vmatmul.mubr.bf16.gmra.mxu0 %v3411
      %v3597 = vpop.f32.mrf.mxu0
      %v3598 = vadd.f32 %v3436, %v3597
      %v3599 = vpop.f32.mrf.mxu0
      %v3600 = vadd.f32 %v3440, %v3599
      %v3601 = vpop.f32.mrf.mxu0
      %v3602 = vadd.f32 %v3436, %v3601
      %v3603 = vpop.f32.mrf.mxu0
      %v3604 = vadd.f32 %v3440, %v3603
      %3605 = vmatprep.mubr.bf16.mxu0 0
      %3606 = vmatmul.mubr.bf16.gmra.mxu0 %v3412
      %v3607 = vpop.f32.mrf.mxu0
      %v3608 = vadd.f32 %v3436, %v3607
      %v3609 = vpop.f32.mrf.mxu0
      %v3610 = vadd.f32 %v3440, %v3609
      %v3611 = vpop.f32.mrf.mxu0
      %v3612 = vadd.f32 %v3436, %v3611
      %v3613 = vpop.f32.mrf.mxu0
      %v3614 = vadd.f32 %v3440, %v3613
      %3615 = vmatprep.mubr.bf16.mxu0 0
      %3616 = vmatmul.mubr.bf16.gmra.mxu0 %v3413
      %v3617 = vpop.f32.mrf.mxu0
      %v3618 = vadd.f32 %v3436, %v3617
      %v3619 = vpop.f32.mrf.mxu0
      %v3620 = vadd.f32 %v3440, %v3619
      %v3621 = vpop.f32.mrf.mxu0
      %v3622 = vadd.f32 %v3436, %v3621
      %v3623 = vpop.f32.mrf.mxu0
      %v3624 = vadd.f32 %v3440, %v3623
      %3625 = vmatprep.mubr.bf16.mxu0 0
      %3626 = vmatmul.mubr.bf16.gmra.mxu0 %v3414
      %v3627 = vpop.f32.mrf.mxu0
      %v3628 = vadd.f32 %v3436, %v3627
      %v3629 = vpop.f32.mrf.mxu0
      %v3630 = vadd.f32 %v3440, %v3629
      %v3631 = vpop.f32.mrf.mxu0
      %v3632 = vadd.f32 %v3436, %v3631
      %v3633 = vpop.f32.mrf.mxu0
      %v3634 = vadd.f32 %v3440, %v3633
      %3635 = vdwg.mxu0
      %v3636 = vmax.f32 %v3558, 0.0
      %v3637 = vmax.f32 %v3560, 0.0
      %v3638 = vmax.f32 %v3562, 0.0
      %v3639 = vmax.f32 %v3564, 0.0
      %v3640 = vmax.f32 %v3568, 0.0
      %v3641 = vmax.f32 %v3570, 0.0
      %v3642 = vmax.f32 %v3572, 0.0
      %v3643 = vmax.f32 %v3574, 0.0
      %v3644 = vmax.f32 %v3578, 0.0
      %v3645 = vmax.f32 %v3580, 0.0
      %v3646 = vmax.f32 %v3582, 0.0
      %v3647 = vmax.f32 %v3584, 0.0
      %v3648 = vmax.f32 %v3588, 0.0
      %v3649 = vmax.f32 %v3590, 0.0
      %v3650 = vmax.f32 %v3592, 0.0
      %v3651 = vmax.f32 %v3594, 0.0
      %v3652 = vmax.f32 %v3598, 0.0
      %v3653 = vmax.f32 %v3600, 0.0
      %v3654 = vmax.f32 %v3602, 0.0
      %v3655 = vmax.f32 %v3604, 0.0
      %v3656 = vmax.f32 %v3608, 0.0
      %v3657 = vmax.f32 %v3610, 0.0
      %v3658 = vmax.f32 %v3612, 0.0
      %v3659 = vmax.f32 %v3614, 0.0
      %v3660 = vmax.f32 %v3618, 0.0
      %v3661 = vmax.f32 %v3620, 0.0
      %v3662 = vmax.f32 %v3622, 0.0
      %v3663 = vmax.f32 %v3624, 0.0
      %v3664 = vmax.f32 %v3628, 0.0
      %v3665 = vmax.f32 %v3630, 0.0
      %v3666 = vmax.f32 %v3632, 0.0
      %v3667 = vmax.f32 %v3634, 0.0
      %v3668 = vpack.c.bf16 %v3638, %v3636
      %v3669 = vpack.c.bf16 %v3639, %v3637
      %v3670 = vpack.c.bf16 %v3642, %v3640
      %v3671 = vpack.c.bf16 %v3643, %v3641
      %v3672 = vpack.c.bf16 %v3646, %v3644
      %v3673 = vpack.c.bf16 %v3647, %v3645
      %v3674 = vpack.c.bf16 %v3650, %v3648
      %v3675 = vpack.c.bf16 %v3651, %v3649
      %v3676 = vpack.c.bf16 %v3654, %v3652
      %v3677 = vpack.c.bf16 %v3655, %v3653
      %v3678 = vpack.c.bf16 %v3658, %v3656
      %v3679 = vpack.c.bf16 %v3659, %v3657
      %v3680 = vpack.c.bf16 %v3662, %v3660
      %v3681 = vpack.c.bf16 %v3663, %v3661
      %v3682 = vpack.c.bf16 %v3666, %v3664
      %v3683 = vpack.c.bf16 %v3667, %v3665
      %v3684 = vld [vmem:[%s10] sm:$0xf]
      %v3685 = vld [vmem:[%s10 + $0x4] sm:$0xf]
      %v3686 = vld [vmem:[%s10 + $0x8] sm:$0xf]
      %v3687 = vld [vmem:[%s10 + $0xc] sm:$0xf]
      %v3688 = vld [vmem:[%s10 + $0x10] sm:$0xf]
      %v3689 = vld [vmem:[%s10 + $0x14] sm:$0xf]
      %v3690 = vld [vmem:[%s10 + $0x18] sm:$0xf]
      %v3691 = vld [vmem:[%s10 + $0x1c] sm:$0xf]
      %v3692 = vld [vmem:[%s10 + $0x20] sm:$0xf]
      %v3693 = vld [vmem:[%s10 + $0x24] sm:$0xf]
      %v3694 = vld [vmem:[%s10 + $0x28] sm:$0xf]
      %v3695 = vld [vmem:[%s10 + $0x2c] sm:$0xf]
      %v3696 = vld [vmem:[%s10 + $0x30] sm:$0xf]
      %v3697 = vld [vmem:[%s10 + $0x34] sm:$0xf]
      %v3698 = vld [vmem:[%s10 + $0x38] sm:$0xf]
      %v3699 = vld [vmem:[%s10 + $0x3c] sm:$0xf]
      %v3700 = vld [vmem:[%s10 + $0x40] sm:$0xf]
      %v3701 = vld [vmem:[%s10 + $0x44] sm:$0xf]
      %v3702 = vld [vmem:[%s10 + $0x48] sm:$0xf]
      %v3703 = vld [vmem:[%s10 + $0x4c] sm:$0xf]
      %v3704 = vld [vmem:[%s10 + $0x50] sm:$0xf]
      %v3705 = vld [vmem:[%s10 + $0x54] sm:$0xf]
      %v3706 = vld [vmem:[%s10 + $0x58] sm:$0xf]
      %v3707 = vld [vmem:[%s10 + $0x5c] sm:$0xf]
      %v3708 = vld [vmem:[%s10 + $0x60] sm:$0xf]
      %v3709 = vld [vmem:[%s10 + $0x64] sm:$0xf]
      %v3710 = vld [vmem:[%s10 + $0x68] sm:$0xf]
      %v3711 = vld [vmem:[%s10 + $0x6c] sm:$0xf]
      %v3712 = vld [vmem:[%s10 + $0x70] sm:$0xf]
      %v3713 = vld [vmem:[%s10 + $0x74] sm:$0xf]
      %v3714 = vld [vmem:[%s10 + $0x78] sm:$0xf]
      %v3715 = vld [vmem:[%s10 + $0x7c] sm:$0xf]
      %v3716 = vld [vmem:[%s11] sm:$0x1]
      %v3718 = vlaneseq
      %v3719 = vshrl.u32 %v3718, 7
      %v3720 = vsub.s32 0, %v3719
      %v3721 = vrot.slane %v3716, %v3720
      %v3755 = vunpack.c.l.b16 %v3684
      %v3756 = vunpack.c.l.b16 %v3685
      %v3757 = vunpack.c.l.b16 %v3686
      %v3758 = vunpack.c.l.b16 %v3687
      %v3759 = vunpack.c.l.b16 %v3688
      %v3760 = vunpack.c.l.b16 %v3689
      %v3761 = vunpack.c.l.b16 %v3690
      %v3762 = vunpack.c.l.b16 %v3691
      %v3763 = vunpack.c.l.b16 %v3692
      %v3764 = vunpack.c.l.b16 %v3693
      %v3765 = vunpack.c.l.b16 %v3694
      %v3766 = vunpack.c.l.b16 %v3695
      %v3767 = vunpack.c.l.b16 %v3696
      %v3768 = vunpack.c.l.b16 %v3697
      %v3769 = vunpack.c.l.b16 %v3698
      %v3770 = vunpack.c.l.b16 %v3699
      %v3771 = vunpack.c.l.b16 %v3700
      %v3772 = vunpack.c.l.b16 %v3701
      %v3773 = vunpack.c.l.b16 %v3702
      %v3774 = vunpack.c.l.b16 %v3703
      %v3775 = vunpack.c.l.b16 %v3704
      %v3776 = vunpack.c.l.b16 %v3705
      %v3777 = vunpack.c.l.b16 %v3706
      %v3778 = vunpack.c.l.b16 %v3707
      %v3779 = vunpack.c.l.b16 %v3708
      %v3780 = vunpack.c.l.b16 %v3709
      %v3781 = vunpack.c.l.b16 %v3710
      %v3782 = vunpack.c.l.b16 %v3711
      %v3783 = vunpack.c.l.b16 %v3712
      %v3784 = vunpack.c.l.b16 %v3713
      %v3785 = vunpack.c.l.b16 %v3714
      %v3786 = vunpack.c.l.b16 %v3715
      %v3787 = vpack.c.b16 %v3756, %v3755
      %v3788 = vpack.c.b16 %v3758, %v3757
      %v3789 = vpack.c.b16 %v3760, %v3759
      %v3790 = vpack.c.b16 %v3762, %v3761
      %v3791 = vpack.c.b16 %v3764, %v3763
      %v3792 = vpack.c.b16 %v3766, %v3765
      %v3793 = vpack.c.b16 %v3768, %v3767
      %v3794 = vpack.c.b16 %v3770, %v3769
      %v3795 = vpack.c.b16 %v3772, %v3771
      %v3796 = vpack.c.b16 %v3774, %v3773
      %v3797 = vpack.c.b16 %v3776, %v3775
      %v3798 = vpack.c.b16 %v3778, %v3777
      %v3799 = vpack.c.b16 %v3780, %v3779
      %v3800 = vpack.c.b16 %v3782, %v3781
      %v3801 = vpack.c.b16 %v3784, %v3783
      %v3802 = vpack.c.b16 %v3786, %v3785
      %3819 = vmatprep.subr.bf16.mxu0 0
      %3820 = vmatpush1.bf16.msra.mxu0 %v3794
      %3821 = vmatprep.subr.bf16.mxu0 0
      %3822 = vmatpush1.bf16.msra.mxu0 %v3793
      %3823 = vmatprep.subr.bf16.mxu0 0
      %3824 = vmatpush1.bf16.msra.mxu0 %v3792
      %3825 = vmatprep.subr.bf16.mxu0 0
      %3826 = vmatpush1.bf16.msra.mxu0 %v3791
      %3827 = vmatprep.subr.bf16.mxu0 0
      %3828 = vmatpush1.bf16.msra.mxu0 %v3790
      %3829 = vmatprep.subr.bf16.mxu0 0
      %3830 = vmatpush1.bf16.msra.mxu0 %v3789
      %3831 = vmatprep.subr.bf16.mxu0 0
      %3832 = vmatpush1.bf16.msra.mxu0 %v3788
      %3833 = vmatprep.subr.bf16.mxu0 0
      %3834 = vmatpush1.bf16.msra.mxu0 %v3787
      %3835 = vmatprep.subr.bf16.mxu0 0
      %3836 = vmatpush2.bf16.msra.mxu0 %v3802
      %3837 = vmatprep.subr.bf16.mxu0 0
      %3838 = vmatpush2.bf16.msra.mxu0 %v3801
      %3839 = vmatprep.subr.bf16.mxu0 0
      %3840 = vmatpush2.bf16.msra.mxu0 %v3800
      %3841 = vmatprep.subr.bf16.mxu0 0
      %3842 = vmatpush2.bf16.msra.mxu0 %v3799
      %3843 = vmatprep.subr.bf16.mxu0 0
      %3844 = vmatpush2.bf16.msra.mxu0 %v3798
      %3845 = vmatprep.subr.bf16.mxu0 0
      %3846 = vmatpush2.bf16.msra.mxu0 %v3797
      %3847 = vmatprep.subr.bf16.mxu0 0
      %3848 = vmatpush2.bf16.msra.mxu0 %v3796
      %3849 = vmatprep.subr.bf16.mxu0 0
      %3850 = vmatpush2.bf16.msra.mxu0 %v3795
      %3851 = vmatprep.mubr.bf16.mxu0 %v3669
      %3852 = vmatmul.mubr.bf16.gmra.mxu0 %v3668
      %v3853 = vpop.f32.mrf.mxu0
      %v3854 = vadd.f32 %v3721, %v3853
      %v3855 = vpop.f32.mrf.mxu0
      %v3856 = vpop.f32.mrf.mxu0
      %v3857 = vadd.f32 %v3721, %v3856
      %v3858 = vpop.f32.mrf.mxu0
      %3859 = vmatprep.mubr.bf16.mxu0 %v3671
      %3860 = vmatmul.mubr.bf16.gmra.mxu0 %v3670
      %v3861 = vpop.f32.mrf.mxu0
      %v3862 = vadd.f32 %v3721, %v3861
      %v3863 = vpop.f32.mrf.mxu0
      %v3864 = vpop.f32.mrf.mxu0
      %v3865 = vadd.f32 %v3721, %v3864
      %v3866 = vpop.f32.mrf.mxu0
      %3867 = vmatprep.mubr.bf16.mxu0 %v3673
      %3868 = vmatmul.mubr.bf16.gmra.mxu0 %v3672
      %v3869 = vpop.f32.mrf.mxu0
      %v3870 = vadd.f32 %v3721, %v3869
      %v3871 = vpop.f32.mrf.mxu0
      %v3872 = vpop.f32.mrf.mxu0
      %v3873 = vadd.f32 %v3721, %v3872
      %v3874 = vpop.f32.mrf.mxu0
      %3875 = vmatprep.mubr.bf16.mxu0 %v3675
      %3876 = vmatmul.mubr.bf16.gmra.mxu0 %v3674
      %v3877 = vpop.f32.mrf.mxu0
      %v3878 = vadd.f32 %v3721, %v3877
      %v3879 = vpop.f32.mrf.mxu0
      %v3880 = vpop.f32.mrf.mxu0
      %v3881 = vadd.f32 %v3721, %v3880
      %v3882 = vpop.f32.mrf.mxu0
      %3883 = vmatprep.mubr.bf16.mxu0 %v3677
      %3884 = vmatmul.mubr.bf16.gmra.mxu0 %v3676
      %v3885 = vpop.f32.mrf.mxu0
      %v3886 = vadd.f32 %v3721, %v3885
      %v3887 = vpop.f32.mrf.mxu0
      %v3888 = vpop.f32.mrf.mxu0
      %v3889 = vadd.f32 %v3721, %v3888
      %v3890 = vpop.f32.mrf.mxu0
      %3891 = vmatprep.mubr.bf16.mxu0 %v3679
      %3892 = vmatmul.mubr.bf16.gmra.mxu0 %v3678
      %v3893 = vpop.f32.mrf.mxu0
      %v3894 = vadd.f32 %v3721, %v3893
      %v3895 = vpop.f32.mrf.mxu0
      %v3896 = vpop.f32.mrf.mxu0
      %v3897 = vadd.f32 %v3721, %v3896
      %v3898 = vpop.f32.mrf.mxu0
      %3899 = vmatprep.mubr.bf16.mxu0 %v3681
      %3900 = vmatmul.mubr.bf16.gmra.mxu0 %v3680
      %v3901 = vpop.f32.mrf.mxu0
      %v3902 = vadd.f32 %v3721, %v3901
      %v3903 = vpop.f32.mrf.mxu0
      %v3904 = vpop.f32.mrf.mxu0
      %v3905 = vadd.f32 %v3721, %v3904
      %v3906 = vpop.f32.mrf.mxu0
      %3907 = vmatprep.mubr.bf16.mxu0 %v3683
      %3908 = vmatmul.mubr.bf16.gmra.mxu0 %v3682
      %v3909 = vpop.f32.mrf.mxu0
      %v3910 = vadd.f32 %v3721, %v3909
      %v3911 = vpop.f32.mrf.mxu0
      %v3912 = vpop.f32.mrf.mxu0
      %v3913 = vadd.f32 %v3721, %v3912
      %v3914 = vpop.f32.mrf.mxu0
      %3915 = vdwg.mxu0
      %v3916 = vadd.f32 %v3854, %v3391
      %v3917 = vadd.f32 %v3857, %v3392
      %v3918 = vadd.f32 %v3862, %v3393
      %v3919 = vadd.f32 %v3865, %v3394
      %v3920 = vadd.f32 %v3870, %v3395
      %v3921 = vadd.f32 %v3873, %v3396
      %v3922 = vadd.f32 %v3878, %v3397
      %v3923 = vadd.f32 %v3881, %v3398
      %v3924 = vadd.f32 %v3886, %v3399
      %v3925 = vadd.f32 %v3889, %v3400
      %v3926 = vadd.f32 %v3894, %v3401
      %v3927 = vadd.f32 %v3897, %v3402
      %v3928 = vadd.f32 %v3902, %v3403
      %v3929 = vadd.f32 %v3905, %v3404
      %v3930 = vadd.f32 %v3910, %v3405
      %v3931 = vadd.f32 %v3913, %v3406
      %v3932 = vld [vmem:[%s12] sm:$0x1]
      %v3933 = vld [vmem:[%s13] sm:$0x1]
      %3934 = vadd.xlane.f32.xlu0 %v3916
      %v3935 = vpop.xlane.xlu0 %3934
      %3936 = vadd.xlane.f32.xlu0 %v3917
      %v3937 = vpop.xlane.xlu0 %3936
      %3938 = vadd.xlane.f32.xlu0 %v3918
      %v3939 = vpop.xlane.xlu0 %3938
      %3940 = vadd.xlane.f32.xlu0 %v3919
      %v3941 = vpop.xlane.xlu0 %3940
      %3942 = vadd.xlane.f32.xlu0 %v3920
      %v3943 = vpop.xlane.xlu0 %3942
      %3944 = vadd.xlane.f32.xlu0 %v3921
      %v3945 = vpop.xlane.xlu0 %3944
      %3946 = vadd.xlane.f32.xlu0 %v3922
      %v3947 = vpop.xlane.xlu0 %3946
      %3948 = vadd.xlane.f32.xlu0 %v3923
      %v3949 = vpop.xlane.xlu0 %3948
      %3950 = vadd.xlane.f32.xlu0 %v3924
      %v3951 = vpop.xlane.xlu0 %3950
      %3952 = vadd.xlane.f32.xlu0 %v3925
      %v3953 = vpop.xlane.xlu0 %3952
      %3954 = vadd.xlane.f32.xlu0 %v3926
      %v3955 = vpop.xlane.xlu0 %3954
      %3956 = vadd.xlane.f32.xlu0 %v3927
      %v3957 = vpop.xlane.xlu0 %3956
      %3958 = vadd.xlane.f32.xlu0 %v3928
      %v3959 = vpop.xlane.xlu0 %3958
      %3960 = vadd.xlane.f32.xlu0 %v3929
      %v3961 = vpop.xlane.xlu0 %3960
      %3962 = vadd.xlane.f32.xlu0 %v3930
      %v3963 = vpop.xlane.xlu0 %3962
      %3964 = vadd.xlane.f32.xlu0 %v3931
      %v3965 = vpop.xlane.xlu0 %3964
      %v3966 = vmul.f32 %v3935, %v3218
      %v3967 = vmul.f32 %v3937, %v3218
      %v3968 = vmul.f32 %v3939, %v3218
      %v3969 = vmul.f32 %v3941, %v3218
      %v3970 = vmul.f32 %v3943, %v3218
      %v3971 = vmul.f32 %v3945, %v3218
      %v3972 = vmul.f32 %v3947, %v3218
      %v3973 = vmul.f32 %v3949, %v3218
      %v3974 = vmul.f32 %v3951, %v3218
      %v3975 = vmul.f32 %v3953, %v3218
      %v3976 = vmul.f32 %v3955, %v3218
      %v3977 = vmul.f32 %v3957, %v3218
      %v3978 = vmul.f32 %v3959, %v3218
      %v3979 = vmul.f32 %v3961, %v3218
      %v3980 = vmul.f32 %v3963, %v3218
      %v3981 = vmul.f32 %v3965, %v3218
      %v3982 = vsub.f32 %v3916, %v3966
      %v3983 = vsub.f32 %v3917, %v3967
      %v3984 = vsub.f32 %v3918, %v3968
      %v3985 = vsub.f32 %v3919, %v3969
      %v3986 = vsub.f32 %v3920, %v3970
      %v3987 = vsub.f32 %v3921, %v3971
      %v3988 = vsub.f32 %v3922, %v3972
      %v3989 = vsub.f32 %v3923, %v3973
      %v3990 = vsub.f32 %v3924, %v3974
      %v3991 = vsub.f32 %v3925, %v3975
      %v3992 = vsub.f32 %v3926, %v3976
      %v3993 = vsub.f32 %v3927, %v3977
      %v3994 = vsub.f32 %v3928, %v3978
      %v3995 = vsub.f32 %v3929, %v3979
      %v3996 = vsub.f32 %v3930, %v3980
      %v3997 = vsub.f32 %v3931, %v3981
      %v3998 = vmul.f32 %v3982, %v3982
      %v3999 = vmul.f32 %v3983, %v3983
      %v4000 = vmul.f32 %v3984, %v3984
      %v4001 = vmul.f32 %v3985, %v3985
      %v4002 = vmul.f32 %v3986, %v3986
      %v4003 = vmul.f32 %v3987, %v3987
      %v4004 = vmul.f32 %v3988, %v3988
      %v4005 = vmul.f32 %v3989, %v3989
      %v4006 = vmul.f32 %v3990, %v3990
      %v4007 = vmul.f32 %v3991, %v3991
      %v4008 = vmul.f32 %v3992, %v3992
      %v4009 = vmul.f32 %v3993, %v3993
      %v4010 = vmul.f32 %v3994, %v3994
      %v4011 = vmul.f32 %v3995, %v3995
      %v4012 = vmul.f32 %v3996, %v3996
      %v4013 = vmul.f32 %v3997, %v3997
      %4014 = vadd.xlane.f32.xlu0 %v3998
      %v4015 = vpop.xlane.xlu0 %4014
      %4016 = vadd.xlane.f32.xlu0 %v3999
      %v4017 = vpop.xlane.xlu0 %4016
      %4018 = vadd.xlane.f32.xlu0 %v4000
      %v4019 = vpop.xlane.xlu0 %4018
      %4020 = vadd.xlane.f32.xlu0 %v4001
      %v4021 = vpop.xlane.xlu0 %4020
      %4022 = vadd.xlane.f32.xlu0 %v4002
      %v4023 = vpop.xlane.xlu0 %4022
      %4024 = vadd.xlane.f32.xlu0 %v4003
      %v4025 = vpop.xlane.xlu0 %4024
      %4026 = vadd.xlane.f32.xlu0 %v4004
      %v4027 = vpop.xlane.xlu0 %4026
      %4028 = vadd.xlane.f32.xlu0 %v4005
      %v4029 = vpop.xlane.xlu0 %4028
      %4030 = vadd.xlane.f32.xlu0 %v4006
      %v4031 = vpop.xlane.xlu0 %4030
      %4032 = vadd.xlane.f32.xlu0 %v4007
      %v4033 = vpop.xlane.xlu0 %4032
      %4034 = vadd.xlane.f32.xlu0 %v4008
      %v4035 = vpop.xlane.xlu0 %4034
      %4036 = vadd.xlane.f32.xlu0 %v4009
      %v4037 = vpop.xlane.xlu0 %4036
      %4038 = vadd.xlane.f32.xlu0 %v4010
      %v4039 = vpop.xlane.xlu0 %4038
      %4040 = vadd.xlane.f32.xlu0 %v4011
      %v4041 = vpop.xlane.xlu0 %4040
      %4042 = vadd.xlane.f32.xlu0 %v4012
      %v4043 = vpop.xlane.xlu0 %4042
      %4044 = vadd.xlane.f32.xlu0 %v4013
      %v4045 = vpop.xlane.xlu0 %4044
      %v4046 = vmul.f32 %v4015, %v3218
      %v4047 = vmul.f32 %v4017, %v3218
      %v4048 = vmul.f32 %v4019, %v3218
      %v4049 = vmul.f32 %v4021, %v3218
      %v4050 = vmul.f32 %v4023, %v3218
      %v4051 = vmul.f32 %v4025, %v3218
      %v4052 = vmul.f32 %v4027, %v3218
      %v4053 = vmul.f32 %v4029, %v3218
      %v4054 = vmul.f32 %v4031, %v3218
      %v4055 = vmul.f32 %v4033, %v3218
      %v4056 = vmul.f32 %v4035, %v3218
      %v4057 = vmul.f32 %v4037, %v3218
      %v4058 = vmul.f32 %v4039, %v3218
      %v4059 = vmul.f32 %v4041, %v3218
      %v4060 = vmul.f32 %v4043, %v3218
      %v4061 = vmul.f32 %v4045, %v3218
      %v4062 = vadd.f32 %v4046, 1e-06
      %v4063 = vadd.f32 %v4047, 1e-06
      %v4064 = vadd.f32 %v4048, 1e-06
      %v4065 = vadd.f32 %v4049, 1e-06
      %v4066 = vadd.f32 %v4050, 1e-06
      %v4067 = vadd.f32 %v4051, 1e-06
      %v4068 = vadd.f32 %v4052, 1e-06
      %v4069 = vadd.f32 %v4053, 1e-06
      %v4070 = vadd.f32 %v4054, 1e-06
      %v4071 = vadd.f32 %v4055, 1e-06
      %v4072 = vadd.f32 %v4056, 1e-06
      %v4073 = vadd.f32 %v4057, 1e-06
      %v4074 = vadd.f32 %v4058, 1e-06
      %v4075 = vadd.f32 %v4059, 1e-06
      %v4076 = vadd.f32 %v4060, 1e-06
      %v4077 = vadd.f32 %v4061, 1e-06
      %v4078 = vrsqrt.pop %v4062
      %v4079 = vrsqrt.pop %v4063
      %v4080 = vrsqrt.pop %v4064
      %v4081 = vrsqrt.pop %v4065
      %v4082 = vrsqrt.pop %v4066
      %v4083 = vrsqrt.pop %v4067
      %v4084 = vrsqrt.pop %v4068
      %v4085 = vrsqrt.pop %v4069
      %v4086 = vrsqrt.pop %v4070
      %v4087 = vrsqrt.pop %v4071
      %v4088 = vrsqrt.pop %v4072
      %v4089 = vrsqrt.pop %v4073
      %v4090 = vrsqrt.pop %v4074
      %v4091 = vrsqrt.pop %v4075
      %v4092 = vrsqrt.pop %v4076
      %v4093 = vrsqrt.pop %v4077
      %v4094 = vmul.f32 %v3982, %v4078
      %v4095 = vmul.f32 %v3983, %v4079
      %v4096 = vmul.f32 %v3984, %v4080
      %v4097 = vmul.f32 %v3985, %v4081
      %v4098 = vmul.f32 %v3986, %v4082
      %v4099 = vmul.f32 %v3987, %v4083
      %v4100 = vmul.f32 %v3988, %v4084
      %v4101 = vmul.f32 %v3989, %v4085
      %v4102 = vmul.f32 %v3990, %v4086
      %v4103 = vmul.f32 %v3991, %v4087
      %v4104 = vmul.f32 %v3992, %v4088
      %v4105 = vmul.f32 %v3993, %v4089
      %v4106 = vmul.f32 %v3994, %v4090
      %v4107 = vmul.f32 %v3995, %v4091
      %v4108 = vmul.f32 %v3996, %v4092
      %v4109 = vmul.f32 %v3997, %v4093
      %v4111 = vlaneseq
      %v4112 = vshrl.u32 %v4111, 7
      %v4113 = vsub.s32 0, %v4112
      %v4114 = vrot.slane %v3932, %v4113
      %v4116 = vmul.f32 %v4094, %v4114
      %v4117 = vmul.f32 %v4095, %v4114
      %v4118 = vmul.f32 %v4096, %v4114
      %v4119 = vmul.f32 %v4097, %v4114
      %v4120 = vmul.f32 %v4098, %v4114
      %v4121 = vmul.f32 %v4099, %v4114
      %v4122 = vmul.f32 %v4100, %v4114
      %v4123 = vmul.f32 %v4101, %v4114
      %v4124 = vmul.f32 %v4102, %v4114
      %v4125 = vmul.f32 %v4103, %v4114
      %v4126 = vmul.f32 %v4104, %v4114
      %v4127 = vmul.f32 %v4105, %v4114
      %v4128 = vmul.f32 %v4106, %v4114
      %v4129 = vmul.f32 %v4107, %v4114
      %v4130 = vmul.f32 %v4108, %v4114
      %v4131 = vmul.f32 %v4109, %v4114
      %v4133 = vlaneseq
      %v4134 = vshrl.u32 %v4133, 7
      %v4135 = vsub.s32 0, %v4134
      %v4136 = vrot.slane %v3933, %v4135
      %v4138 = vadd.f32 %v4116, %v4136
      %v4139 = vadd.f32 %v4117, %v4136
      %v4140 = vadd.f32 %v4118, %v4136
      %v4141 = vadd.f32 %v4119, %v4136
      %v4142 = vadd.f32 %v4120, %v4136
      %v4143 = vadd.f32 %v4121, %v4136
      %v4144 = vadd.f32 %v4122, %v4136
      %v4145 = vadd.f32 %v4123, %v4136
      %v4146 = vadd.f32 %v4124, %v4136
      %v4147 = vadd.f32 %v4125, %v4136
      %v4148 = vadd.f32 %v4126, %v4136
      %v4149 = vadd.f32 %v4127, %v4136
      %v4150 = vadd.f32 %v4128, %v4136
      %v4151 = vadd.f32 %v4129, %v4136
      %v4152 = vadd.f32 %v4130, %v4136
      %v4153 = vadd.f32 %v4131, %v4136
      %v4154 = vpack.c.bf16 %v4139, %v4138
      %v4155 = vpack.c.bf16 %v4141, %v4140
      %v4156 = vpack.c.bf16 %v4143, %v4142
      %v4157 = vpack.c.bf16 %v4145, %v4144
      %v4158 = vpack.c.bf16 %v4147, %v4146
      %v4159 = vpack.c.bf16 %v4149, %v4148
      %v4160 = vpack.c.bf16 %v4151, %v4150
      %v4161 = vpack.c.bf16 %v4153, %v4152
      %v4170 = vunpack.c.l.b16 %v4154
      %v4171 = vunpack.c.h.b16 %v4154
      %v4172 = vunpack.c.l.b16 %v4155
      %v4173 = vunpack.c.h.b16 %v4155
      %v4174 = vunpack.c.l.b16 %v4156
      %v4175 = vunpack.c.h.b16 %v4156
      %v4176 = vunpack.c.l.b16 %v4157
      %v4177 = vunpack.c.h.b16 %v4157
      %v4178 = vunpack.c.l.b16 %v4158
      %v4179 = vunpack.c.h.b16 %v4158
      %v4180 = vunpack.c.l.b16 %v4159
      %v4181 = vunpack.c.h.b16 %v4159
      %v4182 = vunpack.c.l.b16 %v4160
      %v4183 = vunpack.c.h.b16 %v4160
      %v4184 = vunpack.c.l.b16 %v4161
      %v4185 = vunpack.c.h.b16 %v4161
      %v4186 = vpack.c.b16 %v4170, %v4170
      %v4187 = vpack.c.b16 %v4171, %v4171
      %v4188 = vpack.c.b16 %v4172, %v4172
      %v4189 = vpack.c.b16 %v4173, %v4173
      %v4190 = vpack.c.b16 %v4174, %v4174
      %v4191 = vpack.c.b16 %v4175, %v4175
      %v4192 = vpack.c.b16 %v4176, %v4176
      %v4193 = vpack.c.b16 %v4177, %v4177
      %v4194 = vpack.c.b16 %v4178, %v4178
      %v4195 = vpack.c.b16 %v4179, %v4179
      %v4196 = vpack.c.b16 %v4180, %v4180
      %v4197 = vpack.c.b16 %v4181, %v4181
      %v4198 = vpack.c.b16 %v4182, %v4182
      %v4199 = vpack.c.b16 %v4183, %v4183
      %v4200 = vpack.c.b16 %v4184, %v4184
      %v4201 = vpack.c.b16 %v4185, %v4185
      %4218 = vst [vmem:[%s481] sm:$0xf] %v4186
      %4219 = vst [vmem:[%s481 + $0x4] sm:$0xf] %v4187
      %4220 = vst [vmem:[%s481 + $0x8] sm:$0xf] %v4188
      %4221 = vst [vmem:[%s481 + $0xc] sm:$0xf] %v4189
      %4222 = vst [vmem:[%s481 + $0x10] sm:$0xf] %v4190
      %4223 = vst [vmem:[%s481 + $0x14] sm:$0xf] %v4191
      %4224 = vst [vmem:[%s481 + $0x18] sm:$0xf] %v4192
      %4225 = vst [vmem:[%s481 + $0x1c] sm:$0xf] %v4193
      %4226 = vst [vmem:[%s481 + $0x20] sm:$0xf] %v4194
      %4227 = vst [vmem:[%s481 + $0x24] sm:$0xf] %v4195
      %4228 = vst [vmem:[%s481 + $0x28] sm:$0xf] %v4196
      %4229 = vst [vmem:[%s481 + $0x2c] sm:$0xf] %v4197
      %4230 = vst [vmem:[%s481 + $0x30] sm:$0xf] %v4198
      %4231 = vst [vmem:[%s481 + $0x34] sm:$0xf] %v4199
      %4232 = vst [vmem:[%s481 + $0x38] sm:$0xf] %v4200
      %4233 = vst [vmem:[%s481 + $0x3c] sm:$0xf] %v4201
      %p4234 = scmp.lt.s32.totalorder %s25, 1
      %s4235 = scalar_select %p4234, %s25, 1
      %s4236 = smul.addr %s4235, 16
      %s4237 = smul.addr %s4236, 4
      %s4238 = scalar_lea.vmem %s14, %s4237
      // Predicated region
      $region77: #{bert_forward.3} parent=75 // pred_check
        %p4239 = pneg %p347
      $region78: #{bert_forward.3} parent=75 // pred_check_branch
        %4241 = sbr.rel (%p4239) target = $region80
      $region79: #{bert_forward.3} parent=75 // pred_region
        _
      $region80: #{bert_forward.3} parent=75 // pred_fallthru
        _
    $region76: #{bert_forward.3} parent=5 // pred_fallthru
      _
    %p4242 = scmp.le.s32.totalorder 2, %s20
    // Predicated region
    $region81: #{bert_forward.3} parent=5 // pred_check
      %p4243 = pneg %p4242
    $region82: #{bert_forward.3} parent=5 // pred_check_branch
      %4245 = sbr.rel (%p4243) target = $region84
    $region83: #{bert_forward.3} parent=5 // pred_region
      %s4246 = ssub.s32 %s20, 2
      // Predicated region
      $region85: #{bert_forward.3} parent=83 // pred_check
        %p4247 = pneg %p353
      $region86: #{bert_forward.3} parent=83 // pred_check_branch
        %4249 = sbr.rel (%p4247) target = $region88
      $region87: #{bert_forward.3} parent=83 // pred_region
        %p4250 = scmp.lt.s32.totalorder %s26, 1
        %s4251 = scalar_select %p4250, %s26, 1
        %s4252 = smul.addr %s4251, 16
        %s4253 = smul.addr %s4252, 4
        %s4254 = scalar_lea.vmem %s14, %s4253
      $region88: #{bert_forward.3} parent=83 // pred_fallthru
        _
    $region84: #{bert_forward.3} parent=5 // pred_fallthru
      _
  $region6: #{bert_forward.3} parent=0 // loop_footer
    %s24 = sadd.s32 1, %s20
  $region7: #{bert_forward.3} parent=0 // loop_footer_branch
    %19 = sbr.rel target = $region3
  $region8: #{bert_forward.3} parent=0 // loop_exit
    _

</llo_original>
